<compile_context>
chip_gen: v5e
topology: v5e:2x2
jax: 0.10.0
libtpu: 0.0.40
codegen_flags: <defaults>
</compile_context>

<pallas_src>
import math

import jax
import jax.numpy as jnp
from jax.experimental import pallas as pl
from jax.experimental.pallas import tpu as pltpu


_INV_SQRT2 = 0.7071067811865476  # 1/sqrt(2), folded GELU constant


def _gelu_exact_f32(h):
    # Exact (erf) GELU in f32 -- matches torch.nn.GELU() default.
    return 0.5 * h * (1.0 + jax.lax.erf(h * _INV_SQRT2))


# --------------------------------------------------------------------------------------
# Kernels
# --------------------------------------------------------------------------------------

def _mlp_kernel_fused(x_ref, w1_ref, b1_ref, w2_ref, b2_ref, o_ref):
    """Whole hidden dim resident: fc1 -> GELU -> fc2 in one pass per token tile."""
    x = x_ref[...].astype(w1_ref.dtype)                       # matched MXU operand dtypes
    h = jnp.dot(x, w1_ref[...], preferred_element_type=jnp.float32)
    h = _gelu_exact_f32(h + b1_ref[...])
    o = jnp.dot(h.astype(w2_ref.dtype), w2_ref[...], preferred_element_type=jnp.float32)
    o_ref[...] = (o + b2_ref[...]).astype(o_ref.dtype)


def _mlp_kernel_htiled(x_ref, w1_ref, b1_ref, w2_ref, b2_ref, o_ref, acc_ref):
    """Hidden dim tiled: accumulate fc2 partial products into an f32 scratch (P3)."""
    k = pl.program_id(1)

    @pl.when(k == 0)
    def _():
        acc_ref[...] = jnp.zeros_like(acc_ref)

    x = x_ref[...].astype(w1_ref.dtype)
    h = jnp.dot(x, w1_ref[...], preferred_element_type=jnp.float32)
    h = _gelu_exact_f32(h + b1_ref[...])                       # GELU is elementwise in H
    acc_ref[...] += jnp.dot(h.astype(w2_ref.dtype), w2_ref[...],
                            preferred_element_type=jnp.float32)

    @pl.when(k == pl.num_programs(1) - 1)
    def _():
        o_ref[...] = (acc_ref[...] + b2_ref[...]).astype(o_ref.dtype)


# --------------------------------------------------------------------------------------
# Tile planning (generation-aware VMEM budget)
# --------------------------------------------------------------------------------------

def _round_up(v, m):
    return ((v + m - 1) // m) * m


def _vmem_capacity_bytes():
    try:
        cap = int(pltpu.get_tpu_info().vmem_capacity_bytes)
        if cap > 0:
            return cap
    except Exception:
        pass
    return 64 * 1024 * 1024  # conservative fallback (v7x per-TensorCore VMEM)


def _vmem_need_bytes(tm, th, C, H, O, x_isz, w_isz, o_isz, *, n_wbuf, acc):
    w_bytes = n_wbuf * ((C * th + th + th * O + O) * w_isz)
    tile_bytes = (2 * tm * C * x_isz        # double-buffered x tile
                  + 2 * tm * O * o_isz      # double-buffered out tile
                  + tm * th * 4)            # f32 fc1/GELU intermediate
    if acc:
        tile_bytes += tm * O * 4            # f32 fc2 accumulator scratch
    return w_bytes + tile_bytes


def _plan_tiles(M, C, H, O, x_isz, w_isz, o_isz, budget):
    """Pick (tm, th): prefer the largest token tile, then the largest hidden tile."""
    # Sublane packing of the token (second-minor) axis: f32 -> 8, bf16 -> 16, int8/fp8 -> 32.
    align = max(8, 32 // max(1, x_isz))
    min_tm = max(128, align)               # keep the 128x128 / 256x256 MXU reasonably fed

    # Token-tile upper bound: no bigger than the (aligned) token count, keep >= 2 grid
    # steps along M when M allows (v7x shards the "parallel" axis over 2 TensorCores),
    # and cap at 512 (measured ~85% of HBM roofline).
    tm_hi = _round_up(M, align)
    if M >= 2 * min_tm:
        tm_hi = min(tm_hi, max(min_tm, _round_up(pl.cdiv(M, 2), align)))
    tm_hi = min(max(tm_hi, align), 512)

    tm_cands = []
    t = tm_hi
    while t >= min_tm:
        ta = _round_up(t, align)
        if ta not in tm_cands:
            tm_cands.append(ta)
        t //= 2
    if not tm_cands:
        tm_cands = [max(align, min(_round_up(M, align), min_tm))]

    # Hidden-dim tile candidates: exact divisors of H only (padding along a reduction
    # axis would corrupt the fc2 accumulation), lane-aligned when actually tiled.
    th_cands = [H]
    t = H // 2
    while t >= 256:
        if H % t == 0 and t % 128 == 0:
            th_cands.append(t)
        t //= 2

    for tm in tm_cands:
        for th in th_cands:
            n_wbuf = 1 if th == H else 2   # Buffered(1) only when weights are grid-invariant
            if _vmem_need_bytes(tm, th, C, H, O, x_isz, w_isz, o_isz,
                                n_wbuf=n_wbuf, acc=(th != H)) <= budget:
                return tm, th
    return tm_cands[-1], th_cands[-1]      # last resort: smallest tiles


# --------------------------------------------------------------------------------------
# Wrapper
# --------------------------------------------------------------------------------------

def mlp_pallas(x, w1, b1, w2, b2, *, tm=None, th=None):
    """Mlp forward.  x: (B, N, C); w1: (C, H); b1: (H,); w2: (H, O); b2: (O,)."""
    B, N, C = x.shape
    Cw, H = w1.shape
    assert Cw == C, (Cw, C)
    O = w2.shape[1]
    M = B * N

    x_isz = jnp.dtype(x.dtype).itemsize
    w_isz = jnp.dtype(w1.dtype).itemsize
    o_isz = x_isz

    vmem_cap = _vmem_capacity_bytes()
    plan_tm, plan_th = _plan_tiles(M, C, H, O, x_isz, w_isz, o_isz,
                                   budget=int(0.8 * vmem_cap))
    tm = plan_tm if tm is None else tm
    th = plan_th if th is None else th
    if th != H:
        assert H % th == 0 and th % 128 == 0, (
            "hidden-dim tile must evenly divide H and be a multiple of 128")

    x2d = x.reshape(M, C)
    b1_2d = b1.reshape(1, H)
    b2_2d = b2.reshape(1, O)

    m_tiles = pl.cdiv(M, tm)
    h_tiles = H // th
    weights_resident = (h_tiles == 1)

    cost = pl.CostEstimate(
        flops=2 * M * C * H + 2 * M * H * O,
        transcendentals=M * H,
        bytes_accessed=(M * C * x_isz + (C * H + H + H * O + O) * w_isz + M * O * o_isz),
    )

    def build(use_single_wbuf):
        if weights_resident:
            # Constant index_map keeps weights VMEM-resident; Buffered(1) reclaims the
            # second (useless) pipeline buffer so the token tile can be larger.
            wkw = dict(pipeline_mode=pl.Buffered(1)) if use_single_wbuf else {}
            grid = (m_tiles,)
            in_specs = [
                pl.BlockSpec((tm, C), lambda i: (i, 0)),
                pl.BlockSpec((C, H), lambda i: (0, 0), **wkw),
                pl.BlockSpec((1, H), lambda i: (0, 0), **wkw),
                pl.BlockSpec((H, O), lambda i: (0, 0), **wkw),
                pl.BlockSpec((1, O), lambda i: (0, 0), **wkw),
            ]
            out_specs = pl.BlockSpec((tm, O), lambda i: (i, 0))
            scratch = []
            kernel = _mlp_kernel_fused
            dims = ("parallel",)
            n_wbuf = 1 if use_single_wbuf else 2
        else:
            # Hidden-dim tiled: weights move along k, so keep default double-buffering
            # for DMA/compute overlap; fc2 accumulates into an f32 scratch.
            grid = (m_tiles, h_tiles)
            in_specs = [
                pl.BlockSpec((tm, C), lambda i, k: (i, 0)),   # constant in k: no re-DMA
                pl.BlockSpec((C, th), lambda i, k: (0, k)),
                pl.BlockSpec((1, th), lambda i, k: (0, k)),
                pl.BlockSpec((th, O), lambda i, k: (k, 0)),
                pl.BlockSpec((1, O), lambda i, k: (0, 0)),
            ]
            out_specs = pl.BlockSpec((tm, O), lambda i, k: (i, 0))
            scratch = [pltpu.VMEM((tm, O), jnp.float32)]
            kernel = _mlp_kernel_htiled
            dims = ("parallel", "arbitrary")
            n_wbuf = 2

        need = _vmem_need_bytes(tm, th, C, H, O, x_isz, w_isz, o_isz,
                                n_wbuf=n_wbuf, acc=not weights_resident)
        vmem_limit = max(int(need * 1.25), 32 * 1024 * 1024)
        vmem_limit = min(vmem_limit, int(vmem_cap * 0.9))
        vmem_limit = max(vmem_limit, 16 * 1024 * 1024)

        return pl.pallas_call(
            kernel,
            out_shape=jax.ShapeDtypeStruct((M, O), x.dtype),
            grid_spec=pltpu.PrefetchScalarGridSpec(
                num_scalar_prefetch=0,
                grid=grid,
                in_specs=in_specs,
                out_specs=out_specs,
                scratch_shapes=scratch,
            ),
            compiler_params=pltpu.CompilerParams(
                dimension_semantics=dims,
                vmem_limit_bytes=vmem_limit,
            ),
            cost_estimate=cost,
        )

    try:
        out2d = build(True)(x2d, w1, b1_2d, w2, b2_2d)
    except Exception:
        # Fallback for jax builds that reject single-buffer pipeline_mode on weights.
        out2d = build(False)(x2d, w1, b1_2d, w2, b2_2d)

    return out2d.reshape(B, N, O)


# --------------------------------------------------------------------------------------
# Reference & demo
# --------------------------------------------------------------------------------------

def reference_mlp(x, w1, b1, w2, b2):
    h = jnp.einsum("bnc,ch->bnh", x, w1, precision="highest") + b1
    h = 0.5 * h * (1.0 + jax.lax.erf(h * _INV_SQRT2))
    return jnp.einsum("bnh,ho->bno", h, w2, precision="highest") + b2


if __name__ == "__main__":
    # Small, lane-friendly shapes: 2 images x 100 tokens (token count deliberately NOT a
    # multiple of the tile, to exercise the masked partial trailing block), C=128, H=512.
    B, N = 2, 100
    in_features, hidden_features = 128, 512
    out_features = in_features

    key = jax.random.PRNGKey(0)
    kx, k1, k2, k3, k4 = jax.random.split(key, 5)

    x = jax.random.normal(kx, (B, N, in_features), dtype=jnp.float32)

    # Deterministic nn.Linear-style init; weights stored transposed (in, out).
    bound1 = 1.0 / math.sqrt(in_features)
    bound2 = 1.0 / math.sqrt(hidden_features)
    w1 = jax.random.uniform(k1, (in_features, hidden_features), jnp.float32, -bound1, bound1)
    b1 = jax.random.uniform(k2, (hidden_features,), jnp.float32, -bound1, bound1)
    w2 = jax.random.uniform(k3, (hidden_features, out_features), jnp.float32, -bound2, bound2)
    b2 = jax.random.uniform(k4, (out_features,), jnp.float32, -bound2, bound2)

    ref = reference_mlp(x, w1, b1, w2, b2)

    # 1) Auto-planned tiles: full hidden dim resident, single-buffered weights.
    out_a = mlp_pallas(x, w1, b1, w2, b2)
    jax.block_until_ready(out_a)
    assert out_a.shape == (B, N, out_features), out_a.shape
    err_a = float(jnp.max(jnp.abs(out_a - ref)))
    assert jnp.allclose(out_a, ref, atol=2e-3, rtol=2e-3), err_a

    # 2) Forced small tiles: exercises the partial trailing M tile (no jnp.pad) and the
    #    hidden-dim-tiled accumulator path (grid=(2, 2)).
    out_b = mlp_pallas(x, w1, b1, w2, b2, tm=128, th=256)
    jax.block_until_ready(out_b)
    err_b = float(jnp.max(jnp.abs(out_b - ref)))
    assert jnp.allclose(out_b, ref, atol=2e-3, rtol=2e-3), err_b

    print("KERNEL_OK")
</pallas_src>

<mosaic_0001>
module attributes {stable_mosaic.version = 11 : i64} {
  func.func @_mlp_kernel_fused(%arg0: i32, %arg1: memref<200x128xf32, #tpu.memory_space<vmem>>, %arg2: memref<128x512xf32, #tpu.memory_space<vmem>>, %arg3: memref<1x512xf32, #tpu.memory_space<vmem>>, %arg4: memref<512x128xf32, #tpu.memory_space<vmem>>, %arg5: memref<1x128xf32, #tpu.memory_space<vmem>>, %arg6: memref<200x128xf32, #tpu.memory_space<vmem>>) attributes {dimension_semantics = [#tpu.dimension_semantics<parallel>], iteration_bounds = array<i64: 1>, scalar_prefetch = 0 : i64, scratch_operands = 0 : i64, tpu.core_type = #tpu.core_type<tc>, window_params = [{transform_indices = @transform_0, window_bounds = array<i64: 200, 128>}, {pipeline_mode = #tpu.pipeline_mode<synchronous>, transform_indices = @transform_1, window_bounds = array<i64: 128, 512>}, {pipeline_mode = #tpu.pipeline_mode<synchronous>, transform_indices = @transform_2, window_bounds = array<i64: 1, 512>}, {pipeline_mode = #tpu.pipeline_mode<synchronous>, transform_indices = @transform_3, window_bounds = array<i64: 512, 128>}, {pipeline_mode = #tpu.pipeline_mode<synchronous>, transform_indices = @transform_4, window_bounds = array<i64: 1, 128>}, {transform_indices = @transform_5, window_bounds = array<i64: 200, 128>}]} {
    %c0 = arith.constant 0 : index
    %c0_0 = arith.constant 0 : index
    %0 = vector.load %arg1[%c0, %c0_0] : memref<200x128xf32, #tpu.memory_space<vmem>>, vector<200x128xf32>
    %c0_1 = arith.constant 0 : index
    %c0_2 = arith.constant 0 : index
    %1 = vector.load %arg2[%c0_1, %c0_2] : memref<128x512xf32, #tpu.memory_space<vmem>>, vector<128x512xf32>
    %cst = arith.constant dense<0.000000e+00> : vector<200x512xf32>
    %2 = tpu.matmul %0, %1, %cst {dimension_numbers = #tpu.dot_dimension_numbers<[1], [0], [0], [1], [0, 0, 1, 1], [], []>} : vector<200x128xf32>, vector<128x512xf32>, vector<200x512xf32> -> vector<200x512xf32>
    %c0_3 = arith.constant 0 : index
    %c0_4 = arith.constant 0 : index
    %3 = vector.load %arg3[%c0_3, %c0_4] : memref<1x512xf32, #tpu.memory_space<vmem>>, vector<1x512xf32>
    %4 = vector.broadcast %3 : vector<1x512xf32> to vector<200x512xf32>
    %5 = arith.addf %2, %4 : vector<200x512xf32>
    %cst_5 = arith.constant 5.000000e-01 : f32
    %6 = vector.broadcast %cst_5 : f32 to vector<200x512xf32>
    %7 = arith.mulf %6, %5 : vector<200x512xf32>
    %cst_6 = arith.constant 0.707106769 : f32
    %8 = vector.broadcast %cst_6 : f32 to vector<200x512xf32>
    %9 = arith.mulf %5, %8 : vector<200x512xf32>
    %10 = math.erf %9 : vector<200x512xf32>
    %cst_7 = arith.constant 1.000000e+00 : f32
    %11 = vector.broadcast %cst_7 : f32 to vector<200x512xf32>
    %12 = arith.addf %11, %10 : vector<200x512xf32>
    %13 = arith.mulf %7, %12 : vector<200x512xf32>
    %c0_8 = arith.constant 0 : index
    %c0_9 = arith.constant 0 : index
    %14 = vector.load %arg4[%c0_8, %c0_9] : memref<512x128xf32, #tpu.memory_space<vmem>>, vector<512x128xf32>
    %cst_10 = arith.constant dense<0.000000e+00> : vector<200x128xf32>
    %15 = tpu.matmul %13, %14, %cst_10 {dimension_numbers = #tpu.dot_dimension_numbers<[1], [0], [0], [1], [0, 0, 1, 1], [], []>} : vector<200x512xf32>, vector<512x128xf32>, vector<200x128xf32> -> vector<200x128xf32>
    %c0_11 = arith.constant 0 : index
    %c0_12 = arith.constant 0 : index
    %16 = vector.load %arg5[%c0_11, %c0_12] : memref<1x128xf32, #tpu.memory_space<vmem>>, vector<1x128xf32>
    %17 = vector.broadcast %16 : vector<1x128xf32> to vector<200x128xf32>
    %18 = arith.addf %15, %17 : vector<200x128xf32>
    %c0_13 = arith.constant 0 : index
    %c0_14 = arith.constant 0 : index
    %19 = vector.load %arg6[%c0_13, %c0_14] : memref<200x128xf32, #tpu.memory_space<vmem>>, vector<200x128xf32>
    tpu.vector_store %arg6[%c0_13, %c0_14], %18 {strides = array<i32>} : memref<200x128xf32, #tpu.memory_space<vmem>>, vector<200x128xf32>,
    return
  }
  func.func @transform_0(%arg0: i32) -> (i32, i32) {
    %c0_i32 = arith.constant 0 : i32
    %c0_i32_0 = arith.constant 0 : i32
    return %arg0, %c0_i32 : i32, i32
  }
  func.func @transform_1(%arg0: i32) -> (i32, i32) {
    %c0_i32 = arith.constant 0 : i32
    %c0_i32_0 = arith.constant 0 : i32
    %c0_i32_1 = arith.constant 0 : i32
    return %c0_i32, %c0_i32_0 : i32, i32
  }
  func.func @transform_2(%arg0: i32) -> (i32, i32) {
    %c0_i32 = arith.constant 0 : i32
    %c0_i32_0 = arith.constant 0 : i32
    %c0_i32_1 = arith.constant 0 : i32
    return %c0_i32, %c0_i32_0 : i32, i32
  }
  func.func @transform_3(%arg0: i32) -> (i32, i32) {
    %c0_i32 = arith.constant 0 : i32
    %c0_i32_0 = arith.constant 0 : i32
    %c0_i32_1 = arith.constant 0 : i32
    return %c0_i32, %c0_i32_0 : i32, i32
  }
  func.func @transform_4(%arg0: i32) -> (i32, i32) {
    %c0_i32 = arith.constant 0 : i32
    %c0_i32_0 = arith.constant 0 : i32
    %c0_i32_1 = arith.constant 0 : i32
    return %c0_i32, %c0_i32_0 : i32, i32
  }
  func.func @transform_5(%arg0: i32) -> (i32, i32) {
    %c0_i32 = arith.constant 0 : i32
    %c0_i32_0 = arith.constant 0 : i32
    return %arg0, %c0_i32 : i32, i32
  }
}

module attributes {stable_mosaic.version = 11 : i64} {
  func.func @_mlp_kernel_fused(%arg0: i32, %arg1: memref<200x128xf32, #tpu.memory_space<vmem>>, %arg2: memref<128x512xf32, #tpu.memory_space<vmem>>, %arg3: memref<1x512xf32, #tpu.memory_space<vmem>>, %arg4: memref<512x128xf32, #tpu.memory_space<vmem>>, %arg5: memref<1x128xf32, #tpu.memory_space<vmem>>, %arg6: memref<200x128xf32, #tpu.memory_space<vmem>>) attributes {dimension_semantics = [#tpu.dimension_semantics<parallel>], iteration_bounds = array<i64: 1>, scalar_prefetch = 0 : i64, scratch_operands = 0 : i64, tpu.core_type = #tpu.core_type<tc>, window_params = [{transform_indices = @transform_0, window_bounds = array<i64: 200, 128>}, {pipeline_mode = #tpu.pipeline_mode<synchronous>, transform_indices = @transform_1, window_bounds = array<i64: 128, 512>}, {pipeline_mode = #tpu.pipeline_mode<synchronous>, transform_indices = @transform_2, window_bounds = array<i64: 1, 512>}, {pipeline_mode = #tpu.pipeline_mode<synchronous>, transform_indices = @transform_3, window_bounds = array<i64: 512, 128>}, {pipeline_mode = #tpu.pipeline_mode<synchronous>, transform_indices = @transform_4, window_bounds = array<i64: 1, 128>}, {transform_indices = @transform_5, window_bounds = array<i64: 200, 128>}]} {
    %c0 = arith.constant 0 : index
    %c0_0 = arith.constant 0 : index
    %0 = vector.load %arg1[%c0, %c0_0] : memref<200x128xf32, #tpu.memory_space<vmem>>, vector<200x128xf32>
    %c0_1 = arith.constant 0 : index
    %c0_2 = arith.constant 0 : index
    %1 = vector.load %arg2[%c0_1, %c0_2] : memref<128x512xf32, #tpu.memory_space<vmem>>, vector<128x512xf32>
    %cst = arith.constant dense<0.000000e+00> : vector<200x512xf32>
    %2 = tpu.matmul %0, %1, %cst {dimension_numbers = #tpu.dot_dimension_numbers<[1], [0], [0], [1], [0, 0, 1, 1], [], []>} : vector<200x128xf32>, vector<128x512xf32>, vector<200x512xf32> -> vector<200x512xf32>
    %c0_3 = arith.constant 0 : index
    %c0_4 = arith.constant 0 : index
    %3 = vector.load %arg3[%c0_3, %c0_4] : memref<1x512xf32, #tpu.memory_space<vmem>>, vector<1x512xf32>
    %4 = vector.broadcast %3 : vector<1x512xf32> to vector<200x512xf32>
    %5 = arith.addf %2, %4 : vector<200x512xf32>
    %cst_5 = arith.constant 5.000000e-01 : f32
    %6 = vector.broadcast %cst_5 : f32 to vector<200x512xf32>
    %7 = arith.mulf %6, %5 : vector<200x512xf32>
    %cst_6 = arith.constant 0.707106769 : f32
    %8 = vector.broadcast %cst_6 : f32 to vector<200x512xf32>
    %9 = arith.mulf %5, %8 : vector<200x512xf32>
    %10 = math.erf %9 : vector<200x512xf32>
    %cst_7 = arith.constant 1.000000e+00 : f32
    %11 = vector.broadcast %cst_7 : f32 to vector<200x512xf32>
    %12 = arith.addf %11, %10 : vector<200x512xf32>
    %13 = arith.mulf %7, %12 : vector<200x512xf32>
    %c0_8 = arith.constant 0 : index
    %c0_9 = arith.constant 0 : index
    %14 = vector.load %arg4[%c0_8, %c0_9] : memref<512x128xf32, #tpu.memory_space<vmem>>, vector<512x128xf32>
    %cst_10 = arith.constant dense<0.000000e+00> : vector<200x128xf32>
    %15 = tpu.matmul %13, %14, %cst_10 {dimension_numbers = #tpu.dot_dimension_numbers<[1], [0], [0], [1], [0, 0, 1, 1], [], []>} : vector<200x512xf32>, vector<512x128xf32>, vector<200x128xf32> -> vector<200x128xf32>
    %c0_11 = arith.constant 0 : index
    %c0_12 = arith.constant 0 : index
    %16 = vector.load %arg5[%c0_11, %c0_12] : memref<1x128xf32, #tpu.memory_space<vmem>>, vector<1x128xf32>
    %17 = vector.broadcast %16 : vector<1x128xf32> to vector<200x128xf32>
    %18 = arith.addf %15, %17 : vector<200x128xf32>
    %c0_13 = arith.constant 0 : index
    %c0_14 = arith.constant 0 : index
    %19 = vector.load %arg6[%c0_13, %c0_14] : memref<200x128xf32, #tpu.memory_space<vmem>>, vector<200x128xf32>
    tpu.vector_store %arg6[%c0_13, %c0_14], %18 {strides = array<i32>} : memref<200x128xf32, #tpu.memory_space<vmem>>, vector<200x128xf32>,
    return
  }
  func.func @transform_0(%arg0: i32) -> (i32, i32) {
    %c0_i32 = arith.constant 0 : i32
    %c0_i32_0 = arith.constant 0 : i32
    return %arg0, %c0_i32 : i32, i32
  }
  func.func @transform_1(%arg0: i32) -> (i32, i32) {
    %c0_i32 = arith.constant 0 : i32
    %c0_i32_0 = arith.constant 0 : i32
    %c0_i32_1 = arith.constant 0 : i32
    return %c0_i32, %c0_i32_0 : i32, i32
  }
  func.func @transform_2(%arg0: i32) -> (i32, i32) {
    %c0_i32 = arith.constant 0 : i32
    %c0_i32_0 = arith.constant 0 : i32
    %c0_i32_1 = arith.constant 0 : i32
    return %c0_i32, %c0_i32_0 : i32, i32
  }
  func.func @transform_3(%arg0: i32) -> (i32, i32) {
    %c0_i32 = arith.constant 0 : i32
    %c0_i32_0 = arith.constant 0 : i32
    %c0_i32_1 = arith.constant 0 : i32
    return %c0_i32, %c0_i32_0 : i32, i32
  }
  func.func @transform_4(%arg0: i32) -> (i32, i32) {
    %c0_i32 = arith.constant 0 : i32
    %c0_i32_0 = arith.constant 0 : i32
    %c0_i32_1 = arith.constant 0 : i32
    return %c0_i32, %c0_i32_0 : i32, i32
  }
  func.func @transform_5(%arg0: i32) -> (i32, i32) {
    %c0_i32 = arith.constant 0 : i32
    %c0_i32_0 = arith.constant 0 : i32
    return %arg0, %c0_i32 : i32, i32
  }
}

</mosaic_0001>

<llo_original>
// kernel: tpu_custom_call.1
$region0: #{tpu_custom_call.1}
  #allocation0 [shape = 'u32[]', space=smem, size = 0x4, offset = 0x4, fixed_abs, tag = 'smem constant byte address 0x4 - core index']
  #allocation1 [shape = 'u32[72,128]{1,0:T(1,128)}', space=vmem, size = 0x9000, scoped, tag = 'internal scratch']
  %s0 = inlined_call_operand.hbm [shape: f32[200,128], index: 0, kind: input, shape index: {}]
  %s1 = inlined_call_operand.hbm [shape: f32[128,512], index: 1, kind: input, shape index: {}]
  %s2 = inlined_call_operand.hbm [shape: f32[1,512], index: 2, kind: input, shape index: {}]
  %s3 = inlined_call_operand.hbm [shape: f32[512,128], index: 3, kind: input, shape index: {}]
  %s4 = inlined_call_operand.vmem [shape: f32[1,128], index: 4, kind: input, shape index: {}]
  %s5 = inlined_call_operand.hbm [shape: f32[200,128], index: 5, kind: output, shape index: {}]
  %s6 = sld [smem:[#allocation0]]
  $region46: #{tpu_custom_call.1} parent=0
    _
  %s8 = ssub.s32 1, %s6
  %s9 = scalar_select 0, %s8, %s6
  $region1: #{tpu_custom_call.1} parent=0
    #allocation2 [shape = 'u8[102400]{0}', space=vmem, size = 0x19000, scoped, tag = 'input window, operand 0, single buffered']
    #allocation3 [shape = 's32[1]{0}', space=sflag, size = 0x4, scoped, tag = 'scoped memory for tpu_custom_call.1']
    #allocation4 [shape = 's32[1]{0}', space=sflag, size = 0x4, scoped, tag = 'scoped memory for tpu_custom_call.1']
    #allocation5 [shape = 'u8[262144]{0}', space=vmem, size = 0x40000, scoped, tag = 'input window, operand 1, single buffered']
    #allocation6 [shape = 's32[1]{0}', space=sflag, size = 0x4, scoped, tag = 'scoped memory for tpu_custom_call.1']
    #allocation7 [shape = 'u8[2048]{0}', space=vmem, size = 0x800, scoped, tag = 'input window, operand 2, single buffered']
    #allocation8 [shape = 'u8[262144]{0}', space=vmem, size = 0x40000, scoped, tag = 'input window, operand 3, single buffered']
    #allocation9 [shape = 's32[1]{0}', space=sflag, size = 0x4, scoped, tag = 'scoped memory for tpu_custom_call.1']
    #allocation10 [shape = 'u8[102400]{0}', space=vmem, size = 0x19000, scoped, tag = 'output window, operand 0, single buffered']
    %10 = vsyncpa [#allocation3], 0
    %11 = vsyncpa [#allocation6], 0
    %12 = vsyncpa [#allocation9], 0
    %13 = vsyncpa [#allocation4], 0
    // Predicated region
    $region2: #{tpu_custom_call.1} parent=1 // pred_check
      _
    $region3: #{tpu_custom_call.1} parent=1 // pred_check_branch
      %15 = sbr.rel (0) target = $region5
    $region4: #{tpu_custom_call.1} parent=1 // pred_region
      %17 = vsyncadd [#allocation3], 0
      %s18 = sshll.u32 %s0, 4
      %s19 = int_to_ptr.hbm [resolvable:$true] %s18
      %s20 = sshll.u32 [#allocation2], 4
      %s21 = int_to_ptr.vmem [resolvable:$true] %s20
      %26 = dma.hbm_to_vmem [thread:$0]  %s19, 3200, %s21, [#allocation3], 128, 128, 8
    $region5: #{tpu_custom_call.1} parent=1 // pred_fallthru
      _
    // Predicated region
    $region6: #{tpu_custom_call.1} parent=1 // pred_check
      _
    $region7: #{tpu_custom_call.1} parent=1 // pred_check_branch
      %28 = sbr.rel (0) target = $region9
    $region8: #{tpu_custom_call.1} parent=1 // pred_region
      %30 = vsyncadd [#allocation6], 0
      %s31 = sshll.u32 %s1, 4
      %s32 = int_to_ptr.hbm [resolvable:$true] %s31
      %s33 = sshll.u32 [#allocation5], 4
      %s34 = int_to_ptr.vmem [resolvable:$true] %s33
      %39 = dma.hbm_to_vmem [thread:$0]  %s32, 8192, %s34, [#allocation6], 512, 512, 32
    $region9: #{tpu_custom_call.1} parent=1 // pred_fallthru
      _
    // Predicated region
    $region10: #{tpu_custom_call.1} parent=1 // pred_check
      _
    $region11: #{tpu_custom_call.1} parent=1 // pred_check_branch
      %41 = sbr.rel (0) target = $region13
    $region12: #{tpu_custom_call.1} parent=1 // pred_region
      %43 = vsyncadd [#allocation6], 0
      %s45 = sshll.u32 %s2, 4
      %s46 = int_to_ptr.hbm [resolvable:$true] %s45
      %s47 = sshll.u32 [#allocation7], 4
      %s48 = int_to_ptr.vmem [resolvable:$true] %s47
      %50 = dma.hbm_to_vmem [thread:$0]  %s46, 64, %s48, [#allocation6]
    $region13: #{tpu_custom_call.1} parent=1 // pred_fallthru
      _
    // Predicated region
    $region14: #{tpu_custom_call.1} parent=1 // pred_check
      _
    $region15: #{tpu_custom_call.1} parent=1 // pred_check_branch
      %52 = sbr.rel (0) target = $region17
    $region16: #{tpu_custom_call.1} parent=1 // pred_region
      %54 = vsyncadd [#allocation9], 0
      %s55 = sshll.u32 %s3, 4
      %s56 = int_to_ptr.hbm [resolvable:$true] %s55
      %s57 = sshll.u32 [#allocation8], 4
      %s58 = int_to_ptr.vmem [resolvable:$true] %s57
      %63 = dma.hbm_to_vmem [thread:$0]  %s56, 8192, %s58, [#allocation9], 128, 128, 8
    $region17: #{tpu_custom_call.1} parent=1 // pred_fallthru
      _
    // Predicated region
    $region18: #{tpu_custom_call.1} parent=1 // pred_check
      _
    $region19: #{tpu_custom_call.1} parent=1 // pred_check_branch
      %65 = sbr.rel (0) target = $region21
    $region20: #{tpu_custom_call.1} parent=1 // pred_region
      _
    $region21: #{tpu_custom_call.1} parent=1 // pred_fallthru
      _
    // Predicated region
    $region22: #{tpu_custom_call.1} parent=1 // pred_check
      _
    $region23: #{tpu_custom_call.1} parent=1 // pred_check_branch
      %67 = sbr.rel (0) target = $region25
    $region24: #{tpu_custom_call.1} parent=1 // pred_region
      %69 = dma.done [#allocation3], 3200
    $region25: #{tpu_custom_call.1} parent=1 // pred_fallthru
      _
    // Predicated region
    $region26: #{tpu_custom_call.1} parent=1 // pred_check
      _
    $region27: #{tpu_custom_call.1} parent=1 // pred_check_branch
      %71 = sbr.rel (0) target = $region29
    $region28: #{tpu_custom_call.1} parent=1 // pred_region
      %73 = dma.done [#allocation6], 8192
    $region29: #{tpu_custom_call.1} parent=1 // pred_fallthru
      _
    // Predicated region
    $region30: #{tpu_custom_call.1} parent=1 // pred_check
      _
    $region31: #{tpu_custom_call.1} parent=1 // pred_check_branch
      %75 = sbr.rel (0) target = $region33
    $region32: #{tpu_custom_call.1} parent=1 // pred_region
      %77 = dma.done [#allocation6], 64
    $region33: #{tpu_custom_call.1} parent=1 // pred_fallthru
      _
    // Predicated region
    $region34: #{tpu_custom_call.1} parent=1 // pred_check
      _
    $region35: #{tpu_custom_call.1} parent=1 // pred_check_branch
      %79 = sbr.rel (0) target = $region37
    $region36: #{tpu_custom_call.1} parent=1 // pred_region
      %81 = dma.done [#allocation9], 8192
    $region37: #{tpu_custom_call.1} parent=1 // pred_fallthru
      _
    %v82 = vld [vmem:[#allocation2] sm:$0xff]
    %v83 = vld [vmem:[#allocation2 + $0x8] sm:$0xff]
    %v84 = vld [vmem:[#allocation2 + $0x10] sm:$0xff]
    %v85 = vld [vmem:[#allocation2 + $0x18] sm:$0xff]
    %v86 = vld [vmem:[#allocation2 + $0x20] sm:$0xff]
    %v87 = vld [vmem:[#allocation2 + $0x28] sm:$0xff]
    %v88 = vld [vmem:[#allocation2 + $0x30] sm:$0xff]
    %v89 = vld [vmem:[#allocation2 + $0x38] sm:$0xff]
    %v90 = vld [vmem:[#allocation2 + $0x40] sm:$0xff]
    %v91 = vld [vmem:[#allocation2 + $0x48] sm:$0xff]
    %v92 = vld [vmem:[#allocation2 + $0x50] sm:$0xff]
    %v93 = vld [vmem:[#allocation2 + $0x58] sm:$0xff]
    %v94 = vld [vmem:[#allocation2 + $0x60] sm:$0xff]
    %v95 = vld [vmem:[#allocation2 + $0x68] sm:$0xff]
    %v96 = vld [vmem:[#allocation2 + $0x70] sm:$0xff]
    %v97 = vld [vmem:[#allocation2 + $0x78] sm:$0xff]
    %v98 = vld [vmem:[#allocation2 + $0x80] sm:$0xff]
    %v99 = vld [vmem:[#allocation2 + $0x88] sm:$0xff]
    %v100 = vld [vmem:[#allocation2 + $0x90] sm:$0xff]
    %v101 = vld [vmem:[#allocation2 + $0x98] sm:$0xff]
    %v102 = vld [vmem:[#allocation2 + $0xa0] sm:$0xff]
    %v103 = vld [vmem:[#allocation2 + $0xa8] sm:$0xff]
    %v104 = vld [vmem:[#allocation2 + $0xb0] sm:$0xff]
    %v105 = vld [vmem:[#allocation2 + $0xb8] sm:$0xff]
    %v106 = vld [vmem:[#allocation2 + $0xc0] sm:$0xff]
    %v107 = vld [vmem:[#allocation5] sm:$0xff]
    %v108 = vld [vmem:[#allocation5 + $0x8] sm:$0xff]
    %v109 = vld [vmem:[#allocation5 + $0x10] sm:$0xff]
    %v110 = vld [vmem:[#allocation5 + $0x18] sm:$0xff]
    %v111 = vld [vmem:[#allocation5 + $0x20] sm:$0xff]
    %v112 = vld [vmem:[#allocation5 + $0x28] sm:$0xff]
    %v113 = vld [vmem:[#allocation5 + $0x30] sm:$0xff]
    %v114 = vld [vmem:[#allocation5 + $0x38] sm:$0xff]
    %v115 = vld [vmem:[#allocation5 + $0x40] sm:$0xff]
    %v116 = vld [vmem:[#allocation5 + $0x48] sm:$0xff]
    %v117 = vld [vmem:[#allocation5 + $0x50] sm:$0xff]
    %v118 = vld [vmem:[#allocation5 + $0x58] sm:$0xff]
    %v119 = vld [vmem:[#allocation5 + $0x60] sm:$0xff]
    %v120 = vld [vmem:[#allocation5 + $0x68] sm:$0xff]
    %v121 = vld [vmem:[#allocation5 + $0x70] sm:$0xff]
    %v122 = vld [vmem:[#allocation5 + $0x78] sm:$0xff]
    %v123 = vld [vmem:[#allocation5 + $0x80] sm:$0xff]
    %v124 = vld [vmem:[#allocation5 + $0x88] sm:$0xff]
    %v125 = vld [vmem:[#allocation5 + $0x90] sm:$0xff]
    %v126 = vld [vmem:[#allocation5 + $0x98] sm:$0xff]
    %v127 = vld [vmem:[#allocation5 + $0xa0] sm:$0xff]
    %v128 = vld [vmem:[#allocation5 + $0xa8] sm:$0xff]
    %v129 = vld [vmem:[#allocation5 + $0xb0] sm:$0xff]
    %v130 = vld [vmem:[#allocation5 + $0xb8] sm:$0xff]
    %v131 = vld [vmem:[#allocation5 + $0xc0] sm:$0xff]
    %v132 = vld [vmem:[#allocation5 + $0xc8] sm:$0xff]
    %v133 = vld [vmem:[#allocation5 + $0xd0] sm:$0xff]
    %v134 = vld [vmem:[#allocation5 + $0xd8] sm:$0xff]
    %v135 = vld [vmem:[#allocation5 + $0xe0] sm:$0xff]
    %v136 = vld [vmem:[#allocation5 + $0xe8] sm:$0xff]
    %v137 = vld [vmem:[#allocation5 + $0xf0] sm:$0xff]
    %v138 = vld [vmem:[#allocation5 + $0xf8] sm:$0xff]
    %v139 = vld [vmem:[#allocation5 + $0x100] sm:$0xff]
    %v140 = vld [vmem:[#allocation5 + $0x108] sm:$0xff]
    %v141 = vld [vmem:[#allocation5 + $0x110] sm:$0xff]
    %v142 = vld [vmem:[#allocation5 + $0x118] sm:$0xff]
    %v143 = vld [vmem:[#allocation5 + $0x120] sm:$0xff]
    %v144 = vld [vmem:[#allocation5 + $0x128] sm:$0xff]
    %v145 = vld [vmem:[#allocation5 + $0x130] sm:$0xff]
    %v146 = vld [vmem:[#allocation5 + $0x138] sm:$0xff]
    %v147 = vld [vmem:[#allocation5 + $0x140] sm:$0xff]
    %v148 = vld [vmem:[#allocation5 + $0x148] sm:$0xff]
    %v149 = vld [vmem:[#allocation5 + $0x150] sm:$0xff]
    %v150 = vld [vmem:[#allocation5 + $0x158] sm:$0xff]
    %v151 = vld [vmem:[#allocation5 + $0x160] sm:$0xff]
    %v152 = vld [vmem:[#allocation5 + $0x168] sm:$0xff]
    %v153 = vld [vmem:[#allocation5 + $0x170] sm:$0xff]
    %v154 = vld [vmem:[#allocation5 + $0x178] sm:$0xff]
    %v155 = vld [vmem:[#allocation5 + $0x180] sm:$0xff]
    %v156 = vld [vmem:[#allocation5 + $0x188] sm:$0xff]
    %v157 = vld [vmem:[#allocation5 + $0x190] sm:$0xff]
    %v158 = vld [vmem:[#allocation5 + $0x198] sm:$0xff]
    %v159 = vld [vmem:[#allocation5 + $0x1a0] sm:$0xff]
    %v160 = vld [vmem:[#allocation5 + $0x1a8] sm:$0xff]
    %v161 = vld [vmem:[#allocation5 + $0x1b0] sm:$0xff]
    %v162 = vld [vmem:[#allocation5 + $0x1b8] sm:$0xff]
    %v163 = vld [vmem:[#allocation5 + $0x1c0] sm:$0xff]
    %v164 = vld [vmem:[#allocation5 + $0x1c8] sm:$0xff]
    %v165 = vld [vmem:[#allocation5 + $0x1d0] sm:$0xff]
    %v166 = vld [vmem:[#allocation5 + $0x1d8] sm:$0xff]
    %v167 = vld [vmem:[#allocation5 + $0x1e0] sm:$0xff]
    %v168 = vld [vmem:[#allocation5 + $0x1e8] sm:$0xff]
    %v169 = vld [vmem:[#allocation5 + $0x1f0] sm:$0xff]
    %v170 = vld [vmem:[#allocation5 + $0x1f8] sm:$0xff]
    %v171 = vld [vmem:[#allocation7] sm:$0xf]
    %v173 = vperm.slane %v171, 0
    %v174 = vperm.slane %v171, 1
    %v175 = vperm.slane %v171, 2
    %v176 = vperm.slane %v171, 3
    %181 = vmatpush.msra.mxu0 %v167
    %182 = vmatpush.msra.mxu0 %v163
    %183 = vmatpush.msra.mxu0 %v159
    %184 = vmatpush.msra.mxu0 %v155
    %185 = vmatpush.msra.mxu0 %v151
    %186 = vmatpush.msra.mxu0 %v147
    %187 = vmatpush.msra.mxu0 %v143
    %188 = vmatpush.msra.mxu0 %v139
    %189 = vmatpush.msra.mxu0 %v135
    %190 = vmatpush.msra.mxu0 %v131
    %191 = vmatpush.msra.mxu0 %v127
    %192 = vmatpush.msra.mxu0 %v123
    %193 = vmatpush.msra.mxu0 %v119
    %194 = vmatpush.msra.mxu0 %v115
    %195 = vmatpush.msra.mxu0 %v111
    %196 = vmatpush.msra.mxu0 %v107
    %197 = vmatmul.f32.gmra.mxu0 %v82
    %v198 = vpop.f32.mrf.mxu0
    %v199 = vadd.f32 %v173, %v198
    %200 = vmatmul.f32.gmra.mxu0 %v83
    %v201 = vpop.f32.mrf.mxu0
    %v202 = vadd.f32 %v173, %v201
    %203 = vmatmul.f32.gmra.mxu0 %v84
    %v204 = vpop.f32.mrf.mxu0
    %v205 = vadd.f32 %v173, %v204
    %206 = vmatmul.f32.gmra.mxu0 %v85
    %v207 = vpop.f32.mrf.mxu0
    %v208 = vadd.f32 %v173, %v207
    %209 = vmatmul.f32.gmra.mxu0 %v86
    %v210 = vpop.f32.mrf.mxu0
    %v211 = vadd.f32 %v173, %v210
    %212 = vmatmul.f32.gmra.mxu0 %v87
    %v213 = vpop.f32.mrf.mxu0
    %v214 = vadd.f32 %v173, %v213
    %215 = vmatmul.f32.gmra.mxu0 %v88
    %v216 = vpop.f32.mrf.mxu0
    %v217 = vadd.f32 %v173, %v216
    %218 = vmatmul.f32.gmra.mxu0 %v89
    %v219 = vpop.f32.mrf.mxu0
    %v220 = vadd.f32 %v173, %v219
    %221 = vmatmul.f32.gmra.mxu0 %v90
    %v222 = vpop.f32.mrf.mxu0
    %v223 = vadd.f32 %v173, %v222
    %224 = vmatmul.f32.gmra.mxu0 %v91
    %v225 = vpop.f32.mrf.mxu0
    %v226 = vadd.f32 %v173, %v225
    %227 = vmatmul.f32.gmra.mxu0 %v92
    %v228 = vpop.f32.mrf.mxu0
    %v229 = vadd.f32 %v173, %v228
    %230 = vmatmul.f32.gmra.mxu0 %v93
    %v231 = vpop.f32.mrf.mxu0
    %v232 = vadd.f32 %v173, %v231
    %233 = vmatmul.f32.gmra.mxu0 %v94
    %v234 = vpop.f32.mrf.mxu0
    %v235 = vadd.f32 %v173, %v234
    %236 = vmatmul.f32.gmra.mxu0 %v95
    %v237 = vpop.f32.mrf.mxu0
    %v238 = vadd.f32 %v173, %v237
    %239 = vmatmul.f32.gmra.mxu0 %v96
    %v240 = vpop.f32.mrf.mxu0
    %v241 = vadd.f32 %v173, %v240
    %242 = vmatmul.f32.gmra.mxu0 %v97
    %v243 = vpop.f32.mrf.mxu0
    %v244 = vadd.f32 %v173, %v243
    %245 = vmatmul.f32.gmra.mxu0 %v98
    %v246 = vpop.f32.mrf.mxu0
    %v247 = vadd.f32 %v173, %v246
    %248 = vmatmul.f32.gmra.mxu0 %v99
    %v249 = vpop.f32.mrf.mxu0
    %v250 = vadd.f32 %v173, %v249
    %251 = vmatmul.f32.gmra.mxu0 %v100
    %v252 = vpop.f32.mrf.mxu0
    %v253 = vadd.f32 %v173, %v252
    %254 = vmatmul.f32.gmra.mxu0 %v101
    %v255 = vpop.f32.mrf.mxu0
    %v256 = vadd.f32 %v173, %v255
    %257 = vmatmul.f32.gmra.mxu0 %v102
    %v258 = vpop.f32.mrf.mxu0
    %v259 = vadd.f32 %v173, %v258
    %260 = vmatmul.f32.gmra.mxu0 %v103
    %v261 = vpop.f32.mrf.mxu0
    %v262 = vadd.f32 %v173, %v261
    %263 = vmatmul.f32.gmra.mxu0 %v104
    %v264 = vpop.f32.mrf.mxu0
    %v265 = vadd.f32 %v173, %v264
    %266 = vmatmul.f32.gmra.mxu0 %v105
    %v267 = vpop.f32.mrf.mxu0
    %v268 = vadd.f32 %v173, %v267
    %269 = vmatmul.f32.gmra.mxu0 %v106
    %v270 = vpop.f32.mrf.mxu0
    %v271 = vadd.f32 %v173, %v270
    %272 = vdwg.mxu0
    %273 = vmatpush.msra.mxu0 %v168
    %274 = vmatpush.msra.mxu0 %v164
    %275 = vmatpush.msra.mxu0 %v160
    %276 = vmatpush.msra.mxu0 %v156
    %277 = vmatpush.msra.mxu0 %v152
    %278 = vmatpush.msra.mxu0 %v148
    %279 = vmatpush.msra.mxu0 %v144
    %280 = vmatpush.msra.mxu0 %v140
    %281 = vmatpush.msra.mxu0 %v136
    %282 = vmatpush.msra.mxu0 %v132
    %283 = vmatpush.msra.mxu0 %v128
    %284 = vmatpush.msra.mxu0 %v124
    %285 = vmatpush.msra.mxu0 %v120
    %286 = vmatpush.msra.mxu0 %v116
    %287 = vmatpush.msra.mxu0 %v112
    %288 = vmatpush.msra.mxu0 %v108
    %289 = vmatmul.f32.gmra.mxu0 %v82
    %v290 = vpop.f32.mrf.mxu0
    %v291 = vadd.f32 %v174, %v290
    %292 = vmatmul.f32.gmra.mxu0 %v83
    %v293 = vpop.f32.mrf.mxu0
    %v294 = vadd.f32 %v174, %v293
    %295 = vmatmul.f32.gmra.mxu0 %v84
    %v296 = vpop.f32.mrf.mxu0
    %v297 = vadd.f32 %v174, %v296
    %298 = vmatmul.f32.gmra.mxu0 %v85
    %v299 = vpop.f32.mrf.mxu0
    %v300 = vadd.f32 %v174, %v299
    %301 = vmatmul.f32.gmra.mxu0 %v86
    %v302 = vpop.f32.mrf.mxu0
    %v303 = vadd.f32 %v174, %v302
    %304 = vmatmul.f32.gmra.mxu0 %v87
    %v305 = vpop.f32.mrf.mxu0
    %v306 = vadd.f32 %v174, %v305
    %307 = vmatmul.f32.gmra.mxu0 %v88
    %v308 = vpop.f32.mrf.mxu0
    %v309 = vadd.f32 %v174, %v308
    %310 = vmatmul.f32.gmra.mxu0 %v89
    %v311 = vpop.f32.mrf.mxu0
    %v312 = vadd.f32 %v174, %v311
    %313 = vmatmul.f32.gmra.mxu0 %v90
    %v314 = vpop.f32.mrf.mxu0
    %v315 = vadd.f32 %v174, %v314
    %316 = vmatmul.f32.gmra.mxu0 %v91
    %v317 = vpop.f32.mrf.mxu0
    %v318 = vadd.f32 %v174, %v317
    %319 = vmatmul.f32.gmra.mxu0 %v92
    %v320 = vpop.f32.mrf.mxu0
    %v321 = vadd.f32 %v174, %v320
    %322 = vmatmul.f32.gmra.mxu0 %v93
    %v323 = vpop.f32.mrf.mxu0
    %v324 = vadd.f32 %v174, %v323
    %325 = vmatmul.f32.gmra.mxu0 %v94
    %v326 = vpop.f32.mrf.mxu0
    %v327 = vadd.f32 %v174, %v326
    %328 = vmatmul.f32.gmra.mxu0 %v95
    %v329 = vpop.f32.mrf.mxu0
    %v330 = vadd.f32 %v174, %v329
    %331 = vmatmul.f32.gmra.mxu0 %v96
    %v332 = vpop.f32.mrf.mxu0
    %v333 = vadd.f32 %v174, %v332
    %334 = vmatmul.f32.gmra.mxu0 %v97
    %v335 = vpop.f32.mrf.mxu0
    %v336 = vadd.f32 %v174, %v335
    %337 = vmatmul.f32.gmra.mxu0 %v98
    %v338 = vpop.f32.mrf.mxu0
    %v339 = vadd.f32 %v174, %v338
    %340 = vmatmul.f32.gmra.mxu0 %v99
    %v341 = vpop.f32.mrf.mxu0
    %v342 = vadd.f32 %v174, %v341
    %343 = vmatmul.f32.gmra.mxu0 %v100
    %v344 = vpop.f32.mrf.mxu0
    %v345 = vadd.f32 %v174, %v344
    %346 = vmatmul.f32.gmra.mxu0 %v101
    %v347 = vpop.f32.mrf.mxu0
    %v348 = vadd.f32 %v174, %v347
    %349 = vmatmul.f32.gmra.mxu0 %v102
    %v350 = vpop.f32.mrf.mxu0
    %v351 = vadd.f32 %v174, %v350
    %352 = vmatmul.f32.gmra.mxu0 %v103
    %v353 = vpop.f32.mrf.mxu0
    %v354 = vadd.f32 %v174, %v353
    %355 = vmatmul.f32.gmra.mxu0 %v104
    %v356 = vpop.f32.mrf.mxu0
    %v357 = vadd.f32 %v174, %v356
    %358 = vmatmul.f32.gmra.mxu0 %v105
    %v359 = vpop.f32.mrf.mxu0
    %v360 = vadd.f32 %v174, %v359
    %361 = vmatmul.f32.gmra.mxu0 %v106
    %v362 = vpop.f32.mrf.mxu0
    %v363 = vadd.f32 %v174, %v362
    %364 = vdwg.mxu0
    %365 = vmatpush.msra.mxu0 %v169
    %366 = vmatpush.msra.mxu0 %v165
    %367 = vmatpush.msra.mxu0 %v161
    %368 = vmatpush.msra.mxu0 %v157
    %369 = vmatpush.msra.mxu0 %v153
    %370 = vmatpush.msra.mxu0 %v149
    %371 = vmatpush.msra.mxu0 %v145
    %372 = vmatpush.msra.mxu0 %v141
    %373 = vmatpush.msra.mxu0 %v137
    %374 = vmatpush.msra.mxu0 %v133
    %375 = vmatpush.msra.mxu0 %v129
    %376 = vmatpush.msra.mxu0 %v125
    %377 = vmatpush.msra.mxu0 %v121
    %378 = vmatpush.msra.mxu0 %v117
    %379 = vmatpush.msra.mxu0 %v113
    %380 = vmatpush.msra.mxu0 %v109
    %381 = vmatmul.f32.gmra.mxu0 %v82
    %v382 = vpop.f32.mrf.mxu0
    %v383 = vadd.f32 %v175, %v382
    %384 = vmatmul.f32.gmra.mxu0 %v83
    %v385 = vpop.f32.mrf.mxu0
    %v386 = vadd.f32 %v175, %v385
    %387 = vmatmul.f32.gmra.mxu0 %v84
    %v388 = vpop.f32.mrf.mxu0
    %v389 = vadd.f32 %v175, %v388
    %390 = vmatmul.f32.gmra.mxu0 %v85
    %v391 = vpop.f32.mrf.mxu0
    %v392 = vadd.f32 %v175, %v391
    %393 = vmatmul.f32.gmra.mxu0 %v86
    %v394 = vpop.f32.mrf.mxu0
    %v395 = vadd.f32 %v175, %v394
    %396 = vmatmul.f32.gmra.mxu0 %v87
    %v397 = vpop.f32.mrf.mxu0
    %v398 = vadd.f32 %v175, %v397
    %399 = vmatmul.f32.gmra.mxu0 %v88
    %v400 = vpop.f32.mrf.mxu0
    %v401 = vadd.f32 %v175, %v400
    %402 = vmatmul.f32.gmra.mxu0 %v89
    %v403 = vpop.f32.mrf.mxu0
    %v404 = vadd.f32 %v175, %v403
    %405 = vmatmul.f32.gmra.mxu0 %v90
    %v406 = vpop.f32.mrf.mxu0
    %v407 = vadd.f32 %v175, %v406
    %408 = vmatmul.f32.gmra.mxu0 %v91
    %v409 = vpop.f32.mrf.mxu0
    %v410 = vadd.f32 %v175, %v409
    %411 = vmatmul.f32.gmra.mxu0 %v92
    %v412 = vpop.f32.mrf.mxu0
    %v413 = vadd.f32 %v175, %v412
    %414 = vmatmul.f32.gmra.mxu0 %v93
    %v415 = vpop.f32.mrf.mxu0
    %v416 = vadd.f32 %v175, %v415
    %417 = vmatmul.f32.gmra.mxu0 %v94
    %v418 = vpop.f32.mrf.mxu0
    %v419 = vadd.f32 %v175, %v418
    %420 = vmatmul.f32.gmra.mxu0 %v95
    %v421 = vpop.f32.mrf.mxu0
    %v422 = vadd.f32 %v175, %v421
    %423 = vmatmul.f32.gmra.mxu0 %v96
    %v424 = vpop.f32.mrf.mxu0
    %v425 = vadd.f32 %v175, %v424
    %426 = vmatmul.f32.gmra.mxu0 %v97
    %v427 = vpop.f32.mrf.mxu0
    %v428 = vadd.f32 %v175, %v427
    %429 = vmatmul.f32.gmra.mxu0 %v98
    %v430 = vpop.f32.mrf.mxu0
    %v431 = vadd.f32 %v175, %v430
    %432 = vmatmul.f32.gmra.mxu0 %v99
    %v433 = vpop.f32.mrf.mxu0
    %v434 = vadd.f32 %v175, %v433
    %435 = vmatmul.f32.gmra.mxu0 %v100
    %v436 = vpop.f32.mrf.mxu0
    %v437 = vadd.f32 %v175, %v436
    %438 = vmatmul.f32.gmra.mxu0 %v101
    %v439 = vpop.f32.mrf.mxu0
    %v440 = vadd.f32 %v175, %v439
    %441 = vmatmul.f32.gmra.mxu0 %v102
    %v442 = vpop.f32.mrf.mxu0
    %v443 = vadd.f32 %v175, %v442
    %444 = vmatmul.f32.gmra.mxu0 %v103
    %v445 = vpop.f32.mrf.mxu0
    %v446 = vadd.f32 %v175, %v445
    %447 = vmatmul.f32.gmra.mxu0 %v104
    %v448 = vpop.f32.mrf.mxu0
    %v449 = vadd.f32 %v175, %v448
    %450 = vmatmul.f32.gmra.mxu0 %v105
    %v451 = vpop.f32.mrf.mxu0
    %v452 = vadd.f32 %v175, %v451
    %453 = vmatmul.f32.gmra.mxu0 %v106
    %v454 = vpop.f32.mrf.mxu0
    %v455 = vadd.f32 %v175, %v454
    %456 = vdwg.mxu0
    %457 = vmatpush.msra.mxu0 %v170
    %458 = vmatpush.msra.mxu0 %v166
    %459 = vmatpush.msra.mxu0 %v162
    %460 = vmatpush.msra.mxu0 %v158
    %461 = vmatpush.msra.mxu0 %v154
    %462 = vmatpush.msra.mxu0 %v150
    %463 = vmatpush.msra.mxu0 %v146
    %464 = vmatpush.msra.mxu0 %v142
    %465 = vmatpush.msra.mxu0 %v138
    %466 = vmatpush.msra.mxu0 %v134
    %467 = vmatpush.msra.mxu0 %v130
    %468 = vmatpush.msra.mxu0 %v126
    %469 = vmatpush.msra.mxu0 %v122
    %470 = vmatpush.msra.mxu0 %v118
    %471 = vmatpush.msra.mxu0 %v114
    %472 = vmatpush.msra.mxu0 %v110
    %473 = vmatmul.f32.gmra.mxu0 %v82
    %v474 = vpop.f32.mrf.mxu0
    %v475 = vadd.f32 %v176, %v474
    %476 = vmatmul.f32.gmra.mxu0 %v83
    %v477 = vpop.f32.mrf.mxu0
    %v478 = vadd.f32 %v176, %v477
    %479 = vmatmul.f32.gmra.mxu0 %v84
    %v480 = vpop.f32.mrf.mxu0
    %v481 = vadd.f32 %v176, %v480
    %482 = vmatmul.f32.gmra.mxu0 %v85
    %v483 = vpop.f32.mrf.mxu0
    %v484 = vadd.f32 %v176, %v483
    %485 = vmatmul.f32.gmra.mxu0 %v86
    %v486 = vpop.f32.mrf.mxu0
    %v487 = vadd.f32 %v176, %v486
    %488 = vmatmul.f32.gmra.mxu0 %v87
    %v489 = vpop.f32.mrf.mxu0
    %v490 = vadd.f32 %v176, %v489
    %491 = vmatmul.f32.gmra.mxu0 %v88
    %v492 = vpop.f32.mrf.mxu0
    %v493 = vadd.f32 %v176, %v492
    %494 = vmatmul.f32.gmra.mxu0 %v89
    %v495 = vpop.f32.mrf.mxu0
    %v496 = vadd.f32 %v176, %v495
    %497 = vmatmul.f32.gmra.mxu0 %v90
    %v498 = vpop.f32.mrf.mxu0
    %v499 = vadd.f32 %v176, %v498
    %500 = vmatmul.f32.gmra.mxu0 %v91
    %v501 = vpop.f32.mrf.mxu0
    %v502 = vadd.f32 %v176, %v501
    %503 = vmatmul.f32.gmra.mxu0 %v92
    %v504 = vpop.f32.mrf.mxu0
    %v505 = vadd.f32 %v176, %v504
    %506 = vmatmul.f32.gmra.mxu0 %v93
    %v507 = vpop.f32.mrf.mxu0
    %v508 = vadd.f32 %v176, %v507
    %509 = vmatmul.f32.gmra.mxu0 %v94
    %v510 = vpop.f32.mrf.mxu0
    %v511 = vadd.f32 %v176, %v510
    %512 = vmatmul.f32.gmra.mxu0 %v95
    %v513 = vpop.f32.mrf.mxu0
    %v514 = vadd.f32 %v176, %v513
    %515 = vmatmul.f32.gmra.mxu0 %v96
    %v516 = vpop.f32.mrf.mxu0
    %v517 = vadd.f32 %v176, %v516
    %518 = vmatmul.f32.gmra.mxu0 %v97
    %v519 = vpop.f32.mrf.mxu0
    %v520 = vadd.f32 %v176, %v519
    %521 = vmatmul.f32.gmra.mxu0 %v98
    %v522 = vpop.f32.mrf.mxu0
    %v523 = vadd.f32 %v176, %v522
    %524 = vmatmul.f32.gmra.mxu0 %v99
    %v525 = vpop.f32.mrf.mxu0
    %v526 = vadd.f32 %v176, %v525
    %527 = vmatmul.f32.gmra.mxu0 %v100
    %v528 = vpop.f32.mrf.mxu0
    %v529 = vadd.f32 %v176, %v528
    %530 = vmatmul.f32.gmra.mxu0 %v101
    %v531 = vpop.f32.mrf.mxu0
    %v532 = vadd.f32 %v176, %v531
    %533 = vmatmul.f32.gmra.mxu0 %v102
    %v534 = vpop.f32.mrf.mxu0
    %v535 = vadd.f32 %v176, %v534
    %536 = vmatmul.f32.gmra.mxu0 %v103
    %v537 = vpop.f32.mrf.mxu0
    %v538 = vadd.f32 %v176, %v537
    %539 = vmatmul.f32.gmra.mxu0 %v104
    %v540 = vpop.f32.mrf.mxu0
    %v541 = vadd.f32 %v176, %v540
    %542 = vmatmul.f32.gmra.mxu0 %v105
    %v543 = vpop.f32.mrf.mxu0
    %v544 = vadd.f32 %v176, %v543
    %545 = vmatmul.f32.gmra.mxu0 %v106
    %v546 = vpop.f32.mrf.mxu0
    %v547 = vadd.f32 %v176, %v546
    %548 = vdwg.mxu0
    %v549 = vmul.f32 %v199, 0.5
    %v550 = vmul.f32 %v291, 0.5
    %v551 = vmul.f32 %v383, 0.5
    %v552 = vmul.f32 %v475, 0.5
    %v553 = vmul.f32 %v202, 0.5
    %v554 = vmul.f32 %v294, 0.5
    %v555 = vmul.f32 %v386, 0.5
    %v556 = vmul.f32 %v478, 0.5
    %v557 = vmul.f32 %v205, 0.5
    %v558 = vmul.f32 %v297, 0.5
    %v559 = vmul.f32 %v389, 0.5
    %v560 = vmul.f32 %v481, 0.5
    %v561 = vmul.f32 %v208, 0.5
    %v562 = vmul.f32 %v300, 0.5
    %v563 = vmul.f32 %v392, 0.5
    %v564 = vmul.f32 %v484, 0.5
    %v565 = vmul.f32 %v211, 0.5
    %v566 = vmul.f32 %v303, 0.5
    %v567 = vmul.f32 %v395, 0.5
    %v568 = vmul.f32 %v487, 0.5
    %v569 = vmul.f32 %v214, 0.5
    %v570 = vmul.f32 %v306, 0.5
    %v571 = vmul.f32 %v398, 0.5
    %v572 = vmul.f32 %v490, 0.5
    %v573 = vmul.f32 %v217, 0.5
    %v574 = vmul.f32 %v309, 0.5
    %v575 = vmul.f32 %v401, 0.5
    %v576 = vmul.f32 %v493, 0.5
    %v577 = vmul.f32 %v220, 0.5
    %v578 = vmul.f32 %v312, 0.5
    %v579 = vmul.f32 %v404, 0.5
    %v580 = vmul.f32 %v496, 0.5
    %v581 = vmul.f32 %v223, 0.5
    %v582 = vmul.f32 %v315, 0.5
    %v583 = vmul.f32 %v407, 0.5
    %v584 = vmul.f32 %v499, 0.5
    %v585 = vmul.f32 %v226, 0.5
    %v586 = vmul.f32 %v318, 0.5
    %v587 = vmul.f32 %v410, 0.5
    %v588 = vmul.f32 %v502, 0.5
    %v589 = vmul.f32 %v229, 0.5
    %v590 = vmul.f32 %v321, 0.5
    %v591 = vmul.f32 %v413, 0.5
    %v592 = vmul.f32 %v505, 0.5
    %v593 = vmul.f32 %v232, 0.5
    %v594 = vmul.f32 %v324, 0.5
    %v595 = vmul.f32 %v416, 0.5
    %v596 = vmul.f32 %v508, 0.5
    %v597 = vmul.f32 %v235, 0.5
    %v598 = vmul.f32 %v327, 0.5
    %v599 = vmul.f32 %v419, 0.5
    %v600 = vmul.f32 %v511, 0.5
    %v601 = vmul.f32 %v238, 0.5
    %v602 = vmul.f32 %v330, 0.5
    %v603 = vmul.f32 %v422, 0.5
    %v604 = vmul.f32 %v514, 0.5
    %v605 = vmul.f32 %v241, 0.5
    %v606 = vmul.f32 %v333, 0.5
    %v607 = vmul.f32 %v425, 0.5
    %v608 = vmul.f32 %v517, 0.5
    %v609 = vmul.f32 %v244, 0.5
    %v610 = vmul.f32 %v336, 0.5
    %v611 = vmul.f32 %v428, 0.5
    %v612 = vmul.f32 %v520, 0.5
    %v613 = vmul.f32 %v247, 0.5
    %v614 = vmul.f32 %v339, 0.5
    %v615 = vmul.f32 %v431, 0.5
    %v616 = vmul.f32 %v523, 0.5
    %v617 = vmul.f32 %v250, 0.5
    %v618 = vmul.f32 %v342, 0.5
    %v619 = vmul.f32 %v434, 0.5
    %v620 = vmul.f32 %v526, 0.5
    %v621 = vmul.f32 %v253, 0.5
    %v622 = vmul.f32 %v345, 0.5
    %v623 = vmul.f32 %v437, 0.5
    %v624 = vmul.f32 %v529, 0.5
    %v625 = vmul.f32 %v256, 0.5
    %v626 = vmul.f32 %v348, 0.5
    %v627 = vmul.f32 %v440, 0.5
    %v628 = vmul.f32 %v532, 0.5
    %v629 = vmul.f32 %v259, 0.5
    %v630 = vmul.f32 %v351, 0.5
    %v631 = vmul.f32 %v443, 0.5
    %v632 = vmul.f32 %v535, 0.5
    %v633 = vmul.f32 %v262, 0.5
    %v634 = vmul.f32 %v354, 0.5
    %v635 = vmul.f32 %v446, 0.5
    %v636 = vmul.f32 %v538, 0.5
    %v637 = vmul.f32 %v265, 0.5
    %v638 = vmul.f32 %v357, 0.5
    %v639 = vmul.f32 %v449, 0.5
    %v640 = vmul.f32 %v541, 0.5
    %v641 = vmul.f32 %v268, 0.5
    %v642 = vmul.f32 %v360, 0.5
    %v643 = vmul.f32 %v452, 0.5
    %v644 = vmul.f32 %v544, 0.5
    %v645 = vmul.f32 %v271, 0.5
    %v646 = vmul.f32 %v363, 0.5
    %v647 = vmul.f32 %v455, 0.5
    %v648 = vmul.f32 %v547, 0.5
    %v649 = vmul.f32 %v199, 0.70710677
    %v650 = vmul.f32 %v291, 0.70710677
    %v651 = vmul.f32 %v383, 0.70710677
    %v652 = vmul.f32 %v475, 0.70710677
    %v653 = vmul.f32 %v202, 0.70710677
    %v654 = vmul.f32 %v294, 0.70710677
    %v655 = vmul.f32 %v386, 0.70710677
    %v656 = vmul.f32 %v478, 0.70710677
    %v657 = vmul.f32 %v205, 0.70710677
    %v658 = vmul.f32 %v297, 0.70710677
    %v659 = vmul.f32 %v389, 0.70710677
    %v660 = vmul.f32 %v481, 0.70710677
    %v661 = vmul.f32 %v208, 0.70710677
    %v662 = vmul.f32 %v300, 0.70710677
    %v663 = vmul.f32 %v392, 0.70710677
    %v664 = vmul.f32 %v484, 0.70710677
    %v665 = vmul.f32 %v211, 0.70710677
    %v666 = vmul.f32 %v303, 0.70710677
    %v667 = vmul.f32 %v395, 0.70710677
    %v668 = vmul.f32 %v487, 0.70710677
    %v669 = vmul.f32 %v214, 0.70710677
    %v670 = vmul.f32 %v306, 0.70710677
    %v671 = vmul.f32 %v398, 0.70710677
    %v672 = vmul.f32 %v490, 0.70710677
    %v673 = vmul.f32 %v217, 0.70710677
    %v674 = vmul.f32 %v309, 0.70710677
    %v675 = vmul.f32 %v401, 0.70710677
    %v676 = vmul.f32 %v493, 0.70710677
    %v677 = vmul.f32 %v220, 0.70710677
    %v678 = vmul.f32 %v312, 0.70710677
    %v679 = vmul.f32 %v404, 0.70710677
    %v680 = vmul.f32 %v496, 0.70710677
    %v681 = vmul.f32 %v223, 0.70710677
    %v682 = vmul.f32 %v315, 0.70710677
    %v683 = vmul.f32 %v407, 0.70710677
    %v684 = vmul.f32 %v499, 0.70710677
    %v685 = vmul.f32 %v226, 0.70710677
    %v686 = vmul.f32 %v318, 0.70710677
    %v687 = vmul.f32 %v410, 0.70710677
    %v688 = vmul.f32 %v502, 0.70710677
    %v689 = vmul.f32 %v229, 0.70710677
    %v690 = vmul.f32 %v321, 0.70710677
    %v691 = vmul.f32 %v413, 0.70710677
    %v692 = vmul.f32 %v505, 0.70710677
    %v693 = vmul.f32 %v232, 0.70710677
    %v694 = vmul.f32 %v324, 0.70710677
    %v695 = vmul.f32 %v416, 0.70710677
    %v696 = vmul.f32 %v508, 0.70710677
    %v697 = vmul.f32 %v235, 0.70710677
    %v698 = vmul.f32 %v327, 0.70710677
    %v699 = vmul.f32 %v419, 0.70710677
    %v700 = vmul.f32 %v511, 0.70710677
    %v701 = vmul.f32 %v238, 0.70710677
    %v702 = vmul.f32 %v330, 0.70710677
    %v703 = vmul.f32 %v422, 0.70710677
    %v704 = vmul.f32 %v514, 0.70710677
    %v705 = vmul.f32 %v241, 0.70710677
    %v706 = vmul.f32 %v333, 0.70710677
    %v707 = vmul.f32 %v425, 0.70710677
    %v708 = vmul.f32 %v517, 0.70710677
    %v709 = vmul.f32 %v244, 0.70710677
    %v710 = vmul.f32 %v336, 0.70710677
    %v711 = vmul.f32 %v428, 0.70710677
    %v712 = vmul.f32 %v520, 0.70710677
    %v713 = vmul.f32 %v247, 0.70710677
    %v714 = vmul.f32 %v339, 0.70710677
    %v715 = vmul.f32 %v431, 0.70710677
    %v716 = vmul.f32 %v523, 0.70710677
    %v717 = vmul.f32 %v250, 0.70710677
    %v718 = vmul.f32 %v342, 0.70710677
    %v719 = vmul.f32 %v434, 0.70710677
    %v720 = vmul.f32 %v526, 0.70710677
    %v721 = vmul.f32 %v253, 0.70710677
    %v722 = vmul.f32 %v345, 0.70710677
    %v723 = vmul.f32 %v437, 0.70710677
    %v724 = vmul.f32 %v529, 0.70710677
    %v725 = vmul.f32 %v256, 0.70710677
    %v726 = vmul.f32 %v348, 0.70710677
    %v727 = vmul.f32 %v440, 0.70710677
    %v728 = vmul.f32 %v532, 0.70710677
    %v729 = vmul.f32 %v259, 0.70710677
    %v730 = vmul.f32 %v351, 0.70710677
    %v731 = vmul.f32 %v443, 0.70710677
    %v732 = vmul.f32 %v535, 0.70710677
    %v733 = vmul.f32 %v262, 0.70710677
    %v734 = vmul.f32 %v354, 0.70710677
    %v735 = vmul.f32 %v446, 0.70710677
    %v736 = vmul.f32 %v538, 0.70710677
    %v737 = vmul.f32 %v265, 0.70710677
    %v738 = vmul.f32 %v357, 0.70710677
    %v739 = vmul.f32 %v449, 0.70710677
    %v740 = vmul.f32 %v541, 0.70710677
    %v741 = vmul.f32 %v268, 0.70710677
    %v742 = vmul.f32 %v360, 0.70710677
    %v743 = vmul.f32 %v452, 0.70710677
    %v744 = vmul.f32 %v544, 0.70710677
    %v745 = vmul.f32 %v271, 0.70710677
    %v746 = vmul.f32 %v363, 0.70710677
    %v747 = vmul.f32 %v455, 0.70710677
    %v748 = vmul.f32 %v547, 0.70710677
    %v749 = vmul.f32 %v649, %v649
    %v750 = vmin.f32 16.0, %v749
    %v751 = vmul.f32 %v750, 2.1237322e-06
    %v752 = vadd.f32 %v751, 0.00028619796
    %v753 = vmul.f32 %v750, %v752
    %v754 = vadd.f32 %v753, 0.0036580483
    %v755 = vmul.f32 %v750, %v754
    %v756 = vadd.f32 %v755, 0.05243302
    %v757 = vmul.f32 %v750, %v756
    %v758 = vadd.f32 %v757, 0.18741608
    %v759 = vmul.f32 %v750, %v758
    %v760 = vadd.f32 %v759, 1.1283791
    %v761 = vmul.f32 %v649, %v760
    %v762 = vmul.f32 %v750, 3.8918573e-05
    %v763 = vadd.f32 %v762, 0.001143296
    %v764 = vmul.f32 %v750, %v763
    %v765 = vadd.f32 %v764, 0.014752088
    %v766 = vmul.f32 %v750, %v765
    %v767 = vadd.f32 %v766, 0.112945676
    %v768 = vmul.f32 %v750, %v767
    %v769 = vadd.f32 %v768, 0.4994258
    %v770 = vmul.f32 %v750, %v769
    %v771 = vadd.f32 %v770, 1.0
    %v772 = vrcp.pop %v771
    %v773 = vmul.f32 %v771, %v772
    %v774 = vsub.f32 1.0, %v773
    %v775 = vmul.f32 %v772, %v774
    %v776 = vadd.f32 %v772, %v775
    %vm777 = vweird.f32 %v771
    %vm778 = vweird.f32 %v772
    %vm779 = vmor %vm777, %vm778
    %v780 = vsel %vm779, %v772, %v776
    %v781 = vand.u32 2147483647, %v771
    %vm782 = vcmp.eq.f32.partialorder %v781, 8.507059e+37
    %v783 = vand.u32 %v771, 2147483648
    %v784 = vor.u32 1.1754944e-38, %v783
    %v785 = vsel %vm782, %v784, %v780
    %v786 = vmul.f32 %v761, %v785
    %v787 = vmin.f32 %v786, 1.0
    %v788 = vmax.f32 %v787, -1.0
    %v789 = vmul.f32 %v650, %v650
    %v790 = vmin.f32 16.0, %v789
    %v791 = vmul.f32 %v790, 2.1237322e-06
    %v792 = vadd.f32 %v791, 0.00028619796
    %v793 = vmul.f32 %v790, %v792
    %v794 = vadd.f32 %v793, 0.0036580483
    %v795 = vmul.f32 %v790, %v794
    %v796 = vadd.f32 %v795, 0.05243302
    %v797 = vmul.f32 %v790, %v796
    %v798 = vadd.f32 %v797, 0.18741608
    %v799 = vmul.f32 %v790, %v798
    %v800 = vadd.f32 %v799, 1.1283791
    %v801 = vmul.f32 %v650, %v800
    %v802 = vmul.f32 %v790, 3.8918573e-05
    %v803 = vadd.f32 %v802, 0.001143296
    %v804 = vmul.f32 %v790, %v803
    %v805 = vadd.f32 %v804, 0.014752088
    %v806 = vmul.f32 %v790, %v805
    %v807 = vadd.f32 %v806, 0.112945676
    %v808 = vmul.f32 %v790, %v807
    %v809 = vadd.f32 %v808, 0.4994258
    %v810 = vmul.f32 %v790, %v809
    %v811 = vadd.f32 %v810, 1.0
    %v812 = vrcp.pop %v811
    %v813 = vmul.f32 %v811, %v812
    %v814 = vsub.f32 1.0, %v813
    %v815 = vmul.f32 %v812, %v814
    %v816 = vadd.f32 %v812, %v815
    %vm817 = vweird.f32 %v811
    %vm818 = vweird.f32 %v812
    %vm819 = vmor %vm817, %vm818
    %v820 = vsel %vm819, %v812, %v816
    %v821 = vand.u32 2147483647, %v811
    %vm822 = vcmp.eq.f32.partialorder %v821, 8.507059e+37
    %v823 = vand.u32 %v811, 2147483648
    %v824 = vor.u32 1.1754944e-38, %v823
    %v825 = vsel %vm822, %v824, %v820
    %v826 = vmul.f32 %v801, %v825
    %v827 = vmin.f32 %v826, 1.0
    %v828 = vmax.f32 %v827, -1.0
    %v829 = vmul.f32 %v651, %v651
    %v830 = vmin.f32 16.0, %v829
    %v831 = vmul.f32 %v830, 2.1237322e-06
    %v832 = vadd.f32 %v831, 0.00028619796
    %v833 = vmul.f32 %v830, %v832
    %v834 = vadd.f32 %v833, 0.0036580483
    %v835 = vmul.f32 %v830, %v834
    %v836 = vadd.f32 %v835, 0.05243302
    %v837 = vmul.f32 %v830, %v836
    %v838 = vadd.f32 %v837, 0.18741608
    %v839 = vmul.f32 %v830, %v838
    %v840 = vadd.f32 %v839, 1.1283791
    %v841 = vmul.f32 %v651, %v840
    %v842 = vmul.f32 %v830, 3.8918573e-05
    %v843 = vadd.f32 %v842, 0.001143296
    %v844 = vmul.f32 %v830, %v843
    %v845 = vadd.f32 %v844, 0.014752088
    %v846 = vmul.f32 %v830, %v845
    %v847 = vadd.f32 %v846, 0.112945676
    %v848 = vmul.f32 %v830, %v847
    %v849 = vadd.f32 %v848, 0.4994258
    %v850 = vmul.f32 %v830, %v849
    %v851 = vadd.f32 %v850, 1.0
    %v852 = vrcp.pop %v851
    %v853 = vmul.f32 %v851, %v852
    %v854 = vsub.f32 1.0, %v853
    %v855 = vmul.f32 %v852, %v854
    %v856 = vadd.f32 %v852, %v855
    %vm857 = vweird.f32 %v851
    %vm858 = vweird.f32 %v852
    %vm859 = vmor %vm857, %vm858
    %v860 = vsel %vm859, %v852, %v856
    %v861 = vand.u32 2147483647, %v851
    %vm862 = vcmp.eq.f32.partialorder %v861, 8.507059e+37
    %v863 = vand.u32 %v851, 2147483648
    %v864 = vor.u32 1.1754944e-38, %v863
    %v865 = vsel %vm862, %v864, %v860
    %v866 = vmul.f32 %v841, %v865
    %v867 = vmin.f32 %v866, 1.0
    %v868 = vmax.f32 %v867, -1.0
    %v869 = vmul.f32 %v652, %v652
    %v870 = vmin.f32 16.0, %v869
    %v871 = vmul.f32 %v870, 2.1237322e-06
    %v872 = vadd.f32 %v871, 0.00028619796
    %v873 = vmul.f32 %v870, %v872
    %v874 = vadd.f32 %v873, 0.0036580483
    %v875 = vmul.f32 %v870, %v874
    %v876 = vadd.f32 %v875, 0.05243302
    %v877 = vmul.f32 %v870, %v876
    %v878 = vadd.f32 %v877, 0.18741608
    %v879 = vmul.f32 %v870, %v878
    %v880 = vadd.f32 %v879, 1.1283791
    %v881 = vmul.f32 %v652, %v880
    %v882 = vmul.f32 %v870, 3.8918573e-05
    %v883 = vadd.f32 %v882, 0.001143296
    %v884 = vmul.f32 %v870, %v883
    %v885 = vadd.f32 %v884, 0.014752088
    %v886 = vmul.f32 %v870, %v885
    %v887 = vadd.f32 %v886, 0.112945676
    %v888 = vmul.f32 %v870, %v887
    %v889 = vadd.f32 %v888, 0.4994258
    %v890 = vmul.f32 %v870, %v889
    %v891 = vadd.f32 %v890, 1.0
    %v892 = vrcp.pop %v891
    %v893 = vmul.f32 %v891, %v892
    %v894 = vsub.f32 1.0, %v893
    %v895 = vmul.f32 %v892, %v894
    %v896 = vadd.f32 %v892, %v895
    %vm897 = vweird.f32 %v891
    %vm898 = vweird.f32 %v892
    %vm899 = vmor %vm897, %vm898
    %v900 = vsel %vm899, %v892, %v896
    %v901 = vand.u32 2147483647, %v891
    %vm902 = vcmp.eq.f32.partialorder %v901, 8.507059e+37
    %v903 = vand.u32 %v891, 2147483648
    %v904 = vor.u32 1.1754944e-38, %v903
    %v905 = vsel %vm902, %v904, %v900
    %v906 = vmul.f32 %v881, %v905
    %v907 = vmin.f32 %v906, 1.0
    %v908 = vmax.f32 %v907, -1.0
    %v909 = vmul.f32 %v653, %v653
    %v910 = vmin.f32 16.0, %v909
    %v911 = vmul.f32 %v910, 2.1237322e-06
    %v912 = vadd.f32 %v911, 0.00028619796
    %v913 = vmul.f32 %v910, %v912
    %v914 = vadd.f32 %v913, 0.0036580483
    %v915 = vmul.f32 %v910, %v914
    %v916 = vadd.f32 %v915, 0.05243302
    %v917 = vmul.f32 %v910, %v916
    %v918 = vadd.f32 %v917, 0.18741608
    %v919 = vmul.f32 %v910, %v918
    %v920 = vadd.f32 %v919, 1.1283791
    %v921 = vmul.f32 %v653, %v920
    %v922 = vmul.f32 %v910, 3.8918573e-05
    %v923 = vadd.f32 %v922, 0.001143296
    %v924 = vmul.f32 %v910, %v923
    %v925 = vadd.f32 %v924, 0.014752088
    %v926 = vmul.f32 %v910, %v925
    %v927 = vadd.f32 %v926, 0.112945676
    %v928 = vmul.f32 %v910, %v927
    %v929 = vadd.f32 %v928, 0.4994258
    %v930 = vmul.f32 %v910, %v929
    %v931 = vadd.f32 %v930, 1.0
    %v932 = vrcp.pop %v931
    %v933 = vmul.f32 %v931, %v932
    %v934 = vsub.f32 1.0, %v933
    %v935 = vmul.f32 %v932, %v934
    %v936 = vadd.f32 %v932, %v935
    %vm937 = vweird.f32 %v931
    %vm938 = vweird.f32 %v932
    %vm939 = vmor %vm937, %vm938
    %v940 = vsel %vm939, %v932, %v936
    %v941 = vand.u32 2147483647, %v931
    %vm942 = vcmp.eq.f32.partialorder %v941, 8.507059e+37
    %v943 = vand.u32 %v931, 2147483648
    %v944 = vor.u32 1.1754944e-38, %v943
    %v945 = vsel %vm942, %v944, %v940
    %v946 = vmul.f32 %v921, %v945
    %v947 = vmin.f32 %v946, 1.0
    %v948 = vmax.f32 %v947, -1.0
    %v949 = vmul.f32 %v654, %v654
    %v950 = vmin.f32 16.0, %v949
    %v951 = vmul.f32 %v950, 2.1237322e-06
    %v952 = vadd.f32 %v951, 0.00028619796
    %v953 = vmul.f32 %v950, %v952
    %v954 = vadd.f32 %v953, 0.0036580483
    %v955 = vmul.f32 %v950, %v954
    %v956 = vadd.f32 %v955, 0.05243302
    %v957 = vmul.f32 %v950, %v956
    %v958 = vadd.f32 %v957, 0.18741608
    %v959 = vmul.f32 %v950, %v958
    %v960 = vadd.f32 %v959, 1.1283791
    %v961 = vmul.f32 %v654, %v960
    %v962 = vmul.f32 %v950, 3.8918573e-05
    %v963 = vadd.f32 %v962, 0.001143296
    %v964 = vmul.f32 %v950, %v963
    %v965 = vadd.f32 %v964, 0.014752088
    %v966 = vmul.f32 %v950, %v965
    %v967 = vadd.f32 %v966, 0.112945676
    %v968 = vmul.f32 %v950, %v967
    %v969 = vadd.f32 %v968, 0.4994258
    %v970 = vmul.f32 %v950, %v969
    %v971 = vadd.f32 %v970, 1.0
    %v972 = vrcp.pop %v971
    %v973 = vmul.f32 %v971, %v972
    %v974 = vsub.f32 1.0, %v973
    %v975 = vmul.f32 %v972, %v974
    %v976 = vadd.f32 %v972, %v975
    %vm977 = vweird.f32 %v971
    %vm978 = vweird.f32 %v972
    %vm979 = vmor %vm977, %vm978
    %v980 = vsel %vm979, %v972, %v976
    %v981 = vand.u32 2147483647, %v971
    %vm982 = vcmp.eq.f32.partialorder %v981, 8.507059e+37
    %v983 = vand.u32 %v971, 2147483648
    %v984 = vor.u32 1.1754944e-38, %v983
    %v985 = vsel %vm982, %v984, %v980
    %v986 = vmul.f32 %v961, %v985
    %v987 = vmin.f32 %v986, 1.0
    %v988 = vmax.f32 %v987, -1.0
    %v989 = vmul.f32 %v655, %v655
    %v990 = vmin.f32 16.0, %v989
    %v991 = vmul.f32 %v990, 2.1237322e-06
    %v992 = vadd.f32 %v991, 0.00028619796
    %v993 = vmul.f32 %v990, %v992
    %v994 = vadd.f32 %v993, 0.0036580483
    %v995 = vmul.f32 %v990, %v994
    %v996 = vadd.f32 %v995, 0.05243302
    %v997 = vmul.f32 %v990, %v996
    %v998 = vadd.f32 %v997, 0.18741608
    %v999 = vmul.f32 %v990, %v998
    %v1000 = vadd.f32 %v999, 1.1283791
    %v1001 = vmul.f32 %v655, %v1000
    %v1002 = vmul.f32 %v990, 3.8918573e-05
    %v1003 = vadd.f32 %v1002, 0.001143296
    %v1004 = vmul.f32 %v990, %v1003
    %v1005 = vadd.f32 %v1004, 0.014752088
    %v1006 = vmul.f32 %v990, %v1005
    %v1007 = vadd.f32 %v1006, 0.112945676
    %v1008 = vmul.f32 %v990, %v1007
    %v1009 = vadd.f32 %v1008, 0.4994258
    %v1010 = vmul.f32 %v990, %v1009
    %v1011 = vadd.f32 %v1010, 1.0
    %v1012 = vrcp.pop %v1011
    %v1013 = vmul.f32 %v1011, %v1012
    %v1014 = vsub.f32 1.0, %v1013
    %v1015 = vmul.f32 %v1012, %v1014
    %v1016 = vadd.f32 %v1012, %v1015
    %vm1017 = vweird.f32 %v1011
    %vm1018 = vweird.f32 %v1012
    %vm1019 = vmor %vm1017, %vm1018
    %v1020 = vsel %vm1019, %v1012, %v1016
    %v1021 = vand.u32 2147483647, %v1011
    %vm1022 = vcmp.eq.f32.partialorder %v1021, 8.507059e+37
    %v1023 = vand.u32 %v1011, 2147483648
    %v1024 = vor.u32 1.1754944e-38, %v1023
    %v1025 = vsel %vm1022, %v1024, %v1020
    %v1026 = vmul.f32 %v1001, %v1025
    %v1027 = vmin.f32 %v1026, 1.0
    %v1028 = vmax.f32 %v1027, -1.0
    %v1029 = vmul.f32 %v656, %v656
    %v1030 = vmin.f32 16.0, %v1029
    %v1031 = vmul.f32 %v1030, 2.1237322e-06
    %v1032 = vadd.f32 %v1031, 0.00028619796
    %v1033 = vmul.f32 %v1030, %v1032
    %v1034 = vadd.f32 %v1033, 0.0036580483
    %v1035 = vmul.f32 %v1030, %v1034
    %v1036 = vadd.f32 %v1035, 0.05243302
    %v1037 = vmul.f32 %v1030, %v1036
    %v1038 = vadd.f32 %v1037, 0.18741608
    %v1039 = vmul.f32 %v1030, %v1038
    %v1040 = vadd.f32 %v1039, 1.1283791
    %v1041 = vmul.f32 %v656, %v1040
    %v1042 = vmul.f32 %v1030, 3.8918573e-05
    %v1043 = vadd.f32 %v1042, 0.001143296
    %v1044 = vmul.f32 %v1030, %v1043
    %v1045 = vadd.f32 %v1044, 0.014752088
    %v1046 = vmul.f32 %v1030, %v1045
    %v1047 = vadd.f32 %v1046, 0.112945676
    %v1048 = vmul.f32 %v1030, %v1047
    %v1049 = vadd.f32 %v1048, 0.4994258
    %v1050 = vmul.f32 %v1030, %v1049
    %v1051 = vadd.f32 %v1050, 1.0
    %v1052 = vrcp.pop %v1051
    %v1053 = vmul.f32 %v1051, %v1052
    %v1054 = vsub.f32 1.0, %v1053
    %v1055 = vmul.f32 %v1052, %v1054
    %v1056 = vadd.f32 %v1052, %v1055
    %vm1057 = vweird.f32 %v1051
    %vm1058 = vweird.f32 %v1052
    %vm1059 = vmor %vm1057, %vm1058
    %v1060 = vsel %vm1059, %v1052, %v1056
    %v1061 = vand.u32 2147483647, %v1051
    %vm1062 = vcmp.eq.f32.partialorder %v1061, 8.507059e+37
    %v1063 = vand.u32 %v1051, 2147483648
    %v1064 = vor.u32 1.1754944e-38, %v1063
    %v1065 = vsel %vm1062, %v1064, %v1060
    %v1066 = vmul.f32 %v1041, %v1065
    %v1067 = vmin.f32 %v1066, 1.0
    %v1068 = vmax.f32 %v1067, -1.0
    %v1069 = vmul.f32 %v657, %v657
    %v1070 = vmin.f32 16.0, %v1069
    %v1071 = vmul.f32 %v1070, 2.1237322e-06
    %v1072 = vadd.f32 %v1071, 0.00028619796
    %v1073 = vmul.f32 %v1070, %v1072
    %v1074 = vadd.f32 %v1073, 0.0036580483
    %v1075 = vmul.f32 %v1070, %v1074
    %v1076 = vadd.f32 %v1075, 0.05243302
    %v1077 = vmul.f32 %v1070, %v1076
    %v1078 = vadd.f32 %v1077, 0.18741608
    %v1079 = vmul.f32 %v1070, %v1078
    %v1080 = vadd.f32 %v1079, 1.1283791
    %v1081 = vmul.f32 %v657, %v1080
    %v1082 = vmul.f32 %v1070, 3.8918573e-05
    %v1083 = vadd.f32 %v1082, 0.001143296
    %v1084 = vmul.f32 %v1070, %v1083
    %v1085 = vadd.f32 %v1084, 0.014752088
    %v1086 = vmul.f32 %v1070, %v1085
    %v1087 = vadd.f32 %v1086, 0.112945676
    %v1088 = vmul.f32 %v1070, %v1087
    %v1089 = vadd.f32 %v1088, 0.4994258
    %v1090 = vmul.f32 %v1070, %v1089
    %v1091 = vadd.f32 %v1090, 1.0
    %v1092 = vrcp.pop %v1091
    %v1093 = vmul.f32 %v1091, %v1092
    %v1094 = vsub.f32 1.0, %v1093
    %v1095 = vmul.f32 %v1092, %v1094
    %v1096 = vadd.f32 %v1092, %v1095
    %vm1097 = vweird.f32 %v1091
    %vm1098 = vweird.f32 %v1092
    %vm1099 = vmor %vm1097, %vm1098
    %v1100 = vsel %vm1099, %v1092, %v1096
    %v1101 = vand.u32 2147483647, %v1091
    %vm1102 = vcmp.eq.f32.partialorder %v1101, 8.507059e+37
    %v1103 = vand.u32 %v1091, 2147483648
    %v1104 = vor.u32 1.1754944e-38, %v1103
    %v1105 = vsel %vm1102, %v1104, %v1100
    %v1106 = vmul.f32 %v1081, %v1105
    %v1107 = vmin.f32 %v1106, 1.0
    %v1108 = vmax.f32 %v1107, -1.0
    %v1109 = vmul.f32 %v658, %v658
    %v1110 = vmin.f32 16.0, %v1109
    %v1111 = vmul.f32 %v1110, 2.1237322e-06
    %v1112 = vadd.f32 %v1111, 0.00028619796
    %v1113 = vmul.f32 %v1110, %v1112
    %v1114 = vadd.f32 %v1113, 0.0036580483
    %v1115 = vmul.f32 %v1110, %v1114
    %v1116 = vadd.f32 %v1115, 0.05243302
    %v1117 = vmul.f32 %v1110, %v1116
    %v1118 = vadd.f32 %v1117, 0.18741608
    %v1119 = vmul.f32 %v1110, %v1118
    %v1120 = vadd.f32 %v1119, 1.1283791
    %v1121 = vmul.f32 %v658, %v1120
    %v1122 = vmul.f32 %v1110, 3.8918573e-05
    %v1123 = vadd.f32 %v1122, 0.001143296
    %v1124 = vmul.f32 %v1110, %v1123
    %v1125 = vadd.f32 %v1124, 0.014752088
    %v1126 = vmul.f32 %v1110, %v1125
    %v1127 = vadd.f32 %v1126, 0.112945676
    %v1128 = vmul.f32 %v1110, %v1127
    %v1129 = vadd.f32 %v1128, 0.4994258
    %v1130 = vmul.f32 %v1110, %v1129
    %v1131 = vadd.f32 %v1130, 1.0
    %v1132 = vrcp.pop %v1131
    %v1133 = vmul.f32 %v1131, %v1132
    %v1134 = vsub.f32 1.0, %v1133
    %v1135 = vmul.f32 %v1132, %v1134
    %v1136 = vadd.f32 %v1132, %v1135
    %vm1137 = vweird.f32 %v1131
    %vm1138 = vweird.f32 %v1132
    %vm1139 = vmor %vm1137, %vm1138
    %v1140 = vsel %vm1139, %v1132, %v1136
    %v1141 = vand.u32 2147483647, %v1131
    %vm1142 = vcmp.eq.f32.partialorder %v1141, 8.507059e+37
    %v1143 = vand.u32 %v1131, 2147483648
    %v1144 = vor.u32 1.1754944e-38, %v1143
    %v1145 = vsel %vm1142, %v1144, %v1140
    %v1146 = vmul.f32 %v1121, %v1145
    %v1147 = vmin.f32 %v1146, 1.0
    %v1148 = vmax.f32 %v1147, -1.0
    %v1149 = vmul.f32 %v659, %v659
    %v1150 = vmin.f32 16.0, %v1149
    %v1151 = vmul.f32 %v1150, 2.1237322e-06
    %v1152 = vadd.f32 %v1151, 0.00028619796
    %v1153 = vmul.f32 %v1150, %v1152
    %v1154 = vadd.f32 %v1153, 0.0036580483
    %v1155 = vmul.f32 %v1150, %v1154
    %v1156 = vadd.f32 %v1155, 0.05243302
    %v1157 = vmul.f32 %v1150, %v1156
    %v1158 = vadd.f32 %v1157, 0.18741608
    %v1159 = vmul.f32 %v1150, %v1158
    %v1160 = vadd.f32 %v1159, 1.1283791
    %v1161 = vmul.f32 %v659, %v1160
    %v1162 = vmul.f32 %v1150, 3.8918573e-05
    %v1163 = vadd.f32 %v1162, 0.001143296
    %v1164 = vmul.f32 %v1150, %v1163
    %v1165 = vadd.f32 %v1164, 0.014752088
    %v1166 = vmul.f32 %v1150, %v1165
    %v1167 = vadd.f32 %v1166, 0.112945676
    %v1168 = vmul.f32 %v1150, %v1167
    %v1169 = vadd.f32 %v1168, 0.4994258
    %v1170 = vmul.f32 %v1150, %v1169
    %v1171 = vadd.f32 %v1170, 1.0
    %v1172 = vrcp.pop %v1171
    %v1173 = vmul.f32 %v1171, %v1172
    %v1174 = vsub.f32 1.0, %v1173
    %v1175 = vmul.f32 %v1172, %v1174
    %v1176 = vadd.f32 %v1172, %v1175
    %vm1177 = vweird.f32 %v1171
    %vm1178 = vweird.f32 %v1172
    %vm1179 = vmor %vm1177, %vm1178
    %v1180 = vsel %vm1179, %v1172, %v1176
    %v1181 = vand.u32 2147483647, %v1171
    %vm1182 = vcmp.eq.f32.partialorder %v1181, 8.507059e+37
    %v1183 = vand.u32 %v1171, 2147483648
    %v1184 = vor.u32 1.1754944e-38, %v1183
    %v1185 = vsel %vm1182, %v1184, %v1180
    %v1186 = vmul.f32 %v1161, %v1185
    %v1187 = vmin.f32 %v1186, 1.0
    %v1188 = vmax.f32 %v1187, -1.0
    %v1189 = vmul.f32 %v660, %v660
    %v1190 = vmin.f32 16.0, %v1189
    %v1191 = vmul.f32 %v1190, 2.1237322e-06
    %v1192 = vadd.f32 %v1191, 0.00028619796
    %v1193 = vmul.f32 %v1190, %v1192
    %v1194 = vadd.f32 %v1193, 0.0036580483
    %v1195 = vmul.f32 %v1190, %v1194
    %v1196 = vadd.f32 %v1195, 0.05243302
    %v1197 = vmul.f32 %v1190, %v1196
    %v1198 = vadd.f32 %v1197, 0.18741608
    %v1199 = vmul.f32 %v1190, %v1198
    %v1200 = vadd.f32 %v1199, 1.1283791
    %v1201 = vmul.f32 %v660, %v1200
    %v1202 = vmul.f32 %v1190, 3.8918573e-05
    %v1203 = vadd.f32 %v1202, 0.001143296
    %v1204 = vmul.f32 %v1190, %v1203
    %v1205 = vadd.f32 %v1204, 0.014752088
    %v1206 = vmul.f32 %v1190, %v1205
    %v1207 = vadd.f32 %v1206, 0.112945676
    %v1208 = vmul.f32 %v1190, %v1207
    %v1209 = vadd.f32 %v1208, 0.4994258
    %v1210 = vmul.f32 %v1190, %v1209
    %v1211 = vadd.f32 %v1210, 1.0
    %v1212 = vrcp.pop %v1211
    %v1213 = vmul.f32 %v1211, %v1212
    %v1214 = vsub.f32 1.0, %v1213
    %v1215 = vmul.f32 %v1212, %v1214
    %v1216 = vadd.f32 %v1212, %v1215
    %vm1217 = vweird.f32 %v1211
    %vm1218 = vweird.f32 %v1212
    %vm1219 = vmor %vm1217, %vm1218
    %v1220 = vsel %vm1219, %v1212, %v1216
    %v1221 = vand.u32 2147483647, %v1211
    %vm1222 = vcmp.eq.f32.partialorder %v1221, 8.507059e+37
    %v1223 = vand.u32 %v1211, 2147483648
    %v1224 = vor.u32 1.1754944e-38, %v1223
    %v1225 = vsel %vm1222, %v1224, %v1220
    %v1226 = vmul.f32 %v1201, %v1225
    %v1227 = vmin.f32 %v1226, 1.0
    %v1228 = vmax.f32 %v1227, -1.0
    %v1229 = vmul.f32 %v661, %v661
    %v1230 = vmin.f32 16.0, %v1229
    %v1231 = vmul.f32 %v1230, 2.1237322e-06
    %v1232 = vadd.f32 %v1231, 0.00028619796
    %v1233 = vmul.f32 %v1230, %v1232
    %v1234 = vadd.f32 %v1233, 0.0036580483
    %v1235 = vmul.f32 %v1230, %v1234
    %v1236 = vadd.f32 %v1235, 0.05243302
    %v1237 = vmul.f32 %v1230, %v1236
    %v1238 = vadd.f32 %v1237, 0.18741608
    %v1239 = vmul.f32 %v1230, %v1238
    %v1240 = vadd.f32 %v1239, 1.1283791
    %v1241 = vmul.f32 %v661, %v1240
    %v1242 = vmul.f32 %v1230, 3.8918573e-05
    %v1243 = vadd.f32 %v1242, 0.001143296
    %v1244 = vmul.f32 %v1230, %v1243
    %v1245 = vadd.f32 %v1244, 0.014752088
    %v1246 = vmul.f32 %v1230, %v1245
    %v1247 = vadd.f32 %v1246, 0.112945676
    %v1248 = vmul.f32 %v1230, %v1247
    %v1249 = vadd.f32 %v1248, 0.4994258
    %v1250 = vmul.f32 %v1230, %v1249
    %v1251 = vadd.f32 %v1250, 1.0
    %v1252 = vrcp.pop %v1251
    %v1253 = vmul.f32 %v1251, %v1252
    %v1254 = vsub.f32 1.0, %v1253
    %v1255 = vmul.f32 %v1252, %v1254
    %v1256 = vadd.f32 %v1252, %v1255
    %vm1257 = vweird.f32 %v1251
    %vm1258 = vweird.f32 %v1252
    %vm1259 = vmor %vm1257, %vm1258
    %v1260 = vsel %vm1259, %v1252, %v1256
    %v1261 = vand.u32 2147483647, %v1251
    %vm1262 = vcmp.eq.f32.partialorder %v1261, 8.507059e+37
    %v1263 = vand.u32 %v1251, 2147483648
    %v1264 = vor.u32 1.1754944e-38, %v1263
    %v1265 = vsel %vm1262, %v1264, %v1260
    %v1266 = vmul.f32 %v1241, %v1265
    %v1267 = vmin.f32 %v1266, 1.0
    %v1268 = vmax.f32 %v1267, -1.0
    %v1269 = vmul.f32 %v662, %v662
    %v1270 = vmin.f32 16.0, %v1269
    %v1271 = vmul.f32 %v1270, 2.1237322e-06
    %v1272 = vadd.f32 %v1271, 0.00028619796
    %v1273 = vmul.f32 %v1270, %v1272
    %v1274 = vadd.f32 %v1273, 0.0036580483
    %v1275 = vmul.f32 %v1270, %v1274
    %v1276 = vadd.f32 %v1275, 0.05243302
    %v1277 = vmul.f32 %v1270, %v1276
    %v1278 = vadd.f32 %v1277, 0.18741608
    %v1279 = vmul.f32 %v1270, %v1278
    %v1280 = vadd.f32 %v1279, 1.1283791
    %v1281 = vmul.f32 %v662, %v1280
    %v1282 = vmul.f32 %v1270, 3.8918573e-05
    %v1283 = vadd.f32 %v1282, 0.001143296
    %v1284 = vmul.f32 %v1270, %v1283
    %v1285 = vadd.f32 %v1284, 0.014752088
    %v1286 = vmul.f32 %v1270, %v1285
    %v1287 = vadd.f32 %v1286, 0.112945676
    %v1288 = vmul.f32 %v1270, %v1287
    %v1289 = vadd.f32 %v1288, 0.4994258
    %v1290 = vmul.f32 %v1270, %v1289
    %v1291 = vadd.f32 %v1290, 1.0
    %v1292 = vrcp.pop %v1291
    %v1293 = vmul.f32 %v1291, %v1292
    %v1294 = vsub.f32 1.0, %v1293
    %v1295 = vmul.f32 %v1292, %v1294
    %v1296 = vadd.f32 %v1292, %v1295
    %vm1297 = vweird.f32 %v1291
    %vm1298 = vweird.f32 %v1292
    %vm1299 = vmor %vm1297, %vm1298
    %v1300 = vsel %vm1299, %v1292, %v1296
    %v1301 = vand.u32 2147483647, %v1291
    %vm1302 = vcmp.eq.f32.partialorder %v1301, 8.507059e+37
    %v1303 = vand.u32 %v1291, 2147483648
    %v1304 = vor.u32 1.1754944e-38, %v1303
    %v1305 = vsel %vm1302, %v1304, %v1300
    %v1306 = vmul.f32 %v1281, %v1305
    %v1307 = vmin.f32 %v1306, 1.0
    %v1308 = vmax.f32 %v1307, -1.0
    %v1309 = vmul.f32 %v663, %v663
    %v1310 = vmin.f32 16.0, %v1309
    %v1311 = vmul.f32 %v1310, 2.1237322e-06
    %v1312 = vadd.f32 %v1311, 0.00028619796
    %v1313 = vmul.f32 %v1310, %v1312
    %v1314 = vadd.f32 %v1313, 0.0036580483
    %v1315 = vmul.f32 %v1310, %v1314
    %v1316 = vadd.f32 %v1315, 0.05243302
    %v1317 = vmul.f32 %v1310, %v1316
    %v1318 = vadd.f32 %v1317, 0.18741608
    %v1319 = vmul.f32 %v1310, %v1318
    %v1320 = vadd.f32 %v1319, 1.1283791
    %v1321 = vmul.f32 %v663, %v1320
    %v1322 = vmul.f32 %v1310, 3.8918573e-05
    %v1323 = vadd.f32 %v1322, 0.001143296
    %v1324 = vmul.f32 %v1310, %v1323
    %v1325 = vadd.f32 %v1324, 0.014752088
    %v1326 = vmul.f32 %v1310, %v1325
    %v1327 = vadd.f32 %v1326, 0.112945676
    %v1328 = vmul.f32 %v1310, %v1327
    %v1329 = vadd.f32 %v1328, 0.4994258
    %v1330 = vmul.f32 %v1310, %v1329
    %v1331 = vadd.f32 %v1330, 1.0
    %v1332 = vrcp.pop %v1331
    %v1333 = vmul.f32 %v1331, %v1332
    %v1334 = vsub.f32 1.0, %v1333
    %v1335 = vmul.f32 %v1332, %v1334
    %v1336 = vadd.f32 %v1332, %v1335
    %vm1337 = vweird.f32 %v1331
    %vm1338 = vweird.f32 %v1332
    %vm1339 = vmor %vm1337, %vm1338
    %v1340 = vsel %vm1339, %v1332, %v1336
    %v1341 = vand.u32 2147483647, %v1331
    %vm1342 = vcmp.eq.f32.partialorder %v1341, 8.507059e+37
    %v1343 = vand.u32 %v1331, 2147483648
    %v1344 = vor.u32 1.1754944e-38, %v1343
    %v1345 = vsel %vm1342, %v1344, %v1340
    %v1346 = vmul.f32 %v1321, %v1345
    %v1347 = vmin.f32 %v1346, 1.0
    %v1348 = vmax.f32 %v1347, -1.0
    %v1349 = vmul.f32 %v664, %v664
    %v1350 = vmin.f32 16.0, %v1349
    %v1351 = vmul.f32 %v1350, 2.1237322e-06
    %v1352 = vadd.f32 %v1351, 0.00028619796
    %v1353 = vmul.f32 %v1350, %v1352
    %v1354 = vadd.f32 %v1353, 0.0036580483
    %v1355 = vmul.f32 %v1350, %v1354
    %v1356 = vadd.f32 %v1355, 0.05243302
    %v1357 = vmul.f32 %v1350, %v1356
    %v1358 = vadd.f32 %v1357, 0.18741608
    %v1359 = vmul.f32 %v1350, %v1358
    %v1360 = vadd.f32 %v1359, 1.1283791
    %v1361 = vmul.f32 %v664, %v1360
    %v1362 = vmul.f32 %v1350, 3.8918573e-05
    %v1363 = vadd.f32 %v1362, 0.001143296
    %v1364 = vmul.f32 %v1350, %v1363
    %v1365 = vadd.f32 %v1364, 0.014752088
    %v1366 = vmul.f32 %v1350, %v1365
    %v1367 = vadd.f32 %v1366, 0.112945676
    %v1368 = vmul.f32 %v1350, %v1367
    %v1369 = vadd.f32 %v1368, 0.4994258
    %v1370 = vmul.f32 %v1350, %v1369
    %v1371 = vadd.f32 %v1370, 1.0
    %v1372 = vrcp.pop %v1371
    %v1373 = vmul.f32 %v1371, %v1372
    %v1374 = vsub.f32 1.0, %v1373
    %v1375 = vmul.f32 %v1372, %v1374
    %v1376 = vadd.f32 %v1372, %v1375
    %vm1377 = vweird.f32 %v1371
    %vm1378 = vweird.f32 %v1372
    %vm1379 = vmor %vm1377, %vm1378
    %v1380 = vsel %vm1379, %v1372, %v1376
    %v1381 = vand.u32 2147483647, %v1371
    %vm1382 = vcmp.eq.f32.partialorder %v1381, 8.507059e+37
    %v1383 = vand.u32 %v1371, 2147483648
    %v1384 = vor.u32 1.1754944e-38, %v1383
    %v1385 = vsel %vm1382, %v1384, %v1380
    %v1386 = vmul.f32 %v1361, %v1385
    %v1387 = vmin.f32 %v1386, 1.0
    %v1388 = vmax.f32 %v1387, -1.0
    %v1389 = vmul.f32 %v665, %v665
    %v1390 = vmin.f32 16.0, %v1389
    %v1391 = vmul.f32 %v1390, 2.1237322e-06
    %v1392 = vadd.f32 %v1391, 0.00028619796
    %v1393 = vmul.f32 %v1390, %v1392
    %v1394 = vadd.f32 %v1393, 0.0036580483
    %v1395 = vmul.f32 %v1390, %v1394
    %v1396 = vadd.f32 %v1395, 0.05243302
    %v1397 = vmul.f32 %v1390, %v1396
    %v1398 = vadd.f32 %v1397, 0.18741608
    %v1399 = vmul.f32 %v1390, %v1398
    %v1400 = vadd.f32 %v1399, 1.1283791
    %v1401 = vmul.f32 %v665, %v1400
    %v1402 = vmul.f32 %v1390, 3.8918573e-05
    %v1403 = vadd.f32 %v1402, 0.001143296
    %v1404 = vmul.f32 %v1390, %v1403
    %v1405 = vadd.f32 %v1404, 0.014752088
    %v1406 = vmul.f32 %v1390, %v1405
    %v1407 = vadd.f32 %v1406, 0.112945676
    %v1408 = vmul.f32 %v1390, %v1407
    %v1409 = vadd.f32 %v1408, 0.4994258
    %v1410 = vmul.f32 %v1390, %v1409
    %v1411 = vadd.f32 %v1410, 1.0
    %v1412 = vrcp.pop %v1411
    %v1413 = vmul.f32 %v1411, %v1412
    %v1414 = vsub.f32 1.0, %v1413
    %v1415 = vmul.f32 %v1412, %v1414
    %v1416 = vadd.f32 %v1412, %v1415
    %vm1417 = vweird.f32 %v1411
    %vm1418 = vweird.f32 %v1412
    %vm1419 = vmor %vm1417, %vm1418
    %v1420 = vsel %vm1419, %v1412, %v1416
    %v1421 = vand.u32 2147483647, %v1411
    %vm1422 = vcmp.eq.f32.partialorder %v1421, 8.507059e+37
    %v1423 = vand.u32 %v1411, 2147483648
    %v1424 = vor.u32 1.1754944e-38, %v1423
    %v1425 = vsel %vm1422, %v1424, %v1420
    %v1426 = vmul.f32 %v1401, %v1425
    %v1427 = vmin.f32 %v1426, 1.0
    %v1428 = vmax.f32 %v1427, -1.0
    %v1429 = vmul.f32 %v666, %v666
    %v1430 = vmin.f32 16.0, %v1429
    %v1431 = vmul.f32 %v1430, 2.1237322e-06
    %v1432 = vadd.f32 %v1431, 0.00028619796
    %v1433 = vmul.f32 %v1430, %v1432
    %v1434 = vadd.f32 %v1433, 0.0036580483
    %v1435 = vmul.f32 %v1430, %v1434
    %v1436 = vadd.f32 %v1435, 0.05243302
    %v1437 = vmul.f32 %v1430, %v1436
    %v1438 = vadd.f32 %v1437, 0.18741608
    %v1439 = vmul.f32 %v1430, %v1438
    %v1440 = vadd.f32 %v1439, 1.1283791
    %v1441 = vmul.f32 %v666, %v1440
    %v1442 = vmul.f32 %v1430, 3.8918573e-05
    %v1443 = vadd.f32 %v1442, 0.001143296
    %v1444 = vmul.f32 %v1430, %v1443
    %v1445 = vadd.f32 %v1444, 0.014752088
    %v1446 = vmul.f32 %v1430, %v1445
    %v1447 = vadd.f32 %v1446, 0.112945676
    %v1448 = vmul.f32 %v1430, %v1447
    %v1449 = vadd.f32 %v1448, 0.4994258
    %v1450 = vmul.f32 %v1430, %v1449
    %v1451 = vadd.f32 %v1450, 1.0
    %v1452 = vrcp.pop %v1451
    %v1453 = vmul.f32 %v1451, %v1452
    %v1454 = vsub.f32 1.0, %v1453
    %v1455 = vmul.f32 %v1452, %v1454
    %v1456 = vadd.f32 %v1452, %v1455
    %vm1457 = vweird.f32 %v1451
    %vm1458 = vweird.f32 %v1452
    %vm1459 = vmor %vm1457, %vm1458
    %v1460 = vsel %vm1459, %v1452, %v1456
    %v1461 = vand.u32 2147483647, %v1451
    %vm1462 = vcmp.eq.f32.partialorder %v1461, 8.507059e+37
    %v1463 = vand.u32 %v1451, 2147483648
    %v1464 = vor.u32 1.1754944e-38, %v1463
    %v1465 = vsel %vm1462, %v1464, %v1460
    %v1466 = vmul.f32 %v1441, %v1465
    %v1467 = vmin.f32 %v1466, 1.0
    %v1468 = vmax.f32 %v1467, -1.0
    %v1469 = vmul.f32 %v667, %v667
    %v1470 = vmin.f32 16.0, %v1469
    %v1471 = vmul.f32 %v1470, 2.1237322e-06
    %v1472 = vadd.f32 %v1471, 0.00028619796
    %v1473 = vmul.f32 %v1470, %v1472
    %v1474 = vadd.f32 %v1473, 0.0036580483
    %v1475 = vmul.f32 %v1470, %v1474
    %v1476 = vadd.f32 %v1475, 0.05243302
    %v1477 = vmul.f32 %v1470, %v1476
    %v1478 = vadd.f32 %v1477, 0.18741608
    %v1479 = vmul.f32 %v1470, %v1478
    %v1480 = vadd.f32 %v1479, 1.1283791
    %v1481 = vmul.f32 %v667, %v1480
    %v1482 = vmul.f32 %v1470, 3.8918573e-05
    %v1483 = vadd.f32 %v1482, 0.001143296
    %v1484 = vmul.f32 %v1470, %v1483
    %v1485 = vadd.f32 %v1484, 0.014752088
    %v1486 = vmul.f32 %v1470, %v1485
    %v1487 = vadd.f32 %v1486, 0.112945676
    %v1488 = vmul.f32 %v1470, %v1487
    %v1489 = vadd.f32 %v1488, 0.4994258
    %v1490 = vmul.f32 %v1470, %v1489
    %v1491 = vadd.f32 %v1490, 1.0
    %v1492 = vrcp.pop %v1491
    %v1493 = vmul.f32 %v1491, %v1492
    %v1494 = vsub.f32 1.0, %v1493
    %v1495 = vmul.f32 %v1492, %v1494
    %v1496 = vadd.f32 %v1492, %v1495
    %vm1497 = vweird.f32 %v1491
    %vm1498 = vweird.f32 %v1492
    %vm1499 = vmor %vm1497, %vm1498
    %v1500 = vsel %vm1499, %v1492, %v1496
    %v1501 = vand.u32 2147483647, %v1491
    %vm1502 = vcmp.eq.f32.partialorder %v1501, 8.507059e+37
    %v1503 = vand.u32 %v1491, 2147483648
    %v1504 = vor.u32 1.1754944e-38, %v1503
    %v1505 = vsel %vm1502, %v1504, %v1500
    %v1506 = vmul.f32 %v1481, %v1505
    %v1507 = vmin.f32 %v1506, 1.0
    %v1508 = vmax.f32 %v1507, -1.0
    %v1509 = vmul.f32 %v668, %v668
    %v1510 = vmin.f32 16.0, %v1509
    %v1511 = vmul.f32 %v1510, 2.1237322e-06
    %v1512 = vadd.f32 %v1511, 0.00028619796
    %v1513 = vmul.f32 %v1510, %v1512
    %v1514 = vadd.f32 %v1513, 0.0036580483
    %v1515 = vmul.f32 %v1510, %v1514
    %v1516 = vadd.f32 %v1515, 0.05243302
    %v1517 = vmul.f32 %v1510, %v1516
    %v1518 = vadd.f32 %v1517, 0.18741608
    %v1519 = vmul.f32 %v1510, %v1518
    %v1520 = vadd.f32 %v1519, 1.1283791
    %v1521 = vmul.f32 %v668, %v1520
    %v1522 = vmul.f32 %v1510, 3.8918573e-05
    %v1523 = vadd.f32 %v1522, 0.001143296
    %v1524 = vmul.f32 %v1510, %v1523
    %v1525 = vadd.f32 %v1524, 0.014752088
    %v1526 = vmul.f32 %v1510, %v1525
    %v1527 = vadd.f32 %v1526, 0.112945676
    %v1528 = vmul.f32 %v1510, %v1527
    %v1529 = vadd.f32 %v1528, 0.4994258
    %v1530 = vmul.f32 %v1510, %v1529
    %v1531 = vadd.f32 %v1530, 1.0
    %v1532 = vrcp.pop %v1531
    %v1533 = vmul.f32 %v1531, %v1532
    %v1534 = vsub.f32 1.0, %v1533
    %v1535 = vmul.f32 %v1532, %v1534
    %v1536 = vadd.f32 %v1532, %v1535
    %vm1537 = vweird.f32 %v1531
    %vm1538 = vweird.f32 %v1532
    %vm1539 = vmor %vm1537, %vm1538
    %v1540 = vsel %vm1539, %v1532, %v1536
    %v1541 = vand.u32 2147483647, %v1531
    %vm1542 = vcmp.eq.f32.partialorder %v1541, 8.507059e+37
    %v1543 = vand.u32 %v1531, 2147483648
    %v1544 = vor.u32 1.1754944e-38, %v1543
    %v1545 = vsel %vm1542, %v1544, %v1540
    %v1546 = vmul.f32 %v1521, %v1545
    %v1547 = vmin.f32 %v1546, 1.0
    %v1548 = vmax.f32 %v1547, -1.0
    %v1549 = vmul.f32 %v669, %v669
    %v1550 = vmin.f32 16.0, %v1549
    %v1551 = vmul.f32 %v1550, 2.1237322e-06
    %v1552 = vadd.f32 %v1551, 0.00028619796
    %v1553 = vmul.f32 %v1550, %v1552
    %v1554 = vadd.f32 %v1553, 0.0036580483
    %v1555 = vmul.f32 %v1550, %v1554
    %v1556 = vadd.f32 %v1555, 0.05243302
    %v1557 = vmul.f32 %v1550, %v1556
    %v1558 = vadd.f32 %v1557, 0.18741608
    %v1559 = vmul.f32 %v1550, %v1558
    %v1560 = vadd.f32 %v1559, 1.1283791
    %v1561 = vmul.f32 %v669, %v1560
    %v1562 = vmul.f32 %v1550, 3.8918573e-05
    %v1563 = vadd.f32 %v1562, 0.001143296
    %v1564 = vmul.f32 %v1550, %v1563
    %v1565 = vadd.f32 %v1564, 0.014752088
    %v1566 = vmul.f32 %v1550, %v1565
    %v1567 = vadd.f32 %v1566, 0.112945676
    %v1568 = vmul.f32 %v1550, %v1567
    %v1569 = vadd.f32 %v1568, 0.4994258
    %v1570 = vmul.f32 %v1550, %v1569
    %v1571 = vadd.f32 %v1570, 1.0
    %v1572 = vrcp.pop %v1571
    %v1573 = vmul.f32 %v1571, %v1572
    %v1574 = vsub.f32 1.0, %v1573
    %v1575 = vmul.f32 %v1572, %v1574
    %v1576 = vadd.f32 %v1572, %v1575
    %vm1577 = vweird.f32 %v1571
    %vm1578 = vweird.f32 %v1572
    %vm1579 = vmor %vm1577, %vm1578
    %v1580 = vsel %vm1579, %v1572, %v1576
    %v1581 = vand.u32 2147483647, %v1571
    %vm1582 = vcmp.eq.f32.partialorder %v1581, 8.507059e+37
    %v1583 = vand.u32 %v1571, 2147483648
    %v1584 = vor.u32 1.1754944e-38, %v1583
    %v1585 = vsel %vm1582, %v1584, %v1580
    %v1586 = vmul.f32 %v1561, %v1585
    %v1587 = vmin.f32 %v1586, 1.0
    %v1588 = vmax.f32 %v1587, -1.0
    %v1589 = vmul.f32 %v670, %v670
    %v1590 = vmin.f32 16.0, %v1589
    %v1591 = vmul.f32 %v1590, 2.1237322e-06
    %v1592 = vadd.f32 %v1591, 0.00028619796
    %v1593 = vmul.f32 %v1590, %v1592
    %v1594 = vadd.f32 %v1593, 0.0036580483
    %v1595 = vmul.f32 %v1590, %v1594
    %v1596 = vadd.f32 %v1595, 0.05243302
    %v1597 = vmul.f32 %v1590, %v1596
    %v1598 = vadd.f32 %v1597, 0.18741608
    %v1599 = vmul.f32 %v1590, %v1598
    %v1600 = vadd.f32 %v1599, 1.1283791
    %v1601 = vmul.f32 %v670, %v1600
    %v1602 = vmul.f32 %v1590, 3.8918573e-05
    %v1603 = vadd.f32 %v1602, 0.001143296
    %v1604 = vmul.f32 %v1590, %v1603
    %v1605 = vadd.f32 %v1604, 0.014752088
    %v1606 = vmul.f32 %v1590, %v1605
    %v1607 = vadd.f32 %v1606, 0.112945676
    %v1608 = vmul.f32 %v1590, %v1607
    %v1609 = vadd.f32 %v1608, 0.4994258
    %v1610 = vmul.f32 %v1590, %v1609
    %v1611 = vadd.f32 %v1610, 1.0
    %v1612 = vrcp.pop %v1611
    %v1613 = vmul.f32 %v1611, %v1612
    %v1614 = vsub.f32 1.0, %v1613
    %v1615 = vmul.f32 %v1612, %v1614
    %v1616 = vadd.f32 %v1612, %v1615
    %vm1617 = vweird.f32 %v1611
    %vm1618 = vweird.f32 %v1612
    %vm1619 = vmor %vm1617, %vm1618
    %v1620 = vsel %vm1619, %v1612, %v1616
    %v1621 = vand.u32 2147483647, %v1611
    %vm1622 = vcmp.eq.f32.partialorder %v1621, 8.507059e+37
    %v1623 = vand.u32 %v1611, 2147483648
    %v1624 = vor.u32 1.1754944e-38, %v1623
    %v1625 = vsel %vm1622, %v1624, %v1620
    %v1626 = vmul.f32 %v1601, %v1625
    %v1627 = vmin.f32 %v1626, 1.0
    %v1628 = vmax.f32 %v1627, -1.0
    %v1629 = vmul.f32 %v671, %v671
    %v1630 = vmin.f32 16.0, %v1629
    %v1631 = vmul.f32 %v1630, 2.1237322e-06
    %v1632 = vadd.f32 %v1631, 0.00028619796
    %v1633 = vmul.f32 %v1630, %v1632
    %v1634 = vadd.f32 %v1633, 0.0036580483
    %v1635 = vmul.f32 %v1630, %v1634
    %v1636 = vadd.f32 %v1635, 0.05243302
    %v1637 = vmul.f32 %v1630, %v1636
    %v1638 = vadd.f32 %v1637, 0.18741608
    %v1639 = vmul.f32 %v1630, %v1638
    %v1640 = vadd.f32 %v1639, 1.1283791
    %v1641 = vmul.f32 %v671, %v1640
    %v1642 = vmul.f32 %v1630, 3.8918573e-05
    %v1643 = vadd.f32 %v1642, 0.001143296
    %v1644 = vmul.f32 %v1630, %v1643
    %v1645 = vadd.f32 %v1644, 0.014752088
    %v1646 = vmul.f32 %v1630, %v1645
    %v1647 = vadd.f32 %v1646, 0.112945676
    %v1648 = vmul.f32 %v1630, %v1647
    %v1649 = vadd.f32 %v1648, 0.4994258
    %v1650 = vmul.f32 %v1630, %v1649
    %v1651 = vadd.f32 %v1650, 1.0
    %v1652 = vrcp.pop %v1651
    %v1653 = vmul.f32 %v1651, %v1652
    %v1654 = vsub.f32 1.0, %v1653
    %v1655 = vmul.f32 %v1652, %v1654
    %v1656 = vadd.f32 %v1652, %v1655
    %vm1657 = vweird.f32 %v1651
    %vm1658 = vweird.f32 %v1652
    %vm1659 = vmor %vm1657, %vm1658
    %v1660 = vsel %vm1659, %v1652, %v1656
    %v1661 = vand.u32 2147483647, %v1651
    %vm1662 = vcmp.eq.f32.partialorder %v1661, 8.507059e+37
    %v1663 = vand.u32 %v1651, 2147483648
    %v1664 = vor.u32 1.1754944e-38, %v1663
    %v1665 = vsel %vm1662, %v1664, %v1660
    %v1666 = vmul.f32 %v1641, %v1665
    %v1667 = vmin.f32 %v1666, 1.0
    %v1668 = vmax.f32 %v1667, -1.0
    %v1669 = vmul.f32 %v672, %v672
    %v1670 = vmin.f32 16.0, %v1669
    %v1671 = vmul.f32 %v1670, 2.1237322e-06
    %v1672 = vadd.f32 %v1671, 0.00028619796
    %v1673 = vmul.f32 %v1670, %v1672
    %v1674 = vadd.f32 %v1673, 0.0036580483
    %v1675 = vmul.f32 %v1670, %v1674
    %v1676 = vadd.f32 %v1675, 0.05243302
    %v1677 = vmul.f32 %v1670, %v1676
    %v1678 = vadd.f32 %v1677, 0.18741608
    %v1679 = vmul.f32 %v1670, %v1678
    %v1680 = vadd.f32 %v1679, 1.1283791
    %v1681 = vmul.f32 %v672, %v1680
    %v1682 = vmul.f32 %v1670, 3.8918573e-05
    %v1683 = vadd.f32 %v1682, 0.001143296
    %v1684 = vmul.f32 %v1670, %v1683
    %v1685 = vadd.f32 %v1684, 0.014752088
    %v1686 = vmul.f32 %v1670, %v1685
    %v1687 = vadd.f32 %v1686, 0.112945676
    %v1688 = vmul.f32 %v1670, %v1687
    %v1689 = vadd.f32 %v1688, 0.4994258
    %v1690 = vmul.f32 %v1670, %v1689
    %v1691 = vadd.f32 %v1690, 1.0
    %v1692 = vrcp.pop %v1691
    %v1693 = vmul.f32 %v1691, %v1692
    %v1694 = vsub.f32 1.0, %v1693
    %v1695 = vmul.f32 %v1692, %v1694
    %v1696 = vadd.f32 %v1692, %v1695
    %vm1697 = vweird.f32 %v1691
    %vm1698 = vweird.f32 %v1692
    %vm1699 = vmor %vm1697, %vm1698
    %v1700 = vsel %vm1699, %v1692, %v1696
    %v1701 = vand.u32 2147483647, %v1691
    %vm1702 = vcmp.eq.f32.partialorder %v1701, 8.507059e+37
    %v1703 = vand.u32 %v1691, 2147483648
    %v1704 = vor.u32 1.1754944e-38, %v1703
    %v1705 = vsel %vm1702, %v1704, %v1700
    %v1706 = vmul.f32 %v1681, %v1705
    %v1707 = vmin.f32 %v1706, 1.0
    %v1708 = vmax.f32 %v1707, -1.0
    %v1709 = vmul.f32 %v673, %v673
    %v1710 = vmin.f32 16.0, %v1709
    %v1711 = vmul.f32 %v1710, 2.1237322e-06
    %v1712 = vadd.f32 %v1711, 0.00028619796
    %v1713 = vmul.f32 %v1710, %v1712
    %v1714 = vadd.f32 %v1713, 0.0036580483
    %v1715 = vmul.f32 %v1710, %v1714
    %v1716 = vadd.f32 %v1715, 0.05243302
    %v1717 = vmul.f32 %v1710, %v1716
    %v1718 = vadd.f32 %v1717, 0.18741608
    %v1719 = vmul.f32 %v1710, %v1718
    %v1720 = vadd.f32 %v1719, 1.1283791
    %v1721 = vmul.f32 %v673, %v1720
    %v1722 = vmul.f32 %v1710, 3.8918573e-05
    %v1723 = vadd.f32 %v1722, 0.001143296
    %v1724 = vmul.f32 %v1710, %v1723
    %v1725 = vadd.f32 %v1724, 0.014752088
    %v1726 = vmul.f32 %v1710, %v1725
    %v1727 = vadd.f32 %v1726, 0.112945676
    %v1728 = vmul.f32 %v1710, %v1727
    %v1729 = vadd.f32 %v1728, 0.4994258
    %v1730 = vmul.f32 %v1710, %v1729
    %v1731 = vadd.f32 %v1730, 1.0
    %v1732 = vrcp.pop %v1731
    %v1733 = vmul.f32 %v1731, %v1732
    %v1734 = vsub.f32 1.0, %v1733
    %v1735 = vmul.f32 %v1732, %v1734
    %v1736 = vadd.f32 %v1732, %v1735
    %vm1737 = vweird.f32 %v1731
    %vm1738 = vweird.f32 %v1732
    %vm1739 = vmor %vm1737, %vm1738
    %v1740 = vsel %vm1739, %v1732, %v1736
    %v1741 = vand.u32 2147483647, %v1731
    %vm1742 = vcmp.eq.f32.partialorder %v1741, 8.507059e+37
    %v1743 = vand.u32 %v1731, 2147483648
    %v1744 = vor.u32 1.1754944e-38, %v1743
    %v1745 = vsel %vm1742, %v1744, %v1740
    %v1746 = vmul.f32 %v1721, %v1745
    %v1747 = vmin.f32 %v1746, 1.0
    %v1748 = vmax.f32 %v1747, -1.0
    %v1749 = vmul.f32 %v674, %v674
    %v1750 = vmin.f32 16.0, %v1749
    %v1751 = vmul.f32 %v1750, 2.1237322e-06
    %v1752 = vadd.f32 %v1751, 0.00028619796
    %v1753 = vmul.f32 %v1750, %v1752
    %v1754 = vadd.f32 %v1753, 0.0036580483
    %v1755 = vmul.f32 %v1750, %v1754
    %v1756 = vadd.f32 %v1755, 0.05243302
    %v1757 = vmul.f32 %v1750, %v1756
    %v1758 = vadd.f32 %v1757, 0.18741608
    %v1759 = vmul.f32 %v1750, %v1758
    %v1760 = vadd.f32 %v1759, 1.1283791
    %v1761 = vmul.f32 %v674, %v1760
    %v1762 = vmul.f32 %v1750, 3.8918573e-05
    %v1763 = vadd.f32 %v1762, 0.001143296
    %v1764 = vmul.f32 %v1750, %v1763
    %v1765 = vadd.f32 %v1764, 0.014752088
    %v1766 = vmul.f32 %v1750, %v1765
    %v1767 = vadd.f32 %v1766, 0.112945676
    %v1768 = vmul.f32 %v1750, %v1767
    %v1769 = vadd.f32 %v1768, 0.4994258
    %v1770 = vmul.f32 %v1750, %v1769
    %v1771 = vadd.f32 %v1770, 1.0
    %v1772 = vrcp.pop %v1771
    %v1773 = vmul.f32 %v1771, %v1772
    %v1774 = vsub.f32 1.0, %v1773
    %v1775 = vmul.f32 %v1772, %v1774
    %v1776 = vadd.f32 %v1772, %v1775
    %vm1777 = vweird.f32 %v1771
    %vm1778 = vweird.f32 %v1772
    %vm1779 = vmor %vm1777, %vm1778
    %v1780 = vsel %vm1779, %v1772, %v1776
    %v1781 = vand.u32 2147483647, %v1771
    %vm1782 = vcmp.eq.f32.partialorder %v1781, 8.507059e+37
    %v1783 = vand.u32 %v1771, 2147483648
    %v1784 = vor.u32 1.1754944e-38, %v1783
    %v1785 = vsel %vm1782, %v1784, %v1780
    %v1786 = vmul.f32 %v1761, %v1785
    %v1787 = vmin.f32 %v1786, 1.0
    %v1788 = vmax.f32 %v1787, -1.0
    %v1789 = vmul.f32 %v675, %v675
    %v1790 = vmin.f32 16.0, %v1789
    %v1791 = vmul.f32 %v1790, 2.1237322e-06
    %v1792 = vadd.f32 %v1791, 0.00028619796
    %v1793 = vmul.f32 %v1790, %v1792
    %v1794 = vadd.f32 %v1793, 0.0036580483
    %v1795 = vmul.f32 %v1790, %v1794
    %v1796 = vadd.f32 %v1795, 0.05243302
    %v1797 = vmul.f32 %v1790, %v1796
    %v1798 = vadd.f32 %v1797, 0.18741608
    %v1799 = vmul.f32 %v1790, %v1798
    %v1800 = vadd.f32 %v1799, 1.1283791
    %v1801 = vmul.f32 %v675, %v1800
    %v1802 = vmul.f32 %v1790, 3.8918573e-05
    %v1803 = vadd.f32 %v1802, 0.001143296
    %v1804 = vmul.f32 %v1790, %v1803
    %v1805 = vadd.f32 %v1804, 0.014752088
    %v1806 = vmul.f32 %v1790, %v1805
    %v1807 = vadd.f32 %v1806, 0.112945676
    %v1808 = vmul.f32 %v1790, %v1807
    %v1809 = vadd.f32 %v1808, 0.4994258
    %v1810 = vmul.f32 %v1790, %v1809
    %v1811 = vadd.f32 %v1810, 1.0
    %v1812 = vrcp.pop %v1811
    %v1813 = vmul.f32 %v1811, %v1812
    %v1814 = vsub.f32 1.0, %v1813
    %v1815 = vmul.f32 %v1812, %v1814
    %v1816 = vadd.f32 %v1812, %v1815
    %vm1817 = vweird.f32 %v1811
    %vm1818 = vweird.f32 %v1812
    %vm1819 = vmor %vm1817, %vm1818
    %v1820 = vsel %vm1819, %v1812, %v1816
    %v1821 = vand.u32 2147483647, %v1811
    %vm1822 = vcmp.eq.f32.partialorder %v1821, 8.507059e+37
    %v1823 = vand.u32 %v1811, 2147483648
    %v1824 = vor.u32 1.1754944e-38, %v1823
    %v1825 = vsel %vm1822, %v1824, %v1820
    %v1826 = vmul.f32 %v1801, %v1825
    %v1827 = vmin.f32 %v1826, 1.0
    %v1828 = vmax.f32 %v1827, -1.0
    %v1829 = vmul.f32 %v676, %v676
    %v1830 = vmin.f32 16.0, %v1829
    %v1831 = vmul.f32 %v1830, 2.1237322e-06
    %v1832 = vadd.f32 %v1831, 0.00028619796
    %v1833 = vmul.f32 %v1830, %v1832
    %v1834 = vadd.f32 %v1833, 0.0036580483
    %v1835 = vmul.f32 %v1830, %v1834
    %v1836 = vadd.f32 %v1835, 0.05243302
    %v1837 = vmul.f32 %v1830, %v1836
    %v1838 = vadd.f32 %v1837, 0.18741608
    %v1839 = vmul.f32 %v1830, %v1838
    %v1840 = vadd.f32 %v1839, 1.1283791
    %v1841 = vmul.f32 %v676, %v1840
    %v1842 = vmul.f32 %v1830, 3.8918573e-05
    %v1843 = vadd.f32 %v1842, 0.001143296
    %v1844 = vmul.f32 %v1830, %v1843
    %v1845 = vadd.f32 %v1844, 0.014752088
    %v1846 = vmul.f32 %v1830, %v1845
    %v1847 = vadd.f32 %v1846, 0.112945676
    %v1848 = vmul.f32 %v1830, %v1847
    %v1849 = vadd.f32 %v1848, 0.4994258
    %v1850 = vmul.f32 %v1830, %v1849
    %v1851 = vadd.f32 %v1850, 1.0
    %v1852 = vrcp.pop %v1851
    %v1853 = vmul.f32 %v1851, %v1852
    %v1854 = vsub.f32 1.0, %v1853
    %v1855 = vmul.f32 %v1852, %v1854
    %v1856 = vadd.f32 %v1852, %v1855
    %vm1857 = vweird.f32 %v1851
    %vm1858 = vweird.f32 %v1852
    %vm1859 = vmor %vm1857, %vm1858
    %v1860 = vsel %vm1859, %v1852, %v1856
    %v1861 = vand.u32 2147483647, %v1851
    %vm1862 = vcmp.eq.f32.partialorder %v1861, 8.507059e+37
    %v1863 = vand.u32 %v1851, 2147483648
    %v1864 = vor.u32 1.1754944e-38, %v1863
    %v1865 = vsel %vm1862, %v1864, %v1860
    %v1866 = vmul.f32 %v1841, %v1865
    %v1867 = vmin.f32 %v1866, 1.0
    %v1868 = vmax.f32 %v1867, -1.0
    %v1869 = vmul.f32 %v677, %v677
    %v1870 = vmin.f32 16.0, %v1869
    %v1871 = vmul.f32 %v1870, 2.1237322e-06
    %v1872 = vadd.f32 %v1871, 0.00028619796
    %v1873 = vmul.f32 %v1870, %v1872
    %v1874 = vadd.f32 %v1873, 0.0036580483
    %v1875 = vmul.f32 %v1870, %v1874
    %v1876 = vadd.f32 %v1875, 0.05243302
    %v1877 = vmul.f32 %v1870, %v1876
    %v1878 = vadd.f32 %v1877, 0.18741608
    %v1879 = vmul.f32 %v1870, %v1878
    %v1880 = vadd.f32 %v1879, 1.1283791
    %v1881 = vmul.f32 %v677, %v1880
    %v1882 = vmul.f32 %v1870, 3.8918573e-05
    %v1883 = vadd.f32 %v1882, 0.001143296
    %v1884 = vmul.f32 %v1870, %v1883
    %v1885 = vadd.f32 %v1884, 0.014752088
    %v1886 = vmul.f32 %v1870, %v1885
    %v1887 = vadd.f32 %v1886, 0.112945676
    %v1888 = vmul.f32 %v1870, %v1887
    %v1889 = vadd.f32 %v1888, 0.4994258
    %v1890 = vmul.f32 %v1870, %v1889
    %v1891 = vadd.f32 %v1890, 1.0
    %v1892 = vrcp.pop %v1891
    %v1893 = vmul.f32 %v1891, %v1892
    %v1894 = vsub.f32 1.0, %v1893
    %v1895 = vmul.f32 %v1892, %v1894
    %v1896 = vadd.f32 %v1892, %v1895
    %vm1897 = vweird.f32 %v1891
    %vm1898 = vweird.f32 %v1892
    %vm1899 = vmor %vm1897, %vm1898
    %v1900 = vsel %vm1899, %v1892, %v1896
    %v1901 = vand.u32 2147483647, %v1891
    %vm1902 = vcmp.eq.f32.partialorder %v1901, 8.507059e+37
    %v1903 = vand.u32 %v1891, 2147483648
    %v1904 = vor.u32 1.1754944e-38, %v1903
    %v1905 = vsel %vm1902, %v1904, %v1900
    %v1906 = vmul.f32 %v1881, %v1905
    %v1907 = vmin.f32 %v1906, 1.0
    %v1908 = vmax.f32 %v1907, -1.0
    %v1909 = vmul.f32 %v678, %v678
    %v1910 = vmin.f32 16.0, %v1909
    %v1911 = vmul.f32 %v1910, 2.1237322e-06
    %v1912 = vadd.f32 %v1911, 0.00028619796
    %v1913 = vmul.f32 %v1910, %v1912
    %v1914 = vadd.f32 %v1913, 0.0036580483
    %v1915 = vmul.f32 %v1910, %v1914
    %v1916 = vadd.f32 %v1915, 0.05243302
    %v1917 = vmul.f32 %v1910, %v1916
    %v1918 = vadd.f32 %v1917, 0.18741608
    %v1919 = vmul.f32 %v1910, %v1918
    %v1920 = vadd.f32 %v1919, 1.1283791
    %v1921 = vmul.f32 %v678, %v1920
    %v1922 = vmul.f32 %v1910, 3.8918573e-05
    %v1923 = vadd.f32 %v1922, 0.001143296
    %v1924 = vmul.f32 %v1910, %v1923
    %v1925 = vadd.f32 %v1924, 0.014752088
    %v1926 = vmul.f32 %v1910, %v1925
    %v1927 = vadd.f32 %v1926, 0.112945676
    %v1928 = vmul.f32 %v1910, %v1927
    %v1929 = vadd.f32 %v1928, 0.4994258
    %v1930 = vmul.f32 %v1910, %v1929
    %v1931 = vadd.f32 %v1930, 1.0
    %v1932 = vrcp.pop %v1931
    %v1933 = vmul.f32 %v1931, %v1932
    %v1934 = vsub.f32 1.0, %v1933
    %v1935 = vmul.f32 %v1932, %v1934
    %v1936 = vadd.f32 %v1932, %v1935
    %vm1937 = vweird.f32 %v1931
    %vm1938 = vweird.f32 %v1932
    %vm1939 = vmor %vm1937, %vm1938
    %v1940 = vsel %vm1939, %v1932, %v1936
    %v1941 = vand.u32 2147483647, %v1931
    %vm1942 = vcmp.eq.f32.partialorder %v1941, 8.507059e+37
    %v1943 = vand.u32 %v1931, 2147483648
    %v1944 = vor.u32 1.1754944e-38, %v1943
    %v1945 = vsel %vm1942, %v1944, %v1940
    %v1946 = vmul.f32 %v1921, %v1945
    %v1947 = vmin.f32 %v1946, 1.0
    %v1948 = vmax.f32 %v1947, -1.0
    %v1949 = vmul.f32 %v679, %v679
    %v1950 = vmin.f32 16.0, %v1949
    %v1951 = vmul.f32 %v1950, 2.1237322e-06
    %v1952 = vadd.f32 %v1951, 0.00028619796
    %v1953 = vmul.f32 %v1950, %v1952
    %v1954 = vadd.f32 %v1953, 0.0036580483
    %v1955 = vmul.f32 %v1950, %v1954
    %v1956 = vadd.f32 %v1955, 0.05243302
    %v1957 = vmul.f32 %v1950, %v1956
    %v1958 = vadd.f32 %v1957, 0.18741608
    %v1959 = vmul.f32 %v1950, %v1958
    %v1960 = vadd.f32 %v1959, 1.1283791
    %v1961 = vmul.f32 %v679, %v1960
    %v1962 = vmul.f32 %v1950, 3.8918573e-05
    %v1963 = vadd.f32 %v1962, 0.001143296
    %v1964 = vmul.f32 %v1950, %v1963
    %v1965 = vadd.f32 %v1964, 0.014752088
    %v1966 = vmul.f32 %v1950, %v1965
    %v1967 = vadd.f32 %v1966, 0.112945676
    %v1968 = vmul.f32 %v1950, %v1967
    %v1969 = vadd.f32 %v1968, 0.4994258
    %v1970 = vmul.f32 %v1950, %v1969
    %v1971 = vadd.f32 %v1970, 1.0
    %v1972 = vrcp.pop %v1971
    %v1973 = vmul.f32 %v1971, %v1972
    %v1974 = vsub.f32 1.0, %v1973
    %v1975 = vmul.f32 %v1972, %v1974
    %v1976 = vadd.f32 %v1972, %v1975
    %vm1977 = vweird.f32 %v1971
    %vm1978 = vweird.f32 %v1972
    %vm1979 = vmor %vm1977, %vm1978
    %v1980 = vsel %vm1979, %v1972, %v1976
    %v1981 = vand.u32 2147483647, %v1971
    %vm1982 = vcmp.eq.f32.partialorder %v1981, 8.507059e+37
    %v1983 = vand.u32 %v1971, 2147483648
    %v1984 = vor.u32 1.1754944e-38, %v1983
    %v1985 = vsel %vm1982, %v1984, %v1980
    %v1986 = vmul.f32 %v1961, %v1985
    %v1987 = vmin.f32 %v1986, 1.0
    %v1988 = vmax.f32 %v1987, -1.0
    %v1989 = vmul.f32 %v680, %v680
    %v1990 = vmin.f32 16.0, %v1989
    %v1991 = vmul.f32 %v1990, 2.1237322e-06
    %v1992 = vadd.f32 %v1991, 0.00028619796
    %v1993 = vmul.f32 %v1990, %v1992
    %v1994 = vadd.f32 %v1993, 0.0036580483
    %v1995 = vmul.f32 %v1990, %v1994
    %v1996 = vadd.f32 %v1995, 0.05243302
    %v1997 = vmul.f32 %v1990, %v1996
    %v1998 = vadd.f32 %v1997, 0.18741608
    %v1999 = vmul.f32 %v1990, %v1998
    %v2000 = vadd.f32 %v1999, 1.1283791
    %v2001 = vmul.f32 %v680, %v2000
    %v2002 = vmul.f32 %v1990, 3.8918573e-05
    %v2003 = vadd.f32 %v2002, 0.001143296
    %v2004 = vmul.f32 %v1990, %v2003
    %v2005 = vadd.f32 %v2004, 0.014752088
    %v2006 = vmul.f32 %v1990, %v2005
    %v2007 = vadd.f32 %v2006, 0.112945676
    %v2008 = vmul.f32 %v1990, %v2007
    %v2009 = vadd.f32 %v2008, 0.4994258
    %v2010 = vmul.f32 %v1990, %v2009
    %v2011 = vadd.f32 %v2010, 1.0
    %v2012 = vrcp.pop %v2011
    %v2013 = vmul.f32 %v2011, %v2012
    %v2014 = vsub.f32 1.0, %v2013
    %v2015 = vmul.f32 %v2012, %v2014
    %v2016 = vadd.f32 %v2012, %v2015
    %vm2017 = vweird.f32 %v2011
    %vm2018 = vweird.f32 %v2012
    %vm2019 = vmor %vm2017, %vm2018
    %v2020 = vsel %vm2019, %v2012, %v2016
    %v2021 = vand.u32 2147483647, %v2011
    %vm2022 = vcmp.eq.f32.partialorder %v2021, 8.507059e+37
    %v2023 = vand.u32 %v2011, 2147483648
    %v2024 = vor.u32 1.1754944e-38, %v2023
    %v2025 = vsel %vm2022, %v2024, %v2020
    %v2026 = vmul.f32 %v2001, %v2025
    %v2027 = vmin.f32 %v2026, 1.0
    %v2028 = vmax.f32 %v2027, -1.0
    %v2029 = vmul.f32 %v681, %v681
    %v2030 = vmin.f32 16.0, %v2029
    %v2031 = vmul.f32 %v2030, 2.1237322e-06
    %v2032 = vadd.f32 %v2031, 0.00028619796
    %v2033 = vmul.f32 %v2030, %v2032
    %v2034 = vadd.f32 %v2033, 0.0036580483
    %v2035 = vmul.f32 %v2030, %v2034
    %v2036 = vadd.f32 %v2035, 0.05243302
    %v2037 = vmul.f32 %v2030, %v2036
    %v2038 = vadd.f32 %v2037, 0.18741608
    %v2039 = vmul.f32 %v2030, %v2038
    %v2040 = vadd.f32 %v2039, 1.1283791
    %v2041 = vmul.f32 %v681, %v2040
    %v2042 = vmul.f32 %v2030, 3.8918573e-05
    %v2043 = vadd.f32 %v2042, 0.001143296
    %v2044 = vmul.f32 %v2030, %v2043
    %v2045 = vadd.f32 %v2044, 0.014752088
    %v2046 = vmul.f32 %v2030, %v2045
    %v2047 = vadd.f32 %v2046, 0.112945676
    %v2048 = vmul.f32 %v2030, %v2047
    %v2049 = vadd.f32 %v2048, 0.4994258
    %v2050 = vmul.f32 %v2030, %v2049
    %v2051 = vadd.f32 %v2050, 1.0
    %v2052 = vrcp.pop %v2051
    %v2053 = vmul.f32 %v2051, %v2052
    %v2054 = vsub.f32 1.0, %v2053
    %v2055 = vmul.f32 %v2052, %v2054
    %v2056 = vadd.f32 %v2052, %v2055
    %vm2057 = vweird.f32 %v2051
    %vm2058 = vweird.f32 %v2052
    %vm2059 = vmor %vm2057, %vm2058
    %v2060 = vsel %vm2059, %v2052, %v2056
    %v2061 = vand.u32 2147483647, %v2051
    %vm2062 = vcmp.eq.f32.partialorder %v2061, 8.507059e+37
    %v2063 = vand.u32 %v2051, 2147483648
    %v2064 = vor.u32 1.1754944e-38, %v2063
    %v2065 = vsel %vm2062, %v2064, %v2060
    %v2066 = vmul.f32 %v2041, %v2065
    %v2067 = vmin.f32 %v2066, 1.0
    %v2068 = vmax.f32 %v2067, -1.0
    %v2069 = vmul.f32 %v682, %v682
    %v2070 = vmin.f32 16.0, %v2069
    %v2071 = vmul.f32 %v2070, 2.1237322e-06
    %v2072 = vadd.f32 %v2071, 0.00028619796
    %v2073 = vmul.f32 %v2070, %v2072
    %v2074 = vadd.f32 %v2073, 0.0036580483
    %v2075 = vmul.f32 %v2070, %v2074
    %v2076 = vadd.f32 %v2075, 0.05243302
    %v2077 = vmul.f32 %v2070, %v2076
    %v2078 = vadd.f32 %v2077, 0.18741608
    %v2079 = vmul.f32 %v2070, %v2078
    %v2080 = vadd.f32 %v2079, 1.1283791
    %v2081 = vmul.f32 %v682, %v2080
    %v2082 = vmul.f32 %v2070, 3.8918573e-05
    %v2083 = vadd.f32 %v2082, 0.001143296
    %v2084 = vmul.f32 %v2070, %v2083
    %v2085 = vadd.f32 %v2084, 0.014752088
    %v2086 = vmul.f32 %v2070, %v2085
    %v2087 = vadd.f32 %v2086, 0.112945676
    %v2088 = vmul.f32 %v2070, %v2087
    %v2089 = vadd.f32 %v2088, 0.4994258
    %v2090 = vmul.f32 %v2070, %v2089
    %v2091 = vadd.f32 %v2090, 1.0
    %v2092 = vrcp.pop %v2091
    %v2093 = vmul.f32 %v2091, %v2092
    %v2094 = vsub.f32 1.0, %v2093
    %v2095 = vmul.f32 %v2092, %v2094
    %v2096 = vadd.f32 %v2092, %v2095
    %vm2097 = vweird.f32 %v2091
    %vm2098 = vweird.f32 %v2092
    %vm2099 = vmor %vm2097, %vm2098
    %v2100 = vsel %vm2099, %v2092, %v2096
    %v2101 = vand.u32 2147483647, %v2091
    %vm2102 = vcmp.eq.f32.partialorder %v2101, 8.507059e+37
    %v2103 = vand.u32 %v2091, 2147483648
    %v2104 = vor.u32 1.1754944e-38, %v2103
    %v2105 = vsel %vm2102, %v2104, %v2100
    %v2106 = vmul.f32 %v2081, %v2105
    %v2107 = vmin.f32 %v2106, 1.0
    %v2108 = vmax.f32 %v2107, -1.0
    %v2109 = vmul.f32 %v683, %v683
    %v2110 = vmin.f32 16.0, %v2109
    %v2111 = vmul.f32 %v2110, 2.1237322e-06
    %v2112 = vadd.f32 %v2111, 0.00028619796
    %v2113 = vmul.f32 %v2110, %v2112
    %v2114 = vadd.f32 %v2113, 0.0036580483
    %v2115 = vmul.f32 %v2110, %v2114
    %v2116 = vadd.f32 %v2115, 0.05243302
    %v2117 = vmul.f32 %v2110, %v2116
    %v2118 = vadd.f32 %v2117, 0.18741608
    %v2119 = vmul.f32 %v2110, %v2118
    %v2120 = vadd.f32 %v2119, 1.1283791
    %v2121 = vmul.f32 %v683, %v2120
    %v2122 = vmul.f32 %v2110, 3.8918573e-05
    %v2123 = vadd.f32 %v2122, 0.001143296
    %v2124 = vmul.f32 %v2110, %v2123
    %v2125 = vadd.f32 %v2124, 0.014752088
    %v2126 = vmul.f32 %v2110, %v2125
    %v2127 = vadd.f32 %v2126, 0.112945676
    %v2128 = vmul.f32 %v2110, %v2127
    %v2129 = vadd.f32 %v2128, 0.4994258
    %v2130 = vmul.f32 %v2110, %v2129
    %v2131 = vadd.f32 %v2130, 1.0
    %v2132 = vrcp.pop %v2131
    %v2133 = vmul.f32 %v2131, %v2132
    %v2134 = vsub.f32 1.0, %v2133
    %v2135 = vmul.f32 %v2132, %v2134
    %v2136 = vadd.f32 %v2132, %v2135
    %vm2137 = vweird.f32 %v2131
    %vm2138 = vweird.f32 %v2132
    %vm2139 = vmor %vm2137, %vm2138
    %v2140 = vsel %vm2139, %v2132, %v2136
    %v2141 = vand.u32 2147483647, %v2131
    %vm2142 = vcmp.eq.f32.partialorder %v2141, 8.507059e+37
    %v2143 = vand.u32 %v2131, 2147483648
    %v2144 = vor.u32 1.1754944e-38, %v2143
    %v2145 = vsel %vm2142, %v2144, %v2140
    %v2146 = vmul.f32 %v2121, %v2145
    %v2147 = vmin.f32 %v2146, 1.0
    %v2148 = vmax.f32 %v2147, -1.0
    %v2149 = vmul.f32 %v684, %v684
    %v2150 = vmin.f32 16.0, %v2149
    %v2151 = vmul.f32 %v2150, 2.1237322e-06
    %v2152 = vadd.f32 %v2151, 0.00028619796
    %v2153 = vmul.f32 %v2150, %v2152
    %v2154 = vadd.f32 %v2153, 0.0036580483
    %v2155 = vmul.f32 %v2150, %v2154
    %v2156 = vadd.f32 %v2155, 0.05243302
    %v2157 = vmul.f32 %v2150, %v2156
    %v2158 = vadd.f32 %v2157, 0.18741608
    %v2159 = vmul.f32 %v2150, %v2158
    %v2160 = vadd.f32 %v2159, 1.1283791
    %v2161 = vmul.f32 %v684, %v2160
    %v2162 = vmul.f32 %v2150, 3.8918573e-05
    %v2163 = vadd.f32 %v2162, 0.001143296
    %v2164 = vmul.f32 %v2150, %v2163
    %v2165 = vadd.f32 %v2164, 0.014752088
    %v2166 = vmul.f32 %v2150, %v2165
    %v2167 = vadd.f32 %v2166, 0.112945676
    %v2168 = vmul.f32 %v2150, %v2167
    %v2169 = vadd.f32 %v2168, 0.4994258
    %v2170 = vmul.f32 %v2150, %v2169
    %v2171 = vadd.f32 %v2170, 1.0
    %v2172 = vrcp.pop %v2171
    %v2173 = vmul.f32 %v2171, %v2172
    %v2174 = vsub.f32 1.0, %v2173
    %v2175 = vmul.f32 %v2172, %v2174
    %v2176 = vadd.f32 %v2172, %v2175
    %vm2177 = vweird.f32 %v2171
    %vm2178 = vweird.f32 %v2172
    %vm2179 = vmor %vm2177, %vm2178
    %v2180 = vsel %vm2179, %v2172, %v2176
    %v2181 = vand.u32 2147483647, %v2171
    %vm2182 = vcmp.eq.f32.partialorder %v2181, 8.507059e+37
    %v2183 = vand.u32 %v2171, 2147483648
    %v2184 = vor.u32 1.1754944e-38, %v2183
    %v2185 = vsel %vm2182, %v2184, %v2180
    %v2186 = vmul.f32 %v2161, %v2185
    %v2187 = vmin.f32 %v2186, 1.0
    %v2188 = vmax.f32 %v2187, -1.0
    %v2189 = vmul.f32 %v685, %v685
    %v2190 = vmin.f32 16.0, %v2189
    %v2191 = vmul.f32 %v2190, 2.1237322e-06
    %v2192 = vadd.f32 %v2191, 0.00028619796
    %v2193 = vmul.f32 %v2190, %v2192
    %v2194 = vadd.f32 %v2193, 0.0036580483
    %v2195 = vmul.f32 %v2190, %v2194
    %v2196 = vadd.f32 %v2195, 0.05243302
    %v2197 = vmul.f32 %v2190, %v2196
    %v2198 = vadd.f32 %v2197, 0.18741608
    %v2199 = vmul.f32 %v2190, %v2198
    %v2200 = vadd.f32 %v2199, 1.1283791
    %v2201 = vmul.f32 %v685, %v2200
    %v2202 = vmul.f32 %v2190, 3.8918573e-05
    %v2203 = vadd.f32 %v2202, 0.001143296
    %v2204 = vmul.f32 %v2190, %v2203
    %v2205 = vadd.f32 %v2204, 0.014752088
    %v2206 = vmul.f32 %v2190, %v2205
    %v2207 = vadd.f32 %v2206, 0.112945676
    %v2208 = vmul.f32 %v2190, %v2207
    %v2209 = vadd.f32 %v2208, 0.4994258
    %v2210 = vmul.f32 %v2190, %v2209
    %v2211 = vadd.f32 %v2210, 1.0
    %v2212 = vrcp.pop %v2211
    %v2213 = vmul.f32 %v2211, %v2212
    %v2214 = vsub.f32 1.0, %v2213
    %v2215 = vmul.f32 %v2212, %v2214
    %v2216 = vadd.f32 %v2212, %v2215
    %vm2217 = vweird.f32 %v2211
    %vm2218 = vweird.f32 %v2212
    %vm2219 = vmor %vm2217, %vm2218
    %v2220 = vsel %vm2219, %v2212, %v2216
    %v2221 = vand.u32 2147483647, %v2211
    %vm2222 = vcmp.eq.f32.partialorder %v2221, 8.507059e+37
    %v2223 = vand.u32 %v2211, 2147483648
    %v2224 = vor.u32 1.1754944e-38, %v2223
    %v2225 = vsel %vm2222, %v2224, %v2220
    %v2226 = vmul.f32 %v2201, %v2225
    %v2227 = vmin.f32 %v2226, 1.0
    %v2228 = vmax.f32 %v2227, -1.0
    %v2229 = vmul.f32 %v686, %v686
    %v2230 = vmin.f32 16.0, %v2229
    %v2231 = vmul.f32 %v2230, 2.1237322e-06
    %v2232 = vadd.f32 %v2231, 0.00028619796
    %v2233 = vmul.f32 %v2230, %v2232
    %v2234 = vadd.f32 %v2233, 0.0036580483
    %v2235 = vmul.f32 %v2230, %v2234
    %v2236 = vadd.f32 %v2235, 0.05243302
    %v2237 = vmul.f32 %v2230, %v2236
    %v2238 = vadd.f32 %v2237, 0.18741608
    %v2239 = vmul.f32 %v2230, %v2238
    %v2240 = vadd.f32 %v2239, 1.1283791
    %v2241 = vmul.f32 %v686, %v2240
    %v2242 = vmul.f32 %v2230, 3.8918573e-05
    %v2243 = vadd.f32 %v2242, 0.001143296
    %v2244 = vmul.f32 %v2230, %v2243
    %v2245 = vadd.f32 %v2244, 0.014752088
    %v2246 = vmul.f32 %v2230, %v2245
    %v2247 = vadd.f32 %v2246, 0.112945676
    %v2248 = vmul.f32 %v2230, %v2247
    %v2249 = vadd.f32 %v2248, 0.4994258
    %v2250 = vmul.f32 %v2230, %v2249
    %v2251 = vadd.f32 %v2250, 1.0
    %v2252 = vrcp.pop %v2251
    %v2253 = vmul.f32 %v2251, %v2252
    %v2254 = vsub.f32 1.0, %v2253
    %v2255 = vmul.f32 %v2252, %v2254
    %v2256 = vadd.f32 %v2252, %v2255
    %vm2257 = vweird.f32 %v2251
    %vm2258 = vweird.f32 %v2252
    %vm2259 = vmor %vm2257, %vm2258
    %v2260 = vsel %vm2259, %v2252, %v2256
    %v2261 = vand.u32 2147483647, %v2251
    %vm2262 = vcmp.eq.f32.partialorder %v2261, 8.507059e+37
    %v2263 = vand.u32 %v2251, 2147483648
    %v2264 = vor.u32 1.1754944e-38, %v2263
    %v2265 = vsel %vm2262, %v2264, %v2260
    %v2266 = vmul.f32 %v2241, %v2265
    %v2267 = vmin.f32 %v2266, 1.0
    %v2268 = vmax.f32 %v2267, -1.0
    %v2269 = vmul.f32 %v687, %v687
    %v2270 = vmin.f32 16.0, %v2269
    %v2271 = vmul.f32 %v2270, 2.1237322e-06
    %v2272 = vadd.f32 %v2271, 0.00028619796
    %v2273 = vmul.f32 %v2270, %v2272
    %v2274 = vadd.f32 %v2273, 0.0036580483
    %v2275 = vmul.f32 %v2270, %v2274
    %v2276 = vadd.f32 %v2275, 0.05243302
    %v2277 = vmul.f32 %v2270, %v2276
    %v2278 = vadd.f32 %v2277, 0.18741608
    %v2279 = vmul.f32 %v2270, %v2278
    %v2280 = vadd.f32 %v2279, 1.1283791
    %v2281 = vmul.f32 %v687, %v2280
    %v2282 = vmul.f32 %v2270, 3.8918573e-05
    %v2283 = vadd.f32 %v2282, 0.001143296
    %v2284 = vmul.f32 %v2270, %v2283
    %v2285 = vadd.f32 %v2284, 0.014752088
    %v2286 = vmul.f32 %v2270, %v2285
    %v2287 = vadd.f32 %v2286, 0.112945676
    %v2288 = vmul.f32 %v2270, %v2287
    %v2289 = vadd.f32 %v2288, 0.4994258
    %v2290 = vmul.f32 %v2270, %v2289
    %v2291 = vadd.f32 %v2290, 1.0
    %v2292 = vrcp.pop %v2291
    %v2293 = vmul.f32 %v2291, %v2292
    %v2294 = vsub.f32 1.0, %v2293
    %v2295 = vmul.f32 %v2292, %v2294
    %v2296 = vadd.f32 %v2292, %v2295
    %vm2297 = vweird.f32 %v2291
    %vm2298 = vweird.f32 %v2292
    %vm2299 = vmor %vm2297, %vm2298
    %v2300 = vsel %vm2299, %v2292, %v2296
    %v2301 = vand.u32 2147483647, %v2291
    %vm2302 = vcmp.eq.f32.partialorder %v2301, 8.507059e+37
    %v2303 = vand.u32 %v2291, 2147483648
    %v2304 = vor.u32 1.1754944e-38, %v2303
    %v2305 = vsel %vm2302, %v2304, %v2300
    %v2306 = vmul.f32 %v2281, %v2305
    %v2307 = vmin.f32 %v2306, 1.0
    %v2308 = vmax.f32 %v2307, -1.0
    %v2309 = vmul.f32 %v688, %v688
    %v2310 = vmin.f32 16.0, %v2309
    %v2311 = vmul.f32 %v2310, 2.1237322e-06
    %v2312 = vadd.f32 %v2311, 0.00028619796
    %v2313 = vmul.f32 %v2310, %v2312
    %v2314 = vadd.f32 %v2313, 0.0036580483
    %v2315 = vmul.f32 %v2310, %v2314
    %v2316 = vadd.f32 %v2315, 0.05243302
    %v2317 = vmul.f32 %v2310, %v2316
    %v2318 = vadd.f32 %v2317, 0.18741608
    %v2319 = vmul.f32 %v2310, %v2318
    %v2320 = vadd.f32 %v2319, 1.1283791
    %v2321 = vmul.f32 %v688, %v2320
    %v2322 = vmul.f32 %v2310, 3.8918573e-05
    %v2323 = vadd.f32 %v2322, 0.001143296
    %v2324 = vmul.f32 %v2310, %v2323
    %v2325 = vadd.f32 %v2324, 0.014752088
    %v2326 = vmul.f32 %v2310, %v2325
    %v2327 = vadd.f32 %v2326, 0.112945676
    %v2328 = vmul.f32 %v2310, %v2327
    %v2329 = vadd.f32 %v2328, 0.4994258
    %v2330 = vmul.f32 %v2310, %v2329
    %v2331 = vadd.f32 %v2330, 1.0
    %v2332 = vrcp.pop %v2331
    %v2333 = vmul.f32 %v2331, %v2332
    %v2334 = vsub.f32 1.0, %v2333
    %v2335 = vmul.f32 %v2332, %v2334
    %v2336 = vadd.f32 %v2332, %v2335
    %vm2337 = vweird.f32 %v2331
    %vm2338 = vweird.f32 %v2332
    %vm2339 = vmor %vm2337, %vm2338
    %v2340 = vsel %vm2339, %v2332, %v2336
    %v2341 = vand.u32 2147483647, %v2331
    %vm2342 = vcmp.eq.f32.partialorder %v2341, 8.507059e+37
    %v2343 = vand.u32 %v2331, 2147483648
    %v2344 = vor.u32 1.1754944e-38, %v2343
    %v2345 = vsel %vm2342, %v2344, %v2340
    %v2346 = vmul.f32 %v2321, %v2345
    %v2347 = vmin.f32 %v2346, 1.0
    %v2348 = vmax.f32 %v2347, -1.0
    %v2349 = vmul.f32 %v689, %v689
    %v2350 = vmin.f32 16.0, %v2349
    %v2351 = vmul.f32 %v2350, 2.1237322e-06
    %v2352 = vadd.f32 %v2351, 0.00028619796
    %v2353 = vmul.f32 %v2350, %v2352
    %v2354 = vadd.f32 %v2353, 0.0036580483
    %v2355 = vmul.f32 %v2350, %v2354
    %v2356 = vadd.f32 %v2355, 0.05243302
    %v2357 = vmul.f32 %v2350, %v2356
    %v2358 = vadd.f32 %v2357, 0.18741608
    %v2359 = vmul.f32 %v2350, %v2358
    %v2360 = vadd.f32 %v2359, 1.1283791
    %v2361 = vmul.f32 %v689, %v2360
    %v2362 = vmul.f32 %v2350, 3.8918573e-05
    %v2363 = vadd.f32 %v2362, 0.001143296
    %v2364 = vmul.f32 %v2350, %v2363
    %v2365 = vadd.f32 %v2364, 0.014752088
    %v2366 = vmul.f32 %v2350, %v2365
    %v2367 = vadd.f32 %v2366, 0.112945676
    %v2368 = vmul.f32 %v2350, %v2367
    %v2369 = vadd.f32 %v2368, 0.4994258
    %v2370 = vmul.f32 %v2350, %v2369
    %v2371 = vadd.f32 %v2370, 1.0
    %v2372 = vrcp.pop %v2371
    %v2373 = vmul.f32 %v2371, %v2372
    %v2374 = vsub.f32 1.0, %v2373
    %v2375 = vmul.f32 %v2372, %v2374
    %v2376 = vadd.f32 %v2372, %v2375
    %vm2377 = vweird.f32 %v2371
    %vm2378 = vweird.f32 %v2372
    %vm2379 = vmor %vm2377, %vm2378
    %v2380 = vsel %vm2379, %v2372, %v2376
    %v2381 = vand.u32 2147483647, %v2371
    %vm2382 = vcmp.eq.f32.partialorder %v2381, 8.507059e+37
    %v2383 = vand.u32 %v2371, 2147483648
    %v2384 = vor.u32 1.1754944e-38, %v2383
    %v2385 = vsel %vm2382, %v2384, %v2380
    %v2386 = vmul.f32 %v2361, %v2385
    %v2387 = vmin.f32 %v2386, 1.0
    %v2388 = vmax.f32 %v2387, -1.0
    %v2389 = vmul.f32 %v690, %v690
    %v2390 = vmin.f32 16.0, %v2389
    %v2391 = vmul.f32 %v2390, 2.1237322e-06
    %v2392 = vadd.f32 %v2391, 0.00028619796
    %v2393 = vmul.f32 %v2390, %v2392
    %v2394 = vadd.f32 %v2393, 0.0036580483
    %v2395 = vmul.f32 %v2390, %v2394
    %v2396 = vadd.f32 %v2395, 0.05243302
    %v2397 = vmul.f32 %v2390, %v2396
    %v2398 = vadd.f32 %v2397, 0.18741608
    %v2399 = vmul.f32 %v2390, %v2398
    %v2400 = vadd.f32 %v2399, 1.1283791
    %v2401 = vmul.f32 %v690, %v2400
    %v2402 = vmul.f32 %v2390, 3.8918573e-05
    %v2403 = vadd.f32 %v2402, 0.001143296
    %v2404 = vmul.f32 %v2390, %v2403
    %v2405 = vadd.f32 %v2404, 0.014752088
    %v2406 = vmul.f32 %v2390, %v2405
    %v2407 = vadd.f32 %v2406, 0.112945676
    %v2408 = vmul.f32 %v2390, %v2407
    %v2409 = vadd.f32 %v2408, 0.4994258
    %v2410 = vmul.f32 %v2390, %v2409
    %v2411 = vadd.f32 %v2410, 1.0
    %v2412 = vrcp.pop %v2411
    %v2413 = vmul.f32 %v2411, %v2412
    %v2414 = vsub.f32 1.0, %v2413
    %v2415 = vmul.f32 %v2412, %v2414
    %v2416 = vadd.f32 %v2412, %v2415
    %vm2417 = vweird.f32 %v2411
    %vm2418 = vweird.f32 %v2412
    %vm2419 = vmor %vm2417, %vm2418
    %v2420 = vsel %vm2419, %v2412, %v2416
    %v2421 = vand.u32 2147483647, %v2411
    %vm2422 = vcmp.eq.f32.partialorder %v2421, 8.507059e+37
    %v2423 = vand.u32 %v2411, 2147483648
    %v2424 = vor.u32 1.1754944e-38, %v2423
    %v2425 = vsel %vm2422, %v2424, %v2420
    %v2426 = vmul.f32 %v2401, %v2425
    %v2427 = vmin.f32 %v2426, 1.0
    %v2428 = vmax.f32 %v2427, -1.0
    %v2429 = vmul.f32 %v691, %v691
    %v2430 = vmin.f32 16.0, %v2429
    %v2431 = vmul.f32 %v2430, 2.1237322e-06
    %v2432 = vadd.f32 %v2431, 0.00028619796
    %v2433 = vmul.f32 %v2430, %v2432
    %v2434 = vadd.f32 %v2433, 0.0036580483
    %v2435 = vmul.f32 %v2430, %v2434
    %v2436 = vadd.f32 %v2435, 0.05243302
    %v2437 = vmul.f32 %v2430, %v2436
    %v2438 = vadd.f32 %v2437, 0.18741608
    %v2439 = vmul.f32 %v2430, %v2438
    %v2440 = vadd.f32 %v2439, 1.1283791
    %v2441 = vmul.f32 %v691, %v2440
    %v2442 = vmul.f32 %v2430, 3.8918573e-05
    %v2443 = vadd.f32 %v2442, 0.001143296
    %v2444 = vmul.f32 %v2430, %v2443
    %v2445 = vadd.f32 %v2444, 0.014752088
    %v2446 = vmul.f32 %v2430, %v2445
    %v2447 = vadd.f32 %v2446, 0.112945676
    %v2448 = vmul.f32 %v2430, %v2447
    %v2449 = vadd.f32 %v2448, 0.4994258
    %v2450 = vmul.f32 %v2430, %v2449
    %v2451 = vadd.f32 %v2450, 1.0
    %v2452 = vrcp.pop %v2451
    %v2453 = vmul.f32 %v2451, %v2452
    %v2454 = vsub.f32 1.0, %v2453
    %v2455 = vmul.f32 %v2452, %v2454
    %v2456 = vadd.f32 %v2452, %v2455
    %vm2457 = vweird.f32 %v2451
    %vm2458 = vweird.f32 %v2452
    %vm2459 = vmor %vm2457, %vm2458
    %v2460 = vsel %vm2459, %v2452, %v2456
    %v2461 = vand.u32 2147483647, %v2451
    %vm2462 = vcmp.eq.f32.partialorder %v2461, 8.507059e+37
    %v2463 = vand.u32 %v2451, 2147483648
    %v2464 = vor.u32 1.1754944e-38, %v2463
    %v2465 = vsel %vm2462, %v2464, %v2460
    %v2466 = vmul.f32 %v2441, %v2465
    %v2467 = vmin.f32 %v2466, 1.0
    %v2468 = vmax.f32 %v2467, -1.0
    %v2469 = vmul.f32 %v692, %v692
    %v2470 = vmin.f32 16.0, %v2469
    %v2471 = vmul.f32 %v2470, 2.1237322e-06
    %v2472 = vadd.f32 %v2471, 0.00028619796
    %v2473 = vmul.f32 %v2470, %v2472
    %v2474 = vadd.f32 %v2473, 0.0036580483
    %v2475 = vmul.f32 %v2470, %v2474
    %v2476 = vadd.f32 %v2475, 0.05243302
    %v2477 = vmul.f32 %v2470, %v2476
    %v2478 = vadd.f32 %v2477, 0.18741608
    %v2479 = vmul.f32 %v2470, %v2478
    %v2480 = vadd.f32 %v2479, 1.1283791
    %v2481 = vmul.f32 %v692, %v2480
    %v2482 = vmul.f32 %v2470, 3.8918573e-05
    %v2483 = vadd.f32 %v2482, 0.001143296
    %v2484 = vmul.f32 %v2470, %v2483
    %v2485 = vadd.f32 %v2484, 0.014752088
    %v2486 = vmul.f32 %v2470, %v2485
    %v2487 = vadd.f32 %v2486, 0.112945676
    %v2488 = vmul.f32 %v2470, %v2487
    %v2489 = vadd.f32 %v2488, 0.4994258
    %v2490 = vmul.f32 %v2470, %v2489
    %v2491 = vadd.f32 %v2490, 1.0
    %v2492 = vrcp.pop %v2491
    %v2493 = vmul.f32 %v2491, %v2492
    %v2494 = vsub.f32 1.0, %v2493
    %v2495 = vmul.f32 %v2492, %v2494
    %v2496 = vadd.f32 %v2492, %v2495
    %vm2497 = vweird.f32 %v2491
    %vm2498 = vweird.f32 %v2492
    %vm2499 = vmor %vm2497, %vm2498
    %v2500 = vsel %vm2499, %v2492, %v2496
    %v2501 = vand.u32 2147483647, %v2491
    %vm2502 = vcmp.eq.f32.partialorder %v2501, 8.507059e+37
    %v2503 = vand.u32 %v2491, 2147483648
    %v2504 = vor.u32 1.1754944e-38, %v2503
    %v2505 = vsel %vm2502, %v2504, %v2500
    %v2506 = vmul.f32 %v2481, %v2505
    %v2507 = vmin.f32 %v2506, 1.0
    %v2508 = vmax.f32 %v2507, -1.0
    %v2509 = vmul.f32 %v693, %v693
    %v2510 = vmin.f32 16.0, %v2509
    %v2511 = vmul.f32 %v2510, 2.1237322e-06
    %v2512 = vadd.f32 %v2511, 0.00028619796
    %v2513 = vmul.f32 %v2510, %v2512
    %v2514 = vadd.f32 %v2513, 0.0036580483
    %v2515 = vmul.f32 %v2510, %v2514
    %v2516 = vadd.f32 %v2515, 0.05243302
    %v2517 = vmul.f32 %v2510, %v2516
    %v2518 = vadd.f32 %v2517, 0.18741608
    %v2519 = vmul.f32 %v2510, %v2518
    %v2520 = vadd.f32 %v2519, 1.1283791
    %v2521 = vmul.f32 %v693, %v2520
    %v2522 = vmul.f32 %v2510, 3.8918573e-05
    %v2523 = vadd.f32 %v2522, 0.001143296
    %v2524 = vmul.f32 %v2510, %v2523
    %v2525 = vadd.f32 %v2524, 0.014752088
    %v2526 = vmul.f32 %v2510, %v2525
    %v2527 = vadd.f32 %v2526, 0.112945676
    %v2528 = vmul.f32 %v2510, %v2527
    %v2529 = vadd.f32 %v2528, 0.4994258
    %v2530 = vmul.f32 %v2510, %v2529
    %v2531 = vadd.f32 %v2530, 1.0
    %v2532 = vrcp.pop %v2531
    %v2533 = vmul.f32 %v2531, %v2532
    %v2534 = vsub.f32 1.0, %v2533
    %v2535 = vmul.f32 %v2532, %v2534
    %v2536 = vadd.f32 %v2532, %v2535
    %vm2537 = vweird.f32 %v2531
    %vm2538 = vweird.f32 %v2532
    %vm2539 = vmor %vm2537, %vm2538
    %v2540 = vsel %vm2539, %v2532, %v2536
    %v2541 = vand.u32 2147483647, %v2531
    %vm2542 = vcmp.eq.f32.partialorder %v2541, 8.507059e+37
    %v2543 = vand.u32 %v2531, 2147483648
    %v2544 = vor.u32 1.1754944e-38, %v2543
    %v2545 = vsel %vm2542, %v2544, %v2540
    %v2546 = vmul.f32 %v2521, %v2545
    %v2547 = vmin.f32 %v2546, 1.0
    %v2548 = vmax.f32 %v2547, -1.0
    %v2549 = vmul.f32 %v694, %v694
    %v2550 = vmin.f32 16.0, %v2549
    %v2551 = vmul.f32 %v2550, 2.1237322e-06
    %v2552 = vadd.f32 %v2551, 0.00028619796
    %v2553 = vmul.f32 %v2550, %v2552
    %v2554 = vadd.f32 %v2553, 0.0036580483
    %v2555 = vmul.f32 %v2550, %v2554
    %v2556 = vadd.f32 %v2555, 0.05243302
    %v2557 = vmul.f32 %v2550, %v2556
    %v2558 = vadd.f32 %v2557, 0.18741608
    %v2559 = vmul.f32 %v2550, %v2558
    %v2560 = vadd.f32 %v2559, 1.1283791
    %v2561 = vmul.f32 %v694, %v2560
    %v2562 = vmul.f32 %v2550, 3.8918573e-05
    %v2563 = vadd.f32 %v2562, 0.001143296
    %v2564 = vmul.f32 %v2550, %v2563
    %v2565 = vadd.f32 %v2564, 0.014752088
    %v2566 = vmul.f32 %v2550, %v2565
    %v2567 = vadd.f32 %v2566, 0.112945676
    %v2568 = vmul.f32 %v2550, %v2567
    %v2569 = vadd.f32 %v2568, 0.4994258
    %v2570 = vmul.f32 %v2550, %v2569
    %v2571 = vadd.f32 %v2570, 1.0
    %v2572 = vrcp.pop %v2571
    %v2573 = vmul.f32 %v2571, %v2572
    %v2574 = vsub.f32 1.0, %v2573
    %v2575 = vmul.f32 %v2572, %v2574
    %v2576 = vadd.f32 %v2572, %v2575
    %vm2577 = vweird.f32 %v2571
    %vm2578 = vweird.f32 %v2572
    %vm2579 = vmor %vm2577, %vm2578
    %v2580 = vsel %vm2579, %v2572, %v2576
    %v2581 = vand.u32 2147483647, %v2571
    %vm2582 = vcmp.eq.f32.partialorder %v2581, 8.507059e+37
    %v2583 = vand.u32 %v2571, 2147483648
    %v2584 = vor.u32 1.1754944e-38, %v2583
    %v2585 = vsel %vm2582, %v2584, %v2580
    %v2586 = vmul.f32 %v2561, %v2585
    %v2587 = vmin.f32 %v2586, 1.0
    %v2588 = vmax.f32 %v2587, -1.0
    %v2589 = vmul.f32 %v695, %v695
    %v2590 = vmin.f32 16.0, %v2589
    %v2591 = vmul.f32 %v2590, 2.1237322e-06
    %v2592 = vadd.f32 %v2591, 0.00028619796
    %v2593 = vmul.f32 %v2590, %v2592
    %v2594 = vadd.f32 %v2593, 0.0036580483
    %v2595 = vmul.f32 %v2590, %v2594
    %v2596 = vadd.f32 %v2595, 0.05243302
    %v2597 = vmul.f32 %v2590, %v2596
    %v2598 = vadd.f32 %v2597, 0.18741608
    %v2599 = vmul.f32 %v2590, %v2598
    %v2600 = vadd.f32 %v2599, 1.1283791
    %v2601 = vmul.f32 %v695, %v2600
    %v2602 = vmul.f32 %v2590, 3.8918573e-05
    %v2603 = vadd.f32 %v2602, 0.001143296
    %v2604 = vmul.f32 %v2590, %v2603
    %v2605 = vadd.f32 %v2604, 0.014752088
    %v2606 = vmul.f32 %v2590, %v2605
    %v2607 = vadd.f32 %v2606, 0.112945676
    %v2608 = vmul.f32 %v2590, %v2607
    %v2609 = vadd.f32 %v2608, 0.4994258
    %v2610 = vmul.f32 %v2590, %v2609
    %v2611 = vadd.f32 %v2610, 1.0
    %v2612 = vrcp.pop %v2611
    %v2613 = vmul.f32 %v2611, %v2612
    %v2614 = vsub.f32 1.0, %v2613
    %v2615 = vmul.f32 %v2612, %v2614
    %v2616 = vadd.f32 %v2612, %v2615
    %vm2617 = vweird.f32 %v2611
    %vm2618 = vweird.f32 %v2612
    %vm2619 = vmor %vm2617, %vm2618
    %v2620 = vsel %vm2619, %v2612, %v2616
    %v2621 = vand.u32 2147483647, %v2611
    %vm2622 = vcmp.eq.f32.partialorder %v2621, 8.507059e+37
    %v2623 = vand.u32 %v2611, 2147483648
    %v2624 = vor.u32 1.1754944e-38, %v2623
    %v2625 = vsel %vm2622, %v2624, %v2620
    %v2626 = vmul.f32 %v2601, %v2625
    %v2627 = vmin.f32 %v2626, 1.0
    %v2628 = vmax.f32 %v2627, -1.0
    %v2629 = vmul.f32 %v696, %v696
    %v2630 = vmin.f32 16.0, %v2629
    %v2631 = vmul.f32 %v2630, 2.1237322e-06
    %v2632 = vadd.f32 %v2631, 0.00028619796
    %v2633 = vmul.f32 %v2630, %v2632
    %v2634 = vadd.f32 %v2633, 0.0036580483
    %v2635 = vmul.f32 %v2630, %v2634
    %v2636 = vadd.f32 %v2635, 0.05243302
    %v2637 = vmul.f32 %v2630, %v2636
    %v2638 = vadd.f32 %v2637, 0.18741608
    %v2639 = vmul.f32 %v2630, %v2638
    %v2640 = vadd.f32 %v2639, 1.1283791
    %v2641 = vmul.f32 %v696, %v2640
    %v2642 = vmul.f32 %v2630, 3.8918573e-05
    %v2643 = vadd.f32 %v2642, 0.001143296
    %v2644 = vmul.f32 %v2630, %v2643
    %v2645 = vadd.f32 %v2644, 0.014752088
    %v2646 = vmul.f32 %v2630, %v2645
    %v2647 = vadd.f32 %v2646, 0.112945676
    %v2648 = vmul.f32 %v2630, %v2647
    %v2649 = vadd.f32 %v2648, 0.4994258
    %v2650 = vmul.f32 %v2630, %v2649
    %v2651 = vadd.f32 %v2650, 1.0
    %v2652 = vrcp.pop %v2651
    %v2653 = vmul.f32 %v2651, %v2652
    %v2654 = vsub.f32 1.0, %v2653
    %v2655 = vmul.f32 %v2652, %v2654
    %v2656 = vadd.f32 %v2652, %v2655
    %vm2657 = vweird.f32 %v2651
    %vm2658 = vweird.f32 %v2652
    %vm2659 = vmor %vm2657, %vm2658
    %v2660 = vsel %vm2659, %v2652, %v2656
    %v2661 = vand.u32 2147483647, %v2651
    %vm2662 = vcmp.eq.f32.partialorder %v2661, 8.507059e+37
    %v2663 = vand.u32 %v2651, 2147483648
    %v2664 = vor.u32 1.1754944e-38, %v2663
    %v2665 = vsel %vm2662, %v2664, %v2660
    %v2666 = vmul.f32 %v2641, %v2665
    %v2667 = vmin.f32 %v2666, 1.0
    %v2668 = vmax.f32 %v2667, -1.0
    %v2669 = vmul.f32 %v697, %v697
    %v2670 = vmin.f32 16.0, %v2669
    %v2671 = vmul.f32 %v2670, 2.1237322e-06
    %v2672 = vadd.f32 %v2671, 0.00028619796
    %v2673 = vmul.f32 %v2670, %v2672
    %v2674 = vadd.f32 %v2673, 0.0036580483
    %v2675 = vmul.f32 %v2670, %v2674
    %v2676 = vadd.f32 %v2675, 0.05243302
    %v2677 = vmul.f32 %v2670, %v2676
    %v2678 = vadd.f32 %v2677, 0.18741608
    %v2679 = vmul.f32 %v2670, %v2678
    %v2680 = vadd.f32 %v2679, 1.1283791
    %v2681 = vmul.f32 %v697, %v2680
    %v2682 = vmul.f32 %v2670, 3.8918573e-05
    %v2683 = vadd.f32 %v2682, 0.001143296
    %v2684 = vmul.f32 %v2670, %v2683
    %v2685 = vadd.f32 %v2684, 0.014752088
    %v2686 = vmul.f32 %v2670, %v2685
    %v2687 = vadd.f32 %v2686, 0.112945676
    %v2688 = vmul.f32 %v2670, %v2687
    %v2689 = vadd.f32 %v2688, 0.4994258
    %v2690 = vmul.f32 %v2670, %v2689
    %v2691 = vadd.f32 %v2690, 1.0
    %v2692 = vrcp.pop %v2691
    %v2693 = vmul.f32 %v2691, %v2692
    %v2694 = vsub.f32 1.0, %v2693
    %v2695 = vmul.f32 %v2692, %v2694
    %v2696 = vadd.f32 %v2692, %v2695
    %vm2697 = vweird.f32 %v2691
    %vm2698 = vweird.f32 %v2692
    %vm2699 = vmor %vm2697, %vm2698
    %v2700 = vsel %vm2699, %v2692, %v2696
    %v2701 = vand.u32 2147483647, %v2691
    %vm2702 = vcmp.eq.f32.partialorder %v2701, 8.507059e+37
    %v2703 = vand.u32 %v2691, 2147483648
    %v2704 = vor.u32 1.1754944e-38, %v2703
    %v2705 = vsel %vm2702, %v2704, %v2700
    %v2706 = vmul.f32 %v2681, %v2705
    %v2707 = vmin.f32 %v2706, 1.0
    %v2708 = vmax.f32 %v2707, -1.0
    %v2709 = vmul.f32 %v698, %v698
    %v2710 = vmin.f32 16.0, %v2709
    %v2711 = vmul.f32 %v2710, 2.1237322e-06
    %v2712 = vadd.f32 %v2711, 0.00028619796
    %v2713 = vmul.f32 %v2710, %v2712
    %v2714 = vadd.f32 %v2713, 0.0036580483
    %v2715 = vmul.f32 %v2710, %v2714
    %v2716 = vadd.f32 %v2715, 0.05243302
    %v2717 = vmul.f32 %v2710, %v2716
    %v2718 = vadd.f32 %v2717, 0.18741608
    %v2719 = vmul.f32 %v2710, %v2718
    %v2720 = vadd.f32 %v2719, 1.1283791
    %v2721 = vmul.f32 %v698, %v2720
    %v2722 = vmul.f32 %v2710, 3.8918573e-05
    %v2723 = vadd.f32 %v2722, 0.001143296
    %v2724 = vmul.f32 %v2710, %v2723
    %v2725 = vadd.f32 %v2724, 0.014752088
    %v2726 = vmul.f32 %v2710, %v2725
    %v2727 = vadd.f32 %v2726, 0.112945676
    %v2728 = vmul.f32 %v2710, %v2727
    %v2729 = vadd.f32 %v2728, 0.4994258
    %v2730 = vmul.f32 %v2710, %v2729
    %v2731 = vadd.f32 %v2730, 1.0
    %v2732 = vrcp.pop %v2731
    %v2733 = vmul.f32 %v2731, %v2732
    %v2734 = vsub.f32 1.0, %v2733
    %v2735 = vmul.f32 %v2732, %v2734
    %v2736 = vadd.f32 %v2732, %v2735
    %vm2737 = vweird.f32 %v2731
    %vm2738 = vweird.f32 %v2732
    %vm2739 = vmor %vm2737, %vm2738
    %v2740 = vsel %vm2739, %v2732, %v2736
    %v2741 = vand.u32 2147483647, %v2731
    %vm2742 = vcmp.eq.f32.partialorder %v2741, 8.507059e+37
    %v2743 = vand.u32 %v2731, 2147483648
    %v2744 = vor.u32 1.1754944e-38, %v2743
    %v2745 = vsel %vm2742, %v2744, %v2740
    %v2746 = vmul.f32 %v2721, %v2745
    %v2747 = vmin.f32 %v2746, 1.0
    %v2748 = vmax.f32 %v2747, -1.0
    %v2749 = vmul.f32 %v699, %v699
    %v2750 = vmin.f32 16.0, %v2749
    %v2751 = vmul.f32 %v2750, 2.1237322e-06
    %v2752 = vadd.f32 %v2751, 0.00028619796
    %v2753 = vmul.f32 %v2750, %v2752
    %v2754 = vadd.f32 %v2753, 0.0036580483
    %v2755 = vmul.f32 %v2750, %v2754
    %v2756 = vadd.f32 %v2755, 0.05243302
    %v2757 = vmul.f32 %v2750, %v2756
    %v2758 = vadd.f32 %v2757, 0.18741608
    %v2759 = vmul.f32 %v2750, %v2758
    %v2760 = vadd.f32 %v2759, 1.1283791
    %v2761 = vmul.f32 %v699, %v2760
    %v2762 = vmul.f32 %v2750, 3.8918573e-05
    %v2763 = vadd.f32 %v2762, 0.001143296
    %v2764 = vmul.f32 %v2750, %v2763
    %v2765 = vadd.f32 %v2764, 0.014752088
    %v2766 = vmul.f32 %v2750, %v2765
    %v2767 = vadd.f32 %v2766, 0.112945676
    %v2768 = vmul.f32 %v2750, %v2767
    %v2769 = vadd.f32 %v2768, 0.4994258
    %v2770 = vmul.f32 %v2750, %v2769
    %v2771 = vadd.f32 %v2770, 1.0
    %v2772 = vrcp.pop %v2771
    %v2773 = vmul.f32 %v2771, %v2772
    %v2774 = vsub.f32 1.0, %v2773
    %v2775 = vmul.f32 %v2772, %v2774
    %v2776 = vadd.f32 %v2772, %v2775
    %vm2777 = vweird.f32 %v2771
    %vm2778 = vweird.f32 %v2772
    %vm2779 = vmor %vm2777, %vm2778
    %v2780 = vsel %vm2779, %v2772, %v2776
    %v2781 = vand.u32 2147483647, %v2771
    %vm2782 = vcmp.eq.f32.partialorder %v2781, 8.507059e+37
    %v2783 = vand.u32 %v2771, 2147483648
    %v2784 = vor.u32 1.1754944e-38, %v2783
    %v2785 = vsel %vm2782, %v2784, %v2780
    %v2786 = vmul.f32 %v2761, %v2785
    %v2787 = vmin.f32 %v2786, 1.0
    %v2788 = vmax.f32 %v2787, -1.0
    %v2789 = vmul.f32 %v700, %v700
    %v2790 = vmin.f32 16.0, %v2789
    %v2791 = vmul.f32 %v2790, 2.1237322e-06
    %v2792 = vadd.f32 %v2791, 0.00028619796
    %v2793 = vmul.f32 %v2790, %v2792
    %v2794 = vadd.f32 %v2793, 0.0036580483
    %v2795 = vmul.f32 %v2790, %v2794
    %v2796 = vadd.f32 %v2795, 0.05243302
    %v2797 = vmul.f32 %v2790, %v2796
    %v2798 = vadd.f32 %v2797, 0.18741608
    %v2799 = vmul.f32 %v2790, %v2798
    %v2800 = vadd.f32 %v2799, 1.1283791
    %v2801 = vmul.f32 %v700, %v2800
    %v2802 = vmul.f32 %v2790, 3.8918573e-05
    %v2803 = vadd.f32 %v2802, 0.001143296
    %v2804 = vmul.f32 %v2790, %v2803
    %v2805 = vadd.f32 %v2804, 0.014752088
    %v2806 = vmul.f32 %v2790, %v2805
    %v2807 = vadd.f32 %v2806, 0.112945676
    %v2808 = vmul.f32 %v2790, %v2807
    %v2809 = vadd.f32 %v2808, 0.4994258
    %v2810 = vmul.f32 %v2790, %v2809
    %v2811 = vadd.f32 %v2810, 1.0
    %v2812 = vrcp.pop %v2811
    %v2813 = vmul.f32 %v2811, %v2812
    %v2814 = vsub.f32 1.0, %v2813
    %v2815 = vmul.f32 %v2812, %v2814
    %v2816 = vadd.f32 %v2812, %v2815
    %vm2817 = vweird.f32 %v2811
    %vm2818 = vweird.f32 %v2812
    %vm2819 = vmor %vm2817, %vm2818
    %v2820 = vsel %vm2819, %v2812, %v2816
    %v2821 = vand.u32 2147483647, %v2811
    %vm2822 = vcmp.eq.f32.partialorder %v2821, 8.507059e+37
    %v2823 = vand.u32 %v2811, 2147483648
    %v2824 = vor.u32 1.1754944e-38, %v2823
    %v2825 = vsel %vm2822, %v2824, %v2820
    %v2826 = vmul.f32 %v2801, %v2825
    %v2827 = vmin.f32 %v2826, 1.0
    %v2828 = vmax.f32 %v2827, -1.0
    %v2829 = vmul.f32 %v701, %v701
    %v2830 = vmin.f32 16.0, %v2829
    %v2831 = vmul.f32 %v2830, 2.1237322e-06
    %v2832 = vadd.f32 %v2831, 0.00028619796
    %v2833 = vmul.f32 %v2830, %v2832
    %v2834 = vadd.f32 %v2833, 0.0036580483
    %v2835 = vmul.f32 %v2830, %v2834
    %v2836 = vadd.f32 %v2835, 0.05243302
    %v2837 = vmul.f32 %v2830, %v2836
    %v2838 = vadd.f32 %v2837, 0.18741608
    %v2839 = vmul.f32 %v2830, %v2838
    %v2840 = vadd.f32 %v2839, 1.1283791
    %v2841 = vmul.f32 %v701, %v2840
    %v2842 = vmul.f32 %v2830, 3.8918573e-05
    %v2843 = vadd.f32 %v2842, 0.001143296
    %v2844 = vmul.f32 %v2830, %v2843
    %v2845 = vadd.f32 %v2844, 0.014752088
    %v2846 = vmul.f32 %v2830, %v2845
    %v2847 = vadd.f32 %v2846, 0.112945676
    %v2848 = vmul.f32 %v2830, %v2847
    %v2849 = vadd.f32 %v2848, 0.4994258
    %v2850 = vmul.f32 %v2830, %v2849
    %v2851 = vadd.f32 %v2850, 1.0
    %v2852 = vrcp.pop %v2851
    %v2853 = vmul.f32 %v2851, %v2852
    %v2854 = vsub.f32 1.0, %v2853
    %v2855 = vmul.f32 %v2852, %v2854
    %v2856 = vadd.f32 %v2852, %v2855
    %vm2857 = vweird.f32 %v2851
    %vm2858 = vweird.f32 %v2852
    %vm2859 = vmor %vm2857, %vm2858
    %v2860 = vsel %vm2859, %v2852, %v2856
    %v2861 = vand.u32 2147483647, %v2851
    %vm2862 = vcmp.eq.f32.partialorder %v2861, 8.507059e+37
    %v2863 = vand.u32 %v2851, 2147483648
    %v2864 = vor.u32 1.1754944e-38, %v2863
    %v2865 = vsel %vm2862, %v2864, %v2860
    %v2866 = vmul.f32 %v2841, %v2865
    %v2867 = vmin.f32 %v2866, 1.0
    %v2868 = vmax.f32 %v2867, -1.0
    %v2869 = vmul.f32 %v702, %v702
    %v2870 = vmin.f32 16.0, %v2869
    %v2871 = vmul.f32 %v2870, 2.1237322e-06
    %v2872 = vadd.f32 %v2871, 0.00028619796
    %v2873 = vmul.f32 %v2870, %v2872
    %v2874 = vadd.f32 %v2873, 0.0036580483
    %v2875 = vmul.f32 %v2870, %v2874
    %v2876 = vadd.f32 %v2875, 0.05243302
    %v2877 = vmul.f32 %v2870, %v2876
    %v2878 = vadd.f32 %v2877, 0.18741608
    %v2879 = vmul.f32 %v2870, %v2878
    %v2880 = vadd.f32 %v2879, 1.1283791
    %v2881 = vmul.f32 %v702, %v2880
    %v2882 = vmul.f32 %v2870, 3.8918573e-05
    %v2883 = vadd.f32 %v2882, 0.001143296
    %v2884 = vmul.f32 %v2870, %v2883
    %v2885 = vadd.f32 %v2884, 0.014752088
    %v2886 = vmul.f32 %v2870, %v2885
    %v2887 = vadd.f32 %v2886, 0.112945676
    %v2888 = vmul.f32 %v2870, %v2887
    %v2889 = vadd.f32 %v2888, 0.4994258
    %v2890 = vmul.f32 %v2870, %v2889
    %v2891 = vadd.f32 %v2890, 1.0
    %v2892 = vrcp.pop %v2891
    %v2893 = vmul.f32 %v2891, %v2892
    %v2894 = vsub.f32 1.0, %v2893
    %v2895 = vmul.f32 %v2892, %v2894
    %v2896 = vadd.f32 %v2892, %v2895
    %vm2897 = vweird.f32 %v2891
    %vm2898 = vweird.f32 %v2892
    %vm2899 = vmor %vm2897, %vm2898
    %v2900 = vsel %vm2899, %v2892, %v2896
    %v2901 = vand.u32 2147483647, %v2891
    %vm2902 = vcmp.eq.f32.partialorder %v2901, 8.507059e+37
    %v2903 = vand.u32 %v2891, 2147483648
    %v2904 = vor.u32 1.1754944e-38, %v2903
    %v2905 = vsel %vm2902, %v2904, %v2900
    %v2906 = vmul.f32 %v2881, %v2905
    %v2907 = vmin.f32 %v2906, 1.0
    %v2908 = vmax.f32 %v2907, -1.0
    %v2909 = vmul.f32 %v703, %v703
    %v2910 = vmin.f32 16.0, %v2909
    %v2911 = vmul.f32 %v2910, 2.1237322e-06
    %v2912 = vadd.f32 %v2911, 0.00028619796
    %v2913 = vmul.f32 %v2910, %v2912
    %v2914 = vadd.f32 %v2913, 0.0036580483
    %v2915 = vmul.f32 %v2910, %v2914
    %v2916 = vadd.f32 %v2915, 0.05243302
    %v2917 = vmul.f32 %v2910, %v2916
    %v2918 = vadd.f32 %v2917, 0.18741608
    %v2919 = vmul.f32 %v2910, %v2918
    %v2920 = vadd.f32 %v2919, 1.1283791
    %v2921 = vmul.f32 %v703, %v2920
    %v2922 = vmul.f32 %v2910, 3.8918573e-05
    %v2923 = vadd.f32 %v2922, 0.001143296
    %v2924 = vmul.f32 %v2910, %v2923
    %v2925 = vadd.f32 %v2924, 0.014752088
    %v2926 = vmul.f32 %v2910, %v2925
    %v2927 = vadd.f32 %v2926, 0.112945676
    %v2928 = vmul.f32 %v2910, %v2927
    %v2929 = vadd.f32 %v2928, 0.4994258
    %v2930 = vmul.f32 %v2910, %v2929
    %v2931 = vadd.f32 %v2930, 1.0
    %v2932 = vrcp.pop %v2931
    %v2933 = vmul.f32 %v2931, %v2932
    %v2934 = vsub.f32 1.0, %v2933
    %v2935 = vmul.f32 %v2932, %v2934
    %v2936 = vadd.f32 %v2932, %v2935
    %vm2937 = vweird.f32 %v2931
    %vm2938 = vweird.f32 %v2932
    %vm2939 = vmor %vm2937, %vm2938
    %v2940 = vsel %vm2939, %v2932, %v2936
    %v2941 = vand.u32 2147483647, %v2931
    %vm2942 = vcmp.eq.f32.partialorder %v2941, 8.507059e+37
    %v2943 = vand.u32 %v2931, 2147483648
    %v2944 = vor.u32 1.1754944e-38, %v2943
    %v2945 = vsel %vm2942, %v2944, %v2940
    %v2946 = vmul.f32 %v2921, %v2945
    %v2947 = vmin.f32 %v2946, 1.0
    %v2948 = vmax.f32 %v2947, -1.0
    %v2949 = vmul.f32 %v704, %v704
    %v2950 = vmin.f32 16.0, %v2949
    %v2951 = vmul.f32 %v2950, 2.1237322e-06
    %v2952 = vadd.f32 %v2951, 0.00028619796
    %v2953 = vmul.f32 %v2950, %v2952
    %v2954 = vadd.f32 %v2953, 0.0036580483
    %v2955 = vmul.f32 %v2950, %v2954
    %v2956 = vadd.f32 %v2955, 0.05243302
    %v2957 = vmul.f32 %v2950, %v2956
    %v2958 = vadd.f32 %v2957, 0.18741608
    %v2959 = vmul.f32 %v2950, %v2958
    %v2960 = vadd.f32 %v2959, 1.1283791
    %v2961 = vmul.f32 %v704, %v2960
    %v2962 = vmul.f32 %v2950, 3.8918573e-05
    %v2963 = vadd.f32 %v2962, 0.001143296
    %v2964 = vmul.f32 %v2950, %v2963
    %v2965 = vadd.f32 %v2964, 0.014752088
    %v2966 = vmul.f32 %v2950, %v2965
    %v2967 = vadd.f32 %v2966, 0.112945676
    %v2968 = vmul.f32 %v2950, %v2967
    %v2969 = vadd.f32 %v2968, 0.4994258
    %v2970 = vmul.f32 %v2950, %v2969
    %v2971 = vadd.f32 %v2970, 1.0
    %v2972 = vrcp.pop %v2971
    %v2973 = vmul.f32 %v2971, %v2972
    %v2974 = vsub.f32 1.0, %v2973
    %v2975 = vmul.f32 %v2972, %v2974
    %v2976 = vadd.f32 %v2972, %v2975
    %vm2977 = vweird.f32 %v2971
    %vm2978 = vweird.f32 %v2972
    %vm2979 = vmor %vm2977, %vm2978
    %v2980 = vsel %vm2979, %v2972, %v2976
    %v2981 = vand.u32 2147483647, %v2971
    %vm2982 = vcmp.eq.f32.partialorder %v2981, 8.507059e+37
    %v2983 = vand.u32 %v2971, 2147483648
    %v2984 = vor.u32 1.1754944e-38, %v2983
    %v2985 = vsel %vm2982, %v2984, %v2980
    %v2986 = vmul.f32 %v2961, %v2985
    %v2987 = vmin.f32 %v2986, 1.0
    %v2988 = vmax.f32 %v2987, -1.0
    %v2989 = vmul.f32 %v705, %v705
    %v2990 = vmin.f32 16.0, %v2989
    %v2991 = vmul.f32 %v2990, 2.1237322e-06
    %v2992 = vadd.f32 %v2991, 0.00028619796
    %v2993 = vmul.f32 %v2990, %v2992
    %v2994 = vadd.f32 %v2993, 0.0036580483
    %v2995 = vmul.f32 %v2990, %v2994
    %v2996 = vadd.f32 %v2995, 0.05243302
    %v2997 = vmul.f32 %v2990, %v2996
    %v2998 = vadd.f32 %v2997, 0.18741608
    %v2999 = vmul.f32 %v2990, %v2998
    %v3000 = vadd.f32 %v2999, 1.1283791
    %v3001 = vmul.f32 %v705, %v3000
    %v3002 = vmul.f32 %v2990, 3.8918573e-05
    %v3003 = vadd.f32 %v3002, 0.001143296
    %v3004 = vmul.f32 %v2990, %v3003
    %v3005 = vadd.f32 %v3004, 0.014752088
    %v3006 = vmul.f32 %v2990, %v3005
    %v3007 = vadd.f32 %v3006, 0.112945676
    %v3008 = vmul.f32 %v2990, %v3007
    %v3009 = vadd.f32 %v3008, 0.4994258
    %v3010 = vmul.f32 %v2990, %v3009
    %v3011 = vadd.f32 %v3010, 1.0
    %v3012 = vrcp.pop %v3011
    %v3013 = vmul.f32 %v3011, %v3012
    %v3014 = vsub.f32 1.0, %v3013
    %v3015 = vmul.f32 %v3012, %v3014
    %v3016 = vadd.f32 %v3012, %v3015
    %vm3017 = vweird.f32 %v3011
    %vm3018 = vweird.f32 %v3012
    %vm3019 = vmor %vm3017, %vm3018
    %v3020 = vsel %vm3019, %v3012, %v3016
    %v3021 = vand.u32 2147483647, %v3011
    %vm3022 = vcmp.eq.f32.partialorder %v3021, 8.507059e+37
    %v3023 = vand.u32 %v3011, 2147483648
    %v3024 = vor.u32 1.1754944e-38, %v3023
    %v3025 = vsel %vm3022, %v3024, %v3020
    %v3026 = vmul.f32 %v3001, %v3025
    %v3027 = vmin.f32 %v3026, 1.0
    %v3028 = vmax.f32 %v3027, -1.0
    %v3029 = vmul.f32 %v706, %v706
    %v3030 = vmin.f32 16.0, %v3029
    %v3031 = vmul.f32 %v3030, 2.1237322e-06
    %v3032 = vadd.f32 %v3031, 0.00028619796
    %v3033 = vmul.f32 %v3030, %v3032
    %v3034 = vadd.f32 %v3033, 0.0036580483
    %v3035 = vmul.f32 %v3030, %v3034
    %v3036 = vadd.f32 %v3035, 0.05243302
    %v3037 = vmul.f32 %v3030, %v3036
    %v3038 = vadd.f32 %v3037, 0.18741608
    %v3039 = vmul.f32 %v3030, %v3038
    %v3040 = vadd.f32 %v3039, 1.1283791
    %v3041 = vmul.f32 %v706, %v3040
    %v3042 = vmul.f32 %v3030, 3.8918573e-05
    %v3043 = vadd.f32 %v3042, 0.001143296
    %v3044 = vmul.f32 %v3030, %v3043
    %v3045 = vadd.f32 %v3044, 0.014752088
    %v3046 = vmul.f32 %v3030, %v3045
    %v3047 = vadd.f32 %v3046, 0.112945676
    %v3048 = vmul.f32 %v3030, %v3047
    %v3049 = vadd.f32 %v3048, 0.4994258
    %v3050 = vmul.f32 %v3030, %v3049
    %v3051 = vadd.f32 %v3050, 1.0
    %v3052 = vrcp.pop %v3051
    %v3053 = vmul.f32 %v3051, %v3052
    %v3054 = vsub.f32 1.0, %v3053
    %v3055 = vmul.f32 %v3052, %v3054
    %v3056 = vadd.f32 %v3052, %v3055
    %vm3057 = vweird.f32 %v3051
    %vm3058 = vweird.f32 %v3052
    %vm3059 = vmor %vm3057, %vm3058
    %v3060 = vsel %vm3059, %v3052, %v3056
    %v3061 = vand.u32 2147483647, %v3051
    %vm3062 = vcmp.eq.f32.partialorder %v3061, 8.507059e+37
    %v3063 = vand.u32 %v3051, 2147483648
    %v3064 = vor.u32 1.1754944e-38, %v3063
    %v3065 = vsel %vm3062, %v3064, %v3060
    %v3066 = vmul.f32 %v3041, %v3065
    %v3067 = vmin.f32 %v3066, 1.0
    %v3068 = vmax.f32 %v3067, -1.0
    %v3069 = vmul.f32 %v707, %v707
    %v3070 = vmin.f32 16.0, %v3069
    %v3071 = vmul.f32 %v3070, 2.1237322e-06
    %v3072 = vadd.f32 %v3071, 0.00028619796
    %v3073 = vmul.f32 %v3070, %v3072
    %v3074 = vadd.f32 %v3073, 0.0036580483
    %v3075 = vmul.f32 %v3070, %v3074
    %v3076 = vadd.f32 %v3075, 0.05243302
    %v3077 = vmul.f32 %v3070, %v3076
    %v3078 = vadd.f32 %v3077, 0.18741608
    %v3079 = vmul.f32 %v3070, %v3078
    %v3080 = vadd.f32 %v3079, 1.1283791
    %v3081 = vmul.f32 %v707, %v3080
    %v3082 = vmul.f32 %v3070, 3.8918573e-05
    %v3083 = vadd.f32 %v3082, 0.001143296
    %v3084 = vmul.f32 %v3070, %v3083
    %v3085 = vadd.f32 %v3084, 0.014752088
    %v3086 = vmul.f32 %v3070, %v3085
    %v3087 = vadd.f32 %v3086, 0.112945676
    %v3088 = vmul.f32 %v3070, %v3087
    %v3089 = vadd.f32 %v3088, 0.4994258
    %v3090 = vmul.f32 %v3070, %v3089
    %v3091 = vadd.f32 %v3090, 1.0
    %v3092 = vrcp.pop %v3091
    %v3093 = vmul.f32 %v3091, %v3092
    %v3094 = vsub.f32 1.0, %v3093
    %v3095 = vmul.f32 %v3092, %v3094
    %v3096 = vadd.f32 %v3092, %v3095
    %vm3097 = vweird.f32 %v3091
    %vm3098 = vweird.f32 %v3092
    %vm3099 = vmor %vm3097, %vm3098
    %v3100 = vsel %vm3099, %v3092, %v3096
    %v3101 = vand.u32 2147483647, %v3091
    %vm3102 = vcmp.eq.f32.partialorder %v3101, 8.507059e+37
    %v3103 = vand.u32 %v3091, 2147483648
    %v3104 = vor.u32 1.1754944e-38, %v3103
    %v3105 = vsel %vm3102, %v3104, %v3100
    %v3106 = vmul.f32 %v3081, %v3105
    %v3107 = vmin.f32 %v3106, 1.0
    %v3108 = vmax.f32 %v3107, -1.0
    %v3109 = vmul.f32 %v708, %v708
    %v3110 = vmin.f32 16.0, %v3109
    %v3111 = vmul.f32 %v3110, 2.1237322e-06
    %v3112 = vadd.f32 %v3111, 0.00028619796
    %v3113 = vmul.f32 %v3110, %v3112
    %v3114 = vadd.f32 %v3113, 0.0036580483
    %v3115 = vmul.f32 %v3110, %v3114
    %v3116 = vadd.f32 %v3115, 0.05243302
    %v3117 = vmul.f32 %v3110, %v3116
    %v3118 = vadd.f32 %v3117, 0.18741608
    %v3119 = vmul.f32 %v3110, %v3118
    %v3120 = vadd.f32 %v3119, 1.1283791
    %v3121 = vmul.f32 %v708, %v3120
    %v3122 = vmul.f32 %v3110, 3.8918573e-05
    %v3123 = vadd.f32 %v3122, 0.001143296
    %v3124 = vmul.f32 %v3110, %v3123
    %v3125 = vadd.f32 %v3124, 0.014752088
    %v3126 = vmul.f32 %v3110, %v3125
    %v3127 = vadd.f32 %v3126, 0.112945676
    %v3128 = vmul.f32 %v3110, %v3127
    %v3129 = vadd.f32 %v3128, 0.4994258
    %v3130 = vmul.f32 %v3110, %v3129
    %v3131 = vadd.f32 %v3130, 1.0
    %v3132 = vrcp.pop %v3131
    %v3133 = vmul.f32 %v3131, %v3132
    %v3134 = vsub.f32 1.0, %v3133
    %v3135 = vmul.f32 %v3132, %v3134
    %v3136 = vadd.f32 %v3132, %v3135
    %vm3137 = vweird.f32 %v3131
    %vm3138 = vweird.f32 %v3132
    %vm3139 = vmor %vm3137, %vm3138
    %v3140 = vsel %vm3139, %v3132, %v3136
    %v3141 = vand.u32 2147483647, %v3131
    %vm3142 = vcmp.eq.f32.partialorder %v3141, 8.507059e+37
    %v3143 = vand.u32 %v3131, 2147483648
    %v3144 = vor.u32 1.1754944e-38, %v3143
    %v3145 = vsel %vm3142, %v3144, %v3140
    %v3146 = vmul.f32 %v3121, %v3145
    %v3147 = vmin.f32 %v3146, 1.0
    %v3148 = vmax.f32 %v3147, -1.0
    %v3149 = vmul.f32 %v709, %v709
    %v3150 = vmin.f32 16.0, %v3149
    %v3151 = vmul.f32 %v3150, 2.1237322e-06
    %v3152 = vadd.f32 %v3151, 0.00028619796
    %v3153 = vmul.f32 %v3150, %v3152
    %v3154 = vadd.f32 %v3153, 0.0036580483
    %v3155 = vmul.f32 %v3150, %v3154
    %v3156 = vadd.f32 %v3155, 0.05243302
    %v3157 = vmul.f32 %v3150, %v3156
    %v3158 = vadd.f32 %v3157, 0.18741608
    %v3159 = vmul.f32 %v3150, %v3158
    %v3160 = vadd.f32 %v3159, 1.1283791
    %v3161 = vmul.f32 %v709, %v3160
    %v3162 = vmul.f32 %v3150, 3.8918573e-05
    %v3163 = vadd.f32 %v3162, 0.001143296
    %v3164 = vmul.f32 %v3150, %v3163
    %v3165 = vadd.f32 %v3164, 0.014752088
    %v3166 = vmul.f32 %v3150, %v3165
    %v3167 = vadd.f32 %v3166, 0.112945676
    %v3168 = vmul.f32 %v3150, %v3167
    %v3169 = vadd.f32 %v3168, 0.4994258
    %v3170 = vmul.f32 %v3150, %v3169
    %v3171 = vadd.f32 %v3170, 1.0
    %v3172 = vrcp.pop %v3171
    %v3173 = vmul.f32 %v3171, %v3172
    %v3174 = vsub.f32 1.0, %v3173
    %v3175 = vmul.f32 %v3172, %v3174
    %v3176 = vadd.f32 %v3172, %v3175
    %vm3177 = vweird.f32 %v3171
    %vm3178 = vweird.f32 %v3172
    %vm3179 = vmor %vm3177, %vm3178
    %v3180 = vsel %vm3179, %v3172, %v3176
    %v3181 = vand.u32 2147483647, %v3171
    %vm3182 = vcmp.eq.f32.partialorder %v3181, 8.507059e+37
    %v3183 = vand.u32 %v3171, 2147483648
    %v3184 = vor.u32 1.1754944e-38, %v3183
    %v3185 = vsel %vm3182, %v3184, %v3180
    %v3186 = vmul.f32 %v3161, %v3185
    %v3187 = vmin.f32 %v3186, 1.0
    %v3188 = vmax.f32 %v3187, -1.0
    %v3189 = vmul.f32 %v710, %v710
    %v3190 = vmin.f32 16.0, %v3189
    %v3191 = vmul.f32 %v3190, 2.1237322e-06
    %v3192 = vadd.f32 %v3191, 0.00028619796
    %v3193 = vmul.f32 %v3190, %v3192
    %v3194 = vadd.f32 %v3193, 0.0036580483
    %v3195 = vmul.f32 %v3190, %v3194
    %v3196 = vadd.f32 %v3195, 0.05243302
    %v3197 = vmul.f32 %v3190, %v3196
    %v3198 = vadd.f32 %v3197, 0.18741608
    %v3199 = vmul.f32 %v3190, %v3198
    %v3200 = vadd.f32 %v3199, 1.1283791
    %v3201 = vmul.f32 %v710, %v3200
    %v3202 = vmul.f32 %v3190, 3.8918573e-05
    %v3203 = vadd.f32 %v3202, 0.001143296
    %v3204 = vmul.f32 %v3190, %v3203
    %v3205 = vadd.f32 %v3204, 0.014752088
    %v3206 = vmul.f32 %v3190, %v3205
    %v3207 = vadd.f32 %v3206, 0.112945676
    %v3208 = vmul.f32 %v3190, %v3207
    %v3209 = vadd.f32 %v3208, 0.4994258
    %v3210 = vmul.f32 %v3190, %v3209
    %v3211 = vadd.f32 %v3210, 1.0
    %v3212 = vrcp.pop %v3211
    %v3213 = vmul.f32 %v3211, %v3212
    %v3214 = vsub.f32 1.0, %v3213
    %v3215 = vmul.f32 %v3212, %v3214
    %v3216 = vadd.f32 %v3212, %v3215
    %vm3217 = vweird.f32 %v3211
    %vm3218 = vweird.f32 %v3212
    %vm3219 = vmor %vm3217, %vm3218
    %v3220 = vsel %vm3219, %v3212, %v3216
    %v3221 = vand.u32 2147483647, %v3211
    %vm3222 = vcmp.eq.f32.partialorder %v3221, 8.507059e+37
    %v3223 = vand.u32 %v3211, 2147483648
    %v3224 = vor.u32 1.1754944e-38, %v3223
    %v3225 = vsel %vm3222, %v3224, %v3220
    %v3226 = vmul.f32 %v3201, %v3225
    %v3227 = vmin.f32 %v3226, 1.0
    %v3228 = vmax.f32 %v3227, -1.0
    %v3229 = vmul.f32 %v711, %v711
    %v3230 = vmin.f32 16.0, %v3229
    %v3231 = vmul.f32 %v3230, 2.1237322e-06
    %v3232 = vadd.f32 %v3231, 0.00028619796
    %v3233 = vmul.f32 %v3230, %v3232
    %v3234 = vadd.f32 %v3233, 0.0036580483
    %v3235 = vmul.f32 %v3230, %v3234
    %v3236 = vadd.f32 %v3235, 0.05243302
    %v3237 = vmul.f32 %v3230, %v3236
    %v3238 = vadd.f32 %v3237, 0.18741608
    %v3239 = vmul.f32 %v3230, %v3238
    %v3240 = vadd.f32 %v3239, 1.1283791
    %v3241 = vmul.f32 %v711, %v3240
    %v3242 = vmul.f32 %v3230, 3.8918573e-05
    %v3243 = vadd.f32 %v3242, 0.001143296
    %v3244 = vmul.f32 %v3230, %v3243
    %v3245 = vadd.f32 %v3244, 0.014752088
    %v3246 = vmul.f32 %v3230, %v3245
    %v3247 = vadd.f32 %v3246, 0.112945676
    %v3248 = vmul.f32 %v3230, %v3247
    %v3249 = vadd.f32 %v3248, 0.4994258
    %v3250 = vmul.f32 %v3230, %v3249
    %v3251 = vadd.f32 %v3250, 1.0
    %v3252 = vrcp.pop %v3251
    %v3253 = vmul.f32 %v3251, %v3252
    %v3254 = vsub.f32 1.0, %v3253
    %v3255 = vmul.f32 %v3252, %v3254
    %v3256 = vadd.f32 %v3252, %v3255
    %vm3257 = vweird.f32 %v3251
    %vm3258 = vweird.f32 %v3252
    %vm3259 = vmor %vm3257, %vm3258
    %v3260 = vsel %vm3259, %v3252, %v3256
    %v3261 = vand.u32 2147483647, %v3251
    %vm3262 = vcmp.eq.f32.partialorder %v3261, 8.507059e+37
    %v3263 = vand.u32 %v3251, 2147483648
    %v3264 = vor.u32 1.1754944e-38, %v3263
    %v3265 = vsel %vm3262, %v3264, %v3260
    %v3266 = vmul.f32 %v3241, %v3265
    %v3267 = vmin.f32 %v3266, 1.0
    %v3268 = vmax.f32 %v3267, -1.0
    %v3269 = vmul.f32 %v712, %v712
    %v3270 = vmin.f32 16.0, %v3269
    %v3271 = vmul.f32 %v3270, 2.1237322e-06
    %v3272 = vadd.f32 %v3271, 0.00028619796
    %v3273 = vmul.f32 %v3270, %v3272
    %v3274 = vadd.f32 %v3273, 0.0036580483
    %v3275 = vmul.f32 %v3270, %v3274
    %v3276 = vadd.f32 %v3275, 0.05243302
    %v3277 = vmul.f32 %v3270, %v3276
    %v3278 = vadd.f32 %v3277, 0.18741608
    %v3279 = vmul.f32 %v3270, %v3278
    %v3280 = vadd.f32 %v3279, 1.1283791
    %v3281 = vmul.f32 %v712, %v3280
    %v3282 = vmul.f32 %v3270, 3.8918573e-05
    %v3283 = vadd.f32 %v3282, 0.001143296
    %v3284 = vmul.f32 %v3270, %v3283
    %v3285 = vadd.f32 %v3284, 0.014752088
    %v3286 = vmul.f32 %v3270, %v3285
    %v3287 = vadd.f32 %v3286, 0.112945676
    %v3288 = vmul.f32 %v3270, %v3287
    %v3289 = vadd.f32 %v3288, 0.4994258
    %v3290 = vmul.f32 %v3270, %v3289
    %v3291 = vadd.f32 %v3290, 1.0
    %v3292 = vrcp.pop %v3291
    %v3293 = vmul.f32 %v3291, %v3292
    %v3294 = vsub.f32 1.0, %v3293
    %v3295 = vmul.f32 %v3292, %v3294
    %v3296 = vadd.f32 %v3292, %v3295
    %vm3297 = vweird.f32 %v3291
    %vm3298 = vweird.f32 %v3292
    %vm3299 = vmor %vm3297, %vm3298
    %v3300 = vsel %vm3299, %v3292, %v3296
    %v3301 = vand.u32 2147483647, %v3291
    %vm3302 = vcmp.eq.f32.partialorder %v3301, 8.507059e+37
    %v3303 = vand.u32 %v3291, 2147483648
    %v3304 = vor.u32 1.1754944e-38, %v3303
    %v3305 = vsel %vm3302, %v3304, %v3300
    %v3306 = vmul.f32 %v3281, %v3305
    %v3307 = vmin.f32 %v3306, 1.0
    %v3308 = vmax.f32 %v3307, -1.0
    %v3309 = vmul.f32 %v713, %v713
    %v3310 = vmin.f32 16.0, %v3309
    %v3311 = vmul.f32 %v3310, 2.1237322e-06
    %v3312 = vadd.f32 %v3311, 0.00028619796
    %v3313 = vmul.f32 %v3310, %v3312
    %v3314 = vadd.f32 %v3313, 0.0036580483
    %v3315 = vmul.f32 %v3310, %v3314
    %v3316 = vadd.f32 %v3315, 0.05243302
    %v3317 = vmul.f32 %v3310, %v3316
    %v3318 = vadd.f32 %v3317, 0.18741608
    %v3319 = vmul.f32 %v3310, %v3318
    %v3320 = vadd.f32 %v3319, 1.1283791
    %v3321 = vmul.f32 %v713, %v3320
    %v3322 = vmul.f32 %v3310, 3.8918573e-05
    %v3323 = vadd.f32 %v3322, 0.001143296
    %v3324 = vmul.f32 %v3310, %v3323
    %v3325 = vadd.f32 %v3324, 0.014752088
    %v3326 = vmul.f32 %v3310, %v3325
    %v3327 = vadd.f32 %v3326, 0.112945676
    %v3328 = vmul.f32 %v3310, %v3327
    %v3329 = vadd.f32 %v3328, 0.4994258
    %v3330 = vmul.f32 %v3310, %v3329
    %v3331 = vadd.f32 %v3330, 1.0
    %v3332 = vrcp.pop %v3331
    %v3333 = vmul.f32 %v3331, %v3332
    %v3334 = vsub.f32 1.0, %v3333
    %v3335 = vmul.f32 %v3332, %v3334
    %v3336 = vadd.f32 %v3332, %v3335
    %vm3337 = vweird.f32 %v3331
    %vm3338 = vweird.f32 %v3332
    %vm3339 = vmor %vm3337, %vm3338
    %v3340 = vsel %vm3339, %v3332, %v3336
    %v3341 = vand.u32 2147483647, %v3331
    %vm3342 = vcmp.eq.f32.partialorder %v3341, 8.507059e+37
    %v3343 = vand.u32 %v3331, 2147483648
    %v3344 = vor.u32 1.1754944e-38, %v3343
    %v3345 = vsel %vm3342, %v3344, %v3340
    %v3346 = vmul.f32 %v3321, %v3345
    %v3347 = vmin.f32 %v3346, 1.0
    %v3348 = vmax.f32 %v3347, -1.0
    %v3349 = vmul.f32 %v714, %v714
    %v3350 = vmin.f32 16.0, %v3349
    %v3351 = vmul.f32 %v3350, 2.1237322e-06
    %v3352 = vadd.f32 %v3351, 0.00028619796
    %v3353 = vmul.f32 %v3350, %v3352
    %v3354 = vadd.f32 %v3353, 0.0036580483
    %v3355 = vmul.f32 %v3350, %v3354
    %v3356 = vadd.f32 %v3355, 0.05243302
    %v3357 = vmul.f32 %v3350, %v3356
    %v3358 = vadd.f32 %v3357, 0.18741608
    %v3359 = vmul.f32 %v3350, %v3358
    %v3360 = vadd.f32 %v3359, 1.1283791
    %v3361 = vmul.f32 %v714, %v3360
    %v3362 = vmul.f32 %v3350, 3.8918573e-05
    %v3363 = vadd.f32 %v3362, 0.001143296
    %v3364 = vmul.f32 %v3350, %v3363
    %v3365 = vadd.f32 %v3364, 0.014752088
    %v3366 = vmul.f32 %v3350, %v3365
    %v3367 = vadd.f32 %v3366, 0.112945676
    %v3368 = vmul.f32 %v3350, %v3367
    %v3369 = vadd.f32 %v3368, 0.4994258
    %v3370 = vmul.f32 %v3350, %v3369
    %v3371 = vadd.f32 %v3370, 1.0
    %v3372 = vrcp.pop %v3371
    %v3373 = vmul.f32 %v3371, %v3372
    %v3374 = vsub.f32 1.0, %v3373
    %v3375 = vmul.f32 %v3372, %v3374
    %v3376 = vadd.f32 %v3372, %v3375
    %vm3377 = vweird.f32 %v3371
    %vm3378 = vweird.f32 %v3372
    %vm3379 = vmor %vm3377, %vm3378
    %v3380 = vsel %vm3379, %v3372, %v3376
    %v3381 = vand.u32 2147483647, %v3371
    %vm3382 = vcmp.eq.f32.partialorder %v3381, 8.507059e+37
    %v3383 = vand.u32 %v3371, 2147483648
    %v3384 = vor.u32 1.1754944e-38, %v3383
    %v3385 = vsel %vm3382, %v3384, %v3380
    %v3386 = vmul.f32 %v3361, %v3385
    %v3387 = vmin.f32 %v3386, 1.0
    %v3388 = vmax.f32 %v3387, -1.0
    %v3389 = vmul.f32 %v715, %v715
    %v3390 = vmin.f32 16.0, %v3389
    %v3391 = vmul.f32 %v3390, 2.1237322e-06
    %v3392 = vadd.f32 %v3391, 0.00028619796
    %v3393 = vmul.f32 %v3390, %v3392
    %v3394 = vadd.f32 %v3393, 0.0036580483
    %v3395 = vmul.f32 %v3390, %v3394
    %v3396 = vadd.f32 %v3395, 0.05243302
    %v3397 = vmul.f32 %v3390, %v3396
    %v3398 = vadd.f32 %v3397, 0.18741608
    %v3399 = vmul.f32 %v3390, %v3398
    %v3400 = vadd.f32 %v3399, 1.1283791
    %v3401 = vmul.f32 %v715, %v3400
    %v3402 = vmul.f32 %v3390, 3.8918573e-05
    %v3403 = vadd.f32 %v3402, 0.001143296
    %v3404 = vmul.f32 %v3390, %v3403
    %v3405 = vadd.f32 %v3404, 0.014752088
    %v3406 = vmul.f32 %v3390, %v3405
    %v3407 = vadd.f32 %v3406, 0.112945676
    %v3408 = vmul.f32 %v3390, %v3407
    %v3409 = vadd.f32 %v3408, 0.4994258
    %v3410 = vmul.f32 %v3390, %v3409
    %v3411 = vadd.f32 %v3410, 1.0
    %v3412 = vrcp.pop %v3411
    %v3413 = vmul.f32 %v3411, %v3412
    %v3414 = vsub.f32 1.0, %v3413
    %v3415 = vmul.f32 %v3412, %v3414
    %v3416 = vadd.f32 %v3412, %v3415
    %vm3417 = vweird.f32 %v3411
    %vm3418 = vweird.f32 %v3412
    %vm3419 = vmor %vm3417, %vm3418
    %v3420 = vsel %vm3419, %v3412, %v3416
    %v3421 = vand.u32 2147483647, %v3411
    %vm3422 = vcmp.eq.f32.partialorder %v3421, 8.507059e+37
    %v3423 = vand.u32 %v3411, 2147483648
    %v3424 = vor.u32 1.1754944e-38, %v3423
    %v3425 = vsel %vm3422, %v3424, %v3420
    %v3426 = vmul.f32 %v3401, %v3425
    %v3427 = vmin.f32 %v3426, 1.0
    %v3428 = vmax.f32 %v3427, -1.0
    %v3429 = vmul.f32 %v716, %v716
    %v3430 = vmin.f32 16.0, %v3429
    %v3431 = vmul.f32 %v3430, 2.1237322e-06
    %v3432 = vadd.f32 %v3431, 0.00028619796
    %v3433 = vmul.f32 %v3430, %v3432
    %v3434 = vadd.f32 %v3433, 0.0036580483
    %v3435 = vmul.f32 %v3430, %v3434
    %v3436 = vadd.f32 %v3435, 0.05243302
    %v3437 = vmul.f32 %v3430, %v3436
    %v3438 = vadd.f32 %v3437, 0.18741608
    %v3439 = vmul.f32 %v3430, %v3438
    %v3440 = vadd.f32 %v3439, 1.1283791
    %v3441 = vmul.f32 %v716, %v3440
    %v3442 = vmul.f32 %v3430, 3.8918573e-05
    %v3443 = vadd.f32 %v3442, 0.001143296
    %v3444 = vmul.f32 %v3430, %v3443
    %v3445 = vadd.f32 %v3444, 0.014752088
    %v3446 = vmul.f32 %v3430, %v3445
    %v3447 = vadd.f32 %v3446, 0.112945676
    %v3448 = vmul.f32 %v3430, %v3447
    %v3449 = vadd.f32 %v3448, 0.4994258
    %v3450 = vmul.f32 %v3430, %v3449
    %v3451 = vadd.f32 %v3450, 1.0
    %v3452 = vrcp.pop %v3451
    %v3453 = vmul.f32 %v3451, %v3452
    %v3454 = vsub.f32 1.0, %v3453
    %v3455 = vmul.f32 %v3452, %v3454
    %v3456 = vadd.f32 %v3452, %v3455
    %vm3457 = vweird.f32 %v3451
    %vm3458 = vweird.f32 %v3452
    %vm3459 = vmor %vm3457, %vm3458
    %v3460 = vsel %vm3459, %v3452, %v3456
    %v3461 = vand.u32 2147483647, %v3451
    %vm3462 = vcmp.eq.f32.partialorder %v3461, 8.507059e+37
    %v3463 = vand.u32 %v3451, 2147483648
    %v3464 = vor.u32 1.1754944e-38, %v3463
    %v3465 = vsel %vm3462, %v3464, %v3460
    %v3466 = vmul.f32 %v3441, %v3465
    %v3467 = vmin.f32 %v3466, 1.0
    %v3468 = vmax.f32 %v3467, -1.0
    %v3469 = vmul.f32 %v717, %v717
    %v3470 = vmin.f32 16.0, %v3469
    %v3471 = vmul.f32 %v3470, 2.1237322e-06
    %v3472 = vadd.f32 %v3471, 0.00028619796
    %v3473 = vmul.f32 %v3470, %v3472
    %v3474 = vadd.f32 %v3473, 0.0036580483
    %v3475 = vmul.f32 %v3470, %v3474
    %v3476 = vadd.f32 %v3475, 0.05243302
    %v3477 = vmul.f32 %v3470, %v3476
    %v3478 = vadd.f32 %v3477, 0.18741608
    %v3479 = vmul.f32 %v3470, %v3478
    %v3480 = vadd.f32 %v3479, 1.1283791
    %v3481 = vmul.f32 %v717, %v3480
    %v3482 = vmul.f32 %v3470, 3.8918573e-05
    %v3483 = vadd.f32 %v3482, 0.001143296
    %v3484 = vmul.f32 %v3470, %v3483
    %v3485 = vadd.f32 %v3484, 0.014752088
    %v3486 = vmul.f32 %v3470, %v3485
    %v3487 = vadd.f32 %v3486, 0.112945676
    %v3488 = vmul.f32 %v3470, %v3487
    %v3489 = vadd.f32 %v3488, 0.4994258
    %v3490 = vmul.f32 %v3470, %v3489
    %v3491 = vadd.f32 %v3490, 1.0
    %v3492 = vrcp.pop %v3491
    %v3493 = vmul.f32 %v3491, %v3492
    %v3494 = vsub.f32 1.0, %v3493
    %v3495 = vmul.f32 %v3492, %v3494
    %v3496 = vadd.f32 %v3492, %v3495
    %vm3497 = vweird.f32 %v3491
    %vm3498 = vweird.f32 %v3492
    %vm3499 = vmor %vm3497, %vm3498
    %v3500 = vsel %vm3499, %v3492, %v3496
    %v3501 = vand.u32 2147483647, %v3491
    %vm3502 = vcmp.eq.f32.partialorder %v3501, 8.507059e+37
    %v3503 = vand.u32 %v3491, 2147483648
    %v3504 = vor.u32 1.1754944e-38, %v3503
    %v3505 = vsel %vm3502, %v3504, %v3500
    %v3506 = vmul.f32 %v3481, %v3505
    %v3507 = vmin.f32 %v3506, 1.0
    %v3508 = vmax.f32 %v3507, -1.0
    %v3509 = vmul.f32 %v718, %v718
    %v3510 = vmin.f32 16.0, %v3509
    %v3511 = vmul.f32 %v3510, 2.1237322e-06
    %v3512 = vadd.f32 %v3511, 0.00028619796
    %v3513 = vmul.f32 %v3510, %v3512
    %v3514 = vadd.f32 %v3513, 0.0036580483
    %v3515 = vmul.f32 %v3510, %v3514
    %v3516 = vadd.f32 %v3515, 0.05243302
    %v3517 = vmul.f32 %v3510, %v3516
    %v3518 = vadd.f32 %v3517, 0.18741608
    %v3519 = vmul.f32 %v3510, %v3518
    %v3520 = vadd.f32 %v3519, 1.1283791
    %v3521 = vmul.f32 %v718, %v3520
    %v3522 = vmul.f32 %v3510, 3.8918573e-05
    %v3523 = vadd.f32 %v3522, 0.001143296
    %v3524 = vmul.f32 %v3510, %v3523
    %v3525 = vadd.f32 %v3524, 0.014752088
    %v3526 = vmul.f32 %v3510, %v3525
    %v3527 = vadd.f32 %v3526, 0.112945676
    %v3528 = vmul.f32 %v3510, %v3527
    %v3529 = vadd.f32 %v3528, 0.4994258
    %v3530 = vmul.f32 %v3510, %v3529
    %v3531 = vadd.f32 %v3530, 1.0
    %v3532 = vrcp.pop %v3531
    %v3533 = vmul.f32 %v3531, %v3532
    %v3534 = vsub.f32 1.0, %v3533
    %v3535 = vmul.f32 %v3532, %v3534
    %v3536 = vadd.f32 %v3532, %v3535
    %vm3537 = vweird.f32 %v3531
    %vm3538 = vweird.f32 %v3532
    %vm3539 = vmor %vm3537, %vm3538
    %v3540 = vsel %vm3539, %v3532, %v3536
    %v3541 = vand.u32 2147483647, %v3531
    %vm3542 = vcmp.eq.f32.partialorder %v3541, 8.507059e+37
    %v3543 = vand.u32 %v3531, 2147483648
    %v3544 = vor.u32 1.1754944e-38, %v3543
    %v3545 = vsel %vm3542, %v3544, %v3540
    %v3546 = vmul.f32 %v3521, %v3545
    %v3547 = vmin.f32 %v3546, 1.0
    %v3548 = vmax.f32 %v3547, -1.0
    %v3549 = vmul.f32 %v719, %v719
    %v3550 = vmin.f32 16.0, %v3549
    %v3551 = vmul.f32 %v3550, 2.1237322e-06
    %v3552 = vadd.f32 %v3551, 0.00028619796
    %v3553 = vmul.f32 %v3550, %v3552
    %v3554 = vadd.f32 %v3553, 0.0036580483
    %v3555 = vmul.f32 %v3550, %v3554
    %v3556 = vadd.f32 %v3555, 0.05243302
    %v3557 = vmul.f32 %v3550, %v3556
    %v3558 = vadd.f32 %v3557, 0.18741608
    %v3559 = vmul.f32 %v3550, %v3558
    %v3560 = vadd.f32 %v3559, 1.1283791
    %v3561 = vmul.f32 %v719, %v3560
    %v3562 = vmul.f32 %v3550, 3.8918573e-05
    %v3563 = vadd.f32 %v3562, 0.001143296
    %v3564 = vmul.f32 %v3550, %v3563
    %v3565 = vadd.f32 %v3564, 0.014752088
    %v3566 = vmul.f32 %v3550, %v3565
    %v3567 = vadd.f32 %v3566, 0.112945676
    %v3568 = vmul.f32 %v3550, %v3567
    %v3569 = vadd.f32 %v3568, 0.4994258
    %v3570 = vmul.f32 %v3550, %v3569
    %v3571 = vadd.f32 %v3570, 1.0
    %v3572 = vrcp.pop %v3571
    %v3573 = vmul.f32 %v3571, %v3572
    %v3574 = vsub.f32 1.0, %v3573
    %v3575 = vmul.f32 %v3572, %v3574
    %v3576 = vadd.f32 %v3572, %v3575
    %vm3577 = vweird.f32 %v3571
    %vm3578 = vweird.f32 %v3572
    %vm3579 = vmor %vm3577, %vm3578
    %v3580 = vsel %vm3579, %v3572, %v3576
    %v3581 = vand.u32 2147483647, %v3571
    %vm3582 = vcmp.eq.f32.partialorder %v3581, 8.507059e+37
    %v3583 = vand.u32 %v3571, 2147483648
    %v3584 = vor.u32 1.1754944e-38, %v3583
    %v3585 = vsel %vm3582, %v3584, %v3580
    %v3586 = vmul.f32 %v3561, %v3585
    %v3587 = vmin.f32 %v3586, 1.0
    %v3588 = vmax.f32 %v3587, -1.0
    %v3589 = vmul.f32 %v720, %v720
    %v3590 = vmin.f32 16.0, %v3589
    %v3591 = vmul.f32 %v3590, 2.1237322e-06
    %v3592 = vadd.f32 %v3591, 0.00028619796
    %v3593 = vmul.f32 %v3590, %v3592
    %v3594 = vadd.f32 %v3593, 0.0036580483
    %v3595 = vmul.f32 %v3590, %v3594
    %v3596 = vadd.f32 %v3595, 0.05243302
    %v3597 = vmul.f32 %v3590, %v3596
    %v3598 = vadd.f32 %v3597, 0.18741608
    %v3599 = vmul.f32 %v3590, %v3598
    %v3600 = vadd.f32 %v3599, 1.1283791
    %v3601 = vmul.f32 %v720, %v3600
    %v3602 = vmul.f32 %v3590, 3.8918573e-05
    %v3603 = vadd.f32 %v3602, 0.001143296
    %v3604 = vmul.f32 %v3590, %v3603
    %v3605 = vadd.f32 %v3604, 0.014752088
    %v3606 = vmul.f32 %v3590, %v3605
    %v3607 = vadd.f32 %v3606, 0.112945676
    %v3608 = vmul.f32 %v3590, %v3607
    %v3609 = vadd.f32 %v3608, 0.4994258
    %v3610 = vmul.f32 %v3590, %v3609
    %v3611 = vadd.f32 %v3610, 1.0
    %v3612 = vrcp.pop %v3611
    %v3613 = vmul.f32 %v3611, %v3612
    %v3614 = vsub.f32 1.0, %v3613
    %v3615 = vmul.f32 %v3612, %v3614
    %v3616 = vadd.f32 %v3612, %v3615
    %vm3617 = vweird.f32 %v3611
    %vm3618 = vweird.f32 %v3612
    %vm3619 = vmor %vm3617, %vm3618
    %v3620 = vsel %vm3619, %v3612, %v3616
    %v3621 = vand.u32 2147483647, %v3611
    %vm3622 = vcmp.eq.f32.partialorder %v3621, 8.507059e+37
    %v3623 = vand.u32 %v3611, 2147483648
    %v3624 = vor.u32 1.1754944e-38, %v3623
    %v3625 = vsel %vm3622, %v3624, %v3620
    %v3626 = vmul.f32 %v3601, %v3625
    %v3627 = vmin.f32 %v3626, 1.0
    %v3628 = vmax.f32 %v3627, -1.0
    %v3629 = vmul.f32 %v721, %v721
    %v3630 = vmin.f32 16.0, %v3629
    %v3631 = vmul.f32 %v3630, 2.1237322e-06
    %v3632 = vadd.f32 %v3631, 0.00028619796
    %v3633 = vmul.f32 %v3630, %v3632
    %v3634 = vadd.f32 %v3633, 0.0036580483
    %v3635 = vmul.f32 %v3630, %v3634
    %v3636 = vadd.f32 %v3635, 0.05243302
    %v3637 = vmul.f32 %v3630, %v3636
    %v3638 = vadd.f32 %v3637, 0.18741608
    %v3639 = vmul.f32 %v3630, %v3638
    %v3640 = vadd.f32 %v3639, 1.1283791
    %v3641 = vmul.f32 %v721, %v3640
    %v3642 = vmul.f32 %v3630, 3.8918573e-05
    %v3643 = vadd.f32 %v3642, 0.001143296
    %v3644 = vmul.f32 %v3630, %v3643
    %v3645 = vadd.f32 %v3644, 0.014752088
    %v3646 = vmul.f32 %v3630, %v3645
    %v3647 = vadd.f32 %v3646, 0.112945676
    %v3648 = vmul.f32 %v3630, %v3647
    %v3649 = vadd.f32 %v3648, 0.4994258
    %v3650 = vmul.f32 %v3630, %v3649
    %v3651 = vadd.f32 %v3650, 1.0
    %v3652 = vrcp.pop %v3651
    %v3653 = vmul.f32 %v3651, %v3652
    %v3654 = vsub.f32 1.0, %v3653
    %v3655 = vmul.f32 %v3652, %v3654
    %v3656 = vadd.f32 %v3652, %v3655
    %vm3657 = vweird.f32 %v3651
    %vm3658 = vweird.f32 %v3652
    %vm3659 = vmor %vm3657, %vm3658
    %v3660 = vsel %vm3659, %v3652, %v3656
    %v3661 = vand.u32 2147483647, %v3651
    %vm3662 = vcmp.eq.f32.partialorder %v3661, 8.507059e+37
    %v3663 = vand.u32 %v3651, 2147483648
    %v3664 = vor.u32 1.1754944e-38, %v3663
    %v3665 = vsel %vm3662, %v3664, %v3660
    %v3666 = vmul.f32 %v3641, %v3665
    %v3667 = vmin.f32 %v3666, 1.0
    %v3668 = vmax.f32 %v3667, -1.0
    %v3669 = vmul.f32 %v722, %v722
    %v3670 = vmin.f32 16.0, %v3669
    %v3671 = vmul.f32 %v3670, 2.1237322e-06
    %v3672 = vadd.f32 %v3671, 0.00028619796
    %v3673 = vmul.f32 %v3670, %v3672
    %v3674 = vadd.f32 %v3673, 0.0036580483
    %v3675 = vmul.f32 %v3670, %v3674
    %v3676 = vadd.f32 %v3675, 0.05243302
    %v3677 = vmul.f32 %v3670, %v3676
    %v3678 = vadd.f32 %v3677, 0.18741608
    %v3679 = vmul.f32 %v3670, %v3678
    %v3680 = vadd.f32 %v3679, 1.1283791
    %v3681 = vmul.f32 %v722, %v3680
    %v3682 = vmul.f32 %v3670, 3.8918573e-05
    %v3683 = vadd.f32 %v3682, 0.001143296
    %v3684 = vmul.f32 %v3670, %v3683
    %v3685 = vadd.f32 %v3684, 0.014752088
    %v3686 = vmul.f32 %v3670, %v3685
    %v3687 = vadd.f32 %v3686, 0.112945676
    %v3688 = vmul.f32 %v3670, %v3687
    %v3689 = vadd.f32 %v3688, 0.4994258
    %v3690 = vmul.f32 %v3670, %v3689
    %v3691 = vadd.f32 %v3690, 1.0
    %v3692 = vrcp.pop %v3691
    %v3693 = vmul.f32 %v3691, %v3692
    %v3694 = vsub.f32 1.0, %v3693
    %v3695 = vmul.f32 %v3692, %v3694
    %v3696 = vadd.f32 %v3692, %v3695
    %vm3697 = vweird.f32 %v3691
    %vm3698 = vweird.f32 %v3692
    %vm3699 = vmor %vm3697, %vm3698
    %v3700 = vsel %vm3699, %v3692, %v3696
    %v3701 = vand.u32 2147483647, %v3691
    %vm3702 = vcmp.eq.f32.partialorder %v3701, 8.507059e+37
    %v3703 = vand.u32 %v3691, 2147483648
    %v3704 = vor.u32 1.1754944e-38, %v3703
    %v3705 = vsel %vm3702, %v3704, %v3700
    %v3706 = vmul.f32 %v3681, %v3705
    %v3707 = vmin.f32 %v3706, 1.0
    %v3708 = vmax.f32 %v3707, -1.0
    %v3709 = vmul.f32 %v723, %v723
    %v3710 = vmin.f32 16.0, %v3709
    %v3711 = vmul.f32 %v3710, 2.1237322e-06
    %v3712 = vadd.f32 %v3711, 0.00028619796
    %v3713 = vmul.f32 %v3710, %v3712
    %v3714 = vadd.f32 %v3713, 0.0036580483
    %v3715 = vmul.f32 %v3710, %v3714
    %v3716 = vadd.f32 %v3715, 0.05243302
    %v3717 = vmul.f32 %v3710, %v3716
    %v3718 = vadd.f32 %v3717, 0.18741608
    %v3719 = vmul.f32 %v3710, %v3718
    %v3720 = vadd.f32 %v3719, 1.1283791
    %v3721 = vmul.f32 %v723, %v3720
    %v3722 = vmul.f32 %v3710, 3.8918573e-05
    %v3723 = vadd.f32 %v3722, 0.001143296
    %v3724 = vmul.f32 %v3710, %v3723
    %v3725 = vadd.f32 %v3724, 0.014752088
    %v3726 = vmul.f32 %v3710, %v3725
    %v3727 = vadd.f32 %v3726, 0.112945676
    %v3728 = vmul.f32 %v3710, %v3727
    %v3729 = vadd.f32 %v3728, 0.4994258
    %v3730 = vmul.f32 %v3710, %v3729
    %v3731 = vadd.f32 %v3730, 1.0
    %v3732 = vrcp.pop %v3731
    %v3733 = vmul.f32 %v3731, %v3732
    %v3734 = vsub.f32 1.0, %v3733
    %v3735 = vmul.f32 %v3732, %v3734
    %v3736 = vadd.f32 %v3732, %v3735
    %vm3737 = vweird.f32 %v3731
    %vm3738 = vweird.f32 %v3732
    %vm3739 = vmor %vm3737, %vm3738
    %v3740 = vsel %vm3739, %v3732, %v3736
    %v3741 = vand.u32 2147483647, %v3731
    %vm3742 = vcmp.eq.f32.partialorder %v3741, 8.507059e+37
    %v3743 = vand.u32 %v3731, 2147483648
    %v3744 = vor.u32 1.1754944e-38, %v3743
    %v3745 = vsel %vm3742, %v3744, %v3740
    %v3746 = vmul.f32 %v3721, %v3745
    %v3747 = vmin.f32 %v3746, 1.0
    %v3748 = vmax.f32 %v3747, -1.0
    %v3749 = vmul.f32 %v724, %v724
    %v3750 = vmin.f32 16.0, %v3749
    %v3751 = vmul.f32 %v3750, 2.1237322e-06
    %v3752 = vadd.f32 %v3751, 0.00028619796
    %v3753 = vmul.f32 %v3750, %v3752
    %v3754 = vadd.f32 %v3753, 0.0036580483
    %v3755 = vmul.f32 %v3750, %v3754
    %v3756 = vadd.f32 %v3755, 0.05243302
    %v3757 = vmul.f32 %v3750, %v3756
    %v3758 = vadd.f32 %v3757, 0.18741608
    %v3759 = vmul.f32 %v3750, %v3758
    %v3760 = vadd.f32 %v3759, 1.1283791
    %v3761 = vmul.f32 %v724, %v3760
    %v3762 = vmul.f32 %v3750, 3.8918573e-05
    %v3763 = vadd.f32 %v3762, 0.001143296
    %v3764 = vmul.f32 %v3750, %v3763
    %v3765 = vadd.f32 %v3764, 0.014752088
    %v3766 = vmul.f32 %v3750, %v3765
    %v3767 = vadd.f32 %v3766, 0.112945676
    %v3768 = vmul.f32 %v3750, %v3767
    %v3769 = vadd.f32 %v3768, 0.4994258
    %v3770 = vmul.f32 %v3750, %v3769
    %v3771 = vadd.f32 %v3770, 1.0
    %v3772 = vrcp.pop %v3771
    %v3773 = vmul.f32 %v3771, %v3772
    %v3774 = vsub.f32 1.0, %v3773
    %v3775 = vmul.f32 %v3772, %v3774
    %v3776 = vadd.f32 %v3772, %v3775
    %vm3777 = vweird.f32 %v3771
    %vm3778 = vweird.f32 %v3772
    %vm3779 = vmor %vm3777, %vm3778
    %v3780 = vsel %vm3779, %v3772, %v3776
    %v3781 = vand.u32 2147483647, %v3771
    %vm3782 = vcmp.eq.f32.partialorder %v3781, 8.507059e+37
    %v3783 = vand.u32 %v3771, 2147483648
    %v3784 = vor.u32 1.1754944e-38, %v3783
    %v3785 = vsel %vm3782, %v3784, %v3780
    %v3786 = vmul.f32 %v3761, %v3785
    %v3787 = vmin.f32 %v3786, 1.0
    %v3788 = vmax.f32 %v3787, -1.0
    %v3789 = vmul.f32 %v725, %v725
    %v3790 = vmin.f32 16.0, %v3789
    %v3791 = vmul.f32 %v3790, 2.1237322e-06
    %v3792 = vadd.f32 %v3791, 0.00028619796
    %v3793 = vmul.f32 %v3790, %v3792
    %v3794 = vadd.f32 %v3793, 0.0036580483
    %v3795 = vmul.f32 %v3790, %v3794
    %v3796 = vadd.f32 %v3795, 0.05243302
    %v3797 = vmul.f32 %v3790, %v3796
    %v3798 = vadd.f32 %v3797, 0.18741608
    %v3799 = vmul.f32 %v3790, %v3798
    %v3800 = vadd.f32 %v3799, 1.1283791
    %v3801 = vmul.f32 %v725, %v3800
    %v3802 = vmul.f32 %v3790, 3.8918573e-05
    %v3803 = vadd.f32 %v3802, 0.001143296
    %v3804 = vmul.f32 %v3790, %v3803
    %v3805 = vadd.f32 %v3804, 0.014752088
    %v3806 = vmul.f32 %v3790, %v3805
    %v3807 = vadd.f32 %v3806, 0.112945676
    %v3808 = vmul.f32 %v3790, %v3807
    %v3809 = vadd.f32 %v3808, 0.4994258
    %v3810 = vmul.f32 %v3790, %v3809
    %v3811 = vadd.f32 %v3810, 1.0
    %v3812 = vrcp.pop %v3811
    %v3813 = vmul.f32 %v3811, %v3812
    %v3814 = vsub.f32 1.0, %v3813
    %v3815 = vmul.f32 %v3812, %v3814
    %v3816 = vadd.f32 %v3812, %v3815
    %vm3817 = vweird.f32 %v3811
    %vm3818 = vweird.f32 %v3812
    %vm3819 = vmor %vm3817, %vm3818
    %v3820 = vsel %vm3819, %v3812, %v3816
    %v3821 = vand.u32 2147483647, %v3811
    %vm3822 = vcmp.eq.f32.partialorder %v3821, 8.507059e+37
    %v3823 = vand.u32 %v3811, 2147483648
    %v3824 = vor.u32 1.1754944e-38, %v3823
    %v3825 = vsel %vm3822, %v3824, %v3820
    %v3826 = vmul.f32 %v3801, %v3825
    %v3827 = vmin.f32 %v3826, 1.0
    %v3828 = vmax.f32 %v3827, -1.0
    %v3829 = vmul.f32 %v726, %v726
    %v3830 = vmin.f32 16.0, %v3829
    %v3831 = vmul.f32 %v3830, 2.1237322e-06
    %v3832 = vadd.f32 %v3831, 0.00028619796
    %v3833 = vmul.f32 %v3830, %v3832
    %v3834 = vadd.f32 %v3833, 0.0036580483
    %v3835 = vmul.f32 %v3830, %v3834
    %v3836 = vadd.f32 %v3835, 0.05243302
    %v3837 = vmul.f32 %v3830, %v3836
    %v3838 = vadd.f32 %v3837, 0.18741608
    %v3839 = vmul.f32 %v3830, %v3838
    %v3840 = vadd.f32 %v3839, 1.1283791
    %v3841 = vmul.f32 %v726, %v3840
    %v3842 = vmul.f32 %v3830, 3.8918573e-05
    %v3843 = vadd.f32 %v3842, 0.001143296
    %v3844 = vmul.f32 %v3830, %v3843
    %v3845 = vadd.f32 %v3844, 0.014752088
    %v3846 = vmul.f32 %v3830, %v3845
    %v3847 = vadd.f32 %v3846, 0.112945676
    %v3848 = vmul.f32 %v3830, %v3847
    %v3849 = vadd.f32 %v3848, 0.4994258
    %v3850 = vmul.f32 %v3830, %v3849
    %v3851 = vadd.f32 %v3850, 1.0
    %v3852 = vrcp.pop %v3851
    %v3853 = vmul.f32 %v3851, %v3852
    %v3854 = vsub.f32 1.0, %v3853
    %v3855 = vmul.f32 %v3852, %v3854
    %v3856 = vadd.f32 %v3852, %v3855
    %vm3857 = vweird.f32 %v3851
    %vm3858 = vweird.f32 %v3852
    %vm3859 = vmor %vm3857, %vm3858
    %v3860 = vsel %vm3859, %v3852, %v3856
    %v3861 = vand.u32 2147483647, %v3851
    %vm3862 = vcmp.eq.f32.partialorder %v3861, 8.507059e+37
    %v3863 = vand.u32 %v3851, 2147483648
    %v3864 = vor.u32 1.1754944e-38, %v3863
    %v3865 = vsel %vm3862, %v3864, %v3860
    %v3866 = vmul.f32 %v3841, %v3865
    %v3867 = vmin.f32 %v3866, 1.0
    %v3868 = vmax.f32 %v3867, -1.0
    %v3869 = vmul.f32 %v727, %v727
    %v3870 = vmin.f32 16.0, %v3869
    %v3871 = vmul.f32 %v3870, 2.1237322e-06
    %v3872 = vadd.f32 %v3871, 0.00028619796
    %v3873 = vmul.f32 %v3870, %v3872
    %v3874 = vadd.f32 %v3873, 0.0036580483
    %v3875 = vmul.f32 %v3870, %v3874
    %v3876 = vadd.f32 %v3875, 0.05243302
    %v3877 = vmul.f32 %v3870, %v3876
    %v3878 = vadd.f32 %v3877, 0.18741608
    %v3879 = vmul.f32 %v3870, %v3878
    %v3880 = vadd.f32 %v3879, 1.1283791
    %v3881 = vmul.f32 %v727, %v3880
    %v3882 = vmul.f32 %v3870, 3.8918573e-05
    %v3883 = vadd.f32 %v3882, 0.001143296
    %v3884 = vmul.f32 %v3870, %v3883
    %v3885 = vadd.f32 %v3884, 0.014752088
    %v3886 = vmul.f32 %v3870, %v3885
    %v3887 = vadd.f32 %v3886, 0.112945676
    %v3888 = vmul.f32 %v3870, %v3887
    %v3889 = vadd.f32 %v3888, 0.4994258
    %v3890 = vmul.f32 %v3870, %v3889
    %v3891 = vadd.f32 %v3890, 1.0
    %v3892 = vrcp.pop %v3891
    %v3893 = vmul.f32 %v3891, %v3892
    %v3894 = vsub.f32 1.0, %v3893
    %v3895 = vmul.f32 %v3892, %v3894
    %v3896 = vadd.f32 %v3892, %v3895
    %vm3897 = vweird.f32 %v3891
    %vm3898 = vweird.f32 %v3892
    %vm3899 = vmor %vm3897, %vm3898
    %v3900 = vsel %vm3899, %v3892, %v3896
    %v3901 = vand.u32 2147483647, %v3891
    %vm3902 = vcmp.eq.f32.partialorder %v3901, 8.507059e+37
    %v3903 = vand.u32 %v3891, 2147483648
    %v3904 = vor.u32 1.1754944e-38, %v3903
    %v3905 = vsel %vm3902, %v3904, %v3900
    %v3906 = vmul.f32 %v3881, %v3905
    %v3907 = vmin.f32 %v3906, 1.0
    %v3908 = vmax.f32 %v3907, -1.0
    %v3909 = vmul.f32 %v728, %v728
    %v3910 = vmin.f32 16.0, %v3909
    %v3911 = vmul.f32 %v3910, 2.1237322e-06
    %v3912 = vadd.f32 %v3911, 0.00028619796
    %v3913 = vmul.f32 %v3910, %v3912
    %v3914 = vadd.f32 %v3913, 0.0036580483
    %v3915 = vmul.f32 %v3910, %v3914
    %v3916 = vadd.f32 %v3915, 0.05243302
    %v3917 = vmul.f32 %v3910, %v3916
    %v3918 = vadd.f32 %v3917, 0.18741608
    %v3919 = vmul.f32 %v3910, %v3918
    %v3920 = vadd.f32 %v3919, 1.1283791
    %v3921 = vmul.f32 %v728, %v3920
    %v3922 = vmul.f32 %v3910, 3.8918573e-05
    %v3923 = vadd.f32 %v3922, 0.001143296
    %v3924 = vmul.f32 %v3910, %v3923
    %v3925 = vadd.f32 %v3924, 0.014752088
    %v3926 = vmul.f32 %v3910, %v3925
    %v3927 = vadd.f32 %v3926, 0.112945676
    %v3928 = vmul.f32 %v3910, %v3927
    %v3929 = vadd.f32 %v3928, 0.4994258
    %v3930 = vmul.f32 %v3910, %v3929
    %v3931 = vadd.f32 %v3930, 1.0
    %v3932 = vrcp.pop %v3931
    %v3933 = vmul.f32 %v3931, %v3932
    %v3934 = vsub.f32 1.0, %v3933
    %v3935 = vmul.f32 %v3932, %v3934
    %v3936 = vadd.f32 %v3932, %v3935
    %vm3937 = vweird.f32 %v3931
    %vm3938 = vweird.f32 %v3932
    %vm3939 = vmor %vm3937, %vm3938
    %v3940 = vsel %vm3939, %v3932, %v3936
    %v3941 = vand.u32 2147483647, %v3931
    %vm3942 = vcmp.eq.f32.partialorder %v3941, 8.507059e+37
    %v3943 = vand.u32 %v3931, 2147483648
    %v3944 = vor.u32 1.1754944e-38, %v3943
    %v3945 = vsel %vm3942, %v3944, %v3940
    %v3946 = vmul.f32 %v3921, %v3945
    %v3947 = vmin.f32 %v3946, 1.0
    %v3948 = vmax.f32 %v3947, -1.0
    %v3949 = vmul.f32 %v729, %v729
    %v3950 = vmin.f32 16.0, %v3949
    %v3951 = vmul.f32 %v3950, 2.1237322e-06
    %v3952 = vadd.f32 %v3951, 0.00028619796
    %v3953 = vmul.f32 %v3950, %v3952
    %v3954 = vadd.f32 %v3953, 0.0036580483
    %v3955 = vmul.f32 %v3950, %v3954
    %v3956 = vadd.f32 %v3955, 0.05243302
    %v3957 = vmul.f32 %v3950, %v3956
    %v3958 = vadd.f32 %v3957, 0.18741608
    %v3959 = vmul.f32 %v3950, %v3958
    %v3960 = vadd.f32 %v3959, 1.1283791
    %v3961 = vmul.f32 %v729, %v3960
    %v3962 = vmul.f32 %v3950, 3.8918573e-05
    %v3963 = vadd.f32 %v3962, 0.001143296
    %v3964 = vmul.f32 %v3950, %v3963
    %v3965 = vadd.f32 %v3964, 0.014752088
    %v3966 = vmul.f32 %v3950, %v3965
    %v3967 = vadd.f32 %v3966, 0.112945676
    %v3968 = vmul.f32 %v3950, %v3967
    %v3969 = vadd.f32 %v3968, 0.4994258
    %v3970 = vmul.f32 %v3950, %v3969
    %v3971 = vadd.f32 %v3970, 1.0
    %v3972 = vrcp.pop %v3971
    %v3973 = vmul.f32 %v3971, %v3972
    %v3974 = vsub.f32 1.0, %v3973
    %v3975 = vmul.f32 %v3972, %v3974
    %v3976 = vadd.f32 %v3972, %v3975
    %vm3977 = vweird.f32 %v3971
    %vm3978 = vweird.f32 %v3972
    %vm3979 = vmor %vm3977, %vm3978
    %v3980 = vsel %vm3979, %v3972, %v3976
    %v3981 = vand.u32 2147483647, %v3971
    %vm3982 = vcmp.eq.f32.partialorder %v3981, 8.507059e+37
    %v3983 = vand.u32 %v3971, 2147483648
    %v3984 = vor.u32 1.1754944e-38, %v3983
    %v3985 = vsel %vm3982, %v3984, %v3980
    %v3986 = vmul.f32 %v3961, %v3985
    %v3987 = vmin.f32 %v3986, 1.0
    %v3988 = vmax.f32 %v3987, -1.0
    %v3989 = vmul.f32 %v730, %v730
    %v3990 = vmin.f32 16.0, %v3989
    %v3991 = vmul.f32 %v3990, 2.1237322e-06
    %v3992 = vadd.f32 %v3991, 0.00028619796
    %v3993 = vmul.f32 %v3990, %v3992
    %v3994 = vadd.f32 %v3993, 0.0036580483
    %v3995 = vmul.f32 %v3990, %v3994
    %v3996 = vadd.f32 %v3995, 0.05243302
    %v3997 = vmul.f32 %v3990, %v3996
    %v3998 = vadd.f32 %v3997, 0.18741608
    %v3999 = vmul.f32 %v3990, %v3998
    %v4000 = vadd.f32 %v3999, 1.1283791
    %v4001 = vmul.f32 %v730, %v4000
    %v4002 = vmul.f32 %v3990, 3.8918573e-05
    %v4003 = vadd.f32 %v4002, 0.001143296
    %v4004 = vmul.f32 %v3990, %v4003
    %v4005 = vadd.f32 %v4004, 0.014752088
    %v4006 = vmul.f32 %v3990, %v4005
    %v4007 = vadd.f32 %v4006, 0.112945676
    %v4008 = vmul.f32 %v3990, %v4007
    %v4009 = vadd.f32 %v4008, 0.4994258
    %v4010 = vmul.f32 %v3990, %v4009
    %v4011 = vadd.f32 %v4010, 1.0
    %v4012 = vrcp.pop %v4011
    %v4013 = vmul.f32 %v4011, %v4012
    %v4014 = vsub.f32 1.0, %v4013
    %v4015 = vmul.f32 %v4012, %v4014
    %v4016 = vadd.f32 %v4012, %v4015
    %vm4017 = vweird.f32 %v4011
    %vm4018 = vweird.f32 %v4012
    %vm4019 = vmor %vm4017, %vm4018
    %v4020 = vsel %vm4019, %v4012, %v4016
    %v4021 = vand.u32 2147483647, %v4011
    %vm4022 = vcmp.eq.f32.partialorder %v4021, 8.507059e+37
    %v4023 = vand.u32 %v4011, 2147483648
    %v4024 = vor.u32 1.1754944e-38, %v4023
    %v4025 = vsel %vm4022, %v4024, %v4020
    %v4026 = vmul.f32 %v4001, %v4025
    %v4027 = vmin.f32 %v4026, 1.0
    %v4028 = vmax.f32 %v4027, -1.0
    %v4029 = vmul.f32 %v731, %v731
    %v4030 = vmin.f32 16.0, %v4029
    %v4031 = vmul.f32 %v4030, 2.1237322e-06
    %v4032 = vadd.f32 %v4031, 0.00028619796
    %v4033 = vmul.f32 %v4030, %v4032
    %v4034 = vadd.f32 %v4033, 0.0036580483
    %v4035 = vmul.f32 %v4030, %v4034
    %v4036 = vadd.f32 %v4035, 0.05243302
    %v4037 = vmul.f32 %v4030, %v4036
    %v4038 = vadd.f32 %v4037, 0.18741608
    %v4039 = vmul.f32 %v4030, %v4038
    %v4040 = vadd.f32 %v4039, 1.1283791
    %v4041 = vmul.f32 %v731, %v4040
    %v4042 = vmul.f32 %v4030, 3.8918573e-05
    %v4043 = vadd.f32 %v4042, 0.001143296
    %v4044 = vmul.f32 %v4030, %v4043
    %v4045 = vadd.f32 %v4044, 0.014752088
    %v4046 = vmul.f32 %v4030, %v4045
    %v4047 = vadd.f32 %v4046, 0.112945676
    %v4048 = vmul.f32 %v4030, %v4047
    %v4049 = vadd.f32 %v4048, 0.4994258
    %v4050 = vmul.f32 %v4030, %v4049
    %v4051 = vadd.f32 %v4050, 1.0
    %v4052 = vrcp.pop %v4051
    %v4053 = vmul.f32 %v4051, %v4052
    %v4054 = vsub.f32 1.0, %v4053
    %v4055 = vmul.f32 %v4052, %v4054
    %v4056 = vadd.f32 %v4052, %v4055
    %vm4057 = vweird.f32 %v4051
    %vm4058 = vweird.f32 %v4052
    %vm4059 = vmor %vm4057, %vm4058
    %v4060 = vsel %vm4059, %v4052, %v4056
    %v4061 = vand.u32 2147483647, %v4051
    %vm4062 = vcmp.eq.f32.partialorder %v4061, 8.507059e+37
    %v4063 = vand.u32 %v4051, 2147483648
    %v4064 = vor.u32 1.1754944e-38, %v4063
    %v4065 = vsel %vm4062, %v4064, %v4060
    %v4066 = vmul.f32 %v4041, %v4065
    %v4067 = vmin.f32 %v4066, 1.0
    %v4068 = vmax.f32 %v4067, -1.0
    %v4069 = vmul.f32 %v732, %v732
    %v4070 = vmin.f32 16.0, %v4069
    %v4071 = vmul.f32 %v4070, 2.1237322e-06
    %v4072 = vadd.f32 %v4071, 0.00028619796
    %v4073 = vmul.f32 %v4070, %v4072
    %v4074 = vadd.f32 %v4073, 0.0036580483
    %v4075 = vmul.f32 %v4070, %v4074
    %v4076 = vadd.f32 %v4075, 0.05243302
    %v4077 = vmul.f32 %v4070, %v4076
    %v4078 = vadd.f32 %v4077, 0.18741608
    %v4079 = vmul.f32 %v4070, %v4078
    %v4080 = vadd.f32 %v4079, 1.1283791
    %v4081 = vmul.f32 %v732, %v4080
    %v4082 = vmul.f32 %v4070, 3.8918573e-05
    %v4083 = vadd.f32 %v4082, 0.001143296
    %v4084 = vmul.f32 %v4070, %v4083
    %v4085 = vadd.f32 %v4084, 0.014752088
    %v4086 = vmul.f32 %v4070, %v4085
    %v4087 = vadd.f32 %v4086, 0.112945676
    %v4088 = vmul.f32 %v4070, %v4087
    %v4089 = vadd.f32 %v4088, 0.4994258
    %v4090 = vmul.f32 %v4070, %v4089
    %v4091 = vadd.f32 %v4090, 1.0
    %v4092 = vrcp.pop %v4091
    %v4093 = vmul.f32 %v4091, %v4092
    %v4094 = vsub.f32 1.0, %v4093
    %v4095 = vmul.f32 %v4092, %v4094
    %v4096 = vadd.f32 %v4092, %v4095
    %vm4097 = vweird.f32 %v4091
    %vm4098 = vweird.f32 %v4092
    %vm4099 = vmor %vm4097, %vm4098
    %v4100 = vsel %vm4099, %v4092, %v4096
    %v4101 = vand.u32 2147483647, %v4091
    %vm4102 = vcmp.eq.f32.partialorder %v4101, 8.507059e+37
    %v4103 = vand.u32 %v4091, 2147483648
    %v4104 = vor.u32 1.1754944e-38, %v4103
    %v4105 = vsel %vm4102, %v4104, %v4100
    %v4106 = vmul.f32 %v4081, %v4105
    %v4107 = vmin.f32 %v4106, 1.0
    %v4108 = vmax.f32 %v4107, -1.0
    %v4109 = vmul.f32 %v733, %v733
    %v4110 = vmin.f32 16.0, %v4109
    %v4111 = vmul.f32 %v4110, 2.1237322e-06
    %v4112 = vadd.f32 %v4111, 0.00028619796
    %v4113 = vmul.f32 %v4110, %v4112
    %v4114 = vadd.f32 %v4113, 0.0036580483
    %v4115 = vmul.f32 %v4110, %v4114
    %v4116 = vadd.f32 %v4115, 0.05243302
    %v4117 = vmul.f32 %v4110, %v4116
    %v4118 = vadd.f32 %v4117, 0.18741608
    %v4119 = vmul.f32 %v4110, %v4118
    %v4120 = vadd.f32 %v4119, 1.1283791
    %v4121 = vmul.f32 %v733, %v4120
    %v4122 = vmul.f32 %v4110, 3.8918573e-05
    %v4123 = vadd.f32 %v4122, 0.001143296
    %v4124 = vmul.f32 %v4110, %v4123
    %v4125 = vadd.f32 %v4124, 0.014752088
    %v4126 = vmul.f32 %v4110, %v4125
    %v4127 = vadd.f32 %v4126, 0.112945676
    %v4128 = vmul.f32 %v4110, %v4127
    %v4129 = vadd.f32 %v4128, 0.4994258
    %v4130 = vmul.f32 %v4110, %v4129
    %v4131 = vadd.f32 %v4130, 1.0
    %v4132 = vrcp.pop %v4131
    %v4133 = vmul.f32 %v4131, %v4132
    %v4134 = vsub.f32 1.0, %v4133
    %v4135 = vmul.f32 %v4132, %v4134
    %v4136 = vadd.f32 %v4132, %v4135
    %vm4137 = vweird.f32 %v4131
    %vm4138 = vweird.f32 %v4132
    %vm4139 = vmor %vm4137, %vm4138
    %v4140 = vsel %vm4139, %v4132, %v4136
    %v4141 = vand.u32 2147483647, %v4131
    %vm4142 = vcmp.eq.f32.partialorder %v4141, 8.507059e+37
    %v4143 = vand.u32 %v4131, 2147483648
    %v4144 = vor.u32 1.1754944e-38, %v4143
    %v4145 = vsel %vm4142, %v4144, %v4140
    %v4146 = vmul.f32 %v4121, %v4145
    %v4147 = vmin.f32 %v4146, 1.0
    %v4148 = vmax.f32 %v4147, -1.0
    %v4149 = vmul.f32 %v734, %v734
    %v4150 = vmin.f32 16.0, %v4149
    %v4151 = vmul.f32 %v4150, 2.1237322e-06
    %v4152 = vadd.f32 %v4151, 0.00028619796
    %v4153 = vmul.f32 %v4150, %v4152
    %v4154 = vadd.f32 %v4153, 0.0036580483
    %v4155 = vmul.f32 %v4150, %v4154
    %v4156 = vadd.f32 %v4155, 0.05243302
    %v4157 = vmul.f32 %v4150, %v4156
    %v4158 = vadd.f32 %v4157, 0.18741608
    %v4159 = vmul.f32 %v4150, %v4158
    %v4160 = vadd.f32 %v4159, 1.1283791
    %v4161 = vmul.f32 %v734, %v4160
    %v4162 = vmul.f32 %v4150, 3.8918573e-05
    %v4163 = vadd.f32 %v4162, 0.001143296
    %v4164 = vmul.f32 %v4150, %v4163
    %v4165 = vadd.f32 %v4164, 0.014752088
    %v4166 = vmul.f32 %v4150, %v4165
    %v4167 = vadd.f32 %v4166, 0.112945676
    %v4168 = vmul.f32 %v4150, %v4167
    %v4169 = vadd.f32 %v4168, 0.4994258
    %v4170 = vmul.f32 %v4150, %v4169
    %v4171 = vadd.f32 %v4170, 1.0
    %v4172 = vrcp.pop %v4171
    %v4173 = vmul.f32 %v4171, %v4172
    %v4174 = vsub.f32 1.0, %v4173
    %v4175 = vmul.f32 %v4172, %v4174
    %v4176 = vadd.f32 %v4172, %v4175
    %vm4177 = vweird.f32 %v4171
    %vm4178 = vweird.f32 %v4172
    %vm4179 = vmor %vm4177, %vm4178
    %v4180 = vsel %vm4179, %v4172, %v4176
    %v4181 = vand.u32 2147483647, %v4171
    %vm4182 = vcmp.eq.f32.partialorder %v4181, 8.507059e+37
    %v4183 = vand.u32 %v4171, 2147483648
    %v4184 = vor.u32 1.1754944e-38, %v4183
    %v4185 = vsel %vm4182, %v4184, %v4180
    %v4186 = vmul.f32 %v4161, %v4185
    %v4187 = vmin.f32 %v4186, 1.0
    %v4188 = vmax.f32 %v4187, -1.0
    %v4189 = vmul.f32 %v735, %v735
    %v4190 = vmin.f32 16.0, %v4189
    %v4191 = vmul.f32 %v4190, 2.1237322e-06
    %v4192 = vadd.f32 %v4191, 0.00028619796
    %v4193 = vmul.f32 %v4190, %v4192
    %v4194 = vadd.f32 %v4193, 0.0036580483
    %v4195 = vmul.f32 %v4190, %v4194
    %v4196 = vadd.f32 %v4195, 0.05243302
    %v4197 = vmul.f32 %v4190, %v4196
    %v4198 = vadd.f32 %v4197, 0.18741608
    %v4199 = vmul.f32 %v4190, %v4198
    %v4200 = vadd.f32 %v4199, 1.1283791
    %v4201 = vmul.f32 %v735, %v4200
    %v4202 = vmul.f32 %v4190, 3.8918573e-05
    %v4203 = vadd.f32 %v4202, 0.001143296
    %v4204 = vmul.f32 %v4190, %v4203
    %v4205 = vadd.f32 %v4204, 0.014752088
    %v4206 = vmul.f32 %v4190, %v4205
    %v4207 = vadd.f32 %v4206, 0.112945676
    %v4208 = vmul.f32 %v4190, %v4207
    %v4209 = vadd.f32 %v4208, 0.4994258
    %v4210 = vmul.f32 %v4190, %v4209
    %v4211 = vadd.f32 %v4210, 1.0
    %v4212 = vrcp.pop %v4211
    %v4213 = vmul.f32 %v4211, %v4212
    %v4214 = vsub.f32 1.0, %v4213
    %v4215 = vmul.f32 %v4212, %v4214
    %v4216 = vadd.f32 %v4212, %v4215
    %vm4217 = vweird.f32 %v4211
    %vm4218 = vweird.f32 %v4212
    %vm4219 = vmor %vm4217, %vm4218
    %v4220 = vsel %vm4219, %v4212, %v4216
    %v4221 = vand.u32 2147483647, %v4211
    %vm4222 = vcmp.eq.f32.partialorder %v4221, 8.507059e+37
    %v4223 = vand.u32 %v4211, 2147483648
    %v4224 = vor.u32 1.1754944e-38, %v4223
    %v4225 = vsel %vm4222, %v4224, %v4220
    %v4226 = vmul.f32 %v4201, %v4225
    %v4227 = vmin.f32 %v4226, 1.0
    %v4228 = vmax.f32 %v4227, -1.0
    %v4229 = vmul.f32 %v736, %v736
    %v4230 = vmin.f32 16.0, %v4229
    %v4231 = vmul.f32 %v4230, 2.1237322e-06
    %v4232 = vadd.f32 %v4231, 0.00028619796
    %v4233 = vmul.f32 %v4230, %v4232
    %v4234 = vadd.f32 %v4233, 0.0036580483
    %v4235 = vmul.f32 %v4230, %v4234
    %v4236 = vadd.f32 %v4235, 0.05243302
    %v4237 = vmul.f32 %v4230, %v4236
    %v4238 = vadd.f32 %v4237, 0.18741608
    %v4239 = vmul.f32 %v4230, %v4238
    %v4240 = vadd.f32 %v4239, 1.1283791
    %v4241 = vmul.f32 %v736, %v4240
    %v4242 = vmul.f32 %v4230, 3.8918573e-05
    %v4243 = vadd.f32 %v4242, 0.001143296
    %v4244 = vmul.f32 %v4230, %v4243
    %v4245 = vadd.f32 %v4244, 0.014752088
    %v4246 = vmul.f32 %v4230, %v4245
    %v4247 = vadd.f32 %v4246, 0.112945676
    %v4248 = vmul.f32 %v4230, %v4247
    %v4249 = vadd.f32 %v4248, 0.4994258
    %v4250 = vmul.f32 %v4230, %v4249
    %v4251 = vadd.f32 %v4250, 1.0
    %v4252 = vrcp.pop %v4251
    %v4253 = vmul.f32 %v4251, %v4252
    %v4254 = vsub.f32 1.0, %v4253
    %v4255 = vmul.f32 %v4252, %v4254
    %v4256 = vadd.f32 %v4252, %v4255
    %vm4257 = vweird.f32 %v4251
    %vm4258 = vweird.f32 %v4252
    %vm4259 = vmor %vm4257, %vm4258
    %v4260 = vsel %vm4259, %v4252, %v4256
    %v4261 = vand.u32 2147483647, %v4251
    %vm4262 = vcmp.eq.f32.partialorder %v4261, 8.507059e+37
    %v4263 = vand.u32 %v4251, 2147483648
    %v4264 = vor.u32 1.1754944e-38, %v4263
    %v4265 = vsel %vm4262, %v4264, %v4260
    %v4266 = vmul.f32 %v4241, %v4265
    %v4267 = vmin.f32 %v4266, 1.0
    %v4268 = vmax.f32 %v4267, -1.0
    %v4269 = vmul.f32 %v737, %v737
    %v4270 = vmin.f32 16.0, %v4269
    %v4271 = vmul.f32 %v4270, 2.1237322e-06
    %v4272 = vadd.f32 %v4271, 0.00028619796
    %v4273 = vmul.f32 %v4270, %v4272
    %v4274 = vadd.f32 %v4273, 0.0036580483
    %v4275 = vmul.f32 %v4270, %v4274
    %v4276 = vadd.f32 %v4275, 0.05243302
    %v4277 = vmul.f32 %v4270, %v4276
    %v4278 = vadd.f32 %v4277, 0.18741608
    %v4279 = vmul.f32 %v4270, %v4278
    %v4280 = vadd.f32 %v4279, 1.1283791
    %v4281 = vmul.f32 %v737, %v4280
    %v4282 = vmul.f32 %v4270, 3.8918573e-05
    %v4283 = vadd.f32 %v4282, 0.001143296
    %v4284 = vmul.f32 %v4270, %v4283
    %v4285 = vadd.f32 %v4284, 0.014752088
    %v4286 = vmul.f32 %v4270, %v4285
    %v4287 = vadd.f32 %v4286, 0.112945676
    %v4288 = vmul.f32 %v4270, %v4287
    %v4289 = vadd.f32 %v4288, 0.4994258
    %v4290 = vmul.f32 %v4270, %v4289
    %v4291 = vadd.f32 %v4290, 1.0
    %v4292 = vrcp.pop %v4291
    %v4293 = vmul.f32 %v4291, %v4292
    %v4294 = vsub.f32 1.0, %v4293
    %v4295 = vmul.f32 %v4292, %v4294
    %v4296 = vadd.f32 %v4292, %v4295
    %vm4297 = vweird.f32 %v4291
    %vm4298 = vweird.f32 %v4292
    %vm4299 = vmor %vm4297, %vm4298
    %v4300 = vsel %vm4299, %v4292, %v4296
    %v4301 = vand.u32 2147483647, %v4291
    %vm4302 = vcmp.eq.f32.partialorder %v4301, 8.507059e+37
    %v4303 = vand.u32 %v4291, 2147483648
    %v4304 = vor.u32 1.1754944e-38, %v4303
    %v4305 = vsel %vm4302, %v4304, %v4300
    %v4306 = vmul.f32 %v4281, %v4305
    %v4307 = vmin.f32 %v4306, 1.0
    %v4308 = vmax.f32 %v4307, -1.0
    %v4309 = vmul.f32 %v738, %v738
    %v4310 = vmin.f32 16.0, %v4309
    %v4311 = vmul.f32 %v4310, 2.1237322e-06
    %v4312 = vadd.f32 %v4311, 0.00028619796
    %v4313 = vmul.f32 %v4310, %v4312
    %v4314 = vadd.f32 %v4313, 0.0036580483
    %v4315 = vmul.f32 %v4310, %v4314
    %v4316 = vadd.f32 %v4315, 0.05243302
    %v4317 = vmul.f32 %v4310, %v4316
    %v4318 = vadd.f32 %v4317, 0.18741608
    %v4319 = vmul.f32 %v4310, %v4318
    %v4320 = vadd.f32 %v4319, 1.1283791
    %v4321 = vmul.f32 %v738, %v4320
    %v4322 = vmul.f32 %v4310, 3.8918573e-05
    %v4323 = vadd.f32 %v4322, 0.001143296
    %v4324 = vmul.f32 %v4310, %v4323
    %v4325 = vadd.f32 %v4324, 0.014752088
    %v4326 = vmul.f32 %v4310, %v4325
    %v4327 = vadd.f32 %v4326, 0.112945676
    %v4328 = vmul.f32 %v4310, %v4327
    %v4329 = vadd.f32 %v4328, 0.4994258
    %v4330 = vmul.f32 %v4310, %v4329
    %v4331 = vadd.f32 %v4330, 1.0
    %v4332 = vrcp.pop %v4331
    %v4333 = vmul.f32 %v4331, %v4332
    %v4334 = vsub.f32 1.0, %v4333
    %v4335 = vmul.f32 %v4332, %v4334
    %v4336 = vadd.f32 %v4332, %v4335
    %vm4337 = vweird.f32 %v4331
    %vm4338 = vweird.f32 %v4332
    %vm4339 = vmor %vm4337, %vm4338
    %v4340 = vsel %vm4339, %v4332, %v4336
    %v4341 = vand.u32 2147483647, %v4331
    %vm4342 = vcmp.eq.f32.partialorder %v4341, 8.507059e+37
    %v4343 = vand.u32 %v4331, 2147483648
    %v4344 = vor.u32 1.1754944e-38, %v4343
    %v4345 = vsel %vm4342, %v4344, %v4340
    %v4346 = vmul.f32 %v4321, %v4345
    %v4347 = vmin.f32 %v4346, 1.0
    %v4348 = vmax.f32 %v4347, -1.0
    %v4349 = vmul.f32 %v739, %v739
    %v4350 = vmin.f32 16.0, %v4349
    %v4351 = vmul.f32 %v4350, 2.1237322e-06
    %v4352 = vadd.f32 %v4351, 0.00028619796
    %v4353 = vmul.f32 %v4350, %v4352
    %v4354 = vadd.f32 %v4353, 0.0036580483
    %v4355 = vmul.f32 %v4350, %v4354
    %v4356 = vadd.f32 %v4355, 0.05243302
    %v4357 = vmul.f32 %v4350, %v4356
    %v4358 = vadd.f32 %v4357, 0.18741608
    %v4359 = vmul.f32 %v4350, %v4358
    %v4360 = vadd.f32 %v4359, 1.1283791
    %v4361 = vmul.f32 %v739, %v4360
    %v4362 = vmul.f32 %v4350, 3.8918573e-05
    %v4363 = vadd.f32 %v4362, 0.001143296
    %v4364 = vmul.f32 %v4350, %v4363
    %v4365 = vadd.f32 %v4364, 0.014752088
    %v4366 = vmul.f32 %v4350, %v4365
    %v4367 = vadd.f32 %v4366, 0.112945676
    %v4368 = vmul.f32 %v4350, %v4367
    %v4369 = vadd.f32 %v4368, 0.4994258
    %v4370 = vmul.f32 %v4350, %v4369
    %v4371 = vadd.f32 %v4370, 1.0
    %v4372 = vrcp.pop %v4371
    %v4373 = vmul.f32 %v4371, %v4372
    %v4374 = vsub.f32 1.0, %v4373
    %v4375 = vmul.f32 %v4372, %v4374
    %v4376 = vadd.f32 %v4372, %v4375
    %vm4377 = vweird.f32 %v4371
    %vm4378 = vweird.f32 %v4372
    %vm4379 = vmor %vm4377, %vm4378
    %v4380 = vsel %vm4379, %v4372, %v4376
    %v4381 = vand.u32 2147483647, %v4371
    %vm4382 = vcmp.eq.f32.partialorder %v4381, 8.507059e+37
    %v4383 = vand.u32 %v4371, 2147483648
    %v4384 = vor.u32 1.1754944e-38, %v4383
    %v4385 = vsel %vm4382, %v4384, %v4380
    %v4386 = vmul.f32 %v4361, %v4385
    %v4387 = vmin.f32 %v4386, 1.0
    %v4388 = vmax.f32 %v4387, -1.0
    %v4389 = vmul.f32 %v740, %v740
    %v4390 = vmin.f32 16.0, %v4389
    %v4391 = vmul.f32 %v4390, 2.1237322e-06
    %v4392 = vadd.f32 %v4391, 0.00028619796
    %v4393 = vmul.f32 %v4390, %v4392
    %v4394 = vadd.f32 %v4393, 0.0036580483
    %v4395 = vmul.f32 %v4390, %v4394
    %v4396 = vadd.f32 %v4395, 0.05243302
    %v4397 = vmul.f32 %v4390, %v4396
    %v4398 = vadd.f32 %v4397, 0.18741608
    %v4399 = vmul.f32 %v4390, %v4398
    %v4400 = vadd.f32 %v4399, 1.1283791
    %v4401 = vmul.f32 %v740, %v4400
    %v4402 = vmul.f32 %v4390, 3.8918573e-05
    %v4403 = vadd.f32 %v4402, 0.001143296
    %v4404 = vmul.f32 %v4390, %v4403
    %v4405 = vadd.f32 %v4404, 0.014752088
    %v4406 = vmul.f32 %v4390, %v4405
    %v4407 = vadd.f32 %v4406, 0.112945676
    %v4408 = vmul.f32 %v4390, %v4407
    %v4409 = vadd.f32 %v4408, 0.4994258
    %v4410 = vmul.f32 %v4390, %v4409
    %v4411 = vadd.f32 %v4410, 1.0
    %v4412 = vrcp.pop %v4411
    %v4413 = vmul.f32 %v4411, %v4412
    %v4414 = vsub.f32 1.0, %v4413
    %v4415 = vmul.f32 %v4412, %v4414
    %v4416 = vadd.f32 %v4412, %v4415
    %vm4417 = vweird.f32 %v4411
    %vm4418 = vweird.f32 %v4412
    %vm4419 = vmor %vm4417, %vm4418
    %v4420 = vsel %vm4419, %v4412, %v4416
    %v4421 = vand.u32 2147483647, %v4411
    %vm4422 = vcmp.eq.f32.partialorder %v4421, 8.507059e+37
    %v4423 = vand.u32 %v4411, 2147483648
    %v4424 = vor.u32 1.1754944e-38, %v4423
    %v4425 = vsel %vm4422, %v4424, %v4420
    %v4426 = vmul.f32 %v4401, %v4425
    %v4427 = vmin.f32 %v4426, 1.0
    %v4428 = vmax.f32 %v4427, -1.0
    %v4429 = vmul.f32 %v741, %v741
    %v4430 = vmin.f32 16.0, %v4429
    %v4431 = vmul.f32 %v4430, 2.1237322e-06
    %v4432 = vadd.f32 %v4431, 0.00028619796
    %v4433 = vmul.f32 %v4430, %v4432
    %v4434 = vadd.f32 %v4433, 0.0036580483
    %v4435 = vmul.f32 %v4430, %v4434
    %v4436 = vadd.f32 %v4435, 0.05243302
    %v4437 = vmul.f32 %v4430, %v4436
    %v4438 = vadd.f32 %v4437, 0.18741608
    %v4439 = vmul.f32 %v4430, %v4438
    %v4440 = vadd.f32 %v4439, 1.1283791
    %v4441 = vmul.f32 %v741, %v4440
    %v4442 = vmul.f32 %v4430, 3.8918573e-05
    %v4443 = vadd.f32 %v4442, 0.001143296
    %v4444 = vmul.f32 %v4430, %v4443
    %v4445 = vadd.f32 %v4444, 0.014752088
    %v4446 = vmul.f32 %v4430, %v4445
    %v4447 = vadd.f32 %v4446, 0.112945676
    %v4448 = vmul.f32 %v4430, %v4447
    %v4449 = vadd.f32 %v4448, 0.4994258
    %v4450 = vmul.f32 %v4430, %v4449
    %v4451 = vadd.f32 %v4450, 1.0
    %v4452 = vrcp.pop %v4451
    %v4453 = vmul.f32 %v4451, %v4452
    %v4454 = vsub.f32 1.0, %v4453
    %v4455 = vmul.f32 %v4452, %v4454
    %v4456 = vadd.f32 %v4452, %v4455
    %vm4457 = vweird.f32 %v4451
    %vm4458 = vweird.f32 %v4452
    %vm4459 = vmor %vm4457, %vm4458
    %v4460 = vsel %vm4459, %v4452, %v4456
    %v4461 = vand.u32 2147483647, %v4451
    %vm4462 = vcmp.eq.f32.partialorder %v4461, 8.507059e+37
    %v4463 = vand.u32 %v4451, 2147483648
    %v4464 = vor.u32 1.1754944e-38, %v4463
    %v4465 = vsel %vm4462, %v4464, %v4460
    %v4466 = vmul.f32 %v4441, %v4465
    %v4467 = vmin.f32 %v4466, 1.0
    %v4468 = vmax.f32 %v4467, -1.0
    %v4469 = vmul.f32 %v742, %v742
    %v4470 = vmin.f32 16.0, %v4469
    %v4471 = vmul.f32 %v4470, 2.1237322e-06
    %v4472 = vadd.f32 %v4471, 0.00028619796
    %v4473 = vmul.f32 %v4470, %v4472
    %v4474 = vadd.f32 %v4473, 0.0036580483
    %v4475 = vmul.f32 %v4470, %v4474
    %v4476 = vadd.f32 %v4475, 0.05243302
    %v4477 = vmul.f32 %v4470, %v4476
    %v4478 = vadd.f32 %v4477, 0.18741608
    %v4479 = vmul.f32 %v4470, %v4478
    %v4480 = vadd.f32 %v4479, 1.1283791
    %v4481 = vmul.f32 %v742, %v4480
    %v4482 = vmul.f32 %v4470, 3.8918573e-05
    %v4483 = vadd.f32 %v4482, 0.001143296
    %v4484 = vmul.f32 %v4470, %v4483
    %v4485 = vadd.f32 %v4484, 0.014752088
    %v4486 = vmul.f32 %v4470, %v4485
    %v4487 = vadd.f32 %v4486, 0.112945676
    %v4488 = vmul.f32 %v4470, %v4487
    %v4489 = vadd.f32 %v4488, 0.4994258
    %v4490 = vmul.f32 %v4470, %v4489
    %v4491 = vadd.f32 %v4490, 1.0
    %v4492 = vrcp.pop %v4491
    %v4493 = vmul.f32 %v4491, %v4492
    %v4494 = vsub.f32 1.0, %v4493
    %v4495 = vmul.f32 %v4492, %v4494
    %v4496 = vadd.f32 %v4492, %v4495
    %vm4497 = vweird.f32 %v4491
    %vm4498 = vweird.f32 %v4492
    %vm4499 = vmor %vm4497, %vm4498
    %v4500 = vsel %vm4499, %v4492, %v4496
    %v4501 = vand.u32 2147483647, %v4491
    %vm4502 = vcmp.eq.f32.partialorder %v4501, 8.507059e+37
    %v4503 = vand.u32 %v4491, 2147483648
    %v4504 = vor.u32 1.1754944e-38, %v4503
    %v4505 = vsel %vm4502, %v4504, %v4500
    %v4506 = vmul.f32 %v4481, %v4505
    %v4507 = vmin.f32 %v4506, 1.0
    %v4508 = vmax.f32 %v4507, -1.0
    %v4509 = vmul.f32 %v743, %v743
    %v4510 = vmin.f32 16.0, %v4509
    %v4511 = vmul.f32 %v4510, 2.1237322e-06
    %v4512 = vadd.f32 %v4511, 0.00028619796
    %v4513 = vmul.f32 %v4510, %v4512
    %v4514 = vadd.f32 %v4513, 0.0036580483
    %v4515 = vmul.f32 %v4510, %v4514
    %v4516 = vadd.f32 %v4515, 0.05243302
    %v4517 = vmul.f32 %v4510, %v4516
    %v4518 = vadd.f32 %v4517, 0.18741608
    %v4519 = vmul.f32 %v4510, %v4518
    %v4520 = vadd.f32 %v4519, 1.1283791
    %v4521 = vmul.f32 %v743, %v4520
    %v4522 = vmul.f32 %v4510, 3.8918573e-05
    %v4523 = vadd.f32 %v4522, 0.001143296
    %v4524 = vmul.f32 %v4510, %v4523
    %v4525 = vadd.f32 %v4524, 0.014752088
    %v4526 = vmul.f32 %v4510, %v4525
    %v4527 = vadd.f32 %v4526, 0.112945676
    %v4528 = vmul.f32 %v4510, %v4527
    %v4529 = vadd.f32 %v4528, 0.4994258
    %v4530 = vmul.f32 %v4510, %v4529
    %v4531 = vadd.f32 %v4530, 1.0
    %v4532 = vrcp.pop %v4531
    %v4533 = vmul.f32 %v4531, %v4532
    %v4534 = vsub.f32 1.0, %v4533
    %v4535 = vmul.f32 %v4532, %v4534
    %v4536 = vadd.f32 %v4532, %v4535
    %vm4537 = vweird.f32 %v4531
    %vm4538 = vweird.f32 %v4532
    %vm4539 = vmor %vm4537, %vm4538
    %v4540 = vsel %vm4539, %v4532, %v4536
    %v4541 = vand.u32 2147483647, %v4531
    %vm4542 = vcmp.eq.f32.partialorder %v4541, 8.507059e+37
    %v4543 = vand.u32 %v4531, 2147483648
    %v4544 = vor.u32 1.1754944e-38, %v4543
    %v4545 = vsel %vm4542, %v4544, %v4540
    %v4546 = vmul.f32 %v4521, %v4545
    %v4547 = vmin.f32 %v4546, 1.0
    %v4548 = vmax.f32 %v4547, -1.0
    %v4549 = vmul.f32 %v744, %v744
    %v4550 = vmin.f32 16.0, %v4549
    %v4551 = vmul.f32 %v4550, 2.1237322e-06
    %v4552 = vadd.f32 %v4551, 0.00028619796
    %v4553 = vmul.f32 %v4550, %v4552
    %v4554 = vadd.f32 %v4553, 0.0036580483
    %v4555 = vmul.f32 %v4550, %v4554
    %v4556 = vadd.f32 %v4555, 0.05243302
    %v4557 = vmul.f32 %v4550, %v4556
    %v4558 = vadd.f32 %v4557, 0.18741608
    %v4559 = vmul.f32 %v4550, %v4558
    %v4560 = vadd.f32 %v4559, 1.1283791
    %v4561 = vmul.f32 %v744, %v4560
    %v4562 = vmul.f32 %v4550, 3.8918573e-05
    %v4563 = vadd.f32 %v4562, 0.001143296
    %v4564 = vmul.f32 %v4550, %v4563
    %v4565 = vadd.f32 %v4564, 0.014752088
    %v4566 = vmul.f32 %v4550, %v4565
    %v4567 = vadd.f32 %v4566, 0.112945676
    %v4568 = vmul.f32 %v4550, %v4567
    %v4569 = vadd.f32 %v4568, 0.4994258
    %v4570 = vmul.f32 %v4550, %v4569
    %v4571 = vadd.f32 %v4570, 1.0
    %v4572 = vrcp.pop %v4571
    %v4573 = vmul.f32 %v4571, %v4572
    %v4574 = vsub.f32 1.0, %v4573
    %v4575 = vmul.f32 %v4572, %v4574
    %v4576 = vadd.f32 %v4572, %v4575
    %vm4577 = vweird.f32 %v4571
    %vm4578 = vweird.f32 %v4572
    %vm4579 = vmor %vm4577, %vm4578
    %v4580 = vsel %vm4579, %v4572, %v4576
    %v4581 = vand.u32 2147483647, %v4571
    %vm4582 = vcmp.eq.f32.partialorder %v4581, 8.507059e+37
    %v4583 = vand.u32 %v4571, 2147483648
    %v4584 = vor.u32 1.1754944e-38, %v4583
    %v4585 = vsel %vm4582, %v4584, %v4580
    %v4586 = vmul.f32 %v4561, %v4585
    %v4587 = vmin.f32 %v4586, 1.0
    %v4588 = vmax.f32 %v4587, -1.0
    %v4589 = vmul.f32 %v745, %v745
    %v4590 = vmin.f32 16.0, %v4589
    %v4591 = vmul.f32 %v4590, 2.1237322e-06
    %v4592 = vadd.f32 %v4591, 0.00028619796
    %v4593 = vmul.f32 %v4590, %v4592
    %v4594 = vadd.f32 %v4593, 0.0036580483
    %v4595 = vmul.f32 %v4590, %v4594
    %v4596 = vadd.f32 %v4595, 0.05243302
    %v4597 = vmul.f32 %v4590, %v4596
    %v4598 = vadd.f32 %v4597, 0.18741608
    %v4599 = vmul.f32 %v4590, %v4598
    %v4600 = vadd.f32 %v4599, 1.1283791
    %v4601 = vmul.f32 %v745, %v4600
    %v4602 = vmul.f32 %v4590, 3.8918573e-05
    %v4603 = vadd.f32 %v4602, 0.001143296
    %v4604 = vmul.f32 %v4590, %v4603
    %v4605 = vadd.f32 %v4604, 0.014752088
    %v4606 = vmul.f32 %v4590, %v4605
    %v4607 = vadd.f32 %v4606, 0.112945676
    %v4608 = vmul.f32 %v4590, %v4607
    %v4609 = vadd.f32 %v4608, 0.4994258
    %v4610 = vmul.f32 %v4590, %v4609
    %v4611 = vadd.f32 %v4610, 1.0
    %v4612 = vrcp.pop %v4611
    %v4613 = vmul.f32 %v4611, %v4612
    %v4614 = vsub.f32 1.0, %v4613
    %v4615 = vmul.f32 %v4612, %v4614
    %v4616 = vadd.f32 %v4612, %v4615
    %vm4617 = vweird.f32 %v4611
    %vm4618 = vweird.f32 %v4612
    %vm4619 = vmor %vm4617, %vm4618
    %v4620 = vsel %vm4619, %v4612, %v4616
    %v4621 = vand.u32 2147483647, %v4611
    %vm4622 = vcmp.eq.f32.partialorder %v4621, 8.507059e+37
    %v4623 = vand.u32 %v4611, 2147483648
    %v4624 = vor.u32 1.1754944e-38, %v4623
    %v4625 = vsel %vm4622, %v4624, %v4620
    %v4626 = vmul.f32 %v4601, %v4625
    %v4627 = vmin.f32 %v4626, 1.0
    %v4628 = vmax.f32 %v4627, -1.0
    %v4629 = vmul.f32 %v746, %v746
    %v4630 = vmin.f32 16.0, %v4629
    %v4631 = vmul.f32 %v4630, 2.1237322e-06
    %v4632 = vadd.f32 %v4631, 0.00028619796
    %v4633 = vmul.f32 %v4630, %v4632
    %v4634 = vadd.f32 %v4633, 0.0036580483
    %v4635 = vmul.f32 %v4630, %v4634
    %v4636 = vadd.f32 %v4635, 0.05243302
    %v4637 = vmul.f32 %v4630, %v4636
    %v4638 = vadd.f32 %v4637, 0.18741608
    %v4639 = vmul.f32 %v4630, %v4638
    %v4640 = vadd.f32 %v4639, 1.1283791
    %v4641 = vmul.f32 %v746, %v4640
    %v4642 = vmul.f32 %v4630, 3.8918573e-05
    %v4643 = vadd.f32 %v4642, 0.001143296
    %v4644 = vmul.f32 %v4630, %v4643
    %v4645 = vadd.f32 %v4644, 0.014752088
    %v4646 = vmul.f32 %v4630, %v4645
    %v4647 = vadd.f32 %v4646, 0.112945676
    %v4648 = vmul.f32 %v4630, %v4647
    %v4649 = vadd.f32 %v4648, 0.4994258
    %v4650 = vmul.f32 %v4630, %v4649
    %v4651 = vadd.f32 %v4650, 1.0
    %v4652 = vrcp.pop %v4651
    %v4653 = vmul.f32 %v4651, %v4652
    %v4654 = vsub.f32 1.0, %v4653
    %v4655 = vmul.f32 %v4652, %v4654
    %v4656 = vadd.f32 %v4652, %v4655
    %vm4657 = vweird.f32 %v4651
    %vm4658 = vweird.f32 %v4652
    %vm4659 = vmor %vm4657, %vm4658
    %v4660 = vsel %vm4659, %v4652, %v4656
    %v4661 = vand.u32 2147483647, %v4651
    %vm4662 = vcmp.eq.f32.partialorder %v4661, 8.507059e+37
    %v4663 = vand.u32 %v4651, 2147483648
    %v4664 = vor.u32 1.1754944e-38, %v4663
    %v4665 = vsel %vm4662, %v4664, %v4660
    %v4666 = vmul.f32 %v4641, %v4665
    %v4667 = vmin.f32 %v4666, 1.0
    %v4668 = vmax.f32 %v4667, -1.0
    %v4669 = vmul.f32 %v747, %v747
    %v4670 = vmin.f32 16.0, %v4669
    %v4671 = vmul.f32 %v4670, 2.1237322e-06
    %v4672 = vadd.f32 %v4671, 0.00028619796
    %v4673 = vmul.f32 %v4670, %v4672
    %v4674 = vadd.f32 %v4673, 0.0036580483
    %v4675 = vmul.f32 %v4670, %v4674
    %v4676 = vadd.f32 %v4675, 0.05243302
    %v4677 = vmul.f32 %v4670, %v4676
    %v4678 = vadd.f32 %v4677, 0.18741608
    %v4679 = vmul.f32 %v4670, %v4678
    %v4680 = vadd.f32 %v4679, 1.1283791
    %v4681 = vmul.f32 %v747, %v4680
    %v4682 = vmul.f32 %v4670, 3.8918573e-05
    %v4683 = vadd.f32 %v4682, 0.001143296
    %v4684 = vmul.f32 %v4670, %v4683
    %v4685 = vadd.f32 %v4684, 0.014752088
    %v4686 = vmul.f32 %v4670, %v4685
    %v4687 = vadd.f32 %v4686, 0.112945676
    %v4688 = vmul.f32 %v4670, %v4687
    %v4689 = vadd.f32 %v4688, 0.4994258
    %v4690 = vmul.f32 %v4670, %v4689
    %v4691 = vadd.f32 %v4690, 1.0
    %v4692 = vrcp.pop %v4691
    %v4693 = vmul.f32 %v4691, %v4692
    %v4694 = vsub.f32 1.0, %v4693
    %v4695 = vmul.f32 %v4692, %v4694
    %v4696 = vadd.f32 %v4692, %v4695
    %vm4697 = vweird.f32 %v4691
    %vm4698 = vweird.f32 %v4692
    %vm4699 = vmor %vm4697, %vm4698
    %v4700 = vsel %vm4699, %v4692, %v4696
    %v4701 = vand.u32 2147483647, %v4691
    %vm4702 = vcmp.eq.f32.partialorder %v4701, 8.507059e+37
    %v4703 = vand.u32 %v4691, 2147483648
    %v4704 = vor.u32 1.1754944e-38, %v4703
    %v4705 = vsel %vm4702, %v4704, %v4700
    %v4706 = vmul.f32 %v4681, %v4705
    %v4707 = vmin.f32 %v4706, 1.0
    %v4708 = vmax.f32 %v4707, -1.0
    %v4709 = vmul.f32 %v748, %v748
    %v4710 = vmin.f32 16.0, %v4709
    %v4711 = vmul.f32 %v4710, 2.1237322e-06
    %v4712 = vadd.f32 %v4711, 0.00028619796
    %v4713 = vmul.f32 %v4710, %v4712
    %v4714 = vadd.f32 %v4713, 0.0036580483
    %v4715 = vmul.f32 %v4710, %v4714
    %v4716 = vadd.f32 %v4715, 0.05243302
    %v4717 = vmul.f32 %v4710, %v4716
    %v4718 = vadd.f32 %v4717, 0.18741608
    %v4719 = vmul.f32 %v4710, %v4718
    %v4720 = vadd.f32 %v4719, 1.1283791
    %v4721 = vmul.f32 %v748, %v4720
    %v4722 = vmul.f32 %v4710, 3.8918573e-05
    %v4723 = vadd.f32 %v4722, 0.001143296
    %v4724 = vmul.f32 %v4710, %v4723
    %v4725 = vadd.f32 %v4724, 0.014752088
    %v4726 = vmul.f32 %v4710, %v4725
    %v4727 = vadd.f32 %v4726, 0.112945676
    %v4728 = vmul.f32 %v4710, %v4727
    %v4729 = vadd.f32 %v4728, 0.4994258
    %v4730 = vmul.f32 %v4710, %v4729
    %v4731 = vadd.f32 %v4730, 1.0
    %v4732 = vrcp.pop %v4731
    %v4733 = vmul.f32 %v4731, %v4732
    %v4734 = vsub.f32 1.0, %v4733
    %v4735 = vmul.f32 %v4732, %v4734
    %v4736 = vadd.f32 %v4732, %v4735
    %vm4737 = vweird.f32 %v4731
    %vm4738 = vweird.f32 %v4732
    %vm4739 = vmor %vm4737, %vm4738
    %v4740 = vsel %vm4739, %v4732, %v4736
    %v4741 = vand.u32 2147483647, %v4731
    %vm4742 = vcmp.eq.f32.partialorder %v4741, 8.507059e+37
    %v4743 = vand.u32 %v4731, 2147483648
    %v4744 = vor.u32 1.1754944e-38, %v4743
    %v4745 = vsel %vm4742, %v4744, %v4740
    %v4746 = vmul.f32 %v4721, %v4745
    %v4747 = vmin.f32 %v4746, 1.0
    %v4748 = vmax.f32 %v4747, -1.0
    %v4749 = vadd.f32 %v788, 1.0
    %v4750 = vadd.f32 %v828, 1.0
    %v4751 = vadd.f32 %v868, 1.0
    %v4752 = vadd.f32 %v908, 1.0
    %v4753 = vadd.f32 %v948, 1.0
    %v4754 = vadd.f32 %v988, 1.0
    %v4755 = vadd.f32 %v1028, 1.0
    %v4756 = vadd.f32 %v1068, 1.0
    %v4757 = vadd.f32 %v1108, 1.0
    %v4758 = vadd.f32 %v1148, 1.0
    %v4759 = vadd.f32 %v1188, 1.0
    %v4760 = vadd.f32 %v1228, 1.0
    %v4761 = vadd.f32 %v1268, 1.0
    %v4762 = vadd.f32 %v1308, 1.0
    %v4763 = vadd.f32 %v1348, 1.0
    %v4764 = vadd.f32 %v1388, 1.0
    %v4765 = vadd.f32 %v1428, 1.0
    %v4766 = vadd.f32 %v1468, 1.0
    %v4767 = vadd.f32 %v1508, 1.0
    %v4768 = vadd.f32 %v1548, 1.0
    %v4769 = vadd.f32 %v1588, 1.0
    %v4770 = vadd.f32 %v1628, 1.0
    %v4771 = vadd.f32 %v1668, 1.0
    %v4772 = vadd.f32 %v1708, 1.0
    %v4773 = vadd.f32 %v1748, 1.0
    %v4774 = vadd.f32 %v1788, 1.0
    %v4775 = vadd.f32 %v1828, 1.0
    %v4776 = vadd.f32 %v1868, 1.0
    %v4777 = vadd.f32 %v1908, 1.0
    %v4778 = vadd.f32 %v1948, 1.0
    %v4779 = vadd.f32 %v1988, 1.0
    %v4780 = vadd.f32 %v2028, 1.0
    %v4781 = vadd.f32 %v2068, 1.0
    %v4782 = vadd.f32 %v2108, 1.0
    %v4783 = vadd.f32 %v2148, 1.0
    %v4784 = vadd.f32 %v2188, 1.0
    %v4785 = vadd.f32 %v2228, 1.0
    %v4786 = vadd.f32 %v2268, 1.0
    %v4787 = vadd.f32 %v2308, 1.0
    %v4788 = vadd.f32 %v2348, 1.0
    %v4789 = vadd.f32 %v2388, 1.0
    %v4790 = vadd.f32 %v2428, 1.0
    %v4791 = vadd.f32 %v2468, 1.0
    %v4792 = vadd.f32 %v2508, 1.0
    %v4793 = vadd.f32 %v2548, 1.0
    %v4794 = vadd.f32 %v2588, 1.0
    %v4795 = vadd.f32 %v2628, 1.0
    %v4796 = vadd.f32 %v2668, 1.0
    %v4797 = vadd.f32 %v2708, 1.0
    %v4798 = vadd.f32 %v2748, 1.0
    %v4799 = vadd.f32 %v2788, 1.0
    %v4800 = vadd.f32 %v2828, 1.0
    %v4801 = vadd.f32 %v2868, 1.0
    %v4802 = vadd.f32 %v2908, 1.0
    %v4803 = vadd.f32 %v2948, 1.0
    %v4804 = vadd.f32 %v2988, 1.0
    %v4805 = vadd.f32 %v3028, 1.0
    %v4806 = vadd.f32 %v3068, 1.0
    %v4807 = vadd.f32 %v3108, 1.0
    %v4808 = vadd.f32 %v3148, 1.0
    %v4809 = vadd.f32 %v3188, 1.0
    %v4810 = vadd.f32 %v3228, 1.0
    %v4811 = vadd.f32 %v3268, 1.0
    %v4812 = vadd.f32 %v3308, 1.0
    %v4813 = vadd.f32 %v3348, 1.0
    %v4814 = vadd.f32 %v3388, 1.0
    %v4815 = vadd.f32 %v3428, 1.0
    %v4816 = vadd.f32 %v3468, 1.0
    %v4817 = vadd.f32 %v3508, 1.0
    %v4818 = vadd.f32 %v3548, 1.0
    %v4819 = vadd.f32 %v3588, 1.0
    %v4820 = vadd.f32 %v3628, 1.0
    %v4821 = vadd.f32 %v3668, 1.0
    %v4822 = vadd.f32 %v3708, 1.0
    %v4823 = vadd.f32 %v3748, 1.0
    %v4824 = vadd.f32 %v3788, 1.0
    %v4825 = vadd.f32 %v3828, 1.0
    %v4826 = vadd.f32 %v3868, 1.0
    %v4827 = vadd.f32 %v3908, 1.0
    %v4828 = vadd.f32 %v3948, 1.0
    %v4829 = vadd.f32 %v3988, 1.0
    %v4830 = vadd.f32 %v4028, 1.0
    %v4831 = vadd.f32 %v4068, 1.0
    %v4832 = vadd.f32 %v4108, 1.0
    %v4833 = vadd.f32 %v4148, 1.0
    %v4834 = vadd.f32 %v4188, 1.0
    %v4835 = vadd.f32 %v4228, 1.0
    %v4836 = vadd.f32 %v4268, 1.0
    %v4837 = vadd.f32 %v4308, 1.0
    %v4838 = vadd.f32 %v4348, 1.0
    %v4839 = vadd.f32 %v4388, 1.0
    %v4840 = vadd.f32 %v4428, 1.0
    %v4841 = vadd.f32 %v4468, 1.0
    %v4842 = vadd.f32 %v4508, 1.0
    %v4843 = vadd.f32 %v4548, 1.0
    %v4844 = vadd.f32 %v4588, 1.0
    %v4845 = vadd.f32 %v4628, 1.0
    %v4846 = vadd.f32 %v4668, 1.0
    %v4847 = vadd.f32 %v4708, 1.0
    %v4848 = vadd.f32 %v4748, 1.0
    %v4849 = vmul.f32 %v549, %v4749
    %v4850 = vmul.f32 %v550, %v4750
    %v4851 = vmul.f32 %v551, %v4751
    %v4852 = vmul.f32 %v552, %v4752
    %v4853 = vmul.f32 %v553, %v4753
    %v4854 = vmul.f32 %v554, %v4754
    %v4855 = vmul.f32 %v555, %v4755
    %v4856 = vmul.f32 %v556, %v4756
    %v4857 = vmul.f32 %v557, %v4757
    %v4858 = vmul.f32 %v558, %v4758
    %v4859 = vmul.f32 %v559, %v4759
    %v4860 = vmul.f32 %v560, %v4760
    %v4861 = vmul.f32 %v561, %v4761
    %v4862 = vmul.f32 %v562, %v4762
    %v4863 = vmul.f32 %v563, %v4763
    %v4864 = vmul.f32 %v564, %v4764
    %v4865 = vmul.f32 %v565, %v4765
    %v4866 = vmul.f32 %v566, %v4766
    %v4867 = vmul.f32 %v567, %v4767
    %v4868 = vmul.f32 %v568, %v4768
    %v4869 = vmul.f32 %v569, %v4769
    %v4870 = vmul.f32 %v570, %v4770
    %v4871 = vmul.f32 %v571, %v4771
    %v4872 = vmul.f32 %v572, %v4772
    %v4873 = vmul.f32 %v573, %v4773
    %v4874 = vmul.f32 %v574, %v4774
    %v4875 = vmul.f32 %v575, %v4775
    %v4876 = vmul.f32 %v576, %v4776
    %v4877 = vmul.f32 %v577, %v4777
    %v4878 = vmul.f32 %v578, %v4778
    %v4879 = vmul.f32 %v579, %v4779
    %v4880 = vmul.f32 %v580, %v4780
    %v4881 = vmul.f32 %v581, %v4781
    %v4882 = vmul.f32 %v582, %v4782
    %v4883 = vmul.f32 %v583, %v4783
    %v4884 = vmul.f32 %v584, %v4784
    %v4885 = vmul.f32 %v585, %v4785
    %v4886 = vmul.f32 %v586, %v4786
    %v4887 = vmul.f32 %v587, %v4787
    %v4888 = vmul.f32 %v588, %v4788
    %v4889 = vmul.f32 %v589, %v4789
    %v4890 = vmul.f32 %v590, %v4790
    %v4891 = vmul.f32 %v591, %v4791
    %v4892 = vmul.f32 %v592, %v4792
    %v4893 = vmul.f32 %v593, %v4793
    %v4894 = vmul.f32 %v594, %v4794
    %v4895 = vmul.f32 %v595, %v4795
    %v4896 = vmul.f32 %v596, %v4796
    %v4897 = vmul.f32 %v597, %v4797
    %v4898 = vmul.f32 %v598, %v4798
    %v4899 = vmul.f32 %v599, %v4799
    %v4900 = vmul.f32 %v600, %v4800
    %v4901 = vmul.f32 %v601, %v4801
    %v4902 = vmul.f32 %v602, %v4802
    %v4903 = vmul.f32 %v603, %v4803
    %v4904 = vmul.f32 %v604, %v4804
    %v4905 = vmul.f32 %v605, %v4805
    %v4906 = vmul.f32 %v606, %v4806
    %v4907 = vmul.f32 %v607, %v4807
    %v4908 = vmul.f32 %v608, %v4808
    %v4909 = vmul.f32 %v609, %v4809
    %v4910 = vmul.f32 %v610, %v4810
    %v4911 = vmul.f32 %v611, %v4811
    %v4912 = vmul.f32 %v612, %v4812
    %v4913 = vmul.f32 %v613, %v4813
    %v4914 = vmul.f32 %v614, %v4814
    %v4915 = vmul.f32 %v615, %v4815
    %v4916 = vmul.f32 %v616, %v4816
    %v4917 = vmul.f32 %v617, %v4817
    %v4918 = vmul.f32 %v618, %v4818
    %v4919 = vmul.f32 %v619, %v4819
    %v4920 = vmul.f32 %v620, %v4820
    %v4921 = vmul.f32 %v621, %v4821
    %v4922 = vmul.f32 %v622, %v4822
    %v4923 = vmul.f32 %v623, %v4823
    %v4924 = vmul.f32 %v624, %v4824
    %v4925 = vmul.f32 %v625, %v4825
    %v4926 = vmul.f32 %v626, %v4826
    %v4927 = vmul.f32 %v627, %v4827
    %v4928 = vmul.f32 %v628, %v4828
    %v4929 = vmul.f32 %v629, %v4829
    %v4930 = vmul.f32 %v630, %v4830
    %v4931 = vmul.f32 %v631, %v4831
    %v4932 = vmul.f32 %v632, %v4832
    %v4933 = vmul.f32 %v633, %v4833
    %v4934 = vmul.f32 %v634, %v4834
    %v4935 = vmul.f32 %v635, %v4835
    %v4936 = vmul.f32 %v636, %v4836
    %v4937 = vmul.f32 %v637, %v4837
    %v4938 = vmul.f32 %v638, %v4838
    %v4939 = vmul.f32 %v639, %v4839
    %v4940 = vmul.f32 %v640, %v4840
    %v4941 = vmul.f32 %v641, %v4841
    %v4942 = vmul.f32 %v642, %v4842
    %v4943 = vmul.f32 %v643, %v4843
    %v4944 = vmul.f32 %v644, %v4844
    %v4945 = vmul.f32 %v645, %v4845
    %v4946 = vmul.f32 %v646, %v4846
    %v4947 = vmul.f32 %v647, %v4847
    %v4948 = vmul.f32 %v648, %v4848
    %v4949 = vld [vmem:[#allocation8] sm:$0xff]
    %v4950 = vld [vmem:[#allocation8 + $0x8] sm:$0xff]
    %v4951 = vld [vmem:[#allocation8 + $0x10] sm:$0xff]
    %v4952 = vld [vmem:[#allocation8 + $0x18] sm:$0xff]
    %v4953 = vld [vmem:[#allocation8 + $0x20] sm:$0xff]
    %v4954 = vld [vmem:[#allocation8 + $0x28] sm:$0xff]
    %v4955 = vld [vmem:[#allocation8 + $0x30] sm:$0xff]
    %v4956 = vld [vmem:[#allocation8 + $0x38] sm:$0xff]
    %v4957 = vld [vmem:[#allocation8 + $0x40] sm:$0xff]
    %v4958 = vld [vmem:[#allocation8 + $0x48] sm:$0xff]
    %v4959 = vld [vmem:[#allocation8 + $0x50] sm:$0xff]
    %v4960 = vld [vmem:[#allocation8 + $0x58] sm:$0xff]
    %v4961 = vld [vmem:[#allocation8 + $0x60] sm:$0xff]
    %v4962 = vld [vmem:[#allocation8 + $0x68] sm:$0xff]
    %v4963 = vld [vmem:[#allocation8 + $0x70] sm:$0xff]
    %v4964 = vld [vmem:[#allocation8 + $0x78] sm:$0xff]
    %v4965 = vld [vmem:[#allocation8 + $0x80] sm:$0xff]
    %v4966 = vld [vmem:[#allocation8 + $0x88] sm:$0xff]
    %v4967 = vld [vmem:[#allocation8 + $0x90] sm:$0xff]
    %v4968 = vld [vmem:[#allocation8 + $0x98] sm:$0xff]
    %v4969 = vld [vmem:[#allocation8 + $0xa0] sm:$0xff]
    %v4970 = vld [vmem:[#allocation8 + $0xa8] sm:$0xff]
    %v4971 = vld [vmem:[#allocation8 + $0xb0] sm:$0xff]
    %v4972 = vld [vmem:[#allocation8 + $0xb8] sm:$0xff]
    %v4973 = vld [vmem:[#allocation8 + $0xc0] sm:$0xff]
    %v4974 = vld [vmem:[#allocation8 + $0xc8] sm:$0xff]
    %v4975 = vld [vmem:[#allocation8 + $0xd0] sm:$0xff]
    %v4976 = vld [vmem:[#allocation8 + $0xd8] sm:$0xff]
    %v4977 = vld [vmem:[#allocation8 + $0xe0] sm:$0xff]
    %v4978 = vld [vmem:[#allocation8 + $0xe8] sm:$0xff]
    %v4979 = vld [vmem:[#allocation8 + $0xf0] sm:$0xff]
    %v4980 = vld [vmem:[#allocation8 + $0xf8] sm:$0xff]
    %v4981 = vld [vmem:[#allocation8 + $0x100] sm:$0xff]
    %v4982 = vld [vmem:[#allocation8 + $0x108] sm:$0xff]
    %v4983 = vld [vmem:[#allocation8 + $0x110] sm:$0xff]
    %v4984 = vld [vmem:[#allocation8 + $0x118] sm:$0xff]
    %v4985 = vld [vmem:[#allocation8 + $0x120] sm:$0xff]
    %v4986 = vld [vmem:[#allocation8 + $0x128] sm:$0xff]
    %v4987 = vld [vmem:[#allocation8 + $0x130] sm:$0xff]
    %v4988 = vld [vmem:[#allocation8 + $0x138] sm:$0xff]
    %v4989 = vld [vmem:[#allocation8 + $0x140] sm:$0xff]
    %v4990 = vld [vmem:[#allocation8 + $0x148] sm:$0xff]
    %v4991 = vld [vmem:[#allocation8 + $0x150] sm:$0xff]
    %v4992 = vld [vmem:[#allocation8 + $0x158] sm:$0xff]
    %v4993 = vld [vmem:[#allocation8 + $0x160] sm:$0xff]
    %v4994 = vld [vmem:[#allocation8 + $0x168] sm:$0xff]
    %v4995 = vld [vmem:[#allocation8 + $0x170] sm:$0xff]
    %v4996 = vld [vmem:[#allocation8 + $0x178] sm:$0xff]
    %v4997 = vld [vmem:[#allocation8 + $0x180] sm:$0xff]
    %v4998 = vld [vmem:[#allocation8 + $0x188] sm:$0xff]
    %v4999 = vld [vmem:[#allocation8 + $0x190] sm:$0xff]
    %v5000 = vld [vmem:[#allocation8 + $0x198] sm:$0xff]
    %v5001 = vld [vmem:[#allocation8 + $0x1a0] sm:$0xff]
    %v5002 = vld [vmem:[#allocation8 + $0x1a8] sm:$0xff]
    %v5003 = vld [vmem:[#allocation8 + $0x1b0] sm:$0xff]
    %v5004 = vld [vmem:[#allocation8 + $0x1b8] sm:$0xff]
    %v5005 = vld [vmem:[#allocation8 + $0x1c0] sm:$0xff]
    %v5006 = vld [vmem:[#allocation8 + $0x1c8] sm:$0xff]
    %v5007 = vld [vmem:[#allocation8 + $0x1d0] sm:$0xff]
    %v5008 = vld [vmem:[#allocation8 + $0x1d8] sm:$0xff]
    %v5009 = vld [vmem:[#allocation8 + $0x1e0] sm:$0xff]
    %v5010 = vld [vmem:[#allocation8 + $0x1e8] sm:$0xff]
    %v5011 = vld [vmem:[#allocation8 + $0x1f0] sm:$0xff]
    %v5012 = vld [vmem:[#allocation8 + $0x1f8] sm:$0xff]
    %v5013 = vld [vmem:[%s4] sm:$0x1]
    %v5015 = vperm.slane %v5013, 0
    %5017 = vmatpush.msra.mxu0 %v4964
    %5018 = vmatpush.msra.mxu0 %v4963
    %5019 = vmatpush.msra.mxu0 %v4962
    %5020 = vmatpush.msra.mxu0 %v4961
    %5021 = vmatpush.msra.mxu0 %v4960
    %5022 = vmatpush.msra.mxu0 %v4959
    %5023 = vmatpush.msra.mxu0 %v4958
    %5024 = vmatpush.msra.mxu0 %v4957
    %5025 = vmatpush.msra.mxu0 %v4956
    %5026 = vmatpush.msra.mxu0 %v4955
    %5027 = vmatpush.msra.mxu0 %v4954
    %5028 = vmatpush.msra.mxu0 %v4953
    %5029 = vmatpush.msra.mxu0 %v4952
    %5030 = vmatpush.msra.mxu0 %v4951
    %5031 = vmatpush.msra.mxu0 %v4950
    %5032 = vmatpush.msra.mxu0 %v4949
    %5033 = vmatmul.f32.gmra.mxu0 %v4849
    %v5034 = vpop.f32.mrf.mxu0
    %v5035 = vadd.f32 %v5015, %v5034
    %5036 = vmatmul.f32.gmra.mxu0 %v4853
    %v5037 = vpop.f32.mrf.mxu0
    %v5038 = vadd.f32 %v5015, %v5037
    %5039 = vmatmul.f32.gmra.mxu0 %v4857
    %v5040 = vpop.f32.mrf.mxu0
    %v5041 = vadd.f32 %v5015, %v5040
    %5042 = vmatmul.f32.gmra.mxu0 %v4861
    %v5043 = vpop.f32.mrf.mxu0
    %v5044 = vadd.f32 %v5015, %v5043
    %5045 = vmatmul.f32.gmra.mxu0 %v4865
    %v5046 = vpop.f32.mrf.mxu0
    %v5047 = vadd.f32 %v5015, %v5046
    %5048 = vmatmul.f32.gmra.mxu0 %v4869
    %v5049 = vpop.f32.mrf.mxu0
    %v5050 = vadd.f32 %v5015, %v5049
    %5051 = vmatmul.f32.gmra.mxu0 %v4873
    %v5052 = vpop.f32.mrf.mxu0
    %v5053 = vadd.f32 %v5015, %v5052
    %5054 = vmatmul.f32.gmra.mxu0 %v4877
    %v5055 = vpop.f32.mrf.mxu0
    %v5056 = vadd.f32 %v5015, %v5055
    %5057 = vmatmul.f32.gmra.mxu0 %v4881
    %v5058 = vpop.f32.mrf.mxu0
    %v5059 = vadd.f32 %v5015, %v5058
    %5060 = vmatmul.f32.gmra.mxu0 %v4885
    %v5061 = vpop.f32.mrf.mxu0
    %v5062 = vadd.f32 %v5015, %v5061
    %5063 = vmatmul.f32.gmra.mxu0 %v4889
    %v5064 = vpop.f32.mrf.mxu0
    %v5065 = vadd.f32 %v5015, %v5064
    %5066 = vmatmul.f32.gmra.mxu0 %v4893
    %v5067 = vpop.f32.mrf.mxu0
    %v5068 = vadd.f32 %v5015, %v5067
    %5069 = vmatmul.f32.gmra.mxu0 %v4897
    %v5070 = vpop.f32.mrf.mxu0
    %v5071 = vadd.f32 %v5015, %v5070
    %5072 = vmatmul.f32.gmra.mxu0 %v4901
    %v5073 = vpop.f32.mrf.mxu0
    %v5074 = vadd.f32 %v5015, %v5073
    %5075 = vmatmul.f32.gmra.mxu0 %v4905
    %v5076 = vpop.f32.mrf.mxu0
    %v5077 = vadd.f32 %v5015, %v5076
    %5078 = vmatmul.f32.gmra.mxu0 %v4909
    %v5079 = vpop.f32.mrf.mxu0
    %v5080 = vadd.f32 %v5015, %v5079
    %5081 = vmatmul.f32.gmra.mxu0 %v4913
    %v5082 = vpop.f32.mrf.mxu0
    %v5083 = vadd.f32 %v5015, %v5082
    %5084 = vmatmul.f32.gmra.mxu0 %v4917
    %v5085 = vpop.f32.mrf.mxu0
    %v5086 = vadd.f32 %v5015, %v5085
    %5087 = vmatmul.f32.gmra.mxu0 %v4921
    %v5088 = vpop.f32.mrf.mxu0
    %v5089 = vadd.f32 %v5015, %v5088
    %5090 = vmatmul.f32.gmra.mxu0 %v4925
    %v5091 = vpop.f32.mrf.mxu0
    %v5092 = vadd.f32 %v5015, %v5091
    %5093 = vmatmul.f32.gmra.mxu0 %v4929
    %v5094 = vpop.f32.mrf.mxu0
    %v5095 = vadd.f32 %v5015, %v5094
    %5096 = vmatmul.f32.gmra.mxu0 %v4933
    %v5097 = vpop.f32.mrf.mxu0
    %v5098 = vadd.f32 %v5015, %v5097
    %5099 = vmatmul.f32.gmra.mxu0 %v4937
    %v5100 = vpop.f32.mrf.mxu0
    %v5101 = vadd.f32 %v5015, %v5100
    %5102 = vmatmul.f32.gmra.mxu0 %v4941
    %v5103 = vpop.f32.mrf.mxu0
    %v5104 = vadd.f32 %v5015, %v5103
    %5105 = vmatmul.f32.gmra.mxu0 %v4945
    %v5106 = vpop.f32.mrf.mxu0
    %v5107 = vadd.f32 %v5015, %v5106
    %5108 = vdwg.mxu0
    %5109 = vmatpush.msra.mxu0 %v4980
    %5110 = vmatpush.msra.mxu0 %v4979
    %5111 = vmatpush.msra.mxu0 %v4978
    %5112 = vmatpush.msra.mxu0 %v4977
    %5113 = vmatpush.msra.mxu0 %v4976
    %5114 = vmatpush.msra.mxu0 %v4975
    %5115 = vmatpush.msra.mxu0 %v4974
    %5116 = vmatpush.msra.mxu0 %v4973
    %5117 = vmatpush.msra.mxu0 %v4972
    %5118 = vmatpush.msra.mxu0 %v4971
    %5119 = vmatpush.msra.mxu0 %v4970
    %5120 = vmatpush.msra.mxu0 %v4969
    %5121 = vmatpush.msra.mxu0 %v4968
    %5122 = vmatpush.msra.mxu0 %v4967
    %5123 = vmatpush.msra.mxu0 %v4966
    %5124 = vmatpush.msra.mxu0 %v4965
    %5125 = vmatmul.f32.gmra.mxu0 %v4850
    %v5126 = vpop.f32.mrf.mxu0
    %v5127 = vadd.f32 %v5035, %v5126
    %5128 = vmatmul.f32.gmra.mxu0 %v4854
    %v5129 = vpop.f32.mrf.mxu0
    %v5130 = vadd.f32 %v5038, %v5129
    %5131 = vmatmul.f32.gmra.mxu0 %v4858
    %v5132 = vpop.f32.mrf.mxu0
    %v5133 = vadd.f32 %v5041, %v5132
    %5134 = vmatmul.f32.gmra.mxu0 %v4862
    %v5135 = vpop.f32.mrf.mxu0
    %v5136 = vadd.f32 %v5044, %v5135
    %5137 = vmatmul.f32.gmra.mxu0 %v4866
    %v5138 = vpop.f32.mrf.mxu0
    %v5139 = vadd.f32 %v5047, %v5138
    %5140 = vmatmul.f32.gmra.mxu0 %v4870
    %v5141 = vpop.f32.mrf.mxu0
    %v5142 = vadd.f32 %v5050, %v5141
    %5143 = vmatmul.f32.gmra.mxu0 %v4874
    %v5144 = vpop.f32.mrf.mxu0
    %v5145 = vadd.f32 %v5053, %v5144
    %5146 = vmatmul.f32.gmra.mxu0 %v4878
    %v5147 = vpop.f32.mrf.mxu0
    %v5148 = vadd.f32 %v5056, %v5147
    %5149 = vmatmul.f32.gmra.mxu0 %v4882
    %v5150 = vpop.f32.mrf.mxu0
    %v5151 = vadd.f32 %v5059, %v5150
    %5152 = vmatmul.f32.gmra.mxu0 %v4886
    %v5153 = vpop.f32.mrf.mxu0
    %v5154 = vadd.f32 %v5062, %v5153
    %5155 = vmatmul.f32.gmra.mxu0 %v4890
    %v5156 = vpop.f32.mrf.mxu0
    %v5157 = vadd.f32 %v5065, %v5156
    %5158 = vmatmul.f32.gmra.mxu0 %v4894
    %v5159 = vpop.f32.mrf.mxu0
    %v5160 = vadd.f32 %v5068, %v5159
    %5161 = vmatmul.f32.gmra.mxu0 %v4898
    %v5162 = vpop.f32.mrf.mxu0
    %v5163 = vadd.f32 %v5071, %v5162
    %5164 = vmatmul.f32.gmra.mxu0 %v4902
    %v5165 = vpop.f32.mrf.mxu0
    %v5166 = vadd.f32 %v5074, %v5165
    %5167 = vmatmul.f32.gmra.mxu0 %v4906
    %v5168 = vpop.f32.mrf.mxu0
    %v5169 = vadd.f32 %v5077, %v5168
    %5170 = vmatmul.f32.gmra.mxu0 %v4910
    %v5171 = vpop.f32.mrf.mxu0
    %v5172 = vadd.f32 %v5080, %v5171
    %5173 = vmatmul.f32.gmra.mxu0 %v4914
    %v5174 = vpop.f32.mrf.mxu0
    %v5175 = vadd.f32 %v5083, %v5174
    %5176 = vmatmul.f32.gmra.mxu0 %v4918
    %v5177 = vpop.f32.mrf.mxu0
    %v5178 = vadd.f32 %v5086, %v5177
    %5179 = vmatmul.f32.gmra.mxu0 %v4922
    %v5180 = vpop.f32.mrf.mxu0
    %v5181 = vadd.f32 %v5089, %v5180
    %5182 = vmatmul.f32.gmra.mxu0 %v4926
    %v5183 = vpop.f32.mrf.mxu0
    %v5184 = vadd.f32 %v5092, %v5183
    %5185 = vmatmul.f32.gmra.mxu0 %v4930
    %v5186 = vpop.f32.mrf.mxu0
    %v5187 = vadd.f32 %v5095, %v5186
    %5188 = vmatmul.f32.gmra.mxu0 %v4934
    %v5189 = vpop.f32.mrf.mxu0
    %v5190 = vadd.f32 %v5098, %v5189
    %5191 = vmatmul.f32.gmra.mxu0 %v4938
    %v5192 = vpop.f32.mrf.mxu0
    %v5193 = vadd.f32 %v5101, %v5192
    %5194 = vmatmul.f32.gmra.mxu0 %v4942
    %v5195 = vpop.f32.mrf.mxu0
    %v5196 = vadd.f32 %v5104, %v5195
    %5197 = vmatmul.f32.gmra.mxu0 %v4946
    %v5198 = vpop.f32.mrf.mxu0
    %v5199 = vadd.f32 %v5107, %v5198
    %5200 = vdwg.mxu0
    %5201 = vmatpush.msra.mxu0 %v4996
    %5202 = vmatpush.msra.mxu0 %v4995
    %5203 = vmatpush.msra.mxu0 %v4994
    %5204 = vmatpush.msra.mxu0 %v4993
    %5205 = vmatpush.msra.mxu0 %v4992
    %5206 = vmatpush.msra.mxu0 %v4991
    %5207 = vmatpush.msra.mxu0 %v4990
    %5208 = vmatpush.msra.mxu0 %v4989
    %5209 = vmatpush.msra.mxu0 %v4988
    %5210 = vmatpush.msra.mxu0 %v4987
    %5211 = vmatpush.msra.mxu0 %v4986
    %5212 = vmatpush.msra.mxu0 %v4985
    %5213 = vmatpush.msra.mxu0 %v4984
    %5214 = vmatpush.msra.mxu0 %v4983
    %5215 = vmatpush.msra.mxu0 %v4982
    %5216 = vmatpush.msra.mxu0 %v4981
    %5217 = vmatmul.f32.gmra.mxu0 %v4851
    %v5218 = vpop.f32.mrf.mxu0
    %v5219 = vadd.f32 %v5127, %v5218
    %5220 = vmatmul.f32.gmra.mxu0 %v4855
    %v5221 = vpop.f32.mrf.mxu0
    %v5222 = vadd.f32 %v5130, %v5221
    %5223 = vmatmul.f32.gmra.mxu0 %v4859
    %v5224 = vpop.f32.mrf.mxu0
    %v5225 = vadd.f32 %v5133, %v5224
    %5226 = vmatmul.f32.gmra.mxu0 %v4863
    %v5227 = vpop.f32.mrf.mxu0
    %v5228 = vadd.f32 %v5136, %v5227
    %5229 = vmatmul.f32.gmra.mxu0 %v4867
    %v5230 = vpop.f32.mrf.mxu0
    %v5231 = vadd.f32 %v5139, %v5230
    %5232 = vmatmul.f32.gmra.mxu0 %v4871
    %v5233 = vpop.f32.mrf.mxu0
    %v5234 = vadd.f32 %v5142, %v5233
    %5235 = vmatmul.f32.gmra.mxu0 %v4875
    %v5236 = vpop.f32.mrf.mxu0
    %v5237 = vadd.f32 %v5145, %v5236
    %5238 = vmatmul.f32.gmra.mxu0 %v4879
    %v5239 = vpop.f32.mrf.mxu0
    %v5240 = vadd.f32 %v5148, %v5239
    %5241 = vmatmul.f32.gmra.mxu0 %v4883
    %v5242 = vpop.f32.mrf.mxu0
    %v5243 = vadd.f32 %v5151, %v5242
    %5244 = vmatmul.f32.gmra.mxu0 %v4887
    %v5245 = vpop.f32.mrf.mxu0
    %v5246 = vadd.f32 %v5154, %v5245
    %5247 = vmatmul.f32.gmra.mxu0 %v4891
    %v5248 = vpop.f32.mrf.mxu0
    %v5249 = vadd.f32 %v5157, %v5248
    %5250 = vmatmul.f32.gmra.mxu0 %v4895
    %v5251 = vpop.f32.mrf.mxu0
    %v5252 = vadd.f32 %v5160, %v5251
    %5253 = vmatmul.f32.gmra.mxu0 %v4899
    %v5254 = vpop.f32.mrf.mxu0
    %v5255 = vadd.f32 %v5163, %v5254
    %5256 = vmatmul.f32.gmra.mxu0 %v4903
    %v5257 = vpop.f32.mrf.mxu0
    %v5258 = vadd.f32 %v5166, %v5257
    %5259 = vmatmul.f32.gmra.mxu0 %v4907
    %v5260 = vpop.f32.mrf.mxu0
    %v5261 = vadd.f32 %v5169, %v5260
    %5262 = vmatmul.f32.gmra.mxu0 %v4911
    %v5263 = vpop.f32.mrf.mxu0
    %v5264 = vadd.f32 %v5172, %v5263
    %5265 = vmatmul.f32.gmra.mxu0 %v4915
    %v5266 = vpop.f32.mrf.mxu0
    %v5267 = vadd.f32 %v5175, %v5266
    %5268 = vmatmul.f32.gmra.mxu0 %v4919
    %v5269 = vpop.f32.mrf.mxu0
    %v5270 = vadd.f32 %v5178, %v5269
    %5271 = vmatmul.f32.gmra.mxu0 %v4923
    %v5272 = vpop.f32.mrf.mxu0
    %v5273 = vadd.f32 %v5181, %v5272
    %5274 = vmatmul.f32.gmra.mxu0 %v4927
    %v5275 = vpop.f32.mrf.mxu0
    %v5276 = vadd.f32 %v5184, %v5275
    %5277 = vmatmul.f32.gmra.mxu0 %v4931
    %v5278 = vpop.f32.mrf.mxu0
    %v5279 = vadd.f32 %v5187, %v5278
    %5280 = vmatmul.f32.gmra.mxu0 %v4935
    %v5281 = vpop.f32.mrf.mxu0
    %v5282 = vadd.f32 %v5190, %v5281
    %5283 = vmatmul.f32.gmra.mxu0 %v4939
    %v5284 = vpop.f32.mrf.mxu0
    %v5285 = vadd.f32 %v5193, %v5284
    %5286 = vmatmul.f32.gmra.mxu0 %v4943
    %v5287 = vpop.f32.mrf.mxu0
    %v5288 = vadd.f32 %v5196, %v5287
    %5289 = vmatmul.f32.gmra.mxu0 %v4947
    %v5290 = vpop.f32.mrf.mxu0
    %v5291 = vadd.f32 %v5199, %v5290
    %5292 = vdwg.mxu0
    %5293 = vmatpush.msra.mxu0 %v5012
    %5294 = vmatpush.msra.mxu0 %v5011
    %5295 = vmatpush.msra.mxu0 %v5010
    %5296 = vmatpush.msra.mxu0 %v5009
    %5297 = vmatpush.msra.mxu0 %v5008
    %5298 = vmatpush.msra.mxu0 %v5007
    %5299 = vmatpush.msra.mxu0 %v5006
    %5300 = vmatpush.msra.mxu0 %v5005
    %5301 = vmatpush.msra.mxu0 %v5004
    %5302 = vmatpush.msra.mxu0 %v5003
    %5303 = vmatpush.msra.mxu0 %v5002
    %5304 = vmatpush.msra.mxu0 %v5001
    %5305 = vmatpush.msra.mxu0 %v5000
    %5306 = vmatpush.msra.mxu0 %v4999
    %5307 = vmatpush.msra.mxu0 %v4998
    %5308 = vmatpush.msra.mxu0 %v4997
    %5309 = vmatmul.f32.gmra.mxu0 %v4852
    %v5310 = vpop.f32.mrf.mxu0
    %v5311 = vadd.f32 %v5219, %v5310
    %5312 = vmatmul.f32.gmra.mxu0 %v4856
    %v5313 = vpop.f32.mrf.mxu0
    %v5314 = vadd.f32 %v5222, %v5313
    %5315 = vmatmul.f32.gmra.mxu0 %v4860
    %v5316 = vpop.f32.mrf.mxu0
    %v5317 = vadd.f32 %v5225, %v5316
    %5318 = vmatmul.f32.gmra.mxu0 %v4864
    %v5319 = vpop.f32.mrf.mxu0
    %v5320 = vadd.f32 %v5228, %v5319
    %5321 = vmatmul.f32.gmra.mxu0 %v4868
    %v5322 = vpop.f32.mrf.mxu0
    %v5323 = vadd.f32 %v5231, %v5322
    %5324 = vmatmul.f32.gmra.mxu0 %v4872
    %v5325 = vpop.f32.mrf.mxu0
    %v5326 = vadd.f32 %v5234, %v5325
    %5327 = vmatmul.f32.gmra.mxu0 %v4876
    %v5328 = vpop.f32.mrf.mxu0
    %v5329 = vadd.f32 %v5237, %v5328
    %5330 = vmatmul.f32.gmra.mxu0 %v4880
    %v5331 = vpop.f32.mrf.mxu0
    %v5332 = vadd.f32 %v5240, %v5331
    %5333 = vmatmul.f32.gmra.mxu0 %v4884
    %v5334 = vpop.f32.mrf.mxu0
    %v5335 = vadd.f32 %v5243, %v5334
    %5336 = vmatmul.f32.gmra.mxu0 %v4888
    %v5337 = vpop.f32.mrf.mxu0
    %v5338 = vadd.f32 %v5246, %v5337
    %5339 = vmatmul.f32.gmra.mxu0 %v4892
    %v5340 = vpop.f32.mrf.mxu0
    %v5341 = vadd.f32 %v5249, %v5340
    %5342 = vmatmul.f32.gmra.mxu0 %v4896
    %v5343 = vpop.f32.mrf.mxu0
    %v5344 = vadd.f32 %v5252, %v5343
    %5345 = vmatmul.f32.gmra.mxu0 %v4900
    %v5346 = vpop.f32.mrf.mxu0
    %v5347 = vadd.f32 %v5255, %v5346
    %5348 = vmatmul.f32.gmra.mxu0 %v4904
    %v5349 = vpop.f32.mrf.mxu0
    %v5350 = vadd.f32 %v5258, %v5349
    %5351 = vmatmul.f32.gmra.mxu0 %v4908
    %v5352 = vpop.f32.mrf.mxu0
    %v5353 = vadd.f32 %v5261, %v5352
    %5354 = vmatmul.f32.gmra.mxu0 %v4912
    %v5355 = vpop.f32.mrf.mxu0
    %v5356 = vadd.f32 %v5264, %v5355
    %5357 = vmatmul.f32.gmra.mxu0 %v4916
    %v5358 = vpop.f32.mrf.mxu0
    %v5359 = vadd.f32 %v5267, %v5358
    %5360 = vmatmul.f32.gmra.mxu0 %v4920
    %v5361 = vpop.f32.mrf.mxu0
    %v5362 = vadd.f32 %v5270, %v5361
    %5363 = vmatmul.f32.gmra.mxu0 %v4924
    %v5364 = vpop.f32.mrf.mxu0
    %v5365 = vadd.f32 %v5273, %v5364
    %5366 = vmatmul.f32.gmra.mxu0 %v4928
    %v5367 = vpop.f32.mrf.mxu0
    %v5368 = vadd.f32 %v5276, %v5367
    %5369 = vmatmul.f32.gmra.mxu0 %v4932
    %v5370 = vpop.f32.mrf.mxu0
    %v5371 = vadd.f32 %v5279, %v5370
    %5372 = vmatmul.f32.gmra.mxu0 %v4936
    %v5373 = vpop.f32.mrf.mxu0
    %v5374 = vadd.f32 %v5282, %v5373
    %5375 = vmatmul.f32.gmra.mxu0 %v4940
    %v5376 = vpop.f32.mrf.mxu0
    %v5377 = vadd.f32 %v5285, %v5376
    %5378 = vmatmul.f32.gmra.mxu0 %v4944
    %v5379 = vpop.f32.mrf.mxu0
    %v5380 = vadd.f32 %v5288, %v5379
    %5381 = vmatmul.f32.gmra.mxu0 %v4948
    %v5382 = vpop.f32.mrf.mxu0
    %v5383 = vadd.f32 %v5291, %v5382
    %5384 = vdwg.mxu0
    %5385 = vst [vmem:[#allocation10] sm:$0xff] %v5311
    %5386 = vst [vmem:[#allocation10 + $0x8] sm:$0xff] %v5314
    %5387 = vst [vmem:[#allocation10 + $0x10] sm:$0xff] %v5317
    %5388 = vst [vmem:[#allocation10 + $0x18] sm:$0xff] %v5320
    %5389 = vst [vmem:[#allocation10 + $0x20] sm:$0xff] %v5323
    %5390 = vst [vmem:[#allocation10 + $0x28] sm:$0xff] %v5326
    %5391 = vst [vmem:[#allocation10 + $0x30] sm:$0xff] %v5329
    %5392 = vst [vmem:[#allocation10 + $0x38] sm:$0xff] %v5332
    %5393 = vst [vmem:[#allocation10 + $0x40] sm:$0xff] %v5335
    %5394 = vst [vmem:[#allocation10 + $0x48] sm:$0xff] %v5338
    %5395 = vst [vmem:[#allocation10 + $0x50] sm:$0xff] %v5341
    %5396 = vst [vmem:[#allocation10 + $0x58] sm:$0xff] %v5344
    %5397 = vst [vmem:[#allocation10 + $0x60] sm:$0xff] %v5347
    %5398 = vst [vmem:[#allocation10 + $0x68] sm:$0xff] %v5350
    %5399 = vst [vmem:[#allocation10 + $0x70] sm:$0xff] %v5353
    %5400 = vst [vmem:[#allocation10 + $0x78] sm:$0xff] %v5356
    %5401 = vst [vmem:[#allocation10 + $0x80] sm:$0xff] %v5359
    %5402 = vst [vmem:[#allocation10 + $0x88] sm:$0xff] %v5362
    %5403 = vst [vmem:[#allocation10 + $0x90] sm:$0xff] %v5365
    %5404 = vst [vmem:[#allocation10 + $0x98] sm:$0xff] %v5368
    %5405 = vst [vmem:[#allocation10 + $0xa0] sm:$0xff] %v5371
    %5406 = vst [vmem:[#allocation10 + $0xa8] sm:$0xff] %v5374
    %5407 = vst [vmem:[#allocation10 + $0xb0] sm:$0xff] %v5377
    %5408 = vst [vmem:[#allocation10 + $0xb8] sm:$0xff] %v5380
    %5409 = vst [vmem:[#allocation10 + $0xc0] sm:$0xff] %v5383
    // Predicated region
    $region38: #{tpu_custom_call.1} parent=1 // pred_check
      _
    $region39: #{tpu_custom_call.1} parent=1 // pred_check_branch
      %5411 = sbr.rel (0) target = $region41
    $region40: #{tpu_custom_call.1} parent=1 // pred_region
      %5413 = vsyncadd [#allocation4], 0
      %s5414 = sshll.u32 [#allocation10], 4
      %s5415 = int_to_ptr.vmem [resolvable:$true] %s5414
      %s5416 = sshll.u32 %s5, 4
      %s5417 = int_to_ptr.hbm [resolvable:$true] %s5416
      %5422 = dma.vmem_to_hbm [thread:$0]  %s5415, 3200, %s5417, [#allocation4], 128, 128, 8
    $region41: #{tpu_custom_call.1} parent=1 // pred_fallthru
      _
    // Predicated region
    $region42: #{tpu_custom_call.1} parent=1 // pred_check
      _
    $region43: #{tpu_custom_call.1} parent=1 // pred_check_branch
      %5424 = sbr.rel (0) target = $region45
    $region44: #{tpu_custom_call.1} parent=1 // pred_region
      %5426 = dma.done [#allocation4], 3200
    $region45: #{tpu_custom_call.1} parent=1 // pred_fallthru
      _
    %5427 = vsyncpa [#allocation3], 1
    %5428 = vsyncpa [#allocation6], 1
    %5429 = vsyncpa [#allocation9], 1
    %5430 = vsyncpa [#allocation4], 1

// kernel: tpu_custom_call.1
$region0: #{tpu_custom_call.1}
  #allocation0 [shape = 'u32[]', space=smem, size = 0x4, offset = 0x4, fixed_abs, tag = 'smem constant byte address 0x4 - core index']
  #allocation1 [shape = 'u32[72,128]{1,0:T(1,128)}', space=vmem, size = 0x9000, scoped, tag = 'internal scratch']
  %s0 = inlined_call_operand.hbm [shape: f32[200,128], index: 0, kind: input, shape index: {}]
  %s1 = inlined_call_operand.hbm [shape: f32[128,512], index: 1, kind: input, shape index: {}]
  %s2 = inlined_call_operand.hbm [shape: f32[1,512], index: 2, kind: input, shape index: {}]
  %s3 = inlined_call_operand.hbm [shape: f32[512,128], index: 3, kind: input, shape index: {}]
  %s4 = inlined_call_operand.vmem [shape: f32[1,128], index: 4, kind: input, shape index: {}]
  %s5 = inlined_call_operand.hbm [shape: f32[200,128], index: 5, kind: output, shape index: {}]
  %s6 = sld [smem:[#allocation0]]
  $region46: #{tpu_custom_call.1} parent=0
    _
  %s8 = ssub.s32 1, %s6
  %s9 = scalar_select 0, %s8, %s6
  $region1: #{tpu_custom_call.1} parent=0
    #allocation2 [shape = 'u8[102400]{0}', space=vmem, size = 0x19000, scoped, tag = 'input window, operand 0, single buffered']
    #allocation3 [shape = 's32[1]{0}', space=sflag, size = 0x4, scoped, tag = 'scoped memory for tpu_custom_call.1']
    #allocation4 [shape = 's32[1]{0}', space=sflag, size = 0x4, scoped, tag = 'scoped memory for tpu_custom_call.1']
    #allocation5 [shape = 'u8[262144]{0}', space=vmem, size = 0x40000, scoped, tag = 'input window, operand 1, single buffered']
    #allocation6 [shape = 's32[1]{0}', space=sflag, size = 0x4, scoped, tag = 'scoped memory for tpu_custom_call.1']
    #allocation7 [shape = 'u8[2048]{0}', space=vmem, size = 0x800, scoped, tag = 'input window, operand 2, single buffered']
    #allocation8 [shape = 'u8[262144]{0}', space=vmem, size = 0x40000, scoped, tag = 'input window, operand 3, single buffered']
    #allocation9 [shape = 's32[1]{0}', space=sflag, size = 0x4, scoped, tag = 'scoped memory for tpu_custom_call.1']
    #allocation10 [shape = 'u8[102400]{0}', space=vmem, size = 0x19000, scoped, tag = 'output window, operand 0, single buffered']
    %10 = vsyncpa [#allocation3], 0
    %11 = vsyncpa [#allocation6], 0
    %12 = vsyncpa [#allocation9], 0
    %13 = vsyncpa [#allocation4], 0
    // Predicated region
    $region2: #{tpu_custom_call.1} parent=1 // pred_check
      _
    $region3: #{tpu_custom_call.1} parent=1 // pred_check_branch
      %15 = sbr.rel (0) target = $region5
    $region4: #{tpu_custom_call.1} parent=1 // pred_region
      %17 = vsyncadd [#allocation3], 0
      %s18 = sshll.u32 %s0, 4
      %s19 = int_to_ptr.hbm [resolvable:$true] %s18
      %s20 = sshll.u32 [#allocation2], 4
      %s21 = int_to_ptr.vmem [resolvable:$true] %s20
      %26 = dma.hbm_to_vmem [thread:$0]  %s19, 3200, %s21, [#allocation3], 128, 128, 8
    $region5: #{tpu_custom_call.1} parent=1 // pred_fallthru
      _
    // Predicated region
    $region6: #{tpu_custom_call.1} parent=1 // pred_check
      _
    $region7: #{tpu_custom_call.1} parent=1 // pred_check_branch
      %28 = sbr.rel (0) target = $region9
    $region8: #{tpu_custom_call.1} parent=1 // pred_region
      %30 = vsyncadd [#allocation6], 0
      %s31 = sshll.u32 %s1, 4
      %s32 = int_to_ptr.hbm [resolvable:$true] %s31
      %s33 = sshll.u32 [#allocation5], 4
      %s34 = int_to_ptr.vmem [resolvable:$true] %s33
      %39 = dma.hbm_to_vmem [thread:$0]  %s32, 8192, %s34, [#allocation6], 512, 512, 32
    $region9: #{tpu_custom_call.1} parent=1 // pred_fallthru
      _
    // Predicated region
    $region10: #{tpu_custom_call.1} parent=1 // pred_check
      _
    $region11: #{tpu_custom_call.1} parent=1 // pred_check_branch
      %41 = sbr.rel (0) target = $region13
    $region12: #{tpu_custom_call.1} parent=1 // pred_region
      %43 = vsyncadd [#allocation6], 0
      %s45 = sshll.u32 %s2, 4
      %s46 = int_to_ptr.hbm [resolvable:$true] %s45
      %s47 = sshll.u32 [#allocation7], 4
      %s48 = int_to_ptr.vmem [resolvable:$true] %s47
      %50 = dma.hbm_to_vmem [thread:$0]  %s46, 64, %s48, [#allocation6]
    $region13: #{tpu_custom_call.1} parent=1 // pred_fallthru
      _
    // Predicated region
    $region14: #{tpu_custom_call.1} parent=1 // pred_check
      _
    $region15: #{tpu_custom_call.1} parent=1 // pred_check_branch
      %52 = sbr.rel (0) target = $region17
    $region16: #{tpu_custom_call.1} parent=1 // pred_region
      %54 = vsyncadd [#allocation9], 0
      %s55 = sshll.u32 %s3, 4
      %s56 = int_to_ptr.hbm [resolvable:$true] %s55
      %s57 = sshll.u32 [#allocation8], 4
      %s58 = int_to_ptr.vmem [resolvable:$true] %s57
      %63 = dma.hbm_to_vmem [thread:$0]  %s56, 8192, %s58, [#allocation9], 128, 128, 8
    $region17: #{tpu_custom_call.1} parent=1 // pred_fallthru
      _
    // Predicated region
    $region18: #{tpu_custom_call.1} parent=1 // pred_check
      _
    $region19: #{tpu_custom_call.1} parent=1 // pred_check_branch
      %65 = sbr.rel (0) target = $region21
    $region20: #{tpu_custom_call.1} parent=1 // pred_region
      _
    $region21: #{tpu_custom_call.1} parent=1 // pred_fallthru
      _
    // Predicated region
    $region22: #{tpu_custom_call.1} parent=1 // pred_check
      _
    $region23: #{tpu_custom_call.1} parent=1 // pred_check_branch
      %67 = sbr.rel (0) target = $region25
    $region24: #{tpu_custom_call.1} parent=1 // pred_region
      %69 = dma.done [#allocation3], 3200
    $region25: #{tpu_custom_call.1} parent=1 // pred_fallthru
      _
    // Predicated region
    $region26: #{tpu_custom_call.1} parent=1 // pred_check
      _
    $region27: #{tpu_custom_call.1} parent=1 // pred_check_branch
      %71 = sbr.rel (0) target = $region29
    $region28: #{tpu_custom_call.1} parent=1 // pred_region
      %73 = dma.done [#allocation6], 8192
    $region29: #{tpu_custom_call.1} parent=1 // pred_fallthru
      _
    // Predicated region
    $region30: #{tpu_custom_call.1} parent=1 // pred_check
      _
    $region31: #{tpu_custom_call.1} parent=1 // pred_check_branch
      %75 = sbr.rel (0) target = $region33
    $region32: #{tpu_custom_call.1} parent=1 // pred_region
      %77 = dma.done [#allocation6], 64
    $region33: #{tpu_custom_call.1} parent=1 // pred_fallthru
      _
    // Predicated region
    $region34: #{tpu_custom_call.1} parent=1 // pred_check
      _
    $region35: #{tpu_custom_call.1} parent=1 // pred_check_branch
      %79 = sbr.rel (0) target = $region37
    $region36: #{tpu_custom_call.1} parent=1 // pred_region
      %81 = dma.done [#allocation9], 8192
    $region37: #{tpu_custom_call.1} parent=1 // pred_fallthru
      _
    %v82 = vld [vmem:[#allocation2] sm:$0xff]
    %v83 = vld [vmem:[#allocation2 + $0x8] sm:$0xff]
    %v84 = vld [vmem:[#allocation2 + $0x10] sm:$0xff]
    %v85 = vld [vmem:[#allocation2 + $0x18] sm:$0xff]
    %v86 = vld [vmem:[#allocation2 + $0x20] sm:$0xff]
    %v87 = vld [vmem:[#allocation2 + $0x28] sm:$0xff]
    %v88 = vld [vmem:[#allocation2 + $0x30] sm:$0xff]
    %v89 = vld [vmem:[#allocation2 + $0x38] sm:$0xff]
    %v90 = vld [vmem:[#allocation2 + $0x40] sm:$0xff]
    %v91 = vld [vmem:[#allocation2 + $0x48] sm:$0xff]
    %v92 = vld [vmem:[#allocation2 + $0x50] sm:$0xff]
    %v93 = vld [vmem:[#allocation2 + $0x58] sm:$0xff]
    %v94 = vld [vmem:[#allocation2 + $0x60] sm:$0xff]
    %v95 = vld [vmem:[#allocation2 + $0x68] sm:$0xff]
    %v96 = vld [vmem:[#allocation2 + $0x70] sm:$0xff]
    %v97 = vld [vmem:[#allocation2 + $0x78] sm:$0xff]
    %v98 = vld [vmem:[#allocation2 + $0x80] sm:$0xff]
    %v99 = vld [vmem:[#allocation2 + $0x88] sm:$0xff]
    %v100 = vld [vmem:[#allocation2 + $0x90] sm:$0xff]
    %v101 = vld [vmem:[#allocation2 + $0x98] sm:$0xff]
    %v102 = vld [vmem:[#allocation2 + $0xa0] sm:$0xff]
    %v103 = vld [vmem:[#allocation2 + $0xa8] sm:$0xff]
    %v104 = vld [vmem:[#allocation2 + $0xb0] sm:$0xff]
    %v105 = vld [vmem:[#allocation2 + $0xb8] sm:$0xff]
    %v106 = vld [vmem:[#allocation2 + $0xc0] sm:$0xff]
    %v107 = vld [vmem:[#allocation5] sm:$0xff]
    %v108 = vld [vmem:[#allocation5 + $0x8] sm:$0xff]
    %v109 = vld [vmem:[#allocation5 + $0x10] sm:$0xff]
    %v110 = vld [vmem:[#allocation5 + $0x18] sm:$0xff]
    %v111 = vld [vmem:[#allocation5 + $0x20] sm:$0xff]
    %v112 = vld [vmem:[#allocation5 + $0x28] sm:$0xff]
    %v113 = vld [vmem:[#allocation5 + $0x30] sm:$0xff]
    %v114 = vld [vmem:[#allocation5 + $0x38] sm:$0xff]
    %v115 = vld [vmem:[#allocation5 + $0x40] sm:$0xff]
    %v116 = vld [vmem:[#allocation5 + $0x48] sm:$0xff]
    %v117 = vld [vmem:[#allocation5 + $0x50] sm:$0xff]
    %v118 = vld [vmem:[#allocation5 + $0x58] sm:$0xff]
    %v119 = vld [vmem:[#allocation5 + $0x60] sm:$0xff]
    %v120 = vld [vmem:[#allocation5 + $0x68] sm:$0xff]
    %v121 = vld [vmem:[#allocation5 + $0x70] sm:$0xff]
    %v122 = vld [vmem:[#allocation5 + $0x78] sm:$0xff]
    %v123 = vld [vmem:[#allocation5 + $0x80] sm:$0xff]
    %v124 = vld [vmem:[#allocation5 + $0x88] sm:$0xff]
    %v125 = vld [vmem:[#allocation5 + $0x90] sm:$0xff]
    %v126 = vld [vmem:[#allocation5 + $0x98] sm:$0xff]
    %v127 = vld [vmem:[#allocation5 + $0xa0] sm:$0xff]
    %v128 = vld [vmem:[#allocation5 + $0xa8] sm:$0xff]
    %v129 = vld [vmem:[#allocation5 + $0xb0] sm:$0xff]
    %v130 = vld [vmem:[#allocation5 + $0xb8] sm:$0xff]
    %v131 = vld [vmem:[#allocation5 + $0xc0] sm:$0xff]
    %v132 = vld [vmem:[#allocation5 + $0xc8] sm:$0xff]
    %v133 = vld [vmem:[#allocation5 + $0xd0] sm:$0xff]
    %v134 = vld [vmem:[#allocation5 + $0xd8] sm:$0xff]
    %v135 = vld [vmem:[#allocation5 + $0xe0] sm:$0xff]
    %v136 = vld [vmem:[#allocation5 + $0xe8] sm:$0xff]
    %v137 = vld [vmem:[#allocation5 + $0xf0] sm:$0xff]
    %v138 = vld [vmem:[#allocation5 + $0xf8] sm:$0xff]
    %v139 = vld [vmem:[#allocation5 + $0x100] sm:$0xff]
    %v140 = vld [vmem:[#allocation5 + $0x108] sm:$0xff]
    %v141 = vld [vmem:[#allocation5 + $0x110] sm:$0xff]
    %v142 = vld [vmem:[#allocation5 + $0x118] sm:$0xff]
    %v143 = vld [vmem:[#allocation5 + $0x120] sm:$0xff]
    %v144 = vld [vmem:[#allocation5 + $0x128] sm:$0xff]
    %v145 = vld [vmem:[#allocation5 + $0x130] sm:$0xff]
    %v146 = vld [vmem:[#allocation5 + $0x138] sm:$0xff]
    %v147 = vld [vmem:[#allocation5 + $0x140] sm:$0xff]
    %v148 = vld [vmem:[#allocation5 + $0x148] sm:$0xff]
    %v149 = vld [vmem:[#allocation5 + $0x150] sm:$0xff]
    %v150 = vld [vmem:[#allocation5 + $0x158] sm:$0xff]
    %v151 = vld [vmem:[#allocation5 + $0x160] sm:$0xff]
    %v152 = vld [vmem:[#allocation5 + $0x168] sm:$0xff]
    %v153 = vld [vmem:[#allocation5 + $0x170] sm:$0xff]
    %v154 = vld [vmem:[#allocation5 + $0x178] sm:$0xff]
    %v155 = vld [vmem:[#allocation5 + $0x180] sm:$0xff]
    %v156 = vld [vmem:[#allocation5 + $0x188] sm:$0xff]
    %v157 = vld [vmem:[#allocation5 + $0x190] sm:$0xff]
    %v158 = vld [vmem:[#allocation5 + $0x198] sm:$0xff]
    %v159 = vld [vmem:[#allocation5 + $0x1a0] sm:$0xff]
    %v160 = vld [vmem:[#allocation5 + $0x1a8] sm:$0xff]
    %v161 = vld [vmem:[#allocation5 + $0x1b0] sm:$0xff]
    %v162 = vld [vmem:[#allocation5 + $0x1b8] sm:$0xff]
    %v163 = vld [vmem:[#allocation5 + $0x1c0] sm:$0xff]
    %v164 = vld [vmem:[#allocation5 + $0x1c8] sm:$0xff]
    %v165 = vld [vmem:[#allocation5 + $0x1d0] sm:$0xff]
    %v166 = vld [vmem:[#allocation5 + $0x1d8] sm:$0xff]
    %v167 = vld [vmem:[#allocation5 + $0x1e0] sm:$0xff]
    %v168 = vld [vmem:[#allocation5 + $0x1e8] sm:$0xff]
    %v169 = vld [vmem:[#allocation5 + $0x1f0] sm:$0xff]
    %v170 = vld [vmem:[#allocation5 + $0x1f8] sm:$0xff]
    %v171 = vld [vmem:[#allocation7] sm:$0xf]
    %v173 = vperm.slane %v171, 0
    %v174 = vperm.slane %v171, 1
    %v175 = vperm.slane %v171, 2
    %v176 = vperm.slane %v171, 3
    %181 = vmatpush.msra.mxu0 %v167
    %182 = vmatpush.msra.mxu0 %v163
    %183 = vmatpush.msra.mxu0 %v159
    %184 = vmatpush.msra.mxu0 %v155
    %185 = vmatpush.msra.mxu0 %v151
    %186 = vmatpush.msra.mxu0 %v147
    %187 = vmatpush.msra.mxu0 %v143
    %188 = vmatpush.msra.mxu0 %v139
    %189 = vmatpush.msra.mxu0 %v135
    %190 = vmatpush.msra.mxu0 %v131
    %191 = vmatpush.msra.mxu0 %v127
    %192 = vmatpush.msra.mxu0 %v123
    %193 = vmatpush.msra.mxu0 %v119
    %194 = vmatpush.msra.mxu0 %v115
    %195 = vmatpush.msra.mxu0 %v111
    %196 = vmatpush.msra.mxu0 %v107
    %197 = vmatmul.f32.gmra.mxu0 %v82
    %v198 = vpop.f32.mrf.mxu0
    %v199 = vadd.f32 %v173, %v198
    %200 = vmatmul.f32.gmra.mxu0 %v83
    %v201 = vpop.f32.mrf.mxu0
    %v202 = vadd.f32 %v173, %v201
    %203 = vmatmul.f32.gmra.mxu0 %v84
    %v204 = vpop.f32.mrf.mxu0
    %v205 = vadd.f32 %v173, %v204
    %206 = vmatmul.f32.gmra.mxu0 %v85
    %v207 = vpop.f32.mrf.mxu0
    %v208 = vadd.f32 %v173, %v207
    %209 = vmatmul.f32.gmra.mxu0 %v86
    %v210 = vpop.f32.mrf.mxu0
    %v211 = vadd.f32 %v173, %v210
    %212 = vmatmul.f32.gmra.mxu0 %v87
    %v213 = vpop.f32.mrf.mxu0
    %v214 = vadd.f32 %v173, %v213
    %215 = vmatmul.f32.gmra.mxu0 %v88
    %v216 = vpop.f32.mrf.mxu0
    %v217 = vadd.f32 %v173, %v216
    %218 = vmatmul.f32.gmra.mxu0 %v89
    %v219 = vpop.f32.mrf.mxu0
    %v220 = vadd.f32 %v173, %v219
    %221 = vmatmul.f32.gmra.mxu0 %v90
    %v222 = vpop.f32.mrf.mxu0
    %v223 = vadd.f32 %v173, %v222
    %224 = vmatmul.f32.gmra.mxu0 %v91
    %v225 = vpop.f32.mrf.mxu0
    %v226 = vadd.f32 %v173, %v225
    %227 = vmatmul.f32.gmra.mxu0 %v92
    %v228 = vpop.f32.mrf.mxu0
    %v229 = vadd.f32 %v173, %v228
    %230 = vmatmul.f32.gmra.mxu0 %v93
    %v231 = vpop.f32.mrf.mxu0
    %v232 = vadd.f32 %v173, %v231
    %233 = vmatmul.f32.gmra.mxu0 %v94
    %v234 = vpop.f32.mrf.mxu0
    %v235 = vadd.f32 %v173, %v234
    %236 = vmatmul.f32.gmra.mxu0 %v95
    %v237 = vpop.f32.mrf.mxu0
    %v238 = vadd.f32 %v173, %v237
    %239 = vmatmul.f32.gmra.mxu0 %v96
    %v240 = vpop.f32.mrf.mxu0
    %v241 = vadd.f32 %v173, %v240
    %242 = vmatmul.f32.gmra.mxu0 %v97
    %v243 = vpop.f32.mrf.mxu0
    %v244 = vadd.f32 %v173, %v243
    %245 = vmatmul.f32.gmra.mxu0 %v98
    %v246 = vpop.f32.mrf.mxu0
    %v247 = vadd.f32 %v173, %v246
    %248 = vmatmul.f32.gmra.mxu0 %v99
    %v249 = vpop.f32.mrf.mxu0
    %v250 = vadd.f32 %v173, %v249
    %251 = vmatmul.f32.gmra.mxu0 %v100
    %v252 = vpop.f32.mrf.mxu0
    %v253 = vadd.f32 %v173, %v252
    %254 = vmatmul.f32.gmra.mxu0 %v101
    %v255 = vpop.f32.mrf.mxu0
    %v256 = vadd.f32 %v173, %v255
    %257 = vmatmul.f32.gmra.mxu0 %v102
    %v258 = vpop.f32.mrf.mxu0
    %v259 = vadd.f32 %v173, %v258
    %260 = vmatmul.f32.gmra.mxu0 %v103
    %v261 = vpop.f32.mrf.mxu0
    %v262 = vadd.f32 %v173, %v261
    %263 = vmatmul.f32.gmra.mxu0 %v104
    %v264 = vpop.f32.mrf.mxu0
    %v265 = vadd.f32 %v173, %v264
    %266 = vmatmul.f32.gmra.mxu0 %v105
    %v267 = vpop.f32.mrf.mxu0
    %v268 = vadd.f32 %v173, %v267
    %269 = vmatmul.f32.gmra.mxu0 %v106
    %v270 = vpop.f32.mrf.mxu0
    %v271 = vadd.f32 %v173, %v270
    %272 = vdwg.mxu0
    %273 = vmatpush.msra.mxu0 %v168
    %274 = vmatpush.msra.mxu0 %v164
    %275 = vmatpush.msra.mxu0 %v160
    %276 = vmatpush.msra.mxu0 %v156
    %277 = vmatpush.msra.mxu0 %v152
    %278 = vmatpush.msra.mxu0 %v148
    %279 = vmatpush.msra.mxu0 %v144
    %280 = vmatpush.msra.mxu0 %v140
    %281 = vmatpush.msra.mxu0 %v136
    %282 = vmatpush.msra.mxu0 %v132
    %283 = vmatpush.msra.mxu0 %v128
    %284 = vmatpush.msra.mxu0 %v124
    %285 = vmatpush.msra.mxu0 %v120
    %286 = vmatpush.msra.mxu0 %v116
    %287 = vmatpush.msra.mxu0 %v112
    %288 = vmatpush.msra.mxu0 %v108
    %289 = vmatmul.f32.gmra.mxu0 %v82
    %v290 = vpop.f32.mrf.mxu0
    %v291 = vadd.f32 %v174, %v290
    %292 = vmatmul.f32.gmra.mxu0 %v83
    %v293 = vpop.f32.mrf.mxu0
    %v294 = vadd.f32 %v174, %v293
    %295 = vmatmul.f32.gmra.mxu0 %v84
    %v296 = vpop.f32.mrf.mxu0
    %v297 = vadd.f32 %v174, %v296
    %298 = vmatmul.f32.gmra.mxu0 %v85
    %v299 = vpop.f32.mrf.mxu0
    %v300 = vadd.f32 %v174, %v299
    %301 = vmatmul.f32.gmra.mxu0 %v86
    %v302 = vpop.f32.mrf.mxu0
    %v303 = vadd.f32 %v174, %v302
    %304 = vmatmul.f32.gmra.mxu0 %v87
    %v305 = vpop.f32.mrf.mxu0
    %v306 = vadd.f32 %v174, %v305
    %307 = vmatmul.f32.gmra.mxu0 %v88
    %v308 = vpop.f32.mrf.mxu0
    %v309 = vadd.f32 %v174, %v308
    %310 = vmatmul.f32.gmra.mxu0 %v89
    %v311 = vpop.f32.mrf.mxu0
    %v312 = vadd.f32 %v174, %v311
    %313 = vmatmul.f32.gmra.mxu0 %v90
    %v314 = vpop.f32.mrf.mxu0
    %v315 = vadd.f32 %v174, %v314
    %316 = vmatmul.f32.gmra.mxu0 %v91
    %v317 = vpop.f32.mrf.mxu0
    %v318 = vadd.f32 %v174, %v317
    %319 = vmatmul.f32.gmra.mxu0 %v92
    %v320 = vpop.f32.mrf.mxu0
    %v321 = vadd.f32 %v174, %v320
    %322 = vmatmul.f32.gmra.mxu0 %v93
    %v323 = vpop.f32.mrf.mxu0
    %v324 = vadd.f32 %v174, %v323
    %325 = vmatmul.f32.gmra.mxu0 %v94
    %v326 = vpop.f32.mrf.mxu0
    %v327 = vadd.f32 %v174, %v326
    %328 = vmatmul.f32.gmra.mxu0 %v95
    %v329 = vpop.f32.mrf.mxu0
    %v330 = vadd.f32 %v174, %v329
    %331 = vmatmul.f32.gmra.mxu0 %v96
    %v332 = vpop.f32.mrf.mxu0
    %v333 = vadd.f32 %v174, %v332
    %334 = vmatmul.f32.gmra.mxu0 %v97
    %v335 = vpop.f32.mrf.mxu0
    %v336 = vadd.f32 %v174, %v335
    %337 = vmatmul.f32.gmra.mxu0 %v98
    %v338 = vpop.f32.mrf.mxu0
    %v339 = vadd.f32 %v174, %v338
    %340 = vmatmul.f32.gmra.mxu0 %v99
    %v341 = vpop.f32.mrf.mxu0
    %v342 = vadd.f32 %v174, %v341
    %343 = vmatmul.f32.gmra.mxu0 %v100
    %v344 = vpop.f32.mrf.mxu0
    %v345 = vadd.f32 %v174, %v344
    %346 = vmatmul.f32.gmra.mxu0 %v101
    %v347 = vpop.f32.mrf.mxu0
    %v348 = vadd.f32 %v174, %v347
    %349 = vmatmul.f32.gmra.mxu0 %v102
    %v350 = vpop.f32.mrf.mxu0
    %v351 = vadd.f32 %v174, %v350
    %352 = vmatmul.f32.gmra.mxu0 %v103
    %v353 = vpop.f32.mrf.mxu0
    %v354 = vadd.f32 %v174, %v353
    %355 = vmatmul.f32.gmra.mxu0 %v104
    %v356 = vpop.f32.mrf.mxu0
    %v357 = vadd.f32 %v174, %v356
    %358 = vmatmul.f32.gmra.mxu0 %v105
    %v359 = vpop.f32.mrf.mxu0
    %v360 = vadd.f32 %v174, %v359
    %361 = vmatmul.f32.gmra.mxu0 %v106
    %v362 = vpop.f32.mrf.mxu0
    %v363 = vadd.f32 %v174, %v362
    %364 = vdwg.mxu0
    %365 = vmatpush.msra.mxu0 %v169
    %366 = vmatpush.msra.mxu0 %v165
    %367 = vmatpush.msra.mxu0 %v161
    %368 = vmatpush.msra.mxu0 %v157
    %369 = vmatpush.msra.mxu0 %v153
    %370 = vmatpush.msra.mxu0 %v149
    %371 = vmatpush.msra.mxu0 %v145
    %372 = vmatpush.msra.mxu0 %v141
    %373 = vmatpush.msra.mxu0 %v137
    %374 = vmatpush.msra.mxu0 %v133
    %375 = vmatpush.msra.mxu0 %v129
    %376 = vmatpush.msra.mxu0 %v125
    %377 = vmatpush.msra.mxu0 %v121
    %378 = vmatpush.msra.mxu0 %v117
    %379 = vmatpush.msra.mxu0 %v113
    %380 = vmatpush.msra.mxu0 %v109
    %381 = vmatmul.f32.gmra.mxu0 %v82
    %v382 = vpop.f32.mrf.mxu0
    %v383 = vadd.f32 %v175, %v382
    %384 = vmatmul.f32.gmra.mxu0 %v83
    %v385 = vpop.f32.mrf.mxu0
    %v386 = vadd.f32 %v175, %v385
    %387 = vmatmul.f32.gmra.mxu0 %v84
    %v388 = vpop.f32.mrf.mxu0
    %v389 = vadd.f32 %v175, %v388
    %390 = vmatmul.f32.gmra.mxu0 %v85
    %v391 = vpop.f32.mrf.mxu0
    %v392 = vadd.f32 %v175, %v391
    %393 = vmatmul.f32.gmra.mxu0 %v86
    %v394 = vpop.f32.mrf.mxu0
    %v395 = vadd.f32 %v175, %v394
    %396 = vmatmul.f32.gmra.mxu0 %v87
    %v397 = vpop.f32.mrf.mxu0
    %v398 = vadd.f32 %v175, %v397
    %399 = vmatmul.f32.gmra.mxu0 %v88
    %v400 = vpop.f32.mrf.mxu0
    %v401 = vadd.f32 %v175, %v400
    %402 = vmatmul.f32.gmra.mxu0 %v89
    %v403 = vpop.f32.mrf.mxu0
    %v404 = vadd.f32 %v175, %v403
    %405 = vmatmul.f32.gmra.mxu0 %v90
    %v406 = vpop.f32.mrf.mxu0
    %v407 = vadd.f32 %v175, %v406
    %408 = vmatmul.f32.gmra.mxu0 %v91
    %v409 = vpop.f32.mrf.mxu0
    %v410 = vadd.f32 %v175, %v409
    %411 = vmatmul.f32.gmra.mxu0 %v92
    %v412 = vpop.f32.mrf.mxu0
    %v413 = vadd.f32 %v175, %v412
    %414 = vmatmul.f32.gmra.mxu0 %v93
    %v415 = vpop.f32.mrf.mxu0
    %v416 = vadd.f32 %v175, %v415
    %417 = vmatmul.f32.gmra.mxu0 %v94
    %v418 = vpop.f32.mrf.mxu0
    %v419 = vadd.f32 %v175, %v418
    %420 = vmatmul.f32.gmra.mxu0 %v95
    %v421 = vpop.f32.mrf.mxu0
    %v422 = vadd.f32 %v175, %v421
    %423 = vmatmul.f32.gmra.mxu0 %v96
    %v424 = vpop.f32.mrf.mxu0
    %v425 = vadd.f32 %v175, %v424
    %426 = vmatmul.f32.gmra.mxu0 %v97
    %v427 = vpop.f32.mrf.mxu0
    %v428 = vadd.f32 %v175, %v427
    %429 = vmatmul.f32.gmra.mxu0 %v98
    %v430 = vpop.f32.mrf.mxu0
    %v431 = vadd.f32 %v175, %v430
    %432 = vmatmul.f32.gmra.mxu0 %v99
    %v433 = vpop.f32.mrf.mxu0
    %v434 = vadd.f32 %v175, %v433
    %435 = vmatmul.f32.gmra.mxu0 %v100
    %v436 = vpop.f32.mrf.mxu0
    %v437 = vadd.f32 %v175, %v436
    %438 = vmatmul.f32.gmra.mxu0 %v101
    %v439 = vpop.f32.mrf.mxu0
    %v440 = vadd.f32 %v175, %v439
    %441 = vmatmul.f32.gmra.mxu0 %v102
    %v442 = vpop.f32.mrf.mxu0
    %v443 = vadd.f32 %v175, %v442
    %444 = vmatmul.f32.gmra.mxu0 %v103
    %v445 = vpop.f32.mrf.mxu0
    %v446 = vadd.f32 %v175, %v445
    %447 = vmatmul.f32.gmra.mxu0 %v104
    %v448 = vpop.f32.mrf.mxu0
    %v449 = vadd.f32 %v175, %v448
    %450 = vmatmul.f32.gmra.mxu0 %v105
    %v451 = vpop.f32.mrf.mxu0
    %v452 = vadd.f32 %v175, %v451
    %453 = vmatmul.f32.gmra.mxu0 %v106
    %v454 = vpop.f32.mrf.mxu0
    %v455 = vadd.f32 %v175, %v454
    %456 = vdwg.mxu0
    %457 = vmatpush.msra.mxu0 %v170
    %458 = vmatpush.msra.mxu0 %v166
    %459 = vmatpush.msra.mxu0 %v162
    %460 = vmatpush.msra.mxu0 %v158
    %461 = vmatpush.msra.mxu0 %v154
    %462 = vmatpush.msra.mxu0 %v150
    %463 = vmatpush.msra.mxu0 %v146
    %464 = vmatpush.msra.mxu0 %v142
    %465 = vmatpush.msra.mxu0 %v138
    %466 = vmatpush.msra.mxu0 %v134
    %467 = vmatpush.msra.mxu0 %v130
    %468 = vmatpush.msra.mxu0 %v126
    %469 = vmatpush.msra.mxu0 %v122
    %470 = vmatpush.msra.mxu0 %v118
    %471 = vmatpush.msra.mxu0 %v114
    %472 = vmatpush.msra.mxu0 %v110
    %473 = vmatmul.f32.gmra.mxu0 %v82
    %v474 = vpop.f32.mrf.mxu0
    %v475 = vadd.f32 %v176, %v474
    %476 = vmatmul.f32.gmra.mxu0 %v83
    %v477 = vpop.f32.mrf.mxu0
    %v478 = vadd.f32 %v176, %v477
    %479 = vmatmul.f32.gmra.mxu0 %v84
    %v480 = vpop.f32.mrf.mxu0
    %v481 = vadd.f32 %v176, %v480
    %482 = vmatmul.f32.gmra.mxu0 %v85
    %v483 = vpop.f32.mrf.mxu0
    %v484 = vadd.f32 %v176, %v483
    %485 = vmatmul.f32.gmra.mxu0 %v86
    %v486 = vpop.f32.mrf.mxu0
    %v487 = vadd.f32 %v176, %v486
    %488 = vmatmul.f32.gmra.mxu0 %v87
    %v489 = vpop.f32.mrf.mxu0
    %v490 = vadd.f32 %v176, %v489
    %491 = vmatmul.f32.gmra.mxu0 %v88
    %v492 = vpop.f32.mrf.mxu0
    %v493 = vadd.f32 %v176, %v492
    %494 = vmatmul.f32.gmra.mxu0 %v89
    %v495 = vpop.f32.mrf.mxu0
    %v496 = vadd.f32 %v176, %v495
    %497 = vmatmul.f32.gmra.mxu0 %v90
    %v498 = vpop.f32.mrf.mxu0
    %v499 = vadd.f32 %v176, %v498
    %500 = vmatmul.f32.gmra.mxu0 %v91
    %v501 = vpop.f32.mrf.mxu0
    %v502 = vadd.f32 %v176, %v501
    %503 = vmatmul.f32.gmra.mxu0 %v92
    %v504 = vpop.f32.mrf.mxu0
    %v505 = vadd.f32 %v176, %v504
    %506 = vmatmul.f32.gmra.mxu0 %v93
    %v507 = vpop.f32.mrf.mxu0
    %v508 = vadd.f32 %v176, %v507
    %509 = vmatmul.f32.gmra.mxu0 %v94
    %v510 = vpop.f32.mrf.mxu0
    %v511 = vadd.f32 %v176, %v510
    %512 = vmatmul.f32.gmra.mxu0 %v95
    %v513 = vpop.f32.mrf.mxu0
    %v514 = vadd.f32 %v176, %v513
    %515 = vmatmul.f32.gmra.mxu0 %v96
    %v516 = vpop.f32.mrf.mxu0
    %v517 = vadd.f32 %v176, %v516
    %518 = vmatmul.f32.gmra.mxu0 %v97
    %v519 = vpop.f32.mrf.mxu0
    %v520 = vadd.f32 %v176, %v519
    %521 = vmatmul.f32.gmra.mxu0 %v98
    %v522 = vpop.f32.mrf.mxu0
    %v523 = vadd.f32 %v176, %v522
    %524 = vmatmul.f32.gmra.mxu0 %v99
    %v525 = vpop.f32.mrf.mxu0
    %v526 = vadd.f32 %v176, %v525
    %527 = vmatmul.f32.gmra.mxu0 %v100
    %v528 = vpop.f32.mrf.mxu0
    %v529 = vadd.f32 %v176, %v528
    %530 = vmatmul.f32.gmra.mxu0 %v101
    %v531 = vpop.f32.mrf.mxu0
    %v532 = vadd.f32 %v176, %v531
    %533 = vmatmul.f32.gmra.mxu0 %v102
    %v534 = vpop.f32.mrf.mxu0
    %v535 = vadd.f32 %v176, %v534
    %536 = vmatmul.f32.gmra.mxu0 %v103
    %v537 = vpop.f32.mrf.mxu0
    %v538 = vadd.f32 %v176, %v537
    %539 = vmatmul.f32.gmra.mxu0 %v104
    %v540 = vpop.f32.mrf.mxu0
    %v541 = vadd.f32 %v176, %v540
    %542 = vmatmul.f32.gmra.mxu0 %v105
    %v543 = vpop.f32.mrf.mxu0
    %v544 = vadd.f32 %v176, %v543
    %545 = vmatmul.f32.gmra.mxu0 %v106
    %v546 = vpop.f32.mrf.mxu0
    %v547 = vadd.f32 %v176, %v546
    %548 = vdwg.mxu0
    %v549 = vmul.f32 %v199, 0.5
    %v550 = vmul.f32 %v291, 0.5
    %v551 = vmul.f32 %v383, 0.5
    %v552 = vmul.f32 %v475, 0.5
    %v553 = vmul.f32 %v202, 0.5
    %v554 = vmul.f32 %v294, 0.5
    %v555 = vmul.f32 %v386, 0.5
    %v556 = vmul.f32 %v478, 0.5
    %v557 = vmul.f32 %v205, 0.5
    %v558 = vmul.f32 %v297, 0.5
    %v559 = vmul.f32 %v389, 0.5
    %v560 = vmul.f32 %v481, 0.5
    %v561 = vmul.f32 %v208, 0.5
    %v562 = vmul.f32 %v300, 0.5
    %v563 = vmul.f32 %v392, 0.5
    %v564 = vmul.f32 %v484, 0.5
    %v565 = vmul.f32 %v211, 0.5
    %v566 = vmul.f32 %v303, 0.5
    %v567 = vmul.f32 %v395, 0.5
    %v568 = vmul.f32 %v487, 0.5
    %v569 = vmul.f32 %v214, 0.5
    %v570 = vmul.f32 %v306, 0.5
    %v571 = vmul.f32 %v398, 0.5
    %v572 = vmul.f32 %v490, 0.5
    %v573 = vmul.f32 %v217, 0.5
    %v574 = vmul.f32 %v309, 0.5
    %v575 = vmul.f32 %v401, 0.5
    %v576 = vmul.f32 %v493, 0.5
    %v577 = vmul.f32 %v220, 0.5
    %v578 = vmul.f32 %v312, 0.5
    %v579 = vmul.f32 %v404, 0.5
    %v580 = vmul.f32 %v496, 0.5
    %v581 = vmul.f32 %v223, 0.5
    %v582 = vmul.f32 %v315, 0.5
    %v583 = vmul.f32 %v407, 0.5
    %v584 = vmul.f32 %v499, 0.5
    %v585 = vmul.f32 %v226, 0.5
    %v586 = vmul.f32 %v318, 0.5
    %v587 = vmul.f32 %v410, 0.5
    %v588 = vmul.f32 %v502, 0.5
    %v589 = vmul.f32 %v229, 0.5
    %v590 = vmul.f32 %v321, 0.5
    %v591 = vmul.f32 %v413, 0.5
    %v592 = vmul.f32 %v505, 0.5
    %v593 = vmul.f32 %v232, 0.5
    %v594 = vmul.f32 %v324, 0.5
    %v595 = vmul.f32 %v416, 0.5
    %v596 = vmul.f32 %v508, 0.5
    %v597 = vmul.f32 %v235, 0.5
    %v598 = vmul.f32 %v327, 0.5
    %v599 = vmul.f32 %v419, 0.5
    %v600 = vmul.f32 %v511, 0.5
    %v601 = vmul.f32 %v238, 0.5
    %v602 = vmul.f32 %v330, 0.5
    %v603 = vmul.f32 %v422, 0.5
    %v604 = vmul.f32 %v514, 0.5
    %v605 = vmul.f32 %v241, 0.5
    %v606 = vmul.f32 %v333, 0.5
    %v607 = vmul.f32 %v425, 0.5
    %v608 = vmul.f32 %v517, 0.5
    %v609 = vmul.f32 %v244, 0.5
    %v610 = vmul.f32 %v336, 0.5
    %v611 = vmul.f32 %v428, 0.5
    %v612 = vmul.f32 %v520, 0.5
    %v613 = vmul.f32 %v247, 0.5
    %v614 = vmul.f32 %v339, 0.5
    %v615 = vmul.f32 %v431, 0.5
    %v616 = vmul.f32 %v523, 0.5
    %v617 = vmul.f32 %v250, 0.5
    %v618 = vmul.f32 %v342, 0.5
    %v619 = vmul.f32 %v434, 0.5
    %v620 = vmul.f32 %v526, 0.5
    %v621 = vmul.f32 %v253, 0.5
    %v622 = vmul.f32 %v345, 0.5
    %v623 = vmul.f32 %v437, 0.5
    %v624 = vmul.f32 %v529, 0.5
    %v625 = vmul.f32 %v256, 0.5
    %v626 = vmul.f32 %v348, 0.5
    %v627 = vmul.f32 %v440, 0.5
    %v628 = vmul.f32 %v532, 0.5
    %v629 = vmul.f32 %v259, 0.5
    %v630 = vmul.f32 %v351, 0.5
    %v631 = vmul.f32 %v443, 0.5
    %v632 = vmul.f32 %v535, 0.5
    %v633 = vmul.f32 %v262, 0.5
    %v634 = vmul.f32 %v354, 0.5
    %v635 = vmul.f32 %v446, 0.5
    %v636 = vmul.f32 %v538, 0.5
    %v637 = vmul.f32 %v265, 0.5
    %v638 = vmul.f32 %v357, 0.5
    %v639 = vmul.f32 %v449, 0.5
    %v640 = vmul.f32 %v541, 0.5
    %v641 = vmul.f32 %v268, 0.5
    %v642 = vmul.f32 %v360, 0.5
    %v643 = vmul.f32 %v452, 0.5
    %v644 = vmul.f32 %v544, 0.5
    %v645 = vmul.f32 %v271, 0.5
    %v646 = vmul.f32 %v363, 0.5
    %v647 = vmul.f32 %v455, 0.5
    %v648 = vmul.f32 %v547, 0.5
    %v649 = vmul.f32 %v199, 0.70710677
    %v650 = vmul.f32 %v291, 0.70710677
    %v651 = vmul.f32 %v383, 0.70710677
    %v652 = vmul.f32 %v475, 0.70710677
    %v653 = vmul.f32 %v202, 0.70710677
    %v654 = vmul.f32 %v294, 0.70710677
    %v655 = vmul.f32 %v386, 0.70710677
    %v656 = vmul.f32 %v478, 0.70710677
    %v657 = vmul.f32 %v205, 0.70710677
    %v658 = vmul.f32 %v297, 0.70710677
    %v659 = vmul.f32 %v389, 0.70710677
    %v660 = vmul.f32 %v481, 0.70710677
    %v661 = vmul.f32 %v208, 0.70710677
    %v662 = vmul.f32 %v300, 0.70710677
    %v663 = vmul.f32 %v392, 0.70710677
    %v664 = vmul.f32 %v484, 0.70710677
    %v665 = vmul.f32 %v211, 0.70710677
    %v666 = vmul.f32 %v303, 0.70710677
    %v667 = vmul.f32 %v395, 0.70710677
    %v668 = vmul.f32 %v487, 0.70710677
    %v669 = vmul.f32 %v214, 0.70710677
    %v670 = vmul.f32 %v306, 0.70710677
    %v671 = vmul.f32 %v398, 0.70710677
    %v672 = vmul.f32 %v490, 0.70710677
    %v673 = vmul.f32 %v217, 0.70710677
    %v674 = vmul.f32 %v309, 0.70710677
    %v675 = vmul.f32 %v401, 0.70710677
    %v676 = vmul.f32 %v493, 0.70710677
    %v677 = vmul.f32 %v220, 0.70710677
    %v678 = vmul.f32 %v312, 0.70710677
    %v679 = vmul.f32 %v404, 0.70710677
    %v680 = vmul.f32 %v496, 0.70710677
    %v681 = vmul.f32 %v223, 0.70710677
    %v682 = vmul.f32 %v315, 0.70710677
    %v683 = vmul.f32 %v407, 0.70710677
    %v684 = vmul.f32 %v499, 0.70710677
    %v685 = vmul.f32 %v226, 0.70710677
    %v686 = vmul.f32 %v318, 0.70710677
    %v687 = vmul.f32 %v410, 0.70710677
    %v688 = vmul.f32 %v502, 0.70710677
    %v689 = vmul.f32 %v229, 0.70710677
    %v690 = vmul.f32 %v321, 0.70710677
    %v691 = vmul.f32 %v413, 0.70710677
    %v692 = vmul.f32 %v505, 0.70710677
    %v693 = vmul.f32 %v232, 0.70710677
    %v694 = vmul.f32 %v324, 0.70710677
    %v695 = vmul.f32 %v416, 0.70710677
    %v696 = vmul.f32 %v508, 0.70710677
    %v697 = vmul.f32 %v235, 0.70710677
    %v698 = vmul.f32 %v327, 0.70710677
    %v699 = vmul.f32 %v419, 0.70710677
    %v700 = vmul.f32 %v511, 0.70710677
    %v701 = vmul.f32 %v238, 0.70710677
    %v702 = vmul.f32 %v330, 0.70710677
    %v703 = vmul.f32 %v422, 0.70710677
    %v704 = vmul.f32 %v514, 0.70710677
    %v705 = vmul.f32 %v241, 0.70710677
    %v706 = vmul.f32 %v333, 0.70710677
    %v707 = vmul.f32 %v425, 0.70710677
    %v708 = vmul.f32 %v517, 0.70710677
    %v709 = vmul.f32 %v244, 0.70710677
    %v710 = vmul.f32 %v336, 0.70710677
    %v711 = vmul.f32 %v428, 0.70710677
    %v712 = vmul.f32 %v520, 0.70710677
    %v713 = vmul.f32 %v247, 0.70710677
    %v714 = vmul.f32 %v339, 0.70710677
    %v715 = vmul.f32 %v431, 0.70710677
    %v716 = vmul.f32 %v523, 0.70710677
    %v717 = vmul.f32 %v250, 0.70710677
    %v718 = vmul.f32 %v342, 0.70710677
    %v719 = vmul.f32 %v434, 0.70710677
    %v720 = vmul.f32 %v526, 0.70710677
    %v721 = vmul.f32 %v253, 0.70710677
    %v722 = vmul.f32 %v345, 0.70710677
    %v723 = vmul.f32 %v437, 0.70710677
    %v724 = vmul.f32 %v529, 0.70710677
    %v725 = vmul.f32 %v256, 0.70710677
    %v726 = vmul.f32 %v348, 0.70710677
    %v727 = vmul.f32 %v440, 0.70710677
    %v728 = vmul.f32 %v532, 0.70710677
    %v729 = vmul.f32 %v259, 0.70710677
    %v730 = vmul.f32 %v351, 0.70710677
    %v731 = vmul.f32 %v443, 0.70710677
    %v732 = vmul.f32 %v535, 0.70710677
    %v733 = vmul.f32 %v262, 0.70710677
    %v734 = vmul.f32 %v354, 0.70710677
    %v735 = vmul.f32 %v446, 0.70710677
    %v736 = vmul.f32 %v538, 0.70710677
    %v737 = vmul.f32 %v265, 0.70710677
    %v738 = vmul.f32 %v357, 0.70710677
    %v739 = vmul.f32 %v449, 0.70710677
    %v740 = vmul.f32 %v541, 0.70710677
    %v741 = vmul.f32 %v268, 0.70710677
    %v742 = vmul.f32 %v360, 0.70710677
    %v743 = vmul.f32 %v452, 0.70710677
    %v744 = vmul.f32 %v544, 0.70710677
    %v745 = vmul.f32 %v271, 0.70710677
    %v746 = vmul.f32 %v363, 0.70710677
    %v747 = vmul.f32 %v455, 0.70710677
    %v748 = vmul.f32 %v547, 0.70710677
    %v749 = vmul.f32 %v649, %v649
    %v750 = vmin.f32 16.0, %v749
    %v751 = vmul.f32 %v750, 2.1237322e-06
    %v752 = vadd.f32 %v751, 0.00028619796
    %v753 = vmul.f32 %v750, %v752
    %v754 = vadd.f32 %v753, 0.0036580483
    %v755 = vmul.f32 %v750, %v754
    %v756 = vadd.f32 %v755, 0.05243302
    %v757 = vmul.f32 %v750, %v756
    %v758 = vadd.f32 %v757, 0.18741608
    %v759 = vmul.f32 %v750, %v758
    %v760 = vadd.f32 %v759, 1.1283791
    %v761 = vmul.f32 %v649, %v760
    %v762 = vmul.f32 %v750, 3.8918573e-05
    %v763 = vadd.f32 %v762, 0.001143296
    %v764 = vmul.f32 %v750, %v763
    %v765 = vadd.f32 %v764, 0.014752088
    %v766 = vmul.f32 %v750, %v765
    %v767 = vadd.f32 %v766, 0.112945676
    %v768 = vmul.f32 %v750, %v767
    %v769 = vadd.f32 %v768, 0.4994258
    %v770 = vmul.f32 %v750, %v769
    %v771 = vadd.f32 %v770, 1.0
    %v772 = vrcp.pop %v771
    %v773 = vmul.f32 %v771, %v772
    %v774 = vsub.f32 1.0, %v773
    %v775 = vmul.f32 %v772, %v774
    %v776 = vadd.f32 %v772, %v775
    %vm777 = vweird.f32 %v771
    %vm778 = vweird.f32 %v772
    %vm779 = vmor %vm777, %vm778
    %v780 = vsel %vm779, %v772, %v776
    %v781 = vand.u32 2147483647, %v771
    %vm782 = vcmp.eq.f32.partialorder %v781, 8.507059e+37
    %v783 = vand.u32 %v771, 2147483648
    %v784 = vor.u32 1.1754944e-38, %v783
    %v785 = vsel %vm782, %v784, %v780
    %v786 = vmul.f32 %v761, %v785
    %v787 = vmin.f32 %v786, 1.0
    %v788 = vmax.f32 %v787, -1.0
    %v789 = vmul.f32 %v650, %v650
    %v790 = vmin.f32 16.0, %v789
    %v791 = vmul.f32 %v790, 2.1237322e-06
    %v792 = vadd.f32 %v791, 0.00028619796
    %v793 = vmul.f32 %v790, %v792
    %v794 = vadd.f32 %v793, 0.0036580483
    %v795 = vmul.f32 %v790, %v794
    %v796 = vadd.f32 %v795, 0.05243302
    %v797 = vmul.f32 %v790, %v796
    %v798 = vadd.f32 %v797, 0.18741608
    %v799 = vmul.f32 %v790, %v798
    %v800 = vadd.f32 %v799, 1.1283791
    %v801 = vmul.f32 %v650, %v800
    %v802 = vmul.f32 %v790, 3.8918573e-05
    %v803 = vadd.f32 %v802, 0.001143296
    %v804 = vmul.f32 %v790, %v803
    %v805 = vadd.f32 %v804, 0.014752088
    %v806 = vmul.f32 %v790, %v805
    %v807 = vadd.f32 %v806, 0.112945676
    %v808 = vmul.f32 %v790, %v807
    %v809 = vadd.f32 %v808, 0.4994258
    %v810 = vmul.f32 %v790, %v809
    %v811 = vadd.f32 %v810, 1.0
    %v812 = vrcp.pop %v811
    %v813 = vmul.f32 %v811, %v812
    %v814 = vsub.f32 1.0, %v813
    %v815 = vmul.f32 %v812, %v814
    %v816 = vadd.f32 %v812, %v815
    %vm817 = vweird.f32 %v811
    %vm818 = vweird.f32 %v812
    %vm819 = vmor %vm817, %vm818
    %v820 = vsel %vm819, %v812, %v816
    %v821 = vand.u32 2147483647, %v811
    %vm822 = vcmp.eq.f32.partialorder %v821, 8.507059e+37
    %v823 = vand.u32 %v811, 2147483648
    %v824 = vor.u32 1.1754944e-38, %v823
    %v825 = vsel %vm822, %v824, %v820
    %v826 = vmul.f32 %v801, %v825
    %v827 = vmin.f32 %v826, 1.0
    %v828 = vmax.f32 %v827, -1.0
    %v829 = vmul.f32 %v651, %v651
    %v830 = vmin.f32 16.0, %v829
    %v831 = vmul.f32 %v830, 2.1237322e-06
    %v832 = vadd.f32 %v831, 0.00028619796
    %v833 = vmul.f32 %v830, %v832
    %v834 = vadd.f32 %v833, 0.0036580483
    %v835 = vmul.f32 %v830, %v834
    %v836 = vadd.f32 %v835, 0.05243302
    %v837 = vmul.f32 %v830, %v836
    %v838 = vadd.f32 %v837, 0.18741608
    %v839 = vmul.f32 %v830, %v838
    %v840 = vadd.f32 %v839, 1.1283791
    %v841 = vmul.f32 %v651, %v840
    %v842 = vmul.f32 %v830, 3.8918573e-05
    %v843 = vadd.f32 %v842, 0.001143296
    %v844 = vmul.f32 %v830, %v843
    %v845 = vadd.f32 %v844, 0.014752088
    %v846 = vmul.f32 %v830, %v845
    %v847 = vadd.f32 %v846, 0.112945676
    %v848 = vmul.f32 %v830, %v847
    %v849 = vadd.f32 %v848, 0.4994258
    %v850 = vmul.f32 %v830, %v849
    %v851 = vadd.f32 %v850, 1.0
    %v852 = vrcp.pop %v851
    %v853 = vmul.f32 %v851, %v852
    %v854 = vsub.f32 1.0, %v853
    %v855 = vmul.f32 %v852, %v854
    %v856 = vadd.f32 %v852, %v855
    %vm857 = vweird.f32 %v851
    %vm858 = vweird.f32 %v852
    %vm859 = vmor %vm857, %vm858
    %v860 = vsel %vm859, %v852, %v856
    %v861 = vand.u32 2147483647, %v851
    %vm862 = vcmp.eq.f32.partialorder %v861, 8.507059e+37
    %v863 = vand.u32 %v851, 2147483648
    %v864 = vor.u32 1.1754944e-38, %v863
    %v865 = vsel %vm862, %v864, %v860
    %v866 = vmul.f32 %v841, %v865
    %v867 = vmin.f32 %v866, 1.0
    %v868 = vmax.f32 %v867, -1.0
    %v869 = vmul.f32 %v652, %v652
    %v870 = vmin.f32 16.0, %v869
    %v871 = vmul.f32 %v870, 2.1237322e-06
    %v872 = vadd.f32 %v871, 0.00028619796
    %v873 = vmul.f32 %v870, %v872
    %v874 = vadd.f32 %v873, 0.0036580483
    %v875 = vmul.f32 %v870, %v874
    %v876 = vadd.f32 %v875, 0.05243302
    %v877 = vmul.f32 %v870, %v876
    %v878 = vadd.f32 %v877, 0.18741608
    %v879 = vmul.f32 %v870, %v878
    %v880 = vadd.f32 %v879, 1.1283791
    %v881 = vmul.f32 %v652, %v880
    %v882 = vmul.f32 %v870, 3.8918573e-05
    %v883 = vadd.f32 %v882, 0.001143296
    %v884 = vmul.f32 %v870, %v883
    %v885 = vadd.f32 %v884, 0.014752088
    %v886 = vmul.f32 %v870, %v885
    %v887 = vadd.f32 %v886, 0.112945676
    %v888 = vmul.f32 %v870, %v887
    %v889 = vadd.f32 %v888, 0.4994258
    %v890 = vmul.f32 %v870, %v889
    %v891 = vadd.f32 %v890, 1.0
    %v892 = vrcp.pop %v891
    %v893 = vmul.f32 %v891, %v892
    %v894 = vsub.f32 1.0, %v893
    %v895 = vmul.f32 %v892, %v894
    %v896 = vadd.f32 %v892, %v895
    %vm897 = vweird.f32 %v891
    %vm898 = vweird.f32 %v892
    %vm899 = vmor %vm897, %vm898
    %v900 = vsel %vm899, %v892, %v896
    %v901 = vand.u32 2147483647, %v891
    %vm902 = vcmp.eq.f32.partialorder %v901, 8.507059e+37
    %v903 = vand.u32 %v891, 2147483648
    %v904 = vor.u32 1.1754944e-38, %v903
    %v905 = vsel %vm902, %v904, %v900
    %v906 = vmul.f32 %v881, %v905
    %v907 = vmin.f32 %v906, 1.0
    %v908 = vmax.f32 %v907, -1.0
    %v909 = vmul.f32 %v653, %v653
    %v910 = vmin.f32 16.0, %v909
    %v911 = vmul.f32 %v910, 2.1237322e-06
    %v912 = vadd.f32 %v911, 0.00028619796
    %v913 = vmul.f32 %v910, %v912
    %v914 = vadd.f32 %v913, 0.0036580483
    %v915 = vmul.f32 %v910, %v914
    %v916 = vadd.f32 %v915, 0.05243302
    %v917 = vmul.f32 %v910, %v916
    %v918 = vadd.f32 %v917, 0.18741608
    %v919 = vmul.f32 %v910, %v918
    %v920 = vadd.f32 %v919, 1.1283791
    %v921 = vmul.f32 %v653, %v920
    %v922 = vmul.f32 %v910, 3.8918573e-05
    %v923 = vadd.f32 %v922, 0.001143296
    %v924 = vmul.f32 %v910, %v923
    %v925 = vadd.f32 %v924, 0.014752088
    %v926 = vmul.f32 %v910, %v925
    %v927 = vadd.f32 %v926, 0.112945676
    %v928 = vmul.f32 %v910, %v927
    %v929 = vadd.f32 %v928, 0.4994258
    %v930 = vmul.f32 %v910, %v929
    %v931 = vadd.f32 %v930, 1.0
    %v932 = vrcp.pop %v931
    %v933 = vmul.f32 %v931, %v932
    %v934 = vsub.f32 1.0, %v933
    %v935 = vmul.f32 %v932, %v934
    %v936 = vadd.f32 %v932, %v935
    %vm937 = vweird.f32 %v931
    %vm938 = vweird.f32 %v932
    %vm939 = vmor %vm937, %vm938
    %v940 = vsel %vm939, %v932, %v936
    %v941 = vand.u32 2147483647, %v931
    %vm942 = vcmp.eq.f32.partialorder %v941, 8.507059e+37
    %v943 = vand.u32 %v931, 2147483648
    %v944 = vor.u32 1.1754944e-38, %v943
    %v945 = vsel %vm942, %v944, %v940
    %v946 = vmul.f32 %v921, %v945
    %v947 = vmin.f32 %v946, 1.0
    %v948 = vmax.f32 %v947, -1.0
    %v949 = vmul.f32 %v654, %v654
    %v950 = vmin.f32 16.0, %v949
    %v951 = vmul.f32 %v950, 2.1237322e-06
    %v952 = vadd.f32 %v951, 0.00028619796
    %v953 = vmul.f32 %v950, %v952
    %v954 = vadd.f32 %v953, 0.0036580483
    %v955 = vmul.f32 %v950, %v954
    %v956 = vadd.f32 %v955, 0.05243302
    %v957 = vmul.f32 %v950, %v956
    %v958 = vadd.f32 %v957, 0.18741608
    %v959 = vmul.f32 %v950, %v958
    %v960 = vadd.f32 %v959, 1.1283791
    %v961 = vmul.f32 %v654, %v960
    %v962 = vmul.f32 %v950, 3.8918573e-05
    %v963 = vadd.f32 %v962, 0.001143296
    %v964 = vmul.f32 %v950, %v963
    %v965 = vadd.f32 %v964, 0.014752088
    %v966 = vmul.f32 %v950, %v965
    %v967 = vadd.f32 %v966, 0.112945676
    %v968 = vmul.f32 %v950, %v967
    %v969 = vadd.f32 %v968, 0.4994258
    %v970 = vmul.f32 %v950, %v969
    %v971 = vadd.f32 %v970, 1.0
    %v972 = vrcp.pop %v971
    %v973 = vmul.f32 %v971, %v972
    %v974 = vsub.f32 1.0, %v973
    %v975 = vmul.f32 %v972, %v974
    %v976 = vadd.f32 %v972, %v975
    %vm977 = vweird.f32 %v971
    %vm978 = vweird.f32 %v972
    %vm979 = vmor %vm977, %vm978
    %v980 = vsel %vm979, %v972, %v976
    %v981 = vand.u32 2147483647, %v971
    %vm982 = vcmp.eq.f32.partialorder %v981, 8.507059e+37
    %v983 = vand.u32 %v971, 2147483648
    %v984 = vor.u32 1.1754944e-38, %v983
    %v985 = vsel %vm982, %v984, %v980
    %v986 = vmul.f32 %v961, %v985
    %v987 = vmin.f32 %v986, 1.0
    %v988 = vmax.f32 %v987, -1.0
    %v989 = vmul.f32 %v655, %v655
    %v990 = vmin.f32 16.0, %v989
    %v991 = vmul.f32 %v990, 2.1237322e-06
    %v992 = vadd.f32 %v991, 0.00028619796
    %v993 = vmul.f32 %v990, %v992
    %v994 = vadd.f32 %v993, 0.0036580483
    %v995 = vmul.f32 %v990, %v994
    %v996 = vadd.f32 %v995, 0.05243302
    %v997 = vmul.f32 %v990, %v996
    %v998 = vadd.f32 %v997, 0.18741608
    %v999 = vmul.f32 %v990, %v998
    %v1000 = vadd.f32 %v999, 1.1283791
    %v1001 = vmul.f32 %v655, %v1000
    %v1002 = vmul.f32 %v990, 3.8918573e-05
    %v1003 = vadd.f32 %v1002, 0.001143296
    %v1004 = vmul.f32 %v990, %v1003
    %v1005 = vadd.f32 %v1004, 0.014752088
    %v1006 = vmul.f32 %v990, %v1005
    %v1007 = vadd.f32 %v1006, 0.112945676
    %v1008 = vmul.f32 %v990, %v1007
    %v1009 = vadd.f32 %v1008, 0.4994258
    %v1010 = vmul.f32 %v990, %v1009
    %v1011 = vadd.f32 %v1010, 1.0
    %v1012 = vrcp.pop %v1011
    %v1013 = vmul.f32 %v1011, %v1012
    %v1014 = vsub.f32 1.0, %v1013
    %v1015 = vmul.f32 %v1012, %v1014
    %v1016 = vadd.f32 %v1012, %v1015
    %vm1017 = vweird.f32 %v1011
    %vm1018 = vweird.f32 %v1012
    %vm1019 = vmor %vm1017, %vm1018
    %v1020 = vsel %vm1019, %v1012, %v1016
    %v1021 = vand.u32 2147483647, %v1011
    %vm1022 = vcmp.eq.f32.partialorder %v1021, 8.507059e+37
    %v1023 = vand.u32 %v1011, 2147483648
    %v1024 = vor.u32 1.1754944e-38, %v1023
    %v1025 = vsel %vm1022, %v1024, %v1020
    %v1026 = vmul.f32 %v1001, %v1025
    %v1027 = vmin.f32 %v1026, 1.0
    %v1028 = vmax.f32 %v1027, -1.0
    %v1029 = vmul.f32 %v656, %v656
    %v1030 = vmin.f32 16.0, %v1029
    %v1031 = vmul.f32 %v1030, 2.1237322e-06
    %v1032 = vadd.f32 %v1031, 0.00028619796
    %v1033 = vmul.f32 %v1030, %v1032
    %v1034 = vadd.f32 %v1033, 0.0036580483
    %v1035 = vmul.f32 %v1030, %v1034
    %v1036 = vadd.f32 %v1035, 0.05243302
    %v1037 = vmul.f32 %v1030, %v1036
    %v1038 = vadd.f32 %v1037, 0.18741608
    %v1039 = vmul.f32 %v1030, %v1038
    %v1040 = vadd.f32 %v1039, 1.1283791
    %v1041 = vmul.f32 %v656, %v1040
    %v1042 = vmul.f32 %v1030, 3.8918573e-05
    %v1043 = vadd.f32 %v1042, 0.001143296
    %v1044 = vmul.f32 %v1030, %v1043
    %v1045 = vadd.f32 %v1044, 0.014752088
    %v1046 = vmul.f32 %v1030, %v1045
    %v1047 = vadd.f32 %v1046, 0.112945676
    %v1048 = vmul.f32 %v1030, %v1047
    %v1049 = vadd.f32 %v1048, 0.4994258
    %v1050 = vmul.f32 %v1030, %v1049
    %v1051 = vadd.f32 %v1050, 1.0
    %v1052 = vrcp.pop %v1051
    %v1053 = vmul.f32 %v1051, %v1052
    %v1054 = vsub.f32 1.0, %v1053
    %v1055 = vmul.f32 %v1052, %v1054
    %v1056 = vadd.f32 %v1052, %v1055
    %vm1057 = vweird.f32 %v1051
    %vm1058 = vweird.f32 %v1052
    %vm1059 = vmor %vm1057, %vm1058
    %v1060 = vsel %vm1059, %v1052, %v1056
    %v1061 = vand.u32 2147483647, %v1051
    %vm1062 = vcmp.eq.f32.partialorder %v1061, 8.507059e+37
    %v1063 = vand.u32 %v1051, 2147483648
    %v1064 = vor.u32 1.1754944e-38, %v1063
    %v1065 = vsel %vm1062, %v1064, %v1060
    %v1066 = vmul.f32 %v1041, %v1065
    %v1067 = vmin.f32 %v1066, 1.0
    %v1068 = vmax.f32 %v1067, -1.0
    %v1069 = vmul.f32 %v657, %v657
    %v1070 = vmin.f32 16.0, %v1069
    %v1071 = vmul.f32 %v1070, 2.1237322e-06
    %v1072 = vadd.f32 %v1071, 0.00028619796
    %v1073 = vmul.f32 %v1070, %v1072
    %v1074 = vadd.f32 %v1073, 0.0036580483
    %v1075 = vmul.f32 %v1070, %v1074
    %v1076 = vadd.f32 %v1075, 0.05243302
    %v1077 = vmul.f32 %v1070, %v1076
    %v1078 = vadd.f32 %v1077, 0.18741608
    %v1079 = vmul.f32 %v1070, %v1078
    %v1080 = vadd.f32 %v1079, 1.1283791
    %v1081 = vmul.f32 %v657, %v1080
    %v1082 = vmul.f32 %v1070, 3.8918573e-05
    %v1083 = vadd.f32 %v1082, 0.001143296
    %v1084 = vmul.f32 %v1070, %v1083
    %v1085 = vadd.f32 %v1084, 0.014752088
    %v1086 = vmul.f32 %v1070, %v1085
    %v1087 = vadd.f32 %v1086, 0.112945676
    %v1088 = vmul.f32 %v1070, %v1087
    %v1089 = vadd.f32 %v1088, 0.4994258
    %v1090 = vmul.f32 %v1070, %v1089
    %v1091 = vadd.f32 %v1090, 1.0
    %v1092 = vrcp.pop %v1091
    %v1093 = vmul.f32 %v1091, %v1092
    %v1094 = vsub.f32 1.0, %v1093
    %v1095 = vmul.f32 %v1092, %v1094
    %v1096 = vadd.f32 %v1092, %v1095
    %vm1097 = vweird.f32 %v1091
    %vm1098 = vweird.f32 %v1092
    %vm1099 = vmor %vm1097, %vm1098
    %v1100 = vsel %vm1099, %v1092, %v1096
    %v1101 = vand.u32 2147483647, %v1091
    %vm1102 = vcmp.eq.f32.partialorder %v1101, 8.507059e+37
    %v1103 = vand.u32 %v1091, 2147483648
    %v1104 = vor.u32 1.1754944e-38, %v1103
    %v1105 = vsel %vm1102, %v1104, %v1100
    %v1106 = vmul.f32 %v1081, %v1105
    %v1107 = vmin.f32 %v1106, 1.0
    %v1108 = vmax.f32 %v1107, -1.0
    %v1109 = vmul.f32 %v658, %v658
    %v1110 = vmin.f32 16.0, %v1109
    %v1111 = vmul.f32 %v1110, 2.1237322e-06
    %v1112 = vadd.f32 %v1111, 0.00028619796
    %v1113 = vmul.f32 %v1110, %v1112
    %v1114 = vadd.f32 %v1113, 0.0036580483
    %v1115 = vmul.f32 %v1110, %v1114
    %v1116 = vadd.f32 %v1115, 0.05243302
    %v1117 = vmul.f32 %v1110, %v1116
    %v1118 = vadd.f32 %v1117, 0.18741608
    %v1119 = vmul.f32 %v1110, %v1118
    %v1120 = vadd.f32 %v1119, 1.1283791
    %v1121 = vmul.f32 %v658, %v1120
    %v1122 = vmul.f32 %v1110, 3.8918573e-05
    %v1123 = vadd.f32 %v1122, 0.001143296
    %v1124 = vmul.f32 %v1110, %v1123
    %v1125 = vadd.f32 %v1124, 0.014752088
    %v1126 = vmul.f32 %v1110, %v1125
    %v1127 = vadd.f32 %v1126, 0.112945676
    %v1128 = vmul.f32 %v1110, %v1127
    %v1129 = vadd.f32 %v1128, 0.4994258
    %v1130 = vmul.f32 %v1110, %v1129
    %v1131 = vadd.f32 %v1130, 1.0
    %v1132 = vrcp.pop %v1131
    %v1133 = vmul.f32 %v1131, %v1132
    %v1134 = vsub.f32 1.0, %v1133
    %v1135 = vmul.f32 %v1132, %v1134
    %v1136 = vadd.f32 %v1132, %v1135
    %vm1137 = vweird.f32 %v1131
    %vm1138 = vweird.f32 %v1132
    %vm1139 = vmor %vm1137, %vm1138
    %v1140 = vsel %vm1139, %v1132, %v1136
    %v1141 = vand.u32 2147483647, %v1131
    %vm1142 = vcmp.eq.f32.partialorder %v1141, 8.507059e+37
    %v1143 = vand.u32 %v1131, 2147483648
    %v1144 = vor.u32 1.1754944e-38, %v1143
    %v1145 = vsel %vm1142, %v1144, %v1140
    %v1146 = vmul.f32 %v1121, %v1145
    %v1147 = vmin.f32 %v1146, 1.0
    %v1148 = vmax.f32 %v1147, -1.0
    %v1149 = vmul.f32 %v659, %v659
    %v1150 = vmin.f32 16.0, %v1149
    %v1151 = vmul.f32 %v1150, 2.1237322e-06
    %v1152 = vadd.f32 %v1151, 0.00028619796
    %v1153 = vmul.f32 %v1150, %v1152
    %v1154 = vadd.f32 %v1153, 0.0036580483
    %v1155 = vmul.f32 %v1150, %v1154
    %v1156 = vadd.f32 %v1155, 0.05243302
    %v1157 = vmul.f32 %v1150, %v1156
    %v1158 = vadd.f32 %v1157, 0.18741608
    %v1159 = vmul.f32 %v1150, %v1158
    %v1160 = vadd.f32 %v1159, 1.1283791
    %v1161 = vmul.f32 %v659, %v1160
    %v1162 = vmul.f32 %v1150, 3.8918573e-05
    %v1163 = vadd.f32 %v1162, 0.001143296
    %v1164 = vmul.f32 %v1150, %v1163
    %v1165 = vadd.f32 %v1164, 0.014752088
    %v1166 = vmul.f32 %v1150, %v1165
    %v1167 = vadd.f32 %v1166, 0.112945676
    %v1168 = vmul.f32 %v1150, %v1167
    %v1169 = vadd.f32 %v1168, 0.4994258
    %v1170 = vmul.f32 %v1150, %v1169
    %v1171 = vadd.f32 %v1170, 1.0
    %v1172 = vrcp.pop %v1171
    %v1173 = vmul.f32 %v1171, %v1172
    %v1174 = vsub.f32 1.0, %v1173
    %v1175 = vmul.f32 %v1172, %v1174
    %v1176 = vadd.f32 %v1172, %v1175
    %vm1177 = vweird.f32 %v1171
    %vm1178 = vweird.f32 %v1172
    %vm1179 = vmor %vm1177, %vm1178
    %v1180 = vsel %vm1179, %v1172, %v1176
    %v1181 = vand.u32 2147483647, %v1171
    %vm1182 = vcmp.eq.f32.partialorder %v1181, 8.507059e+37
    %v1183 = vand.u32 %v1171, 2147483648
    %v1184 = vor.u32 1.1754944e-38, %v1183
    %v1185 = vsel %vm1182, %v1184, %v1180
    %v1186 = vmul.f32 %v1161, %v1185
    %v1187 = vmin.f32 %v1186, 1.0
    %v1188 = vmax.f32 %v1187, -1.0
    %v1189 = vmul.f32 %v660, %v660
    %v1190 = vmin.f32 16.0, %v1189
    %v1191 = vmul.f32 %v1190, 2.1237322e-06
    %v1192 = vadd.f32 %v1191, 0.00028619796
    %v1193 = vmul.f32 %v1190, %v1192
    %v1194 = vadd.f32 %v1193, 0.0036580483
    %v1195 = vmul.f32 %v1190, %v1194
    %v1196 = vadd.f32 %v1195, 0.05243302
    %v1197 = vmul.f32 %v1190, %v1196
    %v1198 = vadd.f32 %v1197, 0.18741608
    %v1199 = vmul.f32 %v1190, %v1198
    %v1200 = vadd.f32 %v1199, 1.1283791
    %v1201 = vmul.f32 %v660, %v1200
    %v1202 = vmul.f32 %v1190, 3.8918573e-05
    %v1203 = vadd.f32 %v1202, 0.001143296
    %v1204 = vmul.f32 %v1190, %v1203
    %v1205 = vadd.f32 %v1204, 0.014752088
    %v1206 = vmul.f32 %v1190, %v1205
    %v1207 = vadd.f32 %v1206, 0.112945676
    %v1208 = vmul.f32 %v1190, %v1207
    %v1209 = vadd.f32 %v1208, 0.4994258
    %v1210 = vmul.f32 %v1190, %v1209
    %v1211 = vadd.f32 %v1210, 1.0
    %v1212 = vrcp.pop %v1211
    %v1213 = vmul.f32 %v1211, %v1212
    %v1214 = vsub.f32 1.0, %v1213
    %v1215 = vmul.f32 %v1212, %v1214
    %v1216 = vadd.f32 %v1212, %v1215
    %vm1217 = vweird.f32 %v1211
    %vm1218 = vweird.f32 %v1212
    %vm1219 = vmor %vm1217, %vm1218
    %v1220 = vsel %vm1219, %v1212, %v1216
    %v1221 = vand.u32 2147483647, %v1211
    %vm1222 = vcmp.eq.f32.partialorder %v1221, 8.507059e+37
    %v1223 = vand.u32 %v1211, 2147483648
    %v1224 = vor.u32 1.1754944e-38, %v1223
    %v1225 = vsel %vm1222, %v1224, %v1220
    %v1226 = vmul.f32 %v1201, %v1225
    %v1227 = vmin.f32 %v1226, 1.0
    %v1228 = vmax.f32 %v1227, -1.0
    %v1229 = vmul.f32 %v661, %v661
    %v1230 = vmin.f32 16.0, %v1229
    %v1231 = vmul.f32 %v1230, 2.1237322e-06
    %v1232 = vadd.f32 %v1231, 0.00028619796
    %v1233 = vmul.f32 %v1230, %v1232
    %v1234 = vadd.f32 %v1233, 0.0036580483
    %v1235 = vmul.f32 %v1230, %v1234
    %v1236 = vadd.f32 %v1235, 0.05243302
    %v1237 = vmul.f32 %v1230, %v1236
    %v1238 = vadd.f32 %v1237, 0.18741608
    %v1239 = vmul.f32 %v1230, %v1238
    %v1240 = vadd.f32 %v1239, 1.1283791
    %v1241 = vmul.f32 %v661, %v1240
    %v1242 = vmul.f32 %v1230, 3.8918573e-05
    %v1243 = vadd.f32 %v1242, 0.001143296
    %v1244 = vmul.f32 %v1230, %v1243
    %v1245 = vadd.f32 %v1244, 0.014752088
    %v1246 = vmul.f32 %v1230, %v1245
    %v1247 = vadd.f32 %v1246, 0.112945676
    %v1248 = vmul.f32 %v1230, %v1247
    %v1249 = vadd.f32 %v1248, 0.4994258
    %v1250 = vmul.f32 %v1230, %v1249
    %v1251 = vadd.f32 %v1250, 1.0
    %v1252 = vrcp.pop %v1251
    %v1253 = vmul.f32 %v1251, %v1252
    %v1254 = vsub.f32 1.0, %v1253
    %v1255 = vmul.f32 %v1252, %v1254
    %v1256 = vadd.f32 %v1252, %v1255
    %vm1257 = vweird.f32 %v1251
    %vm1258 = vweird.f32 %v1252
    %vm1259 = vmor %vm1257, %vm1258
    %v1260 = vsel %vm1259, %v1252, %v1256
    %v1261 = vand.u32 2147483647, %v1251
    %vm1262 = vcmp.eq.f32.partialorder %v1261, 8.507059e+37
    %v1263 = vand.u32 %v1251, 2147483648
    %v1264 = vor.u32 1.1754944e-38, %v1263
    %v1265 = vsel %vm1262, %v1264, %v1260
    %v1266 = vmul.f32 %v1241, %v1265
    %v1267 = vmin.f32 %v1266, 1.0
    %v1268 = vmax.f32 %v1267, -1.0
    %v1269 = vmul.f32 %v662, %v662
    %v1270 = vmin.f32 16.0, %v1269
    %v1271 = vmul.f32 %v1270, 2.1237322e-06
    %v1272 = vadd.f32 %v1271, 0.00028619796
    %v1273 = vmul.f32 %v1270, %v1272
    %v1274 = vadd.f32 %v1273, 0.0036580483
    %v1275 = vmul.f32 %v1270, %v1274
    %v1276 = vadd.f32 %v1275, 0.05243302
    %v1277 = vmul.f32 %v1270, %v1276
    %v1278 = vadd.f32 %v1277, 0.18741608
    %v1279 = vmul.f32 %v1270, %v1278
    %v1280 = vadd.f32 %v1279, 1.1283791
    %v1281 = vmul.f32 %v662, %v1280
    %v1282 = vmul.f32 %v1270, 3.8918573e-05
    %v1283 = vadd.f32 %v1282, 0.001143296
    %v1284 = vmul.f32 %v1270, %v1283
    %v1285 = vadd.f32 %v1284, 0.014752088
    %v1286 = vmul.f32 %v1270, %v1285
    %v1287 = vadd.f32 %v1286, 0.112945676
    %v1288 = vmul.f32 %v1270, %v1287
    %v1289 = vadd.f32 %v1288, 0.4994258
    %v1290 = vmul.f32 %v1270, %v1289
    %v1291 = vadd.f32 %v1290, 1.0
    %v1292 = vrcp.pop %v1291
    %v1293 = vmul.f32 %v1291, %v1292
    %v1294 = vsub.f32 1.0, %v1293
    %v1295 = vmul.f32 %v1292, %v1294
    %v1296 = vadd.f32 %v1292, %v1295
    %vm1297 = vweird.f32 %v1291
    %vm1298 = vweird.f32 %v1292
    %vm1299 = vmor %vm1297, %vm1298
    %v1300 = vsel %vm1299, %v1292, %v1296
    %v1301 = vand.u32 2147483647, %v1291
    %vm1302 = vcmp.eq.f32.partialorder %v1301, 8.507059e+37
    %v1303 = vand.u32 %v1291, 2147483648
    %v1304 = vor.u32 1.1754944e-38, %v1303
    %v1305 = vsel %vm1302, %v1304, %v1300
    %v1306 = vmul.f32 %v1281, %v1305
    %v1307 = vmin.f32 %v1306, 1.0
    %v1308 = vmax.f32 %v1307, -1.0
    %v1309 = vmul.f32 %v663, %v663
    %v1310 = vmin.f32 16.0, %v1309
    %v1311 = vmul.f32 %v1310, 2.1237322e-06
    %v1312 = vadd.f32 %v1311, 0.00028619796
    %v1313 = vmul.f32 %v1310, %v1312
    %v1314 = vadd.f32 %v1313, 0.0036580483
    %v1315 = vmul.f32 %v1310, %v1314
    %v1316 = vadd.f32 %v1315, 0.05243302
    %v1317 = vmul.f32 %v1310, %v1316
    %v1318 = vadd.f32 %v1317, 0.18741608
    %v1319 = vmul.f32 %v1310, %v1318
    %v1320 = vadd.f32 %v1319, 1.1283791
    %v1321 = vmul.f32 %v663, %v1320
    %v1322 = vmul.f32 %v1310, 3.8918573e-05
    %v1323 = vadd.f32 %v1322, 0.001143296
    %v1324 = vmul.f32 %v1310, %v1323
    %v1325 = vadd.f32 %v1324, 0.014752088
    %v1326 = vmul.f32 %v1310, %v1325
    %v1327 = vadd.f32 %v1326, 0.112945676
    %v1328 = vmul.f32 %v1310, %v1327
    %v1329 = vadd.f32 %v1328, 0.4994258
    %v1330 = vmul.f32 %v1310, %v1329
    %v1331 = vadd.f32 %v1330, 1.0
    %v1332 = vrcp.pop %v1331
    %v1333 = vmul.f32 %v1331, %v1332
    %v1334 = vsub.f32 1.0, %v1333
    %v1335 = vmul.f32 %v1332, %v1334
    %v1336 = vadd.f32 %v1332, %v1335
    %vm1337 = vweird.f32 %v1331
    %vm1338 = vweird.f32 %v1332
    %vm1339 = vmor %vm1337, %vm1338
    %v1340 = vsel %vm1339, %v1332, %v1336
    %v1341 = vand.u32 2147483647, %v1331
    %vm1342 = vcmp.eq.f32.partialorder %v1341, 8.507059e+37
    %v1343 = vand.u32 %v1331, 2147483648
    %v1344 = vor.u32 1.1754944e-38, %v1343
    %v1345 = vsel %vm1342, %v1344, %v1340
    %v1346 = vmul.f32 %v1321, %v1345
    %v1347 = vmin.f32 %v1346, 1.0
    %v1348 = vmax.f32 %v1347, -1.0
    %v1349 = vmul.f32 %v664, %v664
    %v1350 = vmin.f32 16.0, %v1349
    %v1351 = vmul.f32 %v1350, 2.1237322e-06
    %v1352 = vadd.f32 %v1351, 0.00028619796
    %v1353 = vmul.f32 %v1350, %v1352
    %v1354 = vadd.f32 %v1353, 0.0036580483
    %v1355 = vmul.f32 %v1350, %v1354
    %v1356 = vadd.f32 %v1355, 0.05243302
    %v1357 = vmul.f32 %v1350, %v1356
    %v1358 = vadd.f32 %v1357, 0.18741608
    %v1359 = vmul.f32 %v1350, %v1358
    %v1360 = vadd.f32 %v1359, 1.1283791
    %v1361 = vmul.f32 %v664, %v1360
    %v1362 = vmul.f32 %v1350, 3.8918573e-05
    %v1363 = vadd.f32 %v1362, 0.001143296
    %v1364 = vmul.f32 %v1350, %v1363
    %v1365 = vadd.f32 %v1364, 0.014752088
    %v1366 = vmul.f32 %v1350, %v1365
    %v1367 = vadd.f32 %v1366, 0.112945676
    %v1368 = vmul.f32 %v1350, %v1367
    %v1369 = vadd.f32 %v1368, 0.4994258
    %v1370 = vmul.f32 %v1350, %v1369
    %v1371 = vadd.f32 %v1370, 1.0
    %v1372 = vrcp.pop %v1371
    %v1373 = vmul.f32 %v1371, %v1372
    %v1374 = vsub.f32 1.0, %v1373
    %v1375 = vmul.f32 %v1372, %v1374
    %v1376 = vadd.f32 %v1372, %v1375
    %vm1377 = vweird.f32 %v1371
    %vm1378 = vweird.f32 %v1372
    %vm1379 = vmor %vm1377, %vm1378
    %v1380 = vsel %vm1379, %v1372, %v1376
    %v1381 = vand.u32 2147483647, %v1371
    %vm1382 = vcmp.eq.f32.partialorder %v1381, 8.507059e+37
    %v1383 = vand.u32 %v1371, 2147483648
    %v1384 = vor.u32 1.1754944e-38, %v1383
    %v1385 = vsel %vm1382, %v1384, %v1380
    %v1386 = vmul.f32 %v1361, %v1385
    %v1387 = vmin.f32 %v1386, 1.0
    %v1388 = vmax.f32 %v1387, -1.0
    %v1389 = vmul.f32 %v665, %v665
    %v1390 = vmin.f32 16.0, %v1389
    %v1391 = vmul.f32 %v1390, 2.1237322e-06
    %v1392 = vadd.f32 %v1391, 0.00028619796
    %v1393 = vmul.f32 %v1390, %v1392
    %v1394 = vadd.f32 %v1393, 0.0036580483
    %v1395 = vmul.f32 %v1390, %v1394
    %v1396 = vadd.f32 %v1395, 0.05243302
    %v1397 = vmul.f32 %v1390, %v1396
    %v1398 = vadd.f32 %v1397, 0.18741608
    %v1399 = vmul.f32 %v1390, %v1398
    %v1400 = vadd.f32 %v1399, 1.1283791
    %v1401 = vmul.f32 %v665, %v1400
    %v1402 = vmul.f32 %v1390, 3.8918573e-05
    %v1403 = vadd.f32 %v1402, 0.001143296
    %v1404 = vmul.f32 %v1390, %v1403
    %v1405 = vadd.f32 %v1404, 0.014752088
    %v1406 = vmul.f32 %v1390, %v1405
    %v1407 = vadd.f32 %v1406, 0.112945676
    %v1408 = vmul.f32 %v1390, %v1407
    %v1409 = vadd.f32 %v1408, 0.4994258
    %v1410 = vmul.f32 %v1390, %v1409
    %v1411 = vadd.f32 %v1410, 1.0
    %v1412 = vrcp.pop %v1411
    %v1413 = vmul.f32 %v1411, %v1412
    %v1414 = vsub.f32 1.0, %v1413
    %v1415 = vmul.f32 %v1412, %v1414
    %v1416 = vadd.f32 %v1412, %v1415
    %vm1417 = vweird.f32 %v1411
    %vm1418 = vweird.f32 %v1412
    %vm1419 = vmor %vm1417, %vm1418
    %v1420 = vsel %vm1419, %v1412, %v1416
    %v1421 = vand.u32 2147483647, %v1411
    %vm1422 = vcmp.eq.f32.partialorder %v1421, 8.507059e+37
    %v1423 = vand.u32 %v1411, 2147483648
    %v1424 = vor.u32 1.1754944e-38, %v1423
    %v1425 = vsel %vm1422, %v1424, %v1420
    %v1426 = vmul.f32 %v1401, %v1425
    %v1427 = vmin.f32 %v1426, 1.0
    %v1428 = vmax.f32 %v1427, -1.0
    %v1429 = vmul.f32 %v666, %v666
    %v1430 = vmin.f32 16.0, %v1429
    %v1431 = vmul.f32 %v1430, 2.1237322e-06
    %v1432 = vadd.f32 %v1431, 0.00028619796
    %v1433 = vmul.f32 %v1430, %v1432
    %v1434 = vadd.f32 %v1433, 0.0036580483
    %v1435 = vmul.f32 %v1430, %v1434
    %v1436 = vadd.f32 %v1435, 0.05243302
    %v1437 = vmul.f32 %v1430, %v1436
    %v1438 = vadd.f32 %v1437, 0.18741608
    %v1439 = vmul.f32 %v1430, %v1438
    %v1440 = vadd.f32 %v1439, 1.1283791
    %v1441 = vmul.f32 %v666, %v1440
    %v1442 = vmul.f32 %v1430, 3.8918573e-05
    %v1443 = vadd.f32 %v1442, 0.001143296
    %v1444 = vmul.f32 %v1430, %v1443
    %v1445 = vadd.f32 %v1444, 0.014752088
    %v1446 = vmul.f32 %v1430, %v1445
    %v1447 = vadd.f32 %v1446, 0.112945676
    %v1448 = vmul.f32 %v1430, %v1447
    %v1449 = vadd.f32 %v1448, 0.4994258
    %v1450 = vmul.f32 %v1430, %v1449
    %v1451 = vadd.f32 %v1450, 1.0
    %v1452 = vrcp.pop %v1451
    %v1453 = vmul.f32 %v1451, %v1452
    %v1454 = vsub.f32 1.0, %v1453
    %v1455 = vmul.f32 %v1452, %v1454
    %v1456 = vadd.f32 %v1452, %v1455
    %vm1457 = vweird.f32 %v1451
    %vm1458 = vweird.f32 %v1452
    %vm1459 = vmor %vm1457, %vm1458
    %v1460 = vsel %vm1459, %v1452, %v1456
    %v1461 = vand.u32 2147483647, %v1451
    %vm1462 = vcmp.eq.f32.partialorder %v1461, 8.507059e+37
    %v1463 = vand.u32 %v1451, 2147483648
    %v1464 = vor.u32 1.1754944e-38, %v1463
    %v1465 = vsel %vm1462, %v1464, %v1460
    %v1466 = vmul.f32 %v1441, %v1465
    %v1467 = vmin.f32 %v1466, 1.0
    %v1468 = vmax.f32 %v1467, -1.0
    %v1469 = vmul.f32 %v667, %v667
    %v1470 = vmin.f32 16.0, %v1469
    %v1471 = vmul.f32 %v1470, 2.1237322e-06
    %v1472 = vadd.f32 %v1471, 0.00028619796
    %v1473 = vmul.f32 %v1470, %v1472
    %v1474 = vadd.f32 %v1473, 0.0036580483
    %v1475 = vmul.f32 %v1470, %v1474
    %v1476 = vadd.f32 %v1475, 0.05243302
    %v1477 = vmul.f32 %v1470, %v1476
    %v1478 = vadd.f32 %v1477, 0.18741608
    %v1479 = vmul.f32 %v1470, %v1478
    %v1480 = vadd.f32 %v1479, 1.1283791
    %v1481 = vmul.f32 %v667, %v1480
    %v1482 = vmul.f32 %v1470, 3.8918573e-05
    %v1483 = vadd.f32 %v1482, 0.001143296
    %v1484 = vmul.f32 %v1470, %v1483
    %v1485 = vadd.f32 %v1484, 0.014752088
    %v1486 = vmul.f32 %v1470, %v1485
    %v1487 = vadd.f32 %v1486, 0.112945676
    %v1488 = vmul.f32 %v1470, %v1487
    %v1489 = vadd.f32 %v1488, 0.4994258
    %v1490 = vmul.f32 %v1470, %v1489
    %v1491 = vadd.f32 %v1490, 1.0
    %v1492 = vrcp.pop %v1491
    %v1493 = vmul.f32 %v1491, %v1492
    %v1494 = vsub.f32 1.0, %v1493
    %v1495 = vmul.f32 %v1492, %v1494
    %v1496 = vadd.f32 %v1492, %v1495
    %vm1497 = vweird.f32 %v1491
    %vm1498 = vweird.f32 %v1492
    %vm1499 = vmor %vm1497, %vm1498
    %v1500 = vsel %vm1499, %v1492, %v1496
    %v1501 = vand.u32 2147483647, %v1491
    %vm1502 = vcmp.eq.f32.partialorder %v1501, 8.507059e+37
    %v1503 = vand.u32 %v1491, 2147483648
    %v1504 = vor.u32 1.1754944e-38, %v1503
    %v1505 = vsel %vm1502, %v1504, %v1500
    %v1506 = vmul.f32 %v1481, %v1505
    %v1507 = vmin.f32 %v1506, 1.0
    %v1508 = vmax.f32 %v1507, -1.0
    %v1509 = vmul.f32 %v668, %v668
    %v1510 = vmin.f32 16.0, %v1509
    %v1511 = vmul.f32 %v1510, 2.1237322e-06
    %v1512 = vadd.f32 %v1511, 0.00028619796
    %v1513 = vmul.f32 %v1510, %v1512
    %v1514 = vadd.f32 %v1513, 0.0036580483
    %v1515 = vmul.f32 %v1510, %v1514
    %v1516 = vadd.f32 %v1515, 0.05243302
    %v1517 = vmul.f32 %v1510, %v1516
    %v1518 = vadd.f32 %v1517, 0.18741608
    %v1519 = vmul.f32 %v1510, %v1518
    %v1520 = vadd.f32 %v1519, 1.1283791
    %v1521 = vmul.f32 %v668, %v1520
    %v1522 = vmul.f32 %v1510, 3.8918573e-05
    %v1523 = vadd.f32 %v1522, 0.001143296
    %v1524 = vmul.f32 %v1510, %v1523
    %v1525 = vadd.f32 %v1524, 0.014752088
    %v1526 = vmul.f32 %v1510, %v1525
    %v1527 = vadd.f32 %v1526, 0.112945676
    %v1528 = vmul.f32 %v1510, %v1527
    %v1529 = vadd.f32 %v1528, 0.4994258
    %v1530 = vmul.f32 %v1510, %v1529
    %v1531 = vadd.f32 %v1530, 1.0
    %v1532 = vrcp.pop %v1531
    %v1533 = vmul.f32 %v1531, %v1532
    %v1534 = vsub.f32 1.0, %v1533
    %v1535 = vmul.f32 %v1532, %v1534
    %v1536 = vadd.f32 %v1532, %v1535
    %vm1537 = vweird.f32 %v1531
    %vm1538 = vweird.f32 %v1532
    %vm1539 = vmor %vm1537, %vm1538
    %v1540 = vsel %vm1539, %v1532, %v1536
    %v1541 = vand.u32 2147483647, %v1531
    %vm1542 = vcmp.eq.f32.partialorder %v1541, 8.507059e+37
    %v1543 = vand.u32 %v1531, 2147483648
    %v1544 = vor.u32 1.1754944e-38, %v1543
    %v1545 = vsel %vm1542, %v1544, %v1540
    %v1546 = vmul.f32 %v1521, %v1545
    %v1547 = vmin.f32 %v1546, 1.0
    %v1548 = vmax.f32 %v1547, -1.0
    %v1549 = vmul.f32 %v669, %v669
    %v1550 = vmin.f32 16.0, %v1549
    %v1551 = vmul.f32 %v1550, 2.1237322e-06
    %v1552 = vadd.f32 %v1551, 0.00028619796
    %v1553 = vmul.f32 %v1550, %v1552
    %v1554 = vadd.f32 %v1553, 0.0036580483
    %v1555 = vmul.f32 %v1550, %v1554
    %v1556 = vadd.f32 %v1555, 0.05243302
    %v1557 = vmul.f32 %v1550, %v1556
    %v1558 = vadd.f32 %v1557, 0.18741608
    %v1559 = vmul.f32 %v1550, %v1558
    %v1560 = vadd.f32 %v1559, 1.1283791
    %v1561 = vmul.f32 %v669, %v1560
    %v1562 = vmul.f32 %v1550, 3.8918573e-05
    %v1563 = vadd.f32 %v1562, 0.001143296
    %v1564 = vmul.f32 %v1550, %v1563
    %v1565 = vadd.f32 %v1564, 0.014752088
    %v1566 = vmul.f32 %v1550, %v1565
    %v1567 = vadd.f32 %v1566, 0.112945676
    %v1568 = vmul.f32 %v1550, %v1567
    %v1569 = vadd.f32 %v1568, 0.4994258
    %v1570 = vmul.f32 %v1550, %v1569
    %v1571 = vadd.f32 %v1570, 1.0
    %v1572 = vrcp.pop %v1571
    %v1573 = vmul.f32 %v1571, %v1572
    %v1574 = vsub.f32 1.0, %v1573
    %v1575 = vmul.f32 %v1572, %v1574
    %v1576 = vadd.f32 %v1572, %v1575
    %vm1577 = vweird.f32 %v1571
    %vm1578 = vweird.f32 %v1572
    %vm1579 = vmor %vm1577, %vm1578
    %v1580 = vsel %vm1579, %v1572, %v1576
    %v1581 = vand.u32 2147483647, %v1571
    %vm1582 = vcmp.eq.f32.partialorder %v1581, 8.507059e+37
    %v1583 = vand.u32 %v1571, 2147483648
    %v1584 = vor.u32 1.1754944e-38, %v1583
    %v1585 = vsel %vm1582, %v1584, %v1580
    %v1586 = vmul.f32 %v1561, %v1585
    %v1587 = vmin.f32 %v1586, 1.0
    %v1588 = vmax.f32 %v1587, -1.0
    %v1589 = vmul.f32 %v670, %v670
    %v1590 = vmin.f32 16.0, %v1589
    %v1591 = vmul.f32 %v1590, 2.1237322e-06
    %v1592 = vadd.f32 %v1591, 0.00028619796
    %v1593 = vmul.f32 %v1590, %v1592
    %v1594 = vadd.f32 %v1593, 0.0036580483
    %v1595 = vmul.f32 %v1590, %v1594
    %v1596 = vadd.f32 %v1595, 0.05243302
    %v1597 = vmul.f32 %v1590, %v1596
    %v1598 = vadd.f32 %v1597, 0.18741608
    %v1599 = vmul.f32 %v1590, %v1598
    %v1600 = vadd.f32 %v1599, 1.1283791
    %v1601 = vmul.f32 %v670, %v1600
    %v1602 = vmul.f32 %v1590, 3.8918573e-05
    %v1603 = vadd.f32 %v1602, 0.001143296
    %v1604 = vmul.f32 %v1590, %v1603
    %v1605 = vadd.f32 %v1604, 0.014752088
    %v1606 = vmul.f32 %v1590, %v1605
    %v1607 = vadd.f32 %v1606, 0.112945676
    %v1608 = vmul.f32 %v1590, %v1607
    %v1609 = vadd.f32 %v1608, 0.4994258
    %v1610 = vmul.f32 %v1590, %v1609
    %v1611 = vadd.f32 %v1610, 1.0
    %v1612 = vrcp.pop %v1611
    %v1613 = vmul.f32 %v1611, %v1612
    %v1614 = vsub.f32 1.0, %v1613
    %v1615 = vmul.f32 %v1612, %v1614
    %v1616 = vadd.f32 %v1612, %v1615
    %vm1617 = vweird.f32 %v1611
    %vm1618 = vweird.f32 %v1612
    %vm1619 = vmor %vm1617, %vm1618
    %v1620 = vsel %vm1619, %v1612, %v1616
    %v1621 = vand.u32 2147483647, %v1611
    %vm1622 = vcmp.eq.f32.partialorder %v1621, 8.507059e+37
    %v1623 = vand.u32 %v1611, 2147483648
    %v1624 = vor.u32 1.1754944e-38, %v1623
    %v1625 = vsel %vm1622, %v1624, %v1620
    %v1626 = vmul.f32 %v1601, %v1625
    %v1627 = vmin.f32 %v1626, 1.0
    %v1628 = vmax.f32 %v1627, -1.0
    %v1629 = vmul.f32 %v671, %v671
    %v1630 = vmin.f32 16.0, %v1629
    %v1631 = vmul.f32 %v1630, 2.1237322e-06
    %v1632 = vadd.f32 %v1631, 0.00028619796
    %v1633 = vmul.f32 %v1630, %v1632
    %v1634 = vadd.f32 %v1633, 0.0036580483
    %v1635 = vmul.f32 %v1630, %v1634
    %v1636 = vadd.f32 %v1635, 0.05243302
    %v1637 = vmul.f32 %v1630, %v1636
    %v1638 = vadd.f32 %v1637, 0.18741608
    %v1639 = vmul.f32 %v1630, %v1638
    %v1640 = vadd.f32 %v1639, 1.1283791
    %v1641 = vmul.f32 %v671, %v1640
    %v1642 = vmul.f32 %v1630, 3.8918573e-05
    %v1643 = vadd.f32 %v1642, 0.001143296
    %v1644 = vmul.f32 %v1630, %v1643
    %v1645 = vadd.f32 %v1644, 0.014752088
    %v1646 = vmul.f32 %v1630, %v1645
    %v1647 = vadd.f32 %v1646, 0.112945676
    %v1648 = vmul.f32 %v1630, %v1647
    %v1649 = vadd.f32 %v1648, 0.4994258
    %v1650 = vmul.f32 %v1630, %v1649
    %v1651 = vadd.f32 %v1650, 1.0
    %v1652 = vrcp.pop %v1651
    %v1653 = vmul.f32 %v1651, %v1652
    %v1654 = vsub.f32 1.0, %v1653
    %v1655 = vmul.f32 %v1652, %v1654
    %v1656 = vadd.f32 %v1652, %v1655
    %vm1657 = vweird.f32 %v1651
    %vm1658 = vweird.f32 %v1652
    %vm1659 = vmor %vm1657, %vm1658
    %v1660 = vsel %vm1659, %v1652, %v1656
    %v1661 = vand.u32 2147483647, %v1651
    %vm1662 = vcmp.eq.f32.partialorder %v1661, 8.507059e+37
    %v1663 = vand.u32 %v1651, 2147483648
    %v1664 = vor.u32 1.1754944e-38, %v1663
    %v1665 = vsel %vm1662, %v1664, %v1660
    %v1666 = vmul.f32 %v1641, %v1665
    %v1667 = vmin.f32 %v1666, 1.0
    %v1668 = vmax.f32 %v1667, -1.0
    %v1669 = vmul.f32 %v672, %v672
    %v1670 = vmin.f32 16.0, %v1669
    %v1671 = vmul.f32 %v1670, 2.1237322e-06
    %v1672 = vadd.f32 %v1671, 0.00028619796
    %v1673 = vmul.f32 %v1670, %v1672
    %v1674 = vadd.f32 %v1673, 0.0036580483
    %v1675 = vmul.f32 %v1670, %v1674
    %v1676 = vadd.f32 %v1675, 0.05243302
    %v1677 = vmul.f32 %v1670, %v1676
    %v1678 = vadd.f32 %v1677, 0.18741608
    %v1679 = vmul.f32 %v1670, %v1678
    %v1680 = vadd.f32 %v1679, 1.1283791
    %v1681 = vmul.f32 %v672, %v1680
    %v1682 = vmul.f32 %v1670, 3.8918573e-05
    %v1683 = vadd.f32 %v1682, 0.001143296
    %v1684 = vmul.f32 %v1670, %v1683
    %v1685 = vadd.f32 %v1684, 0.014752088
    %v1686 = vmul.f32 %v1670, %v1685
    %v1687 = vadd.f32 %v1686, 0.112945676
    %v1688 = vmul.f32 %v1670, %v1687
    %v1689 = vadd.f32 %v1688, 0.4994258
    %v1690 = vmul.f32 %v1670, %v1689
    %v1691 = vadd.f32 %v1690, 1.0
    %v1692 = vrcp.pop %v1691
    %v1693 = vmul.f32 %v1691, %v1692
    %v1694 = vsub.f32 1.0, %v1693
    %v1695 = vmul.f32 %v1692, %v1694
    %v1696 = vadd.f32 %v1692, %v1695
    %vm1697 = vweird.f32 %v1691
    %vm1698 = vweird.f32 %v1692
    %vm1699 = vmor %vm1697, %vm1698
    %v1700 = vsel %vm1699, %v1692, %v1696
    %v1701 = vand.u32 2147483647, %v1691
    %vm1702 = vcmp.eq.f32.partialorder %v1701, 8.507059e+37
    %v1703 = vand.u32 %v1691, 2147483648
    %v1704 = vor.u32 1.1754944e-38, %v1703
    %v1705 = vsel %vm1702, %v1704, %v1700
    %v1706 = vmul.f32 %v1681, %v1705
    %v1707 = vmin.f32 %v1706, 1.0
    %v1708 = vmax.f32 %v1707, -1.0
    %v1709 = vmul.f32 %v673, %v673
    %v1710 = vmin.f32 16.0, %v1709
    %v1711 = vmul.f32 %v1710, 2.1237322e-06
    %v1712 = vadd.f32 %v1711, 0.00028619796
    %v1713 = vmul.f32 %v1710, %v1712
    %v1714 = vadd.f32 %v1713, 0.0036580483
    %v1715 = vmul.f32 %v1710, %v1714
    %v1716 = vadd.f32 %v1715, 0.05243302
    %v1717 = vmul.f32 %v1710, %v1716
    %v1718 = vadd.f32 %v1717, 0.18741608
    %v1719 = vmul.f32 %v1710, %v1718
    %v1720 = vadd.f32 %v1719, 1.1283791
    %v1721 = vmul.f32 %v673, %v1720
    %v1722 = vmul.f32 %v1710, 3.8918573e-05
    %v1723 = vadd.f32 %v1722, 0.001143296
    %v1724 = vmul.f32 %v1710, %v1723
    %v1725 = vadd.f32 %v1724, 0.014752088
    %v1726 = vmul.f32 %v1710, %v1725
    %v1727 = vadd.f32 %v1726, 0.112945676
    %v1728 = vmul.f32 %v1710, %v1727
    %v1729 = vadd.f32 %v1728, 0.4994258
    %v1730 = vmul.f32 %v1710, %v1729
    %v1731 = vadd.f32 %v1730, 1.0
    %v1732 = vrcp.pop %v1731
    %v1733 = vmul.f32 %v1731, %v1732
    %v1734 = vsub.f32 1.0, %v1733
    %v1735 = vmul.f32 %v1732, %v1734
    %v1736 = vadd.f32 %v1732, %v1735
    %vm1737 = vweird.f32 %v1731
    %vm1738 = vweird.f32 %v1732
    %vm1739 = vmor %vm1737, %vm1738
    %v1740 = vsel %vm1739, %v1732, %v1736
    %v1741 = vand.u32 2147483647, %v1731
    %vm1742 = vcmp.eq.f32.partialorder %v1741, 8.507059e+37
    %v1743 = vand.u32 %v1731, 2147483648
    %v1744 = vor.u32 1.1754944e-38, %v1743
    %v1745 = vsel %vm1742, %v1744, %v1740
    %v1746 = vmul.f32 %v1721, %v1745
    %v1747 = vmin.f32 %v1746, 1.0
    %v1748 = vmax.f32 %v1747, -1.0
    %v1749 = vmul.f32 %v674, %v674
    %v1750 = vmin.f32 16.0, %v1749
    %v1751 = vmul.f32 %v1750, 2.1237322e-06
    %v1752 = vadd.f32 %v1751, 0.00028619796
    %v1753 = vmul.f32 %v1750, %v1752
    %v1754 = vadd.f32 %v1753, 0.0036580483
    %v1755 = vmul.f32 %v1750, %v1754
    %v1756 = vadd.f32 %v1755, 0.05243302
    %v1757 = vmul.f32 %v1750, %v1756
    %v1758 = vadd.f32 %v1757, 0.18741608
    %v1759 = vmul.f32 %v1750, %v1758
    %v1760 = vadd.f32 %v1759, 1.1283791
    %v1761 = vmul.f32 %v674, %v1760
    %v1762 = vmul.f32 %v1750, 3.8918573e-05
    %v1763 = vadd.f32 %v1762, 0.001143296
    %v1764 = vmul.f32 %v1750, %v1763
    %v1765 = vadd.f32 %v1764, 0.014752088
    %v1766 = vmul.f32 %v1750, %v1765
    %v1767 = vadd.f32 %v1766, 0.112945676
    %v1768 = vmul.f32 %v1750, %v1767
    %v1769 = vadd.f32 %v1768, 0.4994258
    %v1770 = vmul.f32 %v1750, %v1769
    %v1771 = vadd.f32 %v1770, 1.0
    %v1772 = vrcp.pop %v1771
    %v1773 = vmul.f32 %v1771, %v1772
    %v1774 = vsub.f32 1.0, %v1773
    %v1775 = vmul.f32 %v1772, %v1774
    %v1776 = vadd.f32 %v1772, %v1775
    %vm1777 = vweird.f32 %v1771
    %vm1778 = vweird.f32 %v1772
    %vm1779 = vmor %vm1777, %vm1778
    %v1780 = vsel %vm1779, %v1772, %v1776
    %v1781 = vand.u32 2147483647, %v1771
    %vm1782 = vcmp.eq.f32.partialorder %v1781, 8.507059e+37
    %v1783 = vand.u32 %v1771, 2147483648
    %v1784 = vor.u32 1.1754944e-38, %v1783
    %v1785 = vsel %vm1782, %v1784, %v1780
    %v1786 = vmul.f32 %v1761, %v1785
    %v1787 = vmin.f32 %v1786, 1.0
    %v1788 = vmax.f32 %v1787, -1.0
    %v1789 = vmul.f32 %v675, %v675
    %v1790 = vmin.f32 16.0, %v1789
    %v1791 = vmul.f32 %v1790, 2.1237322e-06
    %v1792 = vadd.f32 %v1791, 0.00028619796
    %v1793 = vmul.f32 %v1790, %v1792
    %v1794 = vadd.f32 %v1793, 0.0036580483
    %v1795 = vmul.f32 %v1790, %v1794
    %v1796 = vadd.f32 %v1795, 0.05243302
    %v1797 = vmul.f32 %v1790, %v1796
    %v1798 = vadd.f32 %v1797, 0.18741608
    %v1799 = vmul.f32 %v1790, %v1798
    %v1800 = vadd.f32 %v1799, 1.1283791
    %v1801 = vmul.f32 %v675, %v1800
    %v1802 = vmul.f32 %v1790, 3.8918573e-05
    %v1803 = vadd.f32 %v1802, 0.001143296
    %v1804 = vmul.f32 %v1790, %v1803
    %v1805 = vadd.f32 %v1804, 0.014752088
    %v1806 = vmul.f32 %v1790, %v1805
    %v1807 = vadd.f32 %v1806, 0.112945676
    %v1808 = vmul.f32 %v1790, %v1807
    %v1809 = vadd.f32 %v1808, 0.4994258
    %v1810 = vmul.f32 %v1790, %v1809
    %v1811 = vadd.f32 %v1810, 1.0
    %v1812 = vrcp.pop %v1811
    %v1813 = vmul.f32 %v1811, %v1812
    %v1814 = vsub.f32 1.0, %v1813
    %v1815 = vmul.f32 %v1812, %v1814
    %v1816 = vadd.f32 %v1812, %v1815
    %vm1817 = vweird.f32 %v1811
    %vm1818 = vweird.f32 %v1812
    %vm1819 = vmor %vm1817, %vm1818
    %v1820 = vsel %vm1819, %v1812, %v1816
    %v1821 = vand.u32 2147483647, %v1811
    %vm1822 = vcmp.eq.f32.partialorder %v1821, 8.507059e+37
    %v1823 = vand.u32 %v1811, 2147483648
    %v1824 = vor.u32 1.1754944e-38, %v1823
    %v1825 = vsel %vm1822, %v1824, %v1820
    %v1826 = vmul.f32 %v1801, %v1825
    %v1827 = vmin.f32 %v1826, 1.0
    %v1828 = vmax.f32 %v1827, -1.0
    %v1829 = vmul.f32 %v676, %v676
    %v1830 = vmin.f32 16.0, %v1829
    %v1831 = vmul.f32 %v1830, 2.1237322e-06
    %v1832 = vadd.f32 %v1831, 0.00028619796
    %v1833 = vmul.f32 %v1830, %v1832
    %v1834 = vadd.f32 %v1833, 0.0036580483
    %v1835 = vmul.f32 %v1830, %v1834
    %v1836 = vadd.f32 %v1835, 0.05243302
    %v1837 = vmul.f32 %v1830, %v1836
    %v1838 = vadd.f32 %v1837, 0.18741608
    %v1839 = vmul.f32 %v1830, %v1838
    %v1840 = vadd.f32 %v1839, 1.1283791
    %v1841 = vmul.f32 %v676, %v1840
    %v1842 = vmul.f32 %v1830, 3.8918573e-05
    %v1843 = vadd.f32 %v1842, 0.001143296
    %v1844 = vmul.f32 %v1830, %v1843
    %v1845 = vadd.f32 %v1844, 0.014752088
    %v1846 = vmul.f32 %v1830, %v1845
    %v1847 = vadd.f32 %v1846, 0.112945676
    %v1848 = vmul.f32 %v1830, %v1847
    %v1849 = vadd.f32 %v1848, 0.4994258
    %v1850 = vmul.f32 %v1830, %v1849
    %v1851 = vadd.f32 %v1850, 1.0
    %v1852 = vrcp.pop %v1851
    %v1853 = vmul.f32 %v1851, %v1852
    %v1854 = vsub.f32 1.0, %v1853
    %v1855 = vmul.f32 %v1852, %v1854
    %v1856 = vadd.f32 %v1852, %v1855
    %vm1857 = vweird.f32 %v1851
    %vm1858 = vweird.f32 %v1852
    %vm1859 = vmor %vm1857, %vm1858
    %v1860 = vsel %vm1859, %v1852, %v1856
    %v1861 = vand.u32 2147483647, %v1851
    %vm1862 = vcmp.eq.f32.partialorder %v1861, 8.507059e+37
    %v1863 = vand.u32 %v1851, 2147483648
    %v1864 = vor.u32 1.1754944e-38, %v1863
    %v1865 = vsel %vm1862, %v1864, %v1860
    %v1866 = vmul.f32 %v1841, %v1865
    %v1867 = vmin.f32 %v1866, 1.0
    %v1868 = vmax.f32 %v1867, -1.0
    %v1869 = vmul.f32 %v677, %v677
    %v1870 = vmin.f32 16.0, %v1869
    %v1871 = vmul.f32 %v1870, 2.1237322e-06
    %v1872 = vadd.f32 %v1871, 0.00028619796
    %v1873 = vmul.f32 %v1870, %v1872
    %v1874 = vadd.f32 %v1873, 0.0036580483
    %v1875 = vmul.f32 %v1870, %v1874
    %v1876 = vadd.f32 %v1875, 0.05243302
    %v1877 = vmul.f32 %v1870, %v1876
    %v1878 = vadd.f32 %v1877, 0.18741608
    %v1879 = vmul.f32 %v1870, %v1878
    %v1880 = vadd.f32 %v1879, 1.1283791
    %v1881 = vmul.f32 %v677, %v1880
    %v1882 = vmul.f32 %v1870, 3.8918573e-05
    %v1883 = vadd.f32 %v1882, 0.001143296
    %v1884 = vmul.f32 %v1870, %v1883
    %v1885 = vadd.f32 %v1884, 0.014752088
    %v1886 = vmul.f32 %v1870, %v1885
    %v1887 = vadd.f32 %v1886, 0.112945676
    %v1888 = vmul.f32 %v1870, %v1887
    %v1889 = vadd.f32 %v1888, 0.4994258
    %v1890 = vmul.f32 %v1870, %v1889
    %v1891 = vadd.f32 %v1890, 1.0
    %v1892 = vrcp.pop %v1891
    %v1893 = vmul.f32 %v1891, %v1892
    %v1894 = vsub.f32 1.0, %v1893
    %v1895 = vmul.f32 %v1892, %v1894
    %v1896 = vadd.f32 %v1892, %v1895
    %vm1897 = vweird.f32 %v1891
    %vm1898 = vweird.f32 %v1892
    %vm1899 = vmor %vm1897, %vm1898
    %v1900 = vsel %vm1899, %v1892, %v1896
    %v1901 = vand.u32 2147483647, %v1891
    %vm1902 = vcmp.eq.f32.partialorder %v1901, 8.507059e+37
    %v1903 = vand.u32 %v1891, 2147483648
    %v1904 = vor.u32 1.1754944e-38, %v1903
    %v1905 = vsel %vm1902, %v1904, %v1900
    %v1906 = vmul.f32 %v1881, %v1905
    %v1907 = vmin.f32 %v1906, 1.0
    %v1908 = vmax.f32 %v1907, -1.0
    %v1909 = vmul.f32 %v678, %v678
    %v1910 = vmin.f32 16.0, %v1909
    %v1911 = vmul.f32 %v1910, 2.1237322e-06
    %v1912 = vadd.f32 %v1911, 0.00028619796
    %v1913 = vmul.f32 %v1910, %v1912
    %v1914 = vadd.f32 %v1913, 0.0036580483
    %v1915 = vmul.f32 %v1910, %v1914
    %v1916 = vadd.f32 %v1915, 0.05243302
    %v1917 = vmul.f32 %v1910, %v1916
    %v1918 = vadd.f32 %v1917, 0.18741608
    %v1919 = vmul.f32 %v1910, %v1918
    %v1920 = vadd.f32 %v1919, 1.1283791
    %v1921 = vmul.f32 %v678, %v1920
    %v1922 = vmul.f32 %v1910, 3.8918573e-05
    %v1923 = vadd.f32 %v1922, 0.001143296
    %v1924 = vmul.f32 %v1910, %v1923
    %v1925 = vadd.f32 %v1924, 0.014752088
    %v1926 = vmul.f32 %v1910, %v1925
    %v1927 = vadd.f32 %v1926, 0.112945676
    %v1928 = vmul.f32 %v1910, %v1927
    %v1929 = vadd.f32 %v1928, 0.4994258
    %v1930 = vmul.f32 %v1910, %v1929
    %v1931 = vadd.f32 %v1930, 1.0
    %v1932 = vrcp.pop %v1931
    %v1933 = vmul.f32 %v1931, %v1932
    %v1934 = vsub.f32 1.0, %v1933
    %v1935 = vmul.f32 %v1932, %v1934
    %v1936 = vadd.f32 %v1932, %v1935
    %vm1937 = vweird.f32 %v1931
    %vm1938 = vweird.f32 %v1932
    %vm1939 = vmor %vm1937, %vm1938
    %v1940 = vsel %vm1939, %v1932, %v1936
    %v1941 = vand.u32 2147483647, %v1931
    %vm1942 = vcmp.eq.f32.partialorder %v1941, 8.507059e+37
    %v1943 = vand.u32 %v1931, 2147483648
    %v1944 = vor.u32 1.1754944e-38, %v1943
    %v1945 = vsel %vm1942, %v1944, %v1940
    %v1946 = vmul.f32 %v1921, %v1945
    %v1947 = vmin.f32 %v1946, 1.0
    %v1948 = vmax.f32 %v1947, -1.0
    %v1949 = vmul.f32 %v679, %v679
    %v1950 = vmin.f32 16.0, %v1949
    %v1951 = vmul.f32 %v1950, 2.1237322e-06
    %v1952 = vadd.f32 %v1951, 0.00028619796
    %v1953 = vmul.f32 %v1950, %v1952
    %v1954 = vadd.f32 %v1953, 0.0036580483
    %v1955 = vmul.f32 %v1950, %v1954
    %v1956 = vadd.f32 %v1955, 0.05243302
    %v1957 = vmul.f32 %v1950, %v1956
    %v1958 = vadd.f32 %v1957, 0.18741608
    %v1959 = vmul.f32 %v1950, %v1958
    %v1960 = vadd.f32 %v1959, 1.1283791
    %v1961 = vmul.f32 %v679, %v1960
    %v1962 = vmul.f32 %v1950, 3.8918573e-05
    %v1963 = vadd.f32 %v1962, 0.001143296
    %v1964 = vmul.f32 %v1950, %v1963
    %v1965 = vadd.f32 %v1964, 0.014752088
    %v1966 = vmul.f32 %v1950, %v1965
    %v1967 = vadd.f32 %v1966, 0.112945676
    %v1968 = vmul.f32 %v1950, %v1967
    %v1969 = vadd.f32 %v1968, 0.4994258
    %v1970 = vmul.f32 %v1950, %v1969
    %v1971 = vadd.f32 %v1970, 1.0
    %v1972 = vrcp.pop %v1971
    %v1973 = vmul.f32 %v1971, %v1972
    %v1974 = vsub.f32 1.0, %v1973
    %v1975 = vmul.f32 %v1972, %v1974
    %v1976 = vadd.f32 %v1972, %v1975
    %vm1977 = vweird.f32 %v1971
    %vm1978 = vweird.f32 %v1972
    %vm1979 = vmor %vm1977, %vm1978
    %v1980 = vsel %vm1979, %v1972, %v1976
    %v1981 = vand.u32 2147483647, %v1971
    %vm1982 = vcmp.eq.f32.partialorder %v1981, 8.507059e+37
    %v1983 = vand.u32 %v1971, 2147483648
    %v1984 = vor.u32 1.1754944e-38, %v1983
    %v1985 = vsel %vm1982, %v1984, %v1980
    %v1986 = vmul.f32 %v1961, %v1985
    %v1987 = vmin.f32 %v1986, 1.0
    %v1988 = vmax.f32 %v1987, -1.0
    %v1989 = vmul.f32 %v680, %v680
    %v1990 = vmin.f32 16.0, %v1989
    %v1991 = vmul.f32 %v1990, 2.1237322e-06
    %v1992 = vadd.f32 %v1991, 0.00028619796
    %v1993 = vmul.f32 %v1990, %v1992
    %v1994 = vadd.f32 %v1993, 0.0036580483
    %v1995 = vmul.f32 %v1990, %v1994
    %v1996 = vadd.f32 %v1995, 0.05243302
    %v1997 = vmul.f32 %v1990, %v1996
    %v1998 = vadd.f32 %v1997, 0.18741608
    %v1999 = vmul.f32 %v1990, %v1998
    %v2000 = vadd.f32 %v1999, 1.1283791
    %v2001 = vmul.f32 %v680, %v2000
    %v2002 = vmul.f32 %v1990, 3.8918573e-05
    %v2003 = vadd.f32 %v2002, 0.001143296
    %v2004 = vmul.f32 %v1990, %v2003
    %v2005 = vadd.f32 %v2004, 0.014752088
    %v2006 = vmul.f32 %v1990, %v2005
    %v2007 = vadd.f32 %v2006, 0.112945676
    %v2008 = vmul.f32 %v1990, %v2007
    %v2009 = vadd.f32 %v2008, 0.4994258
    %v2010 = vmul.f32 %v1990, %v2009
    %v2011 = vadd.f32 %v2010, 1.0
    %v2012 = vrcp.pop %v2011
    %v2013 = vmul.f32 %v2011, %v2012
    %v2014 = vsub.f32 1.0, %v2013
    %v2015 = vmul.f32 %v2012, %v2014
    %v2016 = vadd.f32 %v2012, %v2015
    %vm2017 = vweird.f32 %v2011
    %vm2018 = vweird.f32 %v2012
    %vm2019 = vmor %vm2017, %vm2018
    %v2020 = vsel %vm2019, %v2012, %v2016
    %v2021 = vand.u32 2147483647, %v2011
    %vm2022 = vcmp.eq.f32.partialorder %v2021, 8.507059e+37
    %v2023 = vand.u32 %v2011, 2147483648
    %v2024 = vor.u32 1.1754944e-38, %v2023
    %v2025 = vsel %vm2022, %v2024, %v2020
    %v2026 = vmul.f32 %v2001, %v2025
    %v2027 = vmin.f32 %v2026, 1.0
    %v2028 = vmax.f32 %v2027, -1.0
    %v2029 = vmul.f32 %v681, %v681
    %v2030 = vmin.f32 16.0, %v2029
    %v2031 = vmul.f32 %v2030, 2.1237322e-06
    %v2032 = vadd.f32 %v2031, 0.00028619796
    %v2033 = vmul.f32 %v2030, %v2032
    %v2034 = vadd.f32 %v2033, 0.0036580483
    %v2035 = vmul.f32 %v2030, %v2034
    %v2036 = vadd.f32 %v2035, 0.05243302
    %v2037 = vmul.f32 %v2030, %v2036
    %v2038 = vadd.f32 %v2037, 0.18741608
    %v2039 = vmul.f32 %v2030, %v2038
    %v2040 = vadd.f32 %v2039, 1.1283791
    %v2041 = vmul.f32 %v681, %v2040
    %v2042 = vmul.f32 %v2030, 3.8918573e-05
    %v2043 = vadd.f32 %v2042, 0.001143296
    %v2044 = vmul.f32 %v2030, %v2043
    %v2045 = vadd.f32 %v2044, 0.014752088
    %v2046 = vmul.f32 %v2030, %v2045
    %v2047 = vadd.f32 %v2046, 0.112945676
    %v2048 = vmul.f32 %v2030, %v2047
    %v2049 = vadd.f32 %v2048, 0.4994258
    %v2050 = vmul.f32 %v2030, %v2049
    %v2051 = vadd.f32 %v2050, 1.0
    %v2052 = vrcp.pop %v2051
    %v2053 = vmul.f32 %v2051, %v2052
    %v2054 = vsub.f32 1.0, %v2053
    %v2055 = vmul.f32 %v2052, %v2054
    %v2056 = vadd.f32 %v2052, %v2055
    %vm2057 = vweird.f32 %v2051
    %vm2058 = vweird.f32 %v2052
    %vm2059 = vmor %vm2057, %vm2058
    %v2060 = vsel %vm2059, %v2052, %v2056
    %v2061 = vand.u32 2147483647, %v2051
    %vm2062 = vcmp.eq.f32.partialorder %v2061, 8.507059e+37
    %v2063 = vand.u32 %v2051, 2147483648
    %v2064 = vor.u32 1.1754944e-38, %v2063
    %v2065 = vsel %vm2062, %v2064, %v2060
    %v2066 = vmul.f32 %v2041, %v2065
    %v2067 = vmin.f32 %v2066, 1.0
    %v2068 = vmax.f32 %v2067, -1.0
    %v2069 = vmul.f32 %v682, %v682
    %v2070 = vmin.f32 16.0, %v2069
    %v2071 = vmul.f32 %v2070, 2.1237322e-06
    %v2072 = vadd.f32 %v2071, 0.00028619796
    %v2073 = vmul.f32 %v2070, %v2072
    %v2074 = vadd.f32 %v2073, 0.0036580483
    %v2075 = vmul.f32 %v2070, %v2074
    %v2076 = vadd.f32 %v2075, 0.05243302
    %v2077 = vmul.f32 %v2070, %v2076
    %v2078 = vadd.f32 %v2077, 0.18741608
    %v2079 = vmul.f32 %v2070, %v2078
    %v2080 = vadd.f32 %v2079, 1.1283791
    %v2081 = vmul.f32 %v682, %v2080
    %v2082 = vmul.f32 %v2070, 3.8918573e-05
    %v2083 = vadd.f32 %v2082, 0.001143296
    %v2084 = vmul.f32 %v2070, %v2083
    %v2085 = vadd.f32 %v2084, 0.014752088
    %v2086 = vmul.f32 %v2070, %v2085
    %v2087 = vadd.f32 %v2086, 0.112945676
    %v2088 = vmul.f32 %v2070, %v2087
    %v2089 = vadd.f32 %v2088, 0.4994258
    %v2090 = vmul.f32 %v2070, %v2089
    %v2091 = vadd.f32 %v2090, 1.0
    %v2092 = vrcp.pop %v2091
    %v2093 = vmul.f32 %v2091, %v2092
    %v2094 = vsub.f32 1.0, %v2093
    %v2095 = vmul.f32 %v2092, %v2094
    %v2096 = vadd.f32 %v2092, %v2095
    %vm2097 = vweird.f32 %v2091
    %vm2098 = vweird.f32 %v2092
    %vm2099 = vmor %vm2097, %vm2098
    %v2100 = vsel %vm2099, %v2092, %v2096
    %v2101 = vand.u32 2147483647, %v2091
    %vm2102 = vcmp.eq.f32.partialorder %v2101, 8.507059e+37
    %v2103 = vand.u32 %v2091, 2147483648
    %v2104 = vor.u32 1.1754944e-38, %v2103
    %v2105 = vsel %vm2102, %v2104, %v2100
    %v2106 = vmul.f32 %v2081, %v2105
    %v2107 = vmin.f32 %v2106, 1.0
    %v2108 = vmax.f32 %v2107, -1.0
    %v2109 = vmul.f32 %v683, %v683
    %v2110 = vmin.f32 16.0, %v2109
    %v2111 = vmul.f32 %v2110, 2.1237322e-06
    %v2112 = vadd.f32 %v2111, 0.00028619796
    %v2113 = vmul.f32 %v2110, %v2112
    %v2114 = vadd.f32 %v2113, 0.0036580483
    %v2115 = vmul.f32 %v2110, %v2114
    %v2116 = vadd.f32 %v2115, 0.05243302
    %v2117 = vmul.f32 %v2110, %v2116
    %v2118 = vadd.f32 %v2117, 0.18741608
    %v2119 = vmul.f32 %v2110, %v2118
    %v2120 = vadd.f32 %v2119, 1.1283791
    %v2121 = vmul.f32 %v683, %v2120
    %v2122 = vmul.f32 %v2110, 3.8918573e-05
    %v2123 = vadd.f32 %v2122, 0.001143296
    %v2124 = vmul.f32 %v2110, %v2123
    %v2125 = vadd.f32 %v2124, 0.014752088
    %v2126 = vmul.f32 %v2110, %v2125
    %v2127 = vadd.f32 %v2126, 0.112945676
    %v2128 = vmul.f32 %v2110, %v2127
    %v2129 = vadd.f32 %v2128, 0.4994258
    %v2130 = vmul.f32 %v2110, %v2129
    %v2131 = vadd.f32 %v2130, 1.0
    %v2132 = vrcp.pop %v2131
    %v2133 = vmul.f32 %v2131, %v2132
    %v2134 = vsub.f32 1.0, %v2133
    %v2135 = vmul.f32 %v2132, %v2134
    %v2136 = vadd.f32 %v2132, %v2135
    %vm2137 = vweird.f32 %v2131
    %vm2138 = vweird.f32 %v2132
    %vm2139 = vmor %vm2137, %vm2138
    %v2140 = vsel %vm2139, %v2132, %v2136
    %v2141 = vand.u32 2147483647, %v2131
    %vm2142 = vcmp.eq.f32.partialorder %v2141, 8.507059e+37
    %v2143 = vand.u32 %v2131, 2147483648
    %v2144 = vor.u32 1.1754944e-38, %v2143
    %v2145 = vsel %vm2142, %v2144, %v2140
    %v2146 = vmul.f32 %v2121, %v2145
    %v2147 = vmin.f32 %v2146, 1.0
    %v2148 = vmax.f32 %v2147, -1.0
    %v2149 = vmul.f32 %v684, %v684
    %v2150 = vmin.f32 16.0, %v2149
    %v2151 = vmul.f32 %v2150, 2.1237322e-06
    %v2152 = vadd.f32 %v2151, 0.00028619796
    %v2153 = vmul.f32 %v2150, %v2152
    %v2154 = vadd.f32 %v2153, 0.0036580483
    %v2155 = vmul.f32 %v2150, %v2154
    %v2156 = vadd.f32 %v2155, 0.05243302
    %v2157 = vmul.f32 %v2150, %v2156
    %v2158 = vadd.f32 %v2157, 0.18741608
    %v2159 = vmul.f32 %v2150, %v2158
    %v2160 = vadd.f32 %v2159, 1.1283791
    %v2161 = vmul.f32 %v684, %v2160
    %v2162 = vmul.f32 %v2150, 3.8918573e-05
    %v2163 = vadd.f32 %v2162, 0.001143296
    %v2164 = vmul.f32 %v2150, %v2163
    %v2165 = vadd.f32 %v2164, 0.014752088
    %v2166 = vmul.f32 %v2150, %v2165
    %v2167 = vadd.f32 %v2166, 0.112945676
    %v2168 = vmul.f32 %v2150, %v2167
    %v2169 = vadd.f32 %v2168, 0.4994258
    %v2170 = vmul.f32 %v2150, %v2169
    %v2171 = vadd.f32 %v2170, 1.0
    %v2172 = vrcp.pop %v2171
    %v2173 = vmul.f32 %v2171, %v2172
    %v2174 = vsub.f32 1.0, %v2173
    %v2175 = vmul.f32 %v2172, %v2174
    %v2176 = vadd.f32 %v2172, %v2175
    %vm2177 = vweird.f32 %v2171
    %vm2178 = vweird.f32 %v2172
    %vm2179 = vmor %vm2177, %vm2178
    %v2180 = vsel %vm2179, %v2172, %v2176
    %v2181 = vand.u32 2147483647, %v2171
    %vm2182 = vcmp.eq.f32.partialorder %v2181, 8.507059e+37
    %v2183 = vand.u32 %v2171, 2147483648
    %v2184 = vor.u32 1.1754944e-38, %v2183
    %v2185 = vsel %vm2182, %v2184, %v2180
    %v2186 = vmul.f32 %v2161, %v2185
    %v2187 = vmin.f32 %v2186, 1.0
    %v2188 = vmax.f32 %v2187, -1.0
    %v2189 = vmul.f32 %v685, %v685
    %v2190 = vmin.f32 16.0, %v2189
    %v2191 = vmul.f32 %v2190, 2.1237322e-06
    %v2192 = vadd.f32 %v2191, 0.00028619796
    %v2193 = vmul.f32 %v2190, %v2192
    %v2194 = vadd.f32 %v2193, 0.0036580483
    %v2195 = vmul.f32 %v2190, %v2194
    %v2196 = vadd.f32 %v2195, 0.05243302
    %v2197 = vmul.f32 %v2190, %v2196
    %v2198 = vadd.f32 %v2197, 0.18741608
    %v2199 = vmul.f32 %v2190, %v2198
    %v2200 = vadd.f32 %v2199, 1.1283791
    %v2201 = vmul.f32 %v685, %v2200
    %v2202 = vmul.f32 %v2190, 3.8918573e-05
    %v2203 = vadd.f32 %v2202, 0.001143296
    %v2204 = vmul.f32 %v2190, %v2203
    %v2205 = vadd.f32 %v2204, 0.014752088
    %v2206 = vmul.f32 %v2190, %v2205
    %v2207 = vadd.f32 %v2206, 0.112945676
    %v2208 = vmul.f32 %v2190, %v2207
    %v2209 = vadd.f32 %v2208, 0.4994258
    %v2210 = vmul.f32 %v2190, %v2209
    %v2211 = vadd.f32 %v2210, 1.0
    %v2212 = vrcp.pop %v2211
    %v2213 = vmul.f32 %v2211, %v2212
    %v2214 = vsub.f32 1.0, %v2213
    %v2215 = vmul.f32 %v2212, %v2214
    %v2216 = vadd.f32 %v2212, %v2215
    %vm2217 = vweird.f32 %v2211
    %vm2218 = vweird.f32 %v2212
    %vm2219 = vmor %vm2217, %vm2218
    %v2220 = vsel %vm2219, %v2212, %v2216
    %v2221 = vand.u32 2147483647, %v2211
    %vm2222 = vcmp.eq.f32.partialorder %v2221, 8.507059e+37
    %v2223 = vand.u32 %v2211, 2147483648
    %v2224 = vor.u32 1.1754944e-38, %v2223
    %v2225 = vsel %vm2222, %v2224, %v2220
    %v2226 = vmul.f32 %v2201, %v2225
    %v2227 = vmin.f32 %v2226, 1.0
    %v2228 = vmax.f32 %v2227, -1.0
    %v2229 = vmul.f32 %v686, %v686
    %v2230 = vmin.f32 16.0, %v2229
    %v2231 = vmul.f32 %v2230, 2.1237322e-06
    %v2232 = vadd.f32 %v2231, 0.00028619796
    %v2233 = vmul.f32 %v2230, %v2232
    %v2234 = vadd.f32 %v2233, 0.0036580483
    %v2235 = vmul.f32 %v2230, %v2234
    %v2236 = vadd.f32 %v2235, 0.05243302
    %v2237 = vmul.f32 %v2230, %v2236
    %v2238 = vadd.f32 %v2237, 0.18741608
    %v2239 = vmul.f32 %v2230, %v2238
    %v2240 = vadd.f32 %v2239, 1.1283791
    %v2241 = vmul.f32 %v686, %v2240
    %v2242 = vmul.f32 %v2230, 3.8918573e-05
    %v2243 = vadd.f32 %v2242, 0.001143296
    %v2244 = vmul.f32 %v2230, %v2243
    %v2245 = vadd.f32 %v2244, 0.014752088
    %v2246 = vmul.f32 %v2230, %v2245
    %v2247 = vadd.f32 %v2246, 0.112945676
    %v2248 = vmul.f32 %v2230, %v2247
    %v2249 = vadd.f32 %v2248, 0.4994258
    %v2250 = vmul.f32 %v2230, %v2249
    %v2251 = vadd.f32 %v2250, 1.0
    %v2252 = vrcp.pop %v2251
    %v2253 = vmul.f32 %v2251, %v2252
    %v2254 = vsub.f32 1.0, %v2253
    %v2255 = vmul.f32 %v2252, %v2254
    %v2256 = vadd.f32 %v2252, %v2255
    %vm2257 = vweird.f32 %v2251
    %vm2258 = vweird.f32 %v2252
    %vm2259 = vmor %vm2257, %vm2258
    %v2260 = vsel %vm2259, %v2252, %v2256
    %v2261 = vand.u32 2147483647, %v2251
    %vm2262 = vcmp.eq.f32.partialorder %v2261, 8.507059e+37
    %v2263 = vand.u32 %v2251, 2147483648
    %v2264 = vor.u32 1.1754944e-38, %v2263
    %v2265 = vsel %vm2262, %v2264, %v2260
    %v2266 = vmul.f32 %v2241, %v2265
    %v2267 = vmin.f32 %v2266, 1.0
    %v2268 = vmax.f32 %v2267, -1.0
    %v2269 = vmul.f32 %v687, %v687
    %v2270 = vmin.f32 16.0, %v2269
    %v2271 = vmul.f32 %v2270, 2.1237322e-06
    %v2272 = vadd.f32 %v2271, 0.00028619796
    %v2273 = vmul.f32 %v2270, %v2272
    %v2274 = vadd.f32 %v2273, 0.0036580483
    %v2275 = vmul.f32 %v2270, %v2274
    %v2276 = vadd.f32 %v2275, 0.05243302
    %v2277 = vmul.f32 %v2270, %v2276
    %v2278 = vadd.f32 %v2277, 0.18741608
    %v2279 = vmul.f32 %v2270, %v2278
    %v2280 = vadd.f32 %v2279, 1.1283791
    %v2281 = vmul.f32 %v687, %v2280
    %v2282 = vmul.f32 %v2270, 3.8918573e-05
    %v2283 = vadd.f32 %v2282, 0.001143296
    %v2284 = vmul.f32 %v2270, %v2283
    %v2285 = vadd.f32 %v2284, 0.014752088
    %v2286 = vmul.f32 %v2270, %v2285
    %v2287 = vadd.f32 %v2286, 0.112945676
    %v2288 = vmul.f32 %v2270, %v2287
    %v2289 = vadd.f32 %v2288, 0.4994258
    %v2290 = vmul.f32 %v2270, %v2289
    %v2291 = vadd.f32 %v2290, 1.0
    %v2292 = vrcp.pop %v2291
    %v2293 = vmul.f32 %v2291, %v2292
    %v2294 = vsub.f32 1.0, %v2293
    %v2295 = vmul.f32 %v2292, %v2294
    %v2296 = vadd.f32 %v2292, %v2295
    %vm2297 = vweird.f32 %v2291
    %vm2298 = vweird.f32 %v2292
    %vm2299 = vmor %vm2297, %vm2298
    %v2300 = vsel %vm2299, %v2292, %v2296
    %v2301 = vand.u32 2147483647, %v2291
    %vm2302 = vcmp.eq.f32.partialorder %v2301, 8.507059e+37
    %v2303 = vand.u32 %v2291, 2147483648
    %v2304 = vor.u32 1.1754944e-38, %v2303
    %v2305 = vsel %vm2302, %v2304, %v2300
    %v2306 = vmul.f32 %v2281, %v2305
    %v2307 = vmin.f32 %v2306, 1.0
    %v2308 = vmax.f32 %v2307, -1.0
    %v2309 = vmul.f32 %v688, %v688
    %v2310 = vmin.f32 16.0, %v2309
    %v2311 = vmul.f32 %v2310, 2.1237322e-06
    %v2312 = vadd.f32 %v2311, 0.00028619796
    %v2313 = vmul.f32 %v2310, %v2312
    %v2314 = vadd.f32 %v2313, 0.0036580483
    %v2315 = vmul.f32 %v2310, %v2314
    %v2316 = vadd.f32 %v2315, 0.05243302
    %v2317 = vmul.f32 %v2310, %v2316
    %v2318 = vadd.f32 %v2317, 0.18741608
    %v2319 = vmul.f32 %v2310, %v2318
    %v2320 = vadd.f32 %v2319, 1.1283791
    %v2321 = vmul.f32 %v688, %v2320
    %v2322 = vmul.f32 %v2310, 3.8918573e-05
    %v2323 = vadd.f32 %v2322, 0.001143296
    %v2324 = vmul.f32 %v2310, %v2323
    %v2325 = vadd.f32 %v2324, 0.014752088
    %v2326 = vmul.f32 %v2310, %v2325
    %v2327 = vadd.f32 %v2326, 0.112945676
    %v2328 = vmul.f32 %v2310, %v2327
    %v2329 = vadd.f32 %v2328, 0.4994258
    %v2330 = vmul.f32 %v2310, %v2329
    %v2331 = vadd.f32 %v2330, 1.0
    %v2332 = vrcp.pop %v2331
    %v2333 = vmul.f32 %v2331, %v2332
    %v2334 = vsub.f32 1.0, %v2333
    %v2335 = vmul.f32 %v2332, %v2334
    %v2336 = vadd.f32 %v2332, %v2335
    %vm2337 = vweird.f32 %v2331
    %vm2338 = vweird.f32 %v2332
    %vm2339 = vmor %vm2337, %vm2338
    %v2340 = vsel %vm2339, %v2332, %v2336
    %v2341 = vand.u32 2147483647, %v2331
    %vm2342 = vcmp.eq.f32.partialorder %v2341, 8.507059e+37
    %v2343 = vand.u32 %v2331, 2147483648
    %v2344 = vor.u32 1.1754944e-38, %v2343
    %v2345 = vsel %vm2342, %v2344, %v2340
    %v2346 = vmul.f32 %v2321, %v2345
    %v2347 = vmin.f32 %v2346, 1.0
    %v2348 = vmax.f32 %v2347, -1.0
    %v2349 = vmul.f32 %v689, %v689
    %v2350 = vmin.f32 16.0, %v2349
    %v2351 = vmul.f32 %v2350, 2.1237322e-06
    %v2352 = vadd.f32 %v2351, 0.00028619796
    %v2353 = vmul.f32 %v2350, %v2352
    %v2354 = vadd.f32 %v2353, 0.0036580483
    %v2355 = vmul.f32 %v2350, %v2354
    %v2356 = vadd.f32 %v2355, 0.05243302
    %v2357 = vmul.f32 %v2350, %v2356
    %v2358 = vadd.f32 %v2357, 0.18741608
    %v2359 = vmul.f32 %v2350, %v2358
    %v2360 = vadd.f32 %v2359, 1.1283791
    %v2361 = vmul.f32 %v689, %v2360
    %v2362 = vmul.f32 %v2350, 3.8918573e-05
    %v2363 = vadd.f32 %v2362, 0.001143296
    %v2364 = vmul.f32 %v2350, %v2363
    %v2365 = vadd.f32 %v2364, 0.014752088
    %v2366 = vmul.f32 %v2350, %v2365
    %v2367 = vadd.f32 %v2366, 0.112945676
    %v2368 = vmul.f32 %v2350, %v2367
    %v2369 = vadd.f32 %v2368, 0.4994258
    %v2370 = vmul.f32 %v2350, %v2369
    %v2371 = vadd.f32 %v2370, 1.0
    %v2372 = vrcp.pop %v2371
    %v2373 = vmul.f32 %v2371, %v2372
    %v2374 = vsub.f32 1.0, %v2373
    %v2375 = vmul.f32 %v2372, %v2374
    %v2376 = vadd.f32 %v2372, %v2375
    %vm2377 = vweird.f32 %v2371
    %vm2378 = vweird.f32 %v2372
    %vm2379 = vmor %vm2377, %vm2378
    %v2380 = vsel %vm2379, %v2372, %v2376
    %v2381 = vand.u32 2147483647, %v2371
    %vm2382 = vcmp.eq.f32.partialorder %v2381, 8.507059e+37
    %v2383 = vand.u32 %v2371, 2147483648
    %v2384 = vor.u32 1.1754944e-38, %v2383
    %v2385 = vsel %vm2382, %v2384, %v2380
    %v2386 = vmul.f32 %v2361, %v2385
    %v2387 = vmin.f32 %v2386, 1.0
    %v2388 = vmax.f32 %v2387, -1.0
    %v2389 = vmul.f32 %v690, %v690
    %v2390 = vmin.f32 16.0, %v2389
    %v2391 = vmul.f32 %v2390, 2.1237322e-06
    %v2392 = vadd.f32 %v2391, 0.00028619796
    %v2393 = vmul.f32 %v2390, %v2392
    %v2394 = vadd.f32 %v2393, 0.0036580483
    %v2395 = vmul.f32 %v2390, %v2394
    %v2396 = vadd.f32 %v2395, 0.05243302
    %v2397 = vmul.f32 %v2390, %v2396
    %v2398 = vadd.f32 %v2397, 0.18741608
    %v2399 = vmul.f32 %v2390, %v2398
    %v2400 = vadd.f32 %v2399, 1.1283791
    %v2401 = vmul.f32 %v690, %v2400
    %v2402 = vmul.f32 %v2390, 3.8918573e-05
    %v2403 = vadd.f32 %v2402, 0.001143296
    %v2404 = vmul.f32 %v2390, %v2403
    %v2405 = vadd.f32 %v2404, 0.014752088
    %v2406 = vmul.f32 %v2390, %v2405
    %v2407 = vadd.f32 %v2406, 0.112945676
    %v2408 = vmul.f32 %v2390, %v2407
    %v2409 = vadd.f32 %v2408, 0.4994258
    %v2410 = vmul.f32 %v2390, %v2409
    %v2411 = vadd.f32 %v2410, 1.0
    %v2412 = vrcp.pop %v2411
    %v2413 = vmul.f32 %v2411, %v2412
    %v2414 = vsub.f32 1.0, %v2413
    %v2415 = vmul.f32 %v2412, %v2414
    %v2416 = vadd.f32 %v2412, %v2415
    %vm2417 = vweird.f32 %v2411
    %vm2418 = vweird.f32 %v2412
    %vm2419 = vmor %vm2417, %vm2418
    %v2420 = vsel %vm2419, %v2412, %v2416
    %v2421 = vand.u32 2147483647, %v2411
    %vm2422 = vcmp.eq.f32.partialorder %v2421, 8.507059e+37
    %v2423 = vand.u32 %v2411, 2147483648
    %v2424 = vor.u32 1.1754944e-38, %v2423
    %v2425 = vsel %vm2422, %v2424, %v2420
    %v2426 = vmul.f32 %v2401, %v2425
    %v2427 = vmin.f32 %v2426, 1.0
    %v2428 = vmax.f32 %v2427, -1.0
    %v2429 = vmul.f32 %v691, %v691
    %v2430 = vmin.f32 16.0, %v2429
    %v2431 = vmul.f32 %v2430, 2.1237322e-06
    %v2432 = vadd.f32 %v2431, 0.00028619796
    %v2433 = vmul.f32 %v2430, %v2432
    %v2434 = vadd.f32 %v2433, 0.0036580483
    %v2435 = vmul.f32 %v2430, %v2434
    %v2436 = vadd.f32 %v2435, 0.05243302
    %v2437 = vmul.f32 %v2430, %v2436
    %v2438 = vadd.f32 %v2437, 0.18741608
    %v2439 = vmul.f32 %v2430, %v2438
    %v2440 = vadd.f32 %v2439, 1.1283791
    %v2441 = vmul.f32 %v691, %v2440
    %v2442 = vmul.f32 %v2430, 3.8918573e-05
    %v2443 = vadd.f32 %v2442, 0.001143296
    %v2444 = vmul.f32 %v2430, %v2443
    %v2445 = vadd.f32 %v2444, 0.014752088
    %v2446 = vmul.f32 %v2430, %v2445
    %v2447 = vadd.f32 %v2446, 0.112945676
    %v2448 = vmul.f32 %v2430, %v2447
    %v2449 = vadd.f32 %v2448, 0.4994258
    %v2450 = vmul.f32 %v2430, %v2449
    %v2451 = vadd.f32 %v2450, 1.0
    %v2452 = vrcp.pop %v2451
    %v2453 = vmul.f32 %v2451, %v2452
    %v2454 = vsub.f32 1.0, %v2453
    %v2455 = vmul.f32 %v2452, %v2454
    %v2456 = vadd.f32 %v2452, %v2455
    %vm2457 = vweird.f32 %v2451
    %vm2458 = vweird.f32 %v2452
    %vm2459 = vmor %vm2457, %vm2458
    %v2460 = vsel %vm2459, %v2452, %v2456
    %v2461 = vand.u32 2147483647, %v2451
    %vm2462 = vcmp.eq.f32.partialorder %v2461, 8.507059e+37
    %v2463 = vand.u32 %v2451, 2147483648
    %v2464 = vor.u32 1.1754944e-38, %v2463
    %v2465 = vsel %vm2462, %v2464, %v2460
    %v2466 = vmul.f32 %v2441, %v2465
    %v2467 = vmin.f32 %v2466, 1.0
    %v2468 = vmax.f32 %v2467, -1.0
    %v2469 = vmul.f32 %v692, %v692
    %v2470 = vmin.f32 16.0, %v2469
    %v2471 = vmul.f32 %v2470, 2.1237322e-06
    %v2472 = vadd.f32 %v2471, 0.00028619796
    %v2473 = vmul.f32 %v2470, %v2472
    %v2474 = vadd.f32 %v2473, 0.0036580483
    %v2475 = vmul.f32 %v2470, %v2474
    %v2476 = vadd.f32 %v2475, 0.05243302
    %v2477 = vmul.f32 %v2470, %v2476
    %v2478 = vadd.f32 %v2477, 0.18741608
    %v2479 = vmul.f32 %v2470, %v2478
    %v2480 = vadd.f32 %v2479, 1.1283791
    %v2481 = vmul.f32 %v692, %v2480
    %v2482 = vmul.f32 %v2470, 3.8918573e-05
    %v2483 = vadd.f32 %v2482, 0.001143296
    %v2484 = vmul.f32 %v2470, %v2483
    %v2485 = vadd.f32 %v2484, 0.014752088
    %v2486 = vmul.f32 %v2470, %v2485
    %v2487 = vadd.f32 %v2486, 0.112945676
    %v2488 = vmul.f32 %v2470, %v2487
    %v2489 = vadd.f32 %v2488, 0.4994258
    %v2490 = vmul.f32 %v2470, %v2489
    %v2491 = vadd.f32 %v2490, 1.0
    %v2492 = vrcp.pop %v2491
    %v2493 = vmul.f32 %v2491, %v2492
    %v2494 = vsub.f32 1.0, %v2493
    %v2495 = vmul.f32 %v2492, %v2494
    %v2496 = vadd.f32 %v2492, %v2495
    %vm2497 = vweird.f32 %v2491
    %vm2498 = vweird.f32 %v2492
    %vm2499 = vmor %vm2497, %vm2498
    %v2500 = vsel %vm2499, %v2492, %v2496
    %v2501 = vand.u32 2147483647, %v2491
    %vm2502 = vcmp.eq.f32.partialorder %v2501, 8.507059e+37
    %v2503 = vand.u32 %v2491, 2147483648
    %v2504 = vor.u32 1.1754944e-38, %v2503
    %v2505 = vsel %vm2502, %v2504, %v2500
    %v2506 = vmul.f32 %v2481, %v2505
    %v2507 = vmin.f32 %v2506, 1.0
    %v2508 = vmax.f32 %v2507, -1.0
    %v2509 = vmul.f32 %v693, %v693
    %v2510 = vmin.f32 16.0, %v2509
    %v2511 = vmul.f32 %v2510, 2.1237322e-06
    %v2512 = vadd.f32 %v2511, 0.00028619796
    %v2513 = vmul.f32 %v2510, %v2512
    %v2514 = vadd.f32 %v2513, 0.0036580483
    %v2515 = vmul.f32 %v2510, %v2514
    %v2516 = vadd.f32 %v2515, 0.05243302
    %v2517 = vmul.f32 %v2510, %v2516
    %v2518 = vadd.f32 %v2517, 0.18741608
    %v2519 = vmul.f32 %v2510, %v2518
    %v2520 = vadd.f32 %v2519, 1.1283791
    %v2521 = vmul.f32 %v693, %v2520
    %v2522 = vmul.f32 %v2510, 3.8918573e-05
    %v2523 = vadd.f32 %v2522, 0.001143296
    %v2524 = vmul.f32 %v2510, %v2523
    %v2525 = vadd.f32 %v2524, 0.014752088
    %v2526 = vmul.f32 %v2510, %v2525
    %v2527 = vadd.f32 %v2526, 0.112945676
    %v2528 = vmul.f32 %v2510, %v2527
    %v2529 = vadd.f32 %v2528, 0.4994258
    %v2530 = vmul.f32 %v2510, %v2529
    %v2531 = vadd.f32 %v2530, 1.0
    %v2532 = vrcp.pop %v2531
    %v2533 = vmul.f32 %v2531, %v2532
    %v2534 = vsub.f32 1.0, %v2533
    %v2535 = vmul.f32 %v2532, %v2534
    %v2536 = vadd.f32 %v2532, %v2535
    %vm2537 = vweird.f32 %v2531
    %vm2538 = vweird.f32 %v2532
    %vm2539 = vmor %vm2537, %vm2538
    %v2540 = vsel %vm2539, %v2532, %v2536
    %v2541 = vand.u32 2147483647, %v2531
    %vm2542 = vcmp.eq.f32.partialorder %v2541, 8.507059e+37
    %v2543 = vand.u32 %v2531, 2147483648
    %v2544 = vor.u32 1.1754944e-38, %v2543
    %v2545 = vsel %vm2542, %v2544, %v2540
    %v2546 = vmul.f32 %v2521, %v2545
    %v2547 = vmin.f32 %v2546, 1.0
    %v2548 = vmax.f32 %v2547, -1.0
    %v2549 = vmul.f32 %v694, %v694
    %v2550 = vmin.f32 16.0, %v2549
    %v2551 = vmul.f32 %v2550, 2.1237322e-06
    %v2552 = vadd.f32 %v2551, 0.00028619796
    %v2553 = vmul.f32 %v2550, %v2552
    %v2554 = vadd.f32 %v2553, 0.0036580483
    %v2555 = vmul.f32 %v2550, %v2554
    %v2556 = vadd.f32 %v2555, 0.05243302
    %v2557 = vmul.f32 %v2550, %v2556
    %v2558 = vadd.f32 %v2557, 0.18741608
    %v2559 = vmul.f32 %v2550, %v2558
    %v2560 = vadd.f32 %v2559, 1.1283791
    %v2561 = vmul.f32 %v694, %v2560
    %v2562 = vmul.f32 %v2550, 3.8918573e-05
    %v2563 = vadd.f32 %v2562, 0.001143296
    %v2564 = vmul.f32 %v2550, %v2563
    %v2565 = vadd.f32 %v2564, 0.014752088
    %v2566 = vmul.f32 %v2550, %v2565
    %v2567 = vadd.f32 %v2566, 0.112945676
    %v2568 = vmul.f32 %v2550, %v2567
    %v2569 = vadd.f32 %v2568, 0.4994258
    %v2570 = vmul.f32 %v2550, %v2569
    %v2571 = vadd.f32 %v2570, 1.0
    %v2572 = vrcp.pop %v2571
    %v2573 = vmul.f32 %v2571, %v2572
    %v2574 = vsub.f32 1.0, %v2573
    %v2575 = vmul.f32 %v2572, %v2574
    %v2576 = vadd.f32 %v2572, %v2575
    %vm2577 = vweird.f32 %v2571
    %vm2578 = vweird.f32 %v2572
    %vm2579 = vmor %vm2577, %vm2578
    %v2580 = vsel %vm2579, %v2572, %v2576
    %v2581 = vand.u32 2147483647, %v2571
    %vm2582 = vcmp.eq.f32.partialorder %v2581, 8.507059e+37
    %v2583 = vand.u32 %v2571, 2147483648
    %v2584 = vor.u32 1.1754944e-38, %v2583
    %v2585 = vsel %vm2582, %v2584, %v2580
    %v2586 = vmul.f32 %v2561, %v2585
    %v2587 = vmin.f32 %v2586, 1.0
    %v2588 = vmax.f32 %v2587, -1.0
    %v2589 = vmul.f32 %v695, %v695
    %v2590 = vmin.f32 16.0, %v2589
    %v2591 = vmul.f32 %v2590, 2.1237322e-06
    %v2592 = vadd.f32 %v2591, 0.00028619796
    %v2593 = vmul.f32 %v2590, %v2592
    %v2594 = vadd.f32 %v2593, 0.0036580483
    %v2595 = vmul.f32 %v2590, %v2594
    %v2596 = vadd.f32 %v2595, 0.05243302
    %v2597 = vmul.f32 %v2590, %v2596
    %v2598 = vadd.f32 %v2597, 0.18741608
    %v2599 = vmul.f32 %v2590, %v2598
    %v2600 = vadd.f32 %v2599, 1.1283791
    %v2601 = vmul.f32 %v695, %v2600
    %v2602 = vmul.f32 %v2590, 3.8918573e-05
    %v2603 = vadd.f32 %v2602, 0.001143296
    %v2604 = vmul.f32 %v2590, %v2603
    %v2605 = vadd.f32 %v2604, 0.014752088
    %v2606 = vmul.f32 %v2590, %v2605
    %v2607 = vadd.f32 %v2606, 0.112945676
    %v2608 = vmul.f32 %v2590, %v2607
    %v2609 = vadd.f32 %v2608, 0.4994258
    %v2610 = vmul.f32 %v2590, %v2609
    %v2611 = vadd.f32 %v2610, 1.0
    %v2612 = vrcp.pop %v2611
    %v2613 = vmul.f32 %v2611, %v2612
    %v2614 = vsub.f32 1.0, %v2613
    %v2615 = vmul.f32 %v2612, %v2614
    %v2616 = vadd.f32 %v2612, %v2615
    %vm2617 = vweird.f32 %v2611
    %vm2618 = vweird.f32 %v2612
    %vm2619 = vmor %vm2617, %vm2618
    %v2620 = vsel %vm2619, %v2612, %v2616
    %v2621 = vand.u32 2147483647, %v2611
    %vm2622 = vcmp.eq.f32.partialorder %v2621, 8.507059e+37
    %v2623 = vand.u32 %v2611, 2147483648
    %v2624 = vor.u32 1.1754944e-38, %v2623
    %v2625 = vsel %vm2622, %v2624, %v2620
    %v2626 = vmul.f32 %v2601, %v2625
    %v2627 = vmin.f32 %v2626, 1.0
    %v2628 = vmax.f32 %v2627, -1.0
    %v2629 = vmul.f32 %v696, %v696
    %v2630 = vmin.f32 16.0, %v2629
    %v2631 = vmul.f32 %v2630, 2.1237322e-06
    %v2632 = vadd.f32 %v2631, 0.00028619796
    %v2633 = vmul.f32 %v2630, %v2632
    %v2634 = vadd.f32 %v2633, 0.0036580483
    %v2635 = vmul.f32 %v2630, %v2634
    %v2636 = vadd.f32 %v2635, 0.05243302
    %v2637 = vmul.f32 %v2630, %v2636
    %v2638 = vadd.f32 %v2637, 0.18741608
    %v2639 = vmul.f32 %v2630, %v2638
    %v2640 = vadd.f32 %v2639, 1.1283791
    %v2641 = vmul.f32 %v696, %v2640
    %v2642 = vmul.f32 %v2630, 3.8918573e-05
    %v2643 = vadd.f32 %v2642, 0.001143296
    %v2644 = vmul.f32 %v2630, %v2643
    %v2645 = vadd.f32 %v2644, 0.014752088
    %v2646 = vmul.f32 %v2630, %v2645
    %v2647 = vadd.f32 %v2646, 0.112945676
    %v2648 = vmul.f32 %v2630, %v2647
    %v2649 = vadd.f32 %v2648, 0.4994258
    %v2650 = vmul.f32 %v2630, %v2649
    %v2651 = vadd.f32 %v2650, 1.0
    %v2652 = vrcp.pop %v2651
    %v2653 = vmul.f32 %v2651, %v2652
    %v2654 = vsub.f32 1.0, %v2653
    %v2655 = vmul.f32 %v2652, %v2654
    %v2656 = vadd.f32 %v2652, %v2655
    %vm2657 = vweird.f32 %v2651
    %vm2658 = vweird.f32 %v2652
    %vm2659 = vmor %vm2657, %vm2658
    %v2660 = vsel %vm2659, %v2652, %v2656
    %v2661 = vand.u32 2147483647, %v2651
    %vm2662 = vcmp.eq.f32.partialorder %v2661, 8.507059e+37
    %v2663 = vand.u32 %v2651, 2147483648
    %v2664 = vor.u32 1.1754944e-38, %v2663
    %v2665 = vsel %vm2662, %v2664, %v2660
    %v2666 = vmul.f32 %v2641, %v2665
    %v2667 = vmin.f32 %v2666, 1.0
    %v2668 = vmax.f32 %v2667, -1.0
    %v2669 = vmul.f32 %v697, %v697
    %v2670 = vmin.f32 16.0, %v2669
    %v2671 = vmul.f32 %v2670, 2.1237322e-06
    %v2672 = vadd.f32 %v2671, 0.00028619796
    %v2673 = vmul.f32 %v2670, %v2672
    %v2674 = vadd.f32 %v2673, 0.0036580483
    %v2675 = vmul.f32 %v2670, %v2674
    %v2676 = vadd.f32 %v2675, 0.05243302
    %v2677 = vmul.f32 %v2670, %v2676
    %v2678 = vadd.f32 %v2677, 0.18741608
    %v2679 = vmul.f32 %v2670, %v2678
    %v2680 = vadd.f32 %v2679, 1.1283791
    %v2681 = vmul.f32 %v697, %v2680
    %v2682 = vmul.f32 %v2670, 3.8918573e-05
    %v2683 = vadd.f32 %v2682, 0.001143296
    %v2684 = vmul.f32 %v2670, %v2683
    %v2685 = vadd.f32 %v2684, 0.014752088
    %v2686 = vmul.f32 %v2670, %v2685
    %v2687 = vadd.f32 %v2686, 0.112945676
    %v2688 = vmul.f32 %v2670, %v2687
    %v2689 = vadd.f32 %v2688, 0.4994258
    %v2690 = vmul.f32 %v2670, %v2689
    %v2691 = vadd.f32 %v2690, 1.0
    %v2692 = vrcp.pop %v2691
    %v2693 = vmul.f32 %v2691, %v2692
    %v2694 = vsub.f32 1.0, %v2693
    %v2695 = vmul.f32 %v2692, %v2694
    %v2696 = vadd.f32 %v2692, %v2695
    %vm2697 = vweird.f32 %v2691
    %vm2698 = vweird.f32 %v2692
    %vm2699 = vmor %vm2697, %vm2698
    %v2700 = vsel %vm2699, %v2692, %v2696
    %v2701 = vand.u32 2147483647, %v2691
    %vm2702 = vcmp.eq.f32.partialorder %v2701, 8.507059e+37
    %v2703 = vand.u32 %v2691, 2147483648
    %v2704 = vor.u32 1.1754944e-38, %v2703
    %v2705 = vsel %vm2702, %v2704, %v2700
    %v2706 = vmul.f32 %v2681, %v2705
    %v2707 = vmin.f32 %v2706, 1.0
    %v2708 = vmax.f32 %v2707, -1.0
    %v2709 = vmul.f32 %v698, %v698
    %v2710 = vmin.f32 16.0, %v2709
    %v2711 = vmul.f32 %v2710, 2.1237322e-06
    %v2712 = vadd.f32 %v2711, 0.00028619796
    %v2713 = vmul.f32 %v2710, %v2712
    %v2714 = vadd.f32 %v2713, 0.0036580483
    %v2715 = vmul.f32 %v2710, %v2714
    %v2716 = vadd.f32 %v2715, 0.05243302
    %v2717 = vmul.f32 %v2710, %v2716
    %v2718 = vadd.f32 %v2717, 0.18741608
    %v2719 = vmul.f32 %v2710, %v2718
    %v2720 = vadd.f32 %v2719, 1.1283791
    %v2721 = vmul.f32 %v698, %v2720
    %v2722 = vmul.f32 %v2710, 3.8918573e-05
    %v2723 = vadd.f32 %v2722, 0.001143296
    %v2724 = vmul.f32 %v2710, %v2723
    %v2725 = vadd.f32 %v2724, 0.014752088
    %v2726 = vmul.f32 %v2710, %v2725
    %v2727 = vadd.f32 %v2726, 0.112945676
    %v2728 = vmul.f32 %v2710, %v2727
    %v2729 = vadd.f32 %v2728, 0.4994258
    %v2730 = vmul.f32 %v2710, %v2729
    %v2731 = vadd.f32 %v2730, 1.0
    %v2732 = vrcp.pop %v2731
    %v2733 = vmul.f32 %v2731, %v2732
    %v2734 = vsub.f32 1.0, %v2733
    %v2735 = vmul.f32 %v2732, %v2734
    %v2736 = vadd.f32 %v2732, %v2735
    %vm2737 = vweird.f32 %v2731
    %vm2738 = vweird.f32 %v2732
    %vm2739 = vmor %vm2737, %vm2738
    %v2740 = vsel %vm2739, %v2732, %v2736
    %v2741 = vand.u32 2147483647, %v2731
    %vm2742 = vcmp.eq.f32.partialorder %v2741, 8.507059e+37
    %v2743 = vand.u32 %v2731, 2147483648
    %v2744 = vor.u32 1.1754944e-38, %v2743
    %v2745 = vsel %vm2742, %v2744, %v2740
    %v2746 = vmul.f32 %v2721, %v2745
    %v2747 = vmin.f32 %v2746, 1.0
    %v2748 = vmax.f32 %v2747, -1.0
    %v2749 = vmul.f32 %v699, %v699
    %v2750 = vmin.f32 16.0, %v2749
    %v2751 = vmul.f32 %v2750, 2.1237322e-06
    %v2752 = vadd.f32 %v2751, 0.00028619796
    %v2753 = vmul.f32 %v2750, %v2752
    %v2754 = vadd.f32 %v2753, 0.0036580483
    %v2755 = vmul.f32 %v2750, %v2754
    %v2756 = vadd.f32 %v2755, 0.05243302
    %v2757 = vmul.f32 %v2750, %v2756
    %v2758 = vadd.f32 %v2757, 0.18741608
    %v2759 = vmul.f32 %v2750, %v2758
    %v2760 = vadd.f32 %v2759, 1.1283791
    %v2761 = vmul.f32 %v699, %v2760
    %v2762 = vmul.f32 %v2750, 3.8918573e-05
    %v2763 = vadd.f32 %v2762, 0.001143296
    %v2764 = vmul.f32 %v2750, %v2763
    %v2765 = vadd.f32 %v2764, 0.014752088
    %v2766 = vmul.f32 %v2750, %v2765
    %v2767 = vadd.f32 %v2766, 0.112945676
    %v2768 = vmul.f32 %v2750, %v2767
    %v2769 = vadd.f32 %v2768, 0.4994258
    %v2770 = vmul.f32 %v2750, %v2769
    %v2771 = vadd.f32 %v2770, 1.0
    %v2772 = vrcp.pop %v2771
    %v2773 = vmul.f32 %v2771, %v2772
    %v2774 = vsub.f32 1.0, %v2773
    %v2775 = vmul.f32 %v2772, %v2774
    %v2776 = vadd.f32 %v2772, %v2775
    %vm2777 = vweird.f32 %v2771
    %vm2778 = vweird.f32 %v2772
    %vm2779 = vmor %vm2777, %vm2778
    %v2780 = vsel %vm2779, %v2772, %v2776
    %v2781 = vand.u32 2147483647, %v2771
    %vm2782 = vcmp.eq.f32.partialorder %v2781, 8.507059e+37
    %v2783 = vand.u32 %v2771, 2147483648
    %v2784 = vor.u32 1.1754944e-38, %v2783
    %v2785 = vsel %vm2782, %v2784, %v2780
    %v2786 = vmul.f32 %v2761, %v2785
    %v2787 = vmin.f32 %v2786, 1.0
    %v2788 = vmax.f32 %v2787, -1.0
    %v2789 = vmul.f32 %v700, %v700
    %v2790 = vmin.f32 16.0, %v2789
    %v2791 = vmul.f32 %v2790, 2.1237322e-06
    %v2792 = vadd.f32 %v2791, 0.00028619796
    %v2793 = vmul.f32 %v2790, %v2792
    %v2794 = vadd.f32 %v2793, 0.0036580483
    %v2795 = vmul.f32 %v2790, %v2794
    %v2796 = vadd.f32 %v2795, 0.05243302
    %v2797 = vmul.f32 %v2790, %v2796
    %v2798 = vadd.f32 %v2797, 0.18741608
    %v2799 = vmul.f32 %v2790, %v2798
    %v2800 = vadd.f32 %v2799, 1.1283791
    %v2801 = vmul.f32 %v700, %v2800
    %v2802 = vmul.f32 %v2790, 3.8918573e-05
    %v2803 = vadd.f32 %v2802, 0.001143296
    %v2804 = vmul.f32 %v2790, %v2803
    %v2805 = vadd.f32 %v2804, 0.014752088
    %v2806 = vmul.f32 %v2790, %v2805
    %v2807 = vadd.f32 %v2806, 0.112945676
    %v2808 = vmul.f32 %v2790, %v2807
    %v2809 = vadd.f32 %v2808, 0.4994258
    %v2810 = vmul.f32 %v2790, %v2809
    %v2811 = vadd.f32 %v2810, 1.0
    %v2812 = vrcp.pop %v2811
    %v2813 = vmul.f32 %v2811, %v2812
    %v2814 = vsub.f32 1.0, %v2813
    %v2815 = vmul.f32 %v2812, %v2814
    %v2816 = vadd.f32 %v2812, %v2815
    %vm2817 = vweird.f32 %v2811
    %vm2818 = vweird.f32 %v2812
    %vm2819 = vmor %vm2817, %vm2818
    %v2820 = vsel %vm2819, %v2812, %v2816
    %v2821 = vand.u32 2147483647, %v2811
    %vm2822 = vcmp.eq.f32.partialorder %v2821, 8.507059e+37
    %v2823 = vand.u32 %v2811, 2147483648
    %v2824 = vor.u32 1.1754944e-38, %v2823
    %v2825 = vsel %vm2822, %v2824, %v2820
    %v2826 = vmul.f32 %v2801, %v2825
    %v2827 = vmin.f32 %v2826, 1.0
    %v2828 = vmax.f32 %v2827, -1.0
    %v2829 = vmul.f32 %v701, %v701
    %v2830 = vmin.f32 16.0, %v2829
    %v2831 = vmul.f32 %v2830, 2.1237322e-06
    %v2832 = vadd.f32 %v2831, 0.00028619796
    %v2833 = vmul.f32 %v2830, %v2832
    %v2834 = vadd.f32 %v2833, 0.0036580483
    %v2835 = vmul.f32 %v2830, %v2834
    %v2836 = vadd.f32 %v2835, 0.05243302
    %v2837 = vmul.f32 %v2830, %v2836
    %v2838 = vadd.f32 %v2837, 0.18741608
    %v2839 = vmul.f32 %v2830, %v2838
    %v2840 = vadd.f32 %v2839, 1.1283791
    %v2841 = vmul.f32 %v701, %v2840
    %v2842 = vmul.f32 %v2830, 3.8918573e-05
    %v2843 = vadd.f32 %v2842, 0.001143296
    %v2844 = vmul.f32 %v2830, %v2843
    %v2845 = vadd.f32 %v2844, 0.014752088
    %v2846 = vmul.f32 %v2830, %v2845
    %v2847 = vadd.f32 %v2846, 0.112945676
    %v2848 = vmul.f32 %v2830, %v2847
    %v2849 = vadd.f32 %v2848, 0.4994258
    %v2850 = vmul.f32 %v2830, %v2849
    %v2851 = vadd.f32 %v2850, 1.0
    %v2852 = vrcp.pop %v2851
    %v2853 = vmul.f32 %v2851, %v2852
    %v2854 = vsub.f32 1.0, %v2853
    %v2855 = vmul.f32 %v2852, %v2854
    %v2856 = vadd.f32 %v2852, %v2855
    %vm2857 = vweird.f32 %v2851
    %vm2858 = vweird.f32 %v2852
    %vm2859 = vmor %vm2857, %vm2858
    %v2860 = vsel %vm2859, %v2852, %v2856
    %v2861 = vand.u32 2147483647, %v2851
    %vm2862 = vcmp.eq.f32.partialorder %v2861, 8.507059e+37
    %v2863 = vand.u32 %v2851, 2147483648
    %v2864 = vor.u32 1.1754944e-38, %v2863
    %v2865 = vsel %vm2862, %v2864, %v2860
    %v2866 = vmul.f32 %v2841, %v2865
    %v2867 = vmin.f32 %v2866, 1.0
    %v2868 = vmax.f32 %v2867, -1.0
    %v2869 = vmul.f32 %v702, %v702
    %v2870 = vmin.f32 16.0, %v2869
    %v2871 = vmul.f32 %v2870, 2.1237322e-06
    %v2872 = vadd.f32 %v2871, 0.00028619796
    %v2873 = vmul.f32 %v2870, %v2872
    %v2874 = vadd.f32 %v2873, 0.0036580483
    %v2875 = vmul.f32 %v2870, %v2874
    %v2876 = vadd.f32 %v2875, 0.05243302
    %v2877 = vmul.f32 %v2870, %v2876
    %v2878 = vadd.f32 %v2877, 0.18741608
    %v2879 = vmul.f32 %v2870, %v2878
    %v2880 = vadd.f32 %v2879, 1.1283791
    %v2881 = vmul.f32 %v702, %v2880
    %v2882 = vmul.f32 %v2870, 3.8918573e-05
    %v2883 = vadd.f32 %v2882, 0.001143296
    %v2884 = vmul.f32 %v2870, %v2883
    %v2885 = vadd.f32 %v2884, 0.014752088
    %v2886 = vmul.f32 %v2870, %v2885
    %v2887 = vadd.f32 %v2886, 0.112945676
    %v2888 = vmul.f32 %v2870, %v2887
    %v2889 = vadd.f32 %v2888, 0.4994258
    %v2890 = vmul.f32 %v2870, %v2889
    %v2891 = vadd.f32 %v2890, 1.0
    %v2892 = vrcp.pop %v2891
    %v2893 = vmul.f32 %v2891, %v2892
    %v2894 = vsub.f32 1.0, %v2893
    %v2895 = vmul.f32 %v2892, %v2894
    %v2896 = vadd.f32 %v2892, %v2895
    %vm2897 = vweird.f32 %v2891
    %vm2898 = vweird.f32 %v2892
    %vm2899 = vmor %vm2897, %vm2898
    %v2900 = vsel %vm2899, %v2892, %v2896
    %v2901 = vand.u32 2147483647, %v2891
    %vm2902 = vcmp.eq.f32.partialorder %v2901, 8.507059e+37
    %v2903 = vand.u32 %v2891, 2147483648
    %v2904 = vor.u32 1.1754944e-38, %v2903
    %v2905 = vsel %vm2902, %v2904, %v2900
    %v2906 = vmul.f32 %v2881, %v2905
    %v2907 = vmin.f32 %v2906, 1.0
    %v2908 = vmax.f32 %v2907, -1.0
    %v2909 = vmul.f32 %v703, %v703
    %v2910 = vmin.f32 16.0, %v2909
    %v2911 = vmul.f32 %v2910, 2.1237322e-06
    %v2912 = vadd.f32 %v2911, 0.00028619796
    %v2913 = vmul.f32 %v2910, %v2912
    %v2914 = vadd.f32 %v2913, 0.0036580483
    %v2915 = vmul.f32 %v2910, %v2914
    %v2916 = vadd.f32 %v2915, 0.05243302
    %v2917 = vmul.f32 %v2910, %v2916
    %v2918 = vadd.f32 %v2917, 0.18741608
    %v2919 = vmul.f32 %v2910, %v2918
    %v2920 = vadd.f32 %v2919, 1.1283791
    %v2921 = vmul.f32 %v703, %v2920
    %v2922 = vmul.f32 %v2910, 3.8918573e-05
    %v2923 = vadd.f32 %v2922, 0.001143296
    %v2924 = vmul.f32 %v2910, %v2923
    %v2925 = vadd.f32 %v2924, 0.014752088
    %v2926 = vmul.f32 %v2910, %v2925
    %v2927 = vadd.f32 %v2926, 0.112945676
    %v2928 = vmul.f32 %v2910, %v2927
    %v2929 = vadd.f32 %v2928, 0.4994258
    %v2930 = vmul.f32 %v2910, %v2929
    %v2931 = vadd.f32 %v2930, 1.0
    %v2932 = vrcp.pop %v2931
    %v2933 = vmul.f32 %v2931, %v2932
    %v2934 = vsub.f32 1.0, %v2933
    %v2935 = vmul.f32 %v2932, %v2934
    %v2936 = vadd.f32 %v2932, %v2935
    %vm2937 = vweird.f32 %v2931
    %vm2938 = vweird.f32 %v2932
    %vm2939 = vmor %vm2937, %vm2938
    %v2940 = vsel %vm2939, %v2932, %v2936
    %v2941 = vand.u32 2147483647, %v2931
    %vm2942 = vcmp.eq.f32.partialorder %v2941, 8.507059e+37
    %v2943 = vand.u32 %v2931, 2147483648
    %v2944 = vor.u32 1.1754944e-38, %v2943
    %v2945 = vsel %vm2942, %v2944, %v2940
    %v2946 = vmul.f32 %v2921, %v2945
    %v2947 = vmin.f32 %v2946, 1.0
    %v2948 = vmax.f32 %v2947, -1.0
    %v2949 = vmul.f32 %v704, %v704
    %v2950 = vmin.f32 16.0, %v2949
    %v2951 = vmul.f32 %v2950, 2.1237322e-06
    %v2952 = vadd.f32 %v2951, 0.00028619796
    %v2953 = vmul.f32 %v2950, %v2952
    %v2954 = vadd.f32 %v2953, 0.0036580483
    %v2955 = vmul.f32 %v2950, %v2954
    %v2956 = vadd.f32 %v2955, 0.05243302
    %v2957 = vmul.f32 %v2950, %v2956
    %v2958 = vadd.f32 %v2957, 0.18741608
    %v2959 = vmul.f32 %v2950, %v2958
    %v2960 = vadd.f32 %v2959, 1.1283791
    %v2961 = vmul.f32 %v704, %v2960
    %v2962 = vmul.f32 %v2950, 3.8918573e-05
    %v2963 = vadd.f32 %v2962, 0.001143296
    %v2964 = vmul.f32 %v2950, %v2963
    %v2965 = vadd.f32 %v2964, 0.014752088
    %v2966 = vmul.f32 %v2950, %v2965
    %v2967 = vadd.f32 %v2966, 0.112945676
    %v2968 = vmul.f32 %v2950, %v2967
    %v2969 = vadd.f32 %v2968, 0.4994258
    %v2970 = vmul.f32 %v2950, %v2969
    %v2971 = vadd.f32 %v2970, 1.0
    %v2972 = vrcp.pop %v2971
    %v2973 = vmul.f32 %v2971, %v2972
    %v2974 = vsub.f32 1.0, %v2973
    %v2975 = vmul.f32 %v2972, %v2974
    %v2976 = vadd.f32 %v2972, %v2975
    %vm2977 = vweird.f32 %v2971
    %vm2978 = vweird.f32 %v2972
    %vm2979 = vmor %vm2977, %vm2978
    %v2980 = vsel %vm2979, %v2972, %v2976
    %v2981 = vand.u32 2147483647, %v2971
    %vm2982 = vcmp.eq.f32.partialorder %v2981, 8.507059e+37
    %v2983 = vand.u32 %v2971, 2147483648
    %v2984 = vor.u32 1.1754944e-38, %v2983
    %v2985 = vsel %vm2982, %v2984, %v2980
    %v2986 = vmul.f32 %v2961, %v2985
    %v2987 = vmin.f32 %v2986, 1.0
    %v2988 = vmax.f32 %v2987, -1.0
    %v2989 = vmul.f32 %v705, %v705
    %v2990 = vmin.f32 16.0, %v2989
    %v2991 = vmul.f32 %v2990, 2.1237322e-06
    %v2992 = vadd.f32 %v2991, 0.00028619796
    %v2993 = vmul.f32 %v2990, %v2992
    %v2994 = vadd.f32 %v2993, 0.0036580483
    %v2995 = vmul.f32 %v2990, %v2994
    %v2996 = vadd.f32 %v2995, 0.05243302
    %v2997 = vmul.f32 %v2990, %v2996
    %v2998 = vadd.f32 %v2997, 0.18741608
    %v2999 = vmul.f32 %v2990, %v2998
    %v3000 = vadd.f32 %v2999, 1.1283791
    %v3001 = vmul.f32 %v705, %v3000
    %v3002 = vmul.f32 %v2990, 3.8918573e-05
    %v3003 = vadd.f32 %v3002, 0.001143296
    %v3004 = vmul.f32 %v2990, %v3003
    %v3005 = vadd.f32 %v3004, 0.014752088
    %v3006 = vmul.f32 %v2990, %v3005
    %v3007 = vadd.f32 %v3006, 0.112945676
    %v3008 = vmul.f32 %v2990, %v3007
    %v3009 = vadd.f32 %v3008, 0.4994258
    %v3010 = vmul.f32 %v2990, %v3009
    %v3011 = vadd.f32 %v3010, 1.0
    %v3012 = vrcp.pop %v3011
    %v3013 = vmul.f32 %v3011, %v3012
    %v3014 = vsub.f32 1.0, %v3013
    %v3015 = vmul.f32 %v3012, %v3014
    %v3016 = vadd.f32 %v3012, %v3015
    %vm3017 = vweird.f32 %v3011
    %vm3018 = vweird.f32 %v3012
    %vm3019 = vmor %vm3017, %vm3018
    %v3020 = vsel %vm3019, %v3012, %v3016
    %v3021 = vand.u32 2147483647, %v3011
    %vm3022 = vcmp.eq.f32.partialorder %v3021, 8.507059e+37
    %v3023 = vand.u32 %v3011, 2147483648
    %v3024 = vor.u32 1.1754944e-38, %v3023
    %v3025 = vsel %vm3022, %v3024, %v3020
    %v3026 = vmul.f32 %v3001, %v3025
    %v3027 = vmin.f32 %v3026, 1.0
    %v3028 = vmax.f32 %v3027, -1.0
    %v3029 = vmul.f32 %v706, %v706
    %v3030 = vmin.f32 16.0, %v3029
    %v3031 = vmul.f32 %v3030, 2.1237322e-06
    %v3032 = vadd.f32 %v3031, 0.00028619796
    %v3033 = vmul.f32 %v3030, %v3032
    %v3034 = vadd.f32 %v3033, 0.0036580483
    %v3035 = vmul.f32 %v3030, %v3034
    %v3036 = vadd.f32 %v3035, 0.05243302
    %v3037 = vmul.f32 %v3030, %v3036
    %v3038 = vadd.f32 %v3037, 0.18741608
    %v3039 = vmul.f32 %v3030, %v3038
    %v3040 = vadd.f32 %v3039, 1.1283791
    %v3041 = vmul.f32 %v706, %v3040
    %v3042 = vmul.f32 %v3030, 3.8918573e-05
    %v3043 = vadd.f32 %v3042, 0.001143296
    %v3044 = vmul.f32 %v3030, %v3043
    %v3045 = vadd.f32 %v3044, 0.014752088
    %v3046 = vmul.f32 %v3030, %v3045
    %v3047 = vadd.f32 %v3046, 0.112945676
    %v3048 = vmul.f32 %v3030, %v3047
    %v3049 = vadd.f32 %v3048, 0.4994258
    %v3050 = vmul.f32 %v3030, %v3049
    %v3051 = vadd.f32 %v3050, 1.0
    %v3052 = vrcp.pop %v3051
    %v3053 = vmul.f32 %v3051, %v3052
    %v3054 = vsub.f32 1.0, %v3053
    %v3055 = vmul.f32 %v3052, %v3054
    %v3056 = vadd.f32 %v3052, %v3055
    %vm3057 = vweird.f32 %v3051
    %vm3058 = vweird.f32 %v3052
    %vm3059 = vmor %vm3057, %vm3058
    %v3060 = vsel %vm3059, %v3052, %v3056
    %v3061 = vand.u32 2147483647, %v3051
    %vm3062 = vcmp.eq.f32.partialorder %v3061, 8.507059e+37
    %v3063 = vand.u32 %v3051, 2147483648
    %v3064 = vor.u32 1.1754944e-38, %v3063
    %v3065 = vsel %vm3062, %v3064, %v3060
    %v3066 = vmul.f32 %v3041, %v3065
    %v3067 = vmin.f32 %v3066, 1.0
    %v3068 = vmax.f32 %v3067, -1.0
    %v3069 = vmul.f32 %v707, %v707
    %v3070 = vmin.f32 16.0, %v3069
    %v3071 = vmul.f32 %v3070, 2.1237322e-06
    %v3072 = vadd.f32 %v3071, 0.00028619796
    %v3073 = vmul.f32 %v3070, %v3072
    %v3074 = vadd.f32 %v3073, 0.0036580483
    %v3075 = vmul.f32 %v3070, %v3074
    %v3076 = vadd.f32 %v3075, 0.05243302
    %v3077 = vmul.f32 %v3070, %v3076
    %v3078 = vadd.f32 %v3077, 0.18741608
    %v3079 = vmul.f32 %v3070, %v3078
    %v3080 = vadd.f32 %v3079, 1.1283791
    %v3081 = vmul.f32 %v707, %v3080
    %v3082 = vmul.f32 %v3070, 3.8918573e-05
    %v3083 = vadd.f32 %v3082, 0.001143296
    %v3084 = vmul.f32 %v3070, %v3083
    %v3085 = vadd.f32 %v3084, 0.014752088
    %v3086 = vmul.f32 %v3070, %v3085
    %v3087 = vadd.f32 %v3086, 0.112945676
    %v3088 = vmul.f32 %v3070, %v3087
    %v3089 = vadd.f32 %v3088, 0.4994258
    %v3090 = vmul.f32 %v3070, %v3089
    %v3091 = vadd.f32 %v3090, 1.0
    %v3092 = vrcp.pop %v3091
    %v3093 = vmul.f32 %v3091, %v3092
    %v3094 = vsub.f32 1.0, %v3093
    %v3095 = vmul.f32 %v3092, %v3094
    %v3096 = vadd.f32 %v3092, %v3095
    %vm3097 = vweird.f32 %v3091
    %vm3098 = vweird.f32 %v3092
    %vm3099 = vmor %vm3097, %vm3098
    %v3100 = vsel %vm3099, %v3092, %v3096
    %v3101 = vand.u32 2147483647, %v3091
    %vm3102 = vcmp.eq.f32.partialorder %v3101, 8.507059e+37
    %v3103 = vand.u32 %v3091, 2147483648
    %v3104 = vor.u32 1.1754944e-38, %v3103
    %v3105 = vsel %vm3102, %v3104, %v3100
    %v3106 = vmul.f32 %v3081, %v3105
    %v3107 = vmin.f32 %v3106, 1.0
    %v3108 = vmax.f32 %v3107, -1.0
    %v3109 = vmul.f32 %v708, %v708
    %v3110 = vmin.f32 16.0, %v3109
    %v3111 = vmul.f32 %v3110, 2.1237322e-06
    %v3112 = vadd.f32 %v3111, 0.00028619796
    %v3113 = vmul.f32 %v3110, %v3112
    %v3114 = vadd.f32 %v3113, 0.0036580483
    %v3115 = vmul.f32 %v3110, %v3114
    %v3116 = vadd.f32 %v3115, 0.05243302
    %v3117 = vmul.f32 %v3110, %v3116
    %v3118 = vadd.f32 %v3117, 0.18741608
    %v3119 = vmul.f32 %v3110, %v3118
    %v3120 = vadd.f32 %v3119, 1.1283791
    %v3121 = vmul.f32 %v708, %v3120
    %v3122 = vmul.f32 %v3110, 3.8918573e-05
    %v3123 = vadd.f32 %v3122, 0.001143296
    %v3124 = vmul.f32 %v3110, %v3123
    %v3125 = vadd.f32 %v3124, 0.014752088
    %v3126 = vmul.f32 %v3110, %v3125
    %v3127 = vadd.f32 %v3126, 0.112945676
    %v3128 = vmul.f32 %v3110, %v3127
    %v3129 = vadd.f32 %v3128, 0.4994258
    %v3130 = vmul.f32 %v3110, %v3129
    %v3131 = vadd.f32 %v3130, 1.0
    %v3132 = vrcp.pop %v3131
    %v3133 = vmul.f32 %v3131, %v3132
    %v3134 = vsub.f32 1.0, %v3133
    %v3135 = vmul.f32 %v3132, %v3134
    %v3136 = vadd.f32 %v3132, %v3135
    %vm3137 = vweird.f32 %v3131
    %vm3138 = vweird.f32 %v3132
    %vm3139 = vmor %vm3137, %vm3138
    %v3140 = vsel %vm3139, %v3132, %v3136
    %v3141 = vand.u32 2147483647, %v3131
    %vm3142 = vcmp.eq.f32.partialorder %v3141, 8.507059e+37
    %v3143 = vand.u32 %v3131, 2147483648
    %v3144 = vor.u32 1.1754944e-38, %v3143
    %v3145 = vsel %vm3142, %v3144, %v3140
    %v3146 = vmul.f32 %v3121, %v3145
    %v3147 = vmin.f32 %v3146, 1.0
    %v3148 = vmax.f32 %v3147, -1.0
    %v3149 = vmul.f32 %v709, %v709
    %v3150 = vmin.f32 16.0, %v3149
    %v3151 = vmul.f32 %v3150, 2.1237322e-06
    %v3152 = vadd.f32 %v3151, 0.00028619796
    %v3153 = vmul.f32 %v3150, %v3152
    %v3154 = vadd.f32 %v3153, 0.0036580483
    %v3155 = vmul.f32 %v3150, %v3154
    %v3156 = vadd.f32 %v3155, 0.05243302
    %v3157 = vmul.f32 %v3150, %v3156
    %v3158 = vadd.f32 %v3157, 0.18741608
    %v3159 = vmul.f32 %v3150, %v3158
    %v3160 = vadd.f32 %v3159, 1.1283791
    %v3161 = vmul.f32 %v709, %v3160
    %v3162 = vmul.f32 %v3150, 3.8918573e-05
    %v3163 = vadd.f32 %v3162, 0.001143296
    %v3164 = vmul.f32 %v3150, %v3163
    %v3165 = vadd.f32 %v3164, 0.014752088
    %v3166 = vmul.f32 %v3150, %v3165
    %v3167 = vadd.f32 %v3166, 0.112945676
    %v3168 = vmul.f32 %v3150, %v3167
    %v3169 = vadd.f32 %v3168, 0.4994258
    %v3170 = vmul.f32 %v3150, %v3169
    %v3171 = vadd.f32 %v3170, 1.0
    %v3172 = vrcp.pop %v3171
    %v3173 = vmul.f32 %v3171, %v3172
    %v3174 = vsub.f32 1.0, %v3173
    %v3175 = vmul.f32 %v3172, %v3174
    %v3176 = vadd.f32 %v3172, %v3175
    %vm3177 = vweird.f32 %v3171
    %vm3178 = vweird.f32 %v3172
    %vm3179 = vmor %vm3177, %vm3178
    %v3180 = vsel %vm3179, %v3172, %v3176
    %v3181 = vand.u32 2147483647, %v3171
    %vm3182 = vcmp.eq.f32.partialorder %v3181, 8.507059e+37
    %v3183 = vand.u32 %v3171, 2147483648
    %v3184 = vor.u32 1.1754944e-38, %v3183
    %v3185 = vsel %vm3182, %v3184, %v3180
    %v3186 = vmul.f32 %v3161, %v3185
    %v3187 = vmin.f32 %v3186, 1.0
    %v3188 = vmax.f32 %v3187, -1.0
    %v3189 = vmul.f32 %v710, %v710
    %v3190 = vmin.f32 16.0, %v3189
    %v3191 = vmul.f32 %v3190, 2.1237322e-06
    %v3192 = vadd.f32 %v3191, 0.00028619796
    %v3193 = vmul.f32 %v3190, %v3192
    %v3194 = vadd.f32 %v3193, 0.0036580483
    %v3195 = vmul.f32 %v3190, %v3194
    %v3196 = vadd.f32 %v3195, 0.05243302
    %v3197 = vmul.f32 %v3190, %v3196
    %v3198 = vadd.f32 %v3197, 0.18741608
    %v3199 = vmul.f32 %v3190, %v3198
    %v3200 = vadd.f32 %v3199, 1.1283791
    %v3201 = vmul.f32 %v710, %v3200
    %v3202 = vmul.f32 %v3190, 3.8918573e-05
    %v3203 = vadd.f32 %v3202, 0.001143296
    %v3204 = vmul.f32 %v3190, %v3203
    %v3205 = vadd.f32 %v3204, 0.014752088
    %v3206 = vmul.f32 %v3190, %v3205
    %v3207 = vadd.f32 %v3206, 0.112945676
    %v3208 = vmul.f32 %v3190, %v3207
    %v3209 = vadd.f32 %v3208, 0.4994258
    %v3210 = vmul.f32 %v3190, %v3209
    %v3211 = vadd.f32 %v3210, 1.0
    %v3212 = vrcp.pop %v3211
    %v3213 = vmul.f32 %v3211, %v3212
    %v3214 = vsub.f32 1.0, %v3213
    %v3215 = vmul.f32 %v3212, %v3214
    %v3216 = vadd.f32 %v3212, %v3215
    %vm3217 = vweird.f32 %v3211
    %vm3218 = vweird.f32 %v3212
    %vm3219 = vmor %vm3217, %vm3218
    %v3220 = vsel %vm3219, %v3212, %v3216
    %v3221 = vand.u32 2147483647, %v3211
    %vm3222 = vcmp.eq.f32.partialorder %v3221, 8.507059e+37
    %v3223 = vand.u32 %v3211, 2147483648
    %v3224 = vor.u32 1.1754944e-38, %v3223
    %v3225 = vsel %vm3222, %v3224, %v3220
    %v3226 = vmul.f32 %v3201, %v3225
    %v3227 = vmin.f32 %v3226, 1.0
    %v3228 = vmax.f32 %v3227, -1.0
    %v3229 = vmul.f32 %v711, %v711
    %v3230 = vmin.f32 16.0, %v3229
    %v3231 = vmul.f32 %v3230, 2.1237322e-06
    %v3232 = vadd.f32 %v3231, 0.00028619796
    %v3233 = vmul.f32 %v3230, %v3232
    %v3234 = vadd.f32 %v3233, 0.0036580483
    %v3235 = vmul.f32 %v3230, %v3234
    %v3236 = vadd.f32 %v3235, 0.05243302
    %v3237 = vmul.f32 %v3230, %v3236
    %v3238 = vadd.f32 %v3237, 0.18741608
    %v3239 = vmul.f32 %v3230, %v3238
    %v3240 = vadd.f32 %v3239, 1.1283791
    %v3241 = vmul.f32 %v711, %v3240
    %v3242 = vmul.f32 %v3230, 3.8918573e-05
    %v3243 = vadd.f32 %v3242, 0.001143296
    %v3244 = vmul.f32 %v3230, %v3243
    %v3245 = vadd.f32 %v3244, 0.014752088
    %v3246 = vmul.f32 %v3230, %v3245
    %v3247 = vadd.f32 %v3246, 0.112945676
    %v3248 = vmul.f32 %v3230, %v3247
    %v3249 = vadd.f32 %v3248, 0.4994258
    %v3250 = vmul.f32 %v3230, %v3249
    %v3251 = vadd.f32 %v3250, 1.0
    %v3252 = vrcp.pop %v3251
    %v3253 = vmul.f32 %v3251, %v3252
    %v3254 = vsub.f32 1.0, %v3253
    %v3255 = vmul.f32 %v3252, %v3254
    %v3256 = vadd.f32 %v3252, %v3255
    %vm3257 = vweird.f32 %v3251
    %vm3258 = vweird.f32 %v3252
    %vm3259 = vmor %vm3257, %vm3258
    %v3260 = vsel %vm3259, %v3252, %v3256
    %v3261 = vand.u32 2147483647, %v3251
    %vm3262 = vcmp.eq.f32.partialorder %v3261, 8.507059e+37
    %v3263 = vand.u32 %v3251, 2147483648
    %v3264 = vor.u32 1.1754944e-38, %v3263
    %v3265 = vsel %vm3262, %v3264, %v3260
    %v3266 = vmul.f32 %v3241, %v3265
    %v3267 = vmin.f32 %v3266, 1.0
    %v3268 = vmax.f32 %v3267, -1.0
    %v3269 = vmul.f32 %v712, %v712
    %v3270 = vmin.f32 16.0, %v3269
    %v3271 = vmul.f32 %v3270, 2.1237322e-06
    %v3272 = vadd.f32 %v3271, 0.00028619796
    %v3273 = vmul.f32 %v3270, %v3272
    %v3274 = vadd.f32 %v3273, 0.0036580483
    %v3275 = vmul.f32 %v3270, %v3274
    %v3276 = vadd.f32 %v3275, 0.05243302
    %v3277 = vmul.f32 %v3270, %v3276
    %v3278 = vadd.f32 %v3277, 0.18741608
    %v3279 = vmul.f32 %v3270, %v3278
    %v3280 = vadd.f32 %v3279, 1.1283791
    %v3281 = vmul.f32 %v712, %v3280
    %v3282 = vmul.f32 %v3270, 3.8918573e-05
    %v3283 = vadd.f32 %v3282, 0.001143296
    %v3284 = vmul.f32 %v3270, %v3283
    %v3285 = vadd.f32 %v3284, 0.014752088
    %v3286 = vmul.f32 %v3270, %v3285
    %v3287 = vadd.f32 %v3286, 0.112945676
    %v3288 = vmul.f32 %v3270, %v3287
    %v3289 = vadd.f32 %v3288, 0.4994258
    %v3290 = vmul.f32 %v3270, %v3289
    %v3291 = vadd.f32 %v3290, 1.0
    %v3292 = vrcp.pop %v3291
    %v3293 = vmul.f32 %v3291, %v3292
    %v3294 = vsub.f32 1.0, %v3293
    %v3295 = vmul.f32 %v3292, %v3294
    %v3296 = vadd.f32 %v3292, %v3295
    %vm3297 = vweird.f32 %v3291
    %vm3298 = vweird.f32 %v3292
    %vm3299 = vmor %vm3297, %vm3298
    %v3300 = vsel %vm3299, %v3292, %v3296
    %v3301 = vand.u32 2147483647, %v3291
    %vm3302 = vcmp.eq.f32.partialorder %v3301, 8.507059e+37
    %v3303 = vand.u32 %v3291, 2147483648
    %v3304 = vor.u32 1.1754944e-38, %v3303
    %v3305 = vsel %vm3302, %v3304, %v3300
    %v3306 = vmul.f32 %v3281, %v3305
    %v3307 = vmin.f32 %v3306, 1.0
    %v3308 = vmax.f32 %v3307, -1.0
    %v3309 = vmul.f32 %v713, %v713
    %v3310 = vmin.f32 16.0, %v3309
    %v3311 = vmul.f32 %v3310, 2.1237322e-06
    %v3312 = vadd.f32 %v3311, 0.00028619796
    %v3313 = vmul.f32 %v3310, %v3312
    %v3314 = vadd.f32 %v3313, 0.0036580483
    %v3315 = vmul.f32 %v3310, %v3314
    %v3316 = vadd.f32 %v3315, 0.05243302
    %v3317 = vmul.f32 %v3310, %v3316
    %v3318 = vadd.f32 %v3317, 0.18741608
    %v3319 = vmul.f32 %v3310, %v3318
    %v3320 = vadd.f32 %v3319, 1.1283791
    %v3321 = vmul.f32 %v713, %v3320
    %v3322 = vmul.f32 %v3310, 3.8918573e-05
    %v3323 = vadd.f32 %v3322, 0.001143296
    %v3324 = vmul.f32 %v3310, %v3323
    %v3325 = vadd.f32 %v3324, 0.014752088
    %v3326 = vmul.f32 %v3310, %v3325
    %v3327 = vadd.f32 %v3326, 0.112945676
    %v3328 = vmul.f32 %v3310, %v3327
    %v3329 = vadd.f32 %v3328, 0.4994258
    %v3330 = vmul.f32 %v3310, %v3329
    %v3331 = vadd.f32 %v3330, 1.0
    %v3332 = vrcp.pop %v3331
    %v3333 = vmul.f32 %v3331, %v3332
    %v3334 = vsub.f32 1.0, %v3333
    %v3335 = vmul.f32 %v3332, %v3334
    %v3336 = vadd.f32 %v3332, %v3335
    %vm3337 = vweird.f32 %v3331
    %vm3338 = vweird.f32 %v3332
    %vm3339 = vmor %vm3337, %vm3338
    %v3340 = vsel %vm3339, %v3332, %v3336
    %v3341 = vand.u32 2147483647, %v3331
    %vm3342 = vcmp.eq.f32.partialorder %v3341, 8.507059e+37
    %v3343 = vand.u32 %v3331, 2147483648
    %v3344 = vor.u32 1.1754944e-38, %v3343
    %v3345 = vsel %vm3342, %v3344, %v3340
    %v3346 = vmul.f32 %v3321, %v3345
    %v3347 = vmin.f32 %v3346, 1.0
    %v3348 = vmax.f32 %v3347, -1.0
    %v3349 = vmul.f32 %v714, %v714
    %v3350 = vmin.f32 16.0, %v3349
    %v3351 = vmul.f32 %v3350, 2.1237322e-06
    %v3352 = vadd.f32 %v3351, 0.00028619796
    %v3353 = vmul.f32 %v3350, %v3352
    %v3354 = vadd.f32 %v3353, 0.0036580483
    %v3355 = vmul.f32 %v3350, %v3354
    %v3356 = vadd.f32 %v3355, 0.05243302
    %v3357 = vmul.f32 %v3350, %v3356
    %v3358 = vadd.f32 %v3357, 0.18741608
    %v3359 = vmul.f32 %v3350, %v3358
    %v3360 = vadd.f32 %v3359, 1.1283791
    %v3361 = vmul.f32 %v714, %v3360
    %v3362 = vmul.f32 %v3350, 3.8918573e-05
    %v3363 = vadd.f32 %v3362, 0.001143296
    %v3364 = vmul.f32 %v3350, %v3363
    %v3365 = vadd.f32 %v3364, 0.014752088
    %v3366 = vmul.f32 %v3350, %v3365
    %v3367 = vadd.f32 %v3366, 0.112945676
    %v3368 = vmul.f32 %v3350, %v3367
    %v3369 = vadd.f32 %v3368, 0.4994258
    %v3370 = vmul.f32 %v3350, %v3369
    %v3371 = vadd.f32 %v3370, 1.0
    %v3372 = vrcp.pop %v3371
    %v3373 = vmul.f32 %v3371, %v3372
    %v3374 = vsub.f32 1.0, %v3373
    %v3375 = vmul.f32 %v3372, %v3374
    %v3376 = vadd.f32 %v3372, %v3375
    %vm3377 = vweird.f32 %v3371
    %vm3378 = vweird.f32 %v3372
    %vm3379 = vmor %vm3377, %vm3378
    %v3380 = vsel %vm3379, %v3372, %v3376
    %v3381 = vand.u32 2147483647, %v3371
    %vm3382 = vcmp.eq.f32.partialorder %v3381, 8.507059e+37
    %v3383 = vand.u32 %v3371, 2147483648
    %v3384 = vor.u32 1.1754944e-38, %v3383
    %v3385 = vsel %vm3382, %v3384, %v3380
    %v3386 = vmul.f32 %v3361, %v3385
    %v3387 = vmin.f32 %v3386, 1.0
    %v3388 = vmax.f32 %v3387, -1.0
    %v3389 = vmul.f32 %v715, %v715
    %v3390 = vmin.f32 16.0, %v3389
    %v3391 = vmul.f32 %v3390, 2.1237322e-06
    %v3392 = vadd.f32 %v3391, 0.00028619796
    %v3393 = vmul.f32 %v3390, %v3392
    %v3394 = vadd.f32 %v3393, 0.0036580483
    %v3395 = vmul.f32 %v3390, %v3394
    %v3396 = vadd.f32 %v3395, 0.05243302
    %v3397 = vmul.f32 %v3390, %v3396
    %v3398 = vadd.f32 %v3397, 0.18741608
    %v3399 = vmul.f32 %v3390, %v3398
    %v3400 = vadd.f32 %v3399, 1.1283791
    %v3401 = vmul.f32 %v715, %v3400
    %v3402 = vmul.f32 %v3390, 3.8918573e-05
    %v3403 = vadd.f32 %v3402, 0.001143296
    %v3404 = vmul.f32 %v3390, %v3403
    %v3405 = vadd.f32 %v3404, 0.014752088
    %v3406 = vmul.f32 %v3390, %v3405
    %v3407 = vadd.f32 %v3406, 0.112945676
    %v3408 = vmul.f32 %v3390, %v3407
    %v3409 = vadd.f32 %v3408, 0.4994258
    %v3410 = vmul.f32 %v3390, %v3409
    %v3411 = vadd.f32 %v3410, 1.0
    %v3412 = vrcp.pop %v3411
    %v3413 = vmul.f32 %v3411, %v3412
    %v3414 = vsub.f32 1.0, %v3413
    %v3415 = vmul.f32 %v3412, %v3414
    %v3416 = vadd.f32 %v3412, %v3415
    %vm3417 = vweird.f32 %v3411
    %vm3418 = vweird.f32 %v3412
    %vm3419 = vmor %vm3417, %vm3418
    %v3420 = vsel %vm3419, %v3412, %v3416
    %v3421 = vand.u32 2147483647, %v3411
    %vm3422 = vcmp.eq.f32.partialorder %v3421, 8.507059e+37
    %v3423 = vand.u32 %v3411, 2147483648
    %v3424 = vor.u32 1.1754944e-38, %v3423
    %v3425 = vsel %vm3422, %v3424, %v3420
    %v3426 = vmul.f32 %v3401, %v3425
    %v3427 = vmin.f32 %v3426, 1.0
    %v3428 = vmax.f32 %v3427, -1.0
    %v3429 = vmul.f32 %v716, %v716
    %v3430 = vmin.f32 16.0, %v3429
    %v3431 = vmul.f32 %v3430, 2.1237322e-06
    %v3432 = vadd.f32 %v3431, 0.00028619796
    %v3433 = vmul.f32 %v3430, %v3432
    %v3434 = vadd.f32 %v3433, 0.0036580483
    %v3435 = vmul.f32 %v3430, %v3434
    %v3436 = vadd.f32 %v3435, 0.05243302
    %v3437 = vmul.f32 %v3430, %v3436
    %v3438 = vadd.f32 %v3437, 0.18741608
    %v3439 = vmul.f32 %v3430, %v3438
    %v3440 = vadd.f32 %v3439, 1.1283791
    %v3441 = vmul.f32 %v716, %v3440
    %v3442 = vmul.f32 %v3430, 3.8918573e-05
    %v3443 = vadd.f32 %v3442, 0.001143296
    %v3444 = vmul.f32 %v3430, %v3443
    %v3445 = vadd.f32 %v3444, 0.014752088
    %v3446 = vmul.f32 %v3430, %v3445
    %v3447 = vadd.f32 %v3446, 0.112945676
    %v3448 = vmul.f32 %v3430, %v3447
    %v3449 = vadd.f32 %v3448, 0.4994258
    %v3450 = vmul.f32 %v3430, %v3449
    %v3451 = vadd.f32 %v3450, 1.0
    %v3452 = vrcp.pop %v3451
    %v3453 = vmul.f32 %v3451, %v3452
    %v3454 = vsub.f32 1.0, %v3453
    %v3455 = vmul.f32 %v3452, %v3454
    %v3456 = vadd.f32 %v3452, %v3455
    %vm3457 = vweird.f32 %v3451
    %vm3458 = vweird.f32 %v3452
    %vm3459 = vmor %vm3457, %vm3458
    %v3460 = vsel %vm3459, %v3452, %v3456
    %v3461 = vand.u32 2147483647, %v3451
    %vm3462 = vcmp.eq.f32.partialorder %v3461, 8.507059e+37
    %v3463 = vand.u32 %v3451, 2147483648
    %v3464 = vor.u32 1.1754944e-38, %v3463
    %v3465 = vsel %vm3462, %v3464, %v3460
    %v3466 = vmul.f32 %v3441, %v3465
    %v3467 = vmin.f32 %v3466, 1.0
    %v3468 = vmax.f32 %v3467, -1.0
    %v3469 = vmul.f32 %v717, %v717
    %v3470 = vmin.f32 16.0, %v3469
    %v3471 = vmul.f32 %v3470, 2.1237322e-06
    %v3472 = vadd.f32 %v3471, 0.00028619796
    %v3473 = vmul.f32 %v3470, %v3472
    %v3474 = vadd.f32 %v3473, 0.0036580483
    %v3475 = vmul.f32 %v3470, %v3474
    %v3476 = vadd.f32 %v3475, 0.05243302
    %v3477 = vmul.f32 %v3470, %v3476
    %v3478 = vadd.f32 %v3477, 0.18741608
    %v3479 = vmul.f32 %v3470, %v3478
    %v3480 = vadd.f32 %v3479, 1.1283791
    %v3481 = vmul.f32 %v717, %v3480
    %v3482 = vmul.f32 %v3470, 3.8918573e-05
    %v3483 = vadd.f32 %v3482, 0.001143296
    %v3484 = vmul.f32 %v3470, %v3483
    %v3485 = vadd.f32 %v3484, 0.014752088
    %v3486 = vmul.f32 %v3470, %v3485
    %v3487 = vadd.f32 %v3486, 0.112945676
    %v3488 = vmul.f32 %v3470, %v3487
    %v3489 = vadd.f32 %v3488, 0.4994258
    %v3490 = vmul.f32 %v3470, %v3489
    %v3491 = vadd.f32 %v3490, 1.0
    %v3492 = vrcp.pop %v3491
    %v3493 = vmul.f32 %v3491, %v3492
    %v3494 = vsub.f32 1.0, %v3493
    %v3495 = vmul.f32 %v3492, %v3494
    %v3496 = vadd.f32 %v3492, %v3495
    %vm3497 = vweird.f32 %v3491
    %vm3498 = vweird.f32 %v3492
    %vm3499 = vmor %vm3497, %vm3498
    %v3500 = vsel %vm3499, %v3492, %v3496
    %v3501 = vand.u32 2147483647, %v3491
    %vm3502 = vcmp.eq.f32.partialorder %v3501, 8.507059e+37
    %v3503 = vand.u32 %v3491, 2147483648
    %v3504 = vor.u32 1.1754944e-38, %v3503
    %v3505 = vsel %vm3502, %v3504, %v3500
    %v3506 = vmul.f32 %v3481, %v3505
    %v3507 = vmin.f32 %v3506, 1.0
    %v3508 = vmax.f32 %v3507, -1.0
    %v3509 = vmul.f32 %v718, %v718
    %v3510 = vmin.f32 16.0, %v3509
    %v3511 = vmul.f32 %v3510, 2.1237322e-06
    %v3512 = vadd.f32 %v3511, 0.00028619796
    %v3513 = vmul.f32 %v3510, %v3512
    %v3514 = vadd.f32 %v3513, 0.0036580483
    %v3515 = vmul.f32 %v3510, %v3514
    %v3516 = vadd.f32 %v3515, 0.05243302
    %v3517 = vmul.f32 %v3510, %v3516
    %v3518 = vadd.f32 %v3517, 0.18741608
    %v3519 = vmul.f32 %v3510, %v3518
    %v3520 = vadd.f32 %v3519, 1.1283791
    %v3521 = vmul.f32 %v718, %v3520
    %v3522 = vmul.f32 %v3510, 3.8918573e-05
    %v3523 = vadd.f32 %v3522, 0.001143296
    %v3524 = vmul.f32 %v3510, %v3523
    %v3525 = vadd.f32 %v3524, 0.014752088
    %v3526 = vmul.f32 %v3510, %v3525
    %v3527 = vadd.f32 %v3526, 0.112945676
    %v3528 = vmul.f32 %v3510, %v3527
    %v3529 = vadd.f32 %v3528, 0.4994258
    %v3530 = vmul.f32 %v3510, %v3529
    %v3531 = vadd.f32 %v3530, 1.0
    %v3532 = vrcp.pop %v3531
    %v3533 = vmul.f32 %v3531, %v3532
    %v3534 = vsub.f32 1.0, %v3533
    %v3535 = vmul.f32 %v3532, %v3534
    %v3536 = vadd.f32 %v3532, %v3535
    %vm3537 = vweird.f32 %v3531
    %vm3538 = vweird.f32 %v3532
    %vm3539 = vmor %vm3537, %vm3538
    %v3540 = vsel %vm3539, %v3532, %v3536
    %v3541 = vand.u32 2147483647, %v3531
    %vm3542 = vcmp.eq.f32.partialorder %v3541, 8.507059e+37
    %v3543 = vand.u32 %v3531, 2147483648
    %v3544 = vor.u32 1.1754944e-38, %v3543
    %v3545 = vsel %vm3542, %v3544, %v3540
    %v3546 = vmul.f32 %v3521, %v3545
    %v3547 = vmin.f32 %v3546, 1.0
    %v3548 = vmax.f32 %v3547, -1.0
    %v3549 = vmul.f32 %v719, %v719
    %v3550 = vmin.f32 16.0, %v3549
    %v3551 = vmul.f32 %v3550, 2.1237322e-06
    %v3552 = vadd.f32 %v3551, 0.00028619796
    %v3553 = vmul.f32 %v3550, %v3552
    %v3554 = vadd.f32 %v3553, 0.0036580483
    %v3555 = vmul.f32 %v3550, %v3554
    %v3556 = vadd.f32 %v3555, 0.05243302
    %v3557 = vmul.f32 %v3550, %v3556
    %v3558 = vadd.f32 %v3557, 0.18741608
    %v3559 = vmul.f32 %v3550, %v3558
    %v3560 = vadd.f32 %v3559, 1.1283791
    %v3561 = vmul.f32 %v719, %v3560
    %v3562 = vmul.f32 %v3550, 3.8918573e-05
    %v3563 = vadd.f32 %v3562, 0.001143296
    %v3564 = vmul.f32 %v3550, %v3563
    %v3565 = vadd.f32 %v3564, 0.014752088
    %v3566 = vmul.f32 %v3550, %v3565
    %v3567 = vadd.f32 %v3566, 0.112945676
    %v3568 = vmul.f32 %v3550, %v3567
    %v3569 = vadd.f32 %v3568, 0.4994258
    %v3570 = vmul.f32 %v3550, %v3569
    %v3571 = vadd.f32 %v3570, 1.0
    %v3572 = vrcp.pop %v3571
    %v3573 = vmul.f32 %v3571, %v3572
    %v3574 = vsub.f32 1.0, %v3573
    %v3575 = vmul.f32 %v3572, %v3574
    %v3576 = vadd.f32 %v3572, %v3575
    %vm3577 = vweird.f32 %v3571
    %vm3578 = vweird.f32 %v3572
    %vm3579 = vmor %vm3577, %vm3578
    %v3580 = vsel %vm3579, %v3572, %v3576
    %v3581 = vand.u32 2147483647, %v3571
    %vm3582 = vcmp.eq.f32.partialorder %v3581, 8.507059e+37
    %v3583 = vand.u32 %v3571, 2147483648
    %v3584 = vor.u32 1.1754944e-38, %v3583
    %v3585 = vsel %vm3582, %v3584, %v3580
    %v3586 = vmul.f32 %v3561, %v3585
    %v3587 = vmin.f32 %v3586, 1.0
    %v3588 = vmax.f32 %v3587, -1.0
    %v3589 = vmul.f32 %v720, %v720
    %v3590 = vmin.f32 16.0, %v3589
    %v3591 = vmul.f32 %v3590, 2.1237322e-06
    %v3592 = vadd.f32 %v3591, 0.00028619796
    %v3593 = vmul.f32 %v3590, %v3592
    %v3594 = vadd.f32 %v3593, 0.0036580483
    %v3595 = vmul.f32 %v3590, %v3594
    %v3596 = vadd.f32 %v3595, 0.05243302
    %v3597 = vmul.f32 %v3590, %v3596
    %v3598 = vadd.f32 %v3597, 0.18741608
    %v3599 = vmul.f32 %v3590, %v3598
    %v3600 = vadd.f32 %v3599, 1.1283791
    %v3601 = vmul.f32 %v720, %v3600
    %v3602 = vmul.f32 %v3590, 3.8918573e-05
    %v3603 = vadd.f32 %v3602, 0.001143296
    %v3604 = vmul.f32 %v3590, %v3603
    %v3605 = vadd.f32 %v3604, 0.014752088
    %v3606 = vmul.f32 %v3590, %v3605
    %v3607 = vadd.f32 %v3606, 0.112945676
    %v3608 = vmul.f32 %v3590, %v3607
    %v3609 = vadd.f32 %v3608, 0.4994258
    %v3610 = vmul.f32 %v3590, %v3609
    %v3611 = vadd.f32 %v3610, 1.0
    %v3612 = vrcp.pop %v3611
    %v3613 = vmul.f32 %v3611, %v3612
    %v3614 = vsub.f32 1.0, %v3613
    %v3615 = vmul.f32 %v3612, %v3614
    %v3616 = vadd.f32 %v3612, %v3615
    %vm3617 = vweird.f32 %v3611
    %vm3618 = vweird.f32 %v3612
    %vm3619 = vmor %vm3617, %vm3618
    %v3620 = vsel %vm3619, %v3612, %v3616
    %v3621 = vand.u32 2147483647, %v3611
    %vm3622 = vcmp.eq.f32.partialorder %v3621, 8.507059e+37
    %v3623 = vand.u32 %v3611, 2147483648
    %v3624 = vor.u32 1.1754944e-38, %v3623
    %v3625 = vsel %vm3622, %v3624, %v3620
    %v3626 = vmul.f32 %v3601, %v3625
    %v3627 = vmin.f32 %v3626, 1.0
    %v3628 = vmax.f32 %v3627, -1.0
    %v3629 = vmul.f32 %v721, %v721
    %v3630 = vmin.f32 16.0, %v3629
    %v3631 = vmul.f32 %v3630, 2.1237322e-06
    %v3632 = vadd.f32 %v3631, 0.00028619796
    %v3633 = vmul.f32 %v3630, %v3632
    %v3634 = vadd.f32 %v3633, 0.0036580483
    %v3635 = vmul.f32 %v3630, %v3634
    %v3636 = vadd.f32 %v3635, 0.05243302
    %v3637 = vmul.f32 %v3630, %v3636
    %v3638 = vadd.f32 %v3637, 0.18741608
    %v3639 = vmul.f32 %v3630, %v3638
    %v3640 = vadd.f32 %v3639, 1.1283791
    %v3641 = vmul.f32 %v721, %v3640
    %v3642 = vmul.f32 %v3630, 3.8918573e-05
    %v3643 = vadd.f32 %v3642, 0.001143296
    %v3644 = vmul.f32 %v3630, %v3643
    %v3645 = vadd.f32 %v3644, 0.014752088
    %v3646 = vmul.f32 %v3630, %v3645
    %v3647 = vadd.f32 %v3646, 0.112945676
    %v3648 = vmul.f32 %v3630, %v3647
    %v3649 = vadd.f32 %v3648, 0.4994258
    %v3650 = vmul.f32 %v3630, %v3649
    %v3651 = vadd.f32 %v3650, 1.0
    %v3652 = vrcp.pop %v3651
    %v3653 = vmul.f32 %v3651, %v3652
    %v3654 = vsub.f32 1.0, %v3653
    %v3655 = vmul.f32 %v3652, %v3654
    %v3656 = vadd.f32 %v3652, %v3655
    %vm3657 = vweird.f32 %v3651
    %vm3658 = vweird.f32 %v3652
    %vm3659 = vmor %vm3657, %vm3658
    %v3660 = vsel %vm3659, %v3652, %v3656
    %v3661 = vand.u32 2147483647, %v3651
    %vm3662 = vcmp.eq.f32.partialorder %v3661, 8.507059e+37
    %v3663 = vand.u32 %v3651, 2147483648
    %v3664 = vor.u32 1.1754944e-38, %v3663
    %v3665 = vsel %vm3662, %v3664, %v3660
    %v3666 = vmul.f32 %v3641, %v3665
    %v3667 = vmin.f32 %v3666, 1.0
    %v3668 = vmax.f32 %v3667, -1.0
    %v3669 = vmul.f32 %v722, %v722
    %v3670 = vmin.f32 16.0, %v3669
    %v3671 = vmul.f32 %v3670, 2.1237322e-06
    %v3672 = vadd.f32 %v3671, 0.00028619796
    %v3673 = vmul.f32 %v3670, %v3672
    %v3674 = vadd.f32 %v3673, 0.0036580483
    %v3675 = vmul.f32 %v3670, %v3674
    %v3676 = vadd.f32 %v3675, 0.05243302
    %v3677 = vmul.f32 %v3670, %v3676
    %v3678 = vadd.f32 %v3677, 0.18741608
    %v3679 = vmul.f32 %v3670, %v3678
    %v3680 = vadd.f32 %v3679, 1.1283791
    %v3681 = vmul.f32 %v722, %v3680
    %v3682 = vmul.f32 %v3670, 3.8918573e-05
    %v3683 = vadd.f32 %v3682, 0.001143296
    %v3684 = vmul.f32 %v3670, %v3683
    %v3685 = vadd.f32 %v3684, 0.014752088
    %v3686 = vmul.f32 %v3670, %v3685
    %v3687 = vadd.f32 %v3686, 0.112945676
    %v3688 = vmul.f32 %v3670, %v3687
    %v3689 = vadd.f32 %v3688, 0.4994258
    %v3690 = vmul.f32 %v3670, %v3689
    %v3691 = vadd.f32 %v3690, 1.0
    %v3692 = vrcp.pop %v3691
    %v3693 = vmul.f32 %v3691, %v3692
    %v3694 = vsub.f32 1.0, %v3693
    %v3695 = vmul.f32 %v3692, %v3694
    %v3696 = vadd.f32 %v3692, %v3695
    %vm3697 = vweird.f32 %v3691
    %vm3698 = vweird.f32 %v3692
    %vm3699 = vmor %vm3697, %vm3698
    %v3700 = vsel %vm3699, %v3692, %v3696
    %v3701 = vand.u32 2147483647, %v3691
    %vm3702 = vcmp.eq.f32.partialorder %v3701, 8.507059e+37
    %v3703 = vand.u32 %v3691, 2147483648
    %v3704 = vor.u32 1.1754944e-38, %v3703
    %v3705 = vsel %vm3702, %v3704, %v3700
    %v3706 = vmul.f32 %v3681, %v3705
    %v3707 = vmin.f32 %v3706, 1.0
    %v3708 = vmax.f32 %v3707, -1.0
    %v3709 = vmul.f32 %v723, %v723
    %v3710 = vmin.f32 16.0, %v3709
    %v3711 = vmul.f32 %v3710, 2.1237322e-06
    %v3712 = vadd.f32 %v3711, 0.00028619796
    %v3713 = vmul.f32 %v3710, %v3712
    %v3714 = vadd.f32 %v3713, 0.0036580483
    %v3715 = vmul.f32 %v3710, %v3714
    %v3716 = vadd.f32 %v3715, 0.05243302
    %v3717 = vmul.f32 %v3710, %v3716
    %v3718 = vadd.f32 %v3717, 0.18741608
    %v3719 = vmul.f32 %v3710, %v3718
    %v3720 = vadd.f32 %v3719, 1.1283791
    %v3721 = vmul.f32 %v723, %v3720
    %v3722 = vmul.f32 %v3710, 3.8918573e-05
    %v3723 = vadd.f32 %v3722, 0.001143296
    %v3724 = vmul.f32 %v3710, %v3723
    %v3725 = vadd.f32 %v3724, 0.014752088
    %v3726 = vmul.f32 %v3710, %v3725
    %v3727 = vadd.f32 %v3726, 0.112945676
    %v3728 = vmul.f32 %v3710, %v3727
    %v3729 = vadd.f32 %v3728, 0.4994258
    %v3730 = vmul.f32 %v3710, %v3729
    %v3731 = vadd.f32 %v3730, 1.0
    %v3732 = vrcp.pop %v3731
    %v3733 = vmul.f32 %v3731, %v3732
    %v3734 = vsub.f32 1.0, %v3733
    %v3735 = vmul.f32 %v3732, %v3734
    %v3736 = vadd.f32 %v3732, %v3735
    %vm3737 = vweird.f32 %v3731
    %vm3738 = vweird.f32 %v3732
    %vm3739 = vmor %vm3737, %vm3738
    %v3740 = vsel %vm3739, %v3732, %v3736
    %v3741 = vand.u32 2147483647, %v3731
    %vm3742 = vcmp.eq.f32.partialorder %v3741, 8.507059e+37
    %v3743 = vand.u32 %v3731, 2147483648
    %v3744 = vor.u32 1.1754944e-38, %v3743
    %v3745 = vsel %vm3742, %v3744, %v3740
    %v3746 = vmul.f32 %v3721, %v3745
    %v3747 = vmin.f32 %v3746, 1.0
    %v3748 = vmax.f32 %v3747, -1.0
    %v3749 = vmul.f32 %v724, %v724
    %v3750 = vmin.f32 16.0, %v3749
    %v3751 = vmul.f32 %v3750, 2.1237322e-06
    %v3752 = vadd.f32 %v3751, 0.00028619796
    %v3753 = vmul.f32 %v3750, %v3752
    %v3754 = vadd.f32 %v3753, 0.0036580483
    %v3755 = vmul.f32 %v3750, %v3754
    %v3756 = vadd.f32 %v3755, 0.05243302
    %v3757 = vmul.f32 %v3750, %v3756
    %v3758 = vadd.f32 %v3757, 0.18741608
    %v3759 = vmul.f32 %v3750, %v3758
    %v3760 = vadd.f32 %v3759, 1.1283791
    %v3761 = vmul.f32 %v724, %v3760
    %v3762 = vmul.f32 %v3750, 3.8918573e-05
    %v3763 = vadd.f32 %v3762, 0.001143296
    %v3764 = vmul.f32 %v3750, %v3763
    %v3765 = vadd.f32 %v3764, 0.014752088
    %v3766 = vmul.f32 %v3750, %v3765
    %v3767 = vadd.f32 %v3766, 0.112945676
    %v3768 = vmul.f32 %v3750, %v3767
    %v3769 = vadd.f32 %v3768, 0.4994258
    %v3770 = vmul.f32 %v3750, %v3769
    %v3771 = vadd.f32 %v3770, 1.0
    %v3772 = vrcp.pop %v3771
    %v3773 = vmul.f32 %v3771, %v3772
    %v3774 = vsub.f32 1.0, %v3773
    %v3775 = vmul.f32 %v3772, %v3774
    %v3776 = vadd.f32 %v3772, %v3775
    %vm3777 = vweird.f32 %v3771
    %vm3778 = vweird.f32 %v3772
    %vm3779 = vmor %vm3777, %vm3778
    %v3780 = vsel %vm3779, %v3772, %v3776
    %v3781 = vand.u32 2147483647, %v3771
    %vm3782 = vcmp.eq.f32.partialorder %v3781, 8.507059e+37
    %v3783 = vand.u32 %v3771, 2147483648
    %v3784 = vor.u32 1.1754944e-38, %v3783
    %v3785 = vsel %vm3782, %v3784, %v3780
    %v3786 = vmul.f32 %v3761, %v3785
    %v3787 = vmin.f32 %v3786, 1.0
    %v3788 = vmax.f32 %v3787, -1.0
    %v3789 = vmul.f32 %v725, %v725
    %v3790 = vmin.f32 16.0, %v3789
    %v3791 = vmul.f32 %v3790, 2.1237322e-06
    %v3792 = vadd.f32 %v3791, 0.00028619796
    %v3793 = vmul.f32 %v3790, %v3792
    %v3794 = vadd.f32 %v3793, 0.0036580483
    %v3795 = vmul.f32 %v3790, %v3794
    %v3796 = vadd.f32 %v3795, 0.05243302
    %v3797 = vmul.f32 %v3790, %v3796
    %v3798 = vadd.f32 %v3797, 0.18741608
    %v3799 = vmul.f32 %v3790, %v3798
    %v3800 = vadd.f32 %v3799, 1.1283791
    %v3801 = vmul.f32 %v725, %v3800
    %v3802 = vmul.f32 %v3790, 3.8918573e-05
    %v3803 = vadd.f32 %v3802, 0.001143296
    %v3804 = vmul.f32 %v3790, %v3803
    %v3805 = vadd.f32 %v3804, 0.014752088
    %v3806 = vmul.f32 %v3790, %v3805
    %v3807 = vadd.f32 %v3806, 0.112945676
    %v3808 = vmul.f32 %v3790, %v3807
    %v3809 = vadd.f32 %v3808, 0.4994258
    %v3810 = vmul.f32 %v3790, %v3809
    %v3811 = vadd.f32 %v3810, 1.0
    %v3812 = vrcp.pop %v3811
    %v3813 = vmul.f32 %v3811, %v3812
    %v3814 = vsub.f32 1.0, %v3813
    %v3815 = vmul.f32 %v3812, %v3814
    %v3816 = vadd.f32 %v3812, %v3815
    %vm3817 = vweird.f32 %v3811
    %vm3818 = vweird.f32 %v3812
    %vm3819 = vmor %vm3817, %vm3818
    %v3820 = vsel %vm3819, %v3812, %v3816
    %v3821 = vand.u32 2147483647, %v3811
    %vm3822 = vcmp.eq.f32.partialorder %v3821, 8.507059e+37
    %v3823 = vand.u32 %v3811, 2147483648
    %v3824 = vor.u32 1.1754944e-38, %v3823
    %v3825 = vsel %vm3822, %v3824, %v3820
    %v3826 = vmul.f32 %v3801, %v3825
    %v3827 = vmin.f32 %v3826, 1.0
    %v3828 = vmax.f32 %v3827, -1.0
    %v3829 = vmul.f32 %v726, %v726
    %v3830 = vmin.f32 16.0, %v3829
    %v3831 = vmul.f32 %v3830, 2.1237322e-06
    %v3832 = vadd.f32 %v3831, 0.00028619796
    %v3833 = vmul.f32 %v3830, %v3832
    %v3834 = vadd.f32 %v3833, 0.0036580483
    %v3835 = vmul.f32 %v3830, %v3834
    %v3836 = vadd.f32 %v3835, 0.05243302
    %v3837 = vmul.f32 %v3830, %v3836
    %v3838 = vadd.f32 %v3837, 0.18741608
    %v3839 = vmul.f32 %v3830, %v3838
    %v3840 = vadd.f32 %v3839, 1.1283791
    %v3841 = vmul.f32 %v726, %v3840
    %v3842 = vmul.f32 %v3830, 3.8918573e-05
    %v3843 = vadd.f32 %v3842, 0.001143296
    %v3844 = vmul.f32 %v3830, %v3843
    %v3845 = vadd.f32 %v3844, 0.014752088
    %v3846 = vmul.f32 %v3830, %v3845
    %v3847 = vadd.f32 %v3846, 0.112945676
    %v3848 = vmul.f32 %v3830, %v3847
    %v3849 = vadd.f32 %v3848, 0.4994258
    %v3850 = vmul.f32 %v3830, %v3849
    %v3851 = vadd.f32 %v3850, 1.0
    %v3852 = vrcp.pop %v3851
    %v3853 = vmul.f32 %v3851, %v3852
    %v3854 = vsub.f32 1.0, %v3853
    %v3855 = vmul.f32 %v3852, %v3854
    %v3856 = vadd.f32 %v3852, %v3855
    %vm3857 = vweird.f32 %v3851
    %vm3858 = vweird.f32 %v3852
    %vm3859 = vmor %vm3857, %vm3858
    %v3860 = vsel %vm3859, %v3852, %v3856
    %v3861 = vand.u32 2147483647, %v3851
    %vm3862 = vcmp.eq.f32.partialorder %v3861, 8.507059e+37
    %v3863 = vand.u32 %v3851, 2147483648
    %v3864 = vor.u32 1.1754944e-38, %v3863
    %v3865 = vsel %vm3862, %v3864, %v3860
    %v3866 = vmul.f32 %v3841, %v3865
    %v3867 = vmin.f32 %v3866, 1.0
    %v3868 = vmax.f32 %v3867, -1.0
    %v3869 = vmul.f32 %v727, %v727
    %v3870 = vmin.f32 16.0, %v3869
    %v3871 = vmul.f32 %v3870, 2.1237322e-06
    %v3872 = vadd.f32 %v3871, 0.00028619796
    %v3873 = vmul.f32 %v3870, %v3872
    %v3874 = vadd.f32 %v3873, 0.0036580483
    %v3875 = vmul.f32 %v3870, %v3874
    %v3876 = vadd.f32 %v3875, 0.05243302
    %v3877 = vmul.f32 %v3870, %v3876
    %v3878 = vadd.f32 %v3877, 0.18741608
    %v3879 = vmul.f32 %v3870, %v3878
    %v3880 = vadd.f32 %v3879, 1.1283791
    %v3881 = vmul.f32 %v727, %v3880
    %v3882 = vmul.f32 %v3870, 3.8918573e-05
    %v3883 = vadd.f32 %v3882, 0.001143296
    %v3884 = vmul.f32 %v3870, %v3883
    %v3885 = vadd.f32 %v3884, 0.014752088
    %v3886 = vmul.f32 %v3870, %v3885
    %v3887 = vadd.f32 %v3886, 0.112945676
    %v3888 = vmul.f32 %v3870, %v3887
    %v3889 = vadd.f32 %v3888, 0.4994258
    %v3890 = vmul.f32 %v3870, %v3889
    %v3891 = vadd.f32 %v3890, 1.0
    %v3892 = vrcp.pop %v3891
    %v3893 = vmul.f32 %v3891, %v3892
    %v3894 = vsub.f32 1.0, %v3893
    %v3895 = vmul.f32 %v3892, %v3894
    %v3896 = vadd.f32 %v3892, %v3895
    %vm3897 = vweird.f32 %v3891
    %vm3898 = vweird.f32 %v3892
    %vm3899 = vmor %vm3897, %vm3898
    %v3900 = vsel %vm3899, %v3892, %v3896
    %v3901 = vand.u32 2147483647, %v3891
    %vm3902 = vcmp.eq.f32.partialorder %v3901, 8.507059e+37
    %v3903 = vand.u32 %v3891, 2147483648
    %v3904 = vor.u32 1.1754944e-38, %v3903
    %v3905 = vsel %vm3902, %v3904, %v3900
    %v3906 = vmul.f32 %v3881, %v3905
    %v3907 = vmin.f32 %v3906, 1.0
    %v3908 = vmax.f32 %v3907, -1.0
    %v3909 = vmul.f32 %v728, %v728
    %v3910 = vmin.f32 16.0, %v3909
    %v3911 = vmul.f32 %v3910, 2.1237322e-06
    %v3912 = vadd.f32 %v3911, 0.00028619796
    %v3913 = vmul.f32 %v3910, %v3912
    %v3914 = vadd.f32 %v3913, 0.0036580483
    %v3915 = vmul.f32 %v3910, %v3914
    %v3916 = vadd.f32 %v3915, 0.05243302
    %v3917 = vmul.f32 %v3910, %v3916
    %v3918 = vadd.f32 %v3917, 0.18741608
    %v3919 = vmul.f32 %v3910, %v3918
    %v3920 = vadd.f32 %v3919, 1.1283791
    %v3921 = vmul.f32 %v728, %v3920
    %v3922 = vmul.f32 %v3910, 3.8918573e-05
    %v3923 = vadd.f32 %v3922, 0.001143296
    %v3924 = vmul.f32 %v3910, %v3923
    %v3925 = vadd.f32 %v3924, 0.014752088
    %v3926 = vmul.f32 %v3910, %v3925
    %v3927 = vadd.f32 %v3926, 0.112945676
    %v3928 = vmul.f32 %v3910, %v3927
    %v3929 = vadd.f32 %v3928, 0.4994258
    %v3930 = vmul.f32 %v3910, %v3929
    %v3931 = vadd.f32 %v3930, 1.0
    %v3932 = vrcp.pop %v3931
    %v3933 = vmul.f32 %v3931, %v3932
    %v3934 = vsub.f32 1.0, %v3933
    %v3935 = vmul.f32 %v3932, %v3934
    %v3936 = vadd.f32 %v3932, %v3935
    %vm3937 = vweird.f32 %v3931
    %vm3938 = vweird.f32 %v3932
    %vm3939 = vmor %vm3937, %vm3938
    %v3940 = vsel %vm3939, %v3932, %v3936
    %v3941 = vand.u32 2147483647, %v3931
    %vm3942 = vcmp.eq.f32.partialorder %v3941, 8.507059e+37
    %v3943 = vand.u32 %v3931, 2147483648
    %v3944 = vor.u32 1.1754944e-38, %v3943
    %v3945 = vsel %vm3942, %v3944, %v3940
    %v3946 = vmul.f32 %v3921, %v3945
    %v3947 = vmin.f32 %v3946, 1.0
    %v3948 = vmax.f32 %v3947, -1.0
    %v3949 = vmul.f32 %v729, %v729
    %v3950 = vmin.f32 16.0, %v3949
    %v3951 = vmul.f32 %v3950, 2.1237322e-06
    %v3952 = vadd.f32 %v3951, 0.00028619796
    %v3953 = vmul.f32 %v3950, %v3952
    %v3954 = vadd.f32 %v3953, 0.0036580483
    %v3955 = vmul.f32 %v3950, %v3954
    %v3956 = vadd.f32 %v3955, 0.05243302
    %v3957 = vmul.f32 %v3950, %v3956
    %v3958 = vadd.f32 %v3957, 0.18741608
    %v3959 = vmul.f32 %v3950, %v3958
    %v3960 = vadd.f32 %v3959, 1.1283791
    %v3961 = vmul.f32 %v729, %v3960
    %v3962 = vmul.f32 %v3950, 3.8918573e-05
    %v3963 = vadd.f32 %v3962, 0.001143296
    %v3964 = vmul.f32 %v3950, %v3963
    %v3965 = vadd.f32 %v3964, 0.014752088
    %v3966 = vmul.f32 %v3950, %v3965
    %v3967 = vadd.f32 %v3966, 0.112945676
    %v3968 = vmul.f32 %v3950, %v3967
    %v3969 = vadd.f32 %v3968, 0.4994258
    %v3970 = vmul.f32 %v3950, %v3969
    %v3971 = vadd.f32 %v3970, 1.0
    %v3972 = vrcp.pop %v3971
    %v3973 = vmul.f32 %v3971, %v3972
    %v3974 = vsub.f32 1.0, %v3973
    %v3975 = vmul.f32 %v3972, %v3974
    %v3976 = vadd.f32 %v3972, %v3975
    %vm3977 = vweird.f32 %v3971
    %vm3978 = vweird.f32 %v3972
    %vm3979 = vmor %vm3977, %vm3978
    %v3980 = vsel %vm3979, %v3972, %v3976
    %v3981 = vand.u32 2147483647, %v3971
    %vm3982 = vcmp.eq.f32.partialorder %v3981, 8.507059e+37
    %v3983 = vand.u32 %v3971, 2147483648
    %v3984 = vor.u32 1.1754944e-38, %v3983
    %v3985 = vsel %vm3982, %v3984, %v3980
    %v3986 = vmul.f32 %v3961, %v3985
    %v3987 = vmin.f32 %v3986, 1.0
    %v3988 = vmax.f32 %v3987, -1.0
    %v3989 = vmul.f32 %v730, %v730
    %v3990 = vmin.f32 16.0, %v3989
    %v3991 = vmul.f32 %v3990, 2.1237322e-06
    %v3992 = vadd.f32 %v3991, 0.00028619796
    %v3993 = vmul.f32 %v3990, %v3992
    %v3994 = vadd.f32 %v3993, 0.0036580483
    %v3995 = vmul.f32 %v3990, %v3994
    %v3996 = vadd.f32 %v3995, 0.05243302
    %v3997 = vmul.f32 %v3990, %v3996
    %v3998 = vadd.f32 %v3997, 0.18741608
    %v3999 = vmul.f32 %v3990, %v3998
    %v4000 = vadd.f32 %v3999, 1.1283791
    %v4001 = vmul.f32 %v730, %v4000
    %v4002 = vmul.f32 %v3990, 3.8918573e-05
    %v4003 = vadd.f32 %v4002, 0.001143296
    %v4004 = vmul.f32 %v3990, %v4003
    %v4005 = vadd.f32 %v4004, 0.014752088
    %v4006 = vmul.f32 %v3990, %v4005
    %v4007 = vadd.f32 %v4006, 0.112945676
    %v4008 = vmul.f32 %v3990, %v4007
    %v4009 = vadd.f32 %v4008, 0.4994258
    %v4010 = vmul.f32 %v3990, %v4009
    %v4011 = vadd.f32 %v4010, 1.0
    %v4012 = vrcp.pop %v4011
    %v4013 = vmul.f32 %v4011, %v4012
    %v4014 = vsub.f32 1.0, %v4013
    %v4015 = vmul.f32 %v4012, %v4014
    %v4016 = vadd.f32 %v4012, %v4015
    %vm4017 = vweird.f32 %v4011
    %vm4018 = vweird.f32 %v4012
    %vm4019 = vmor %vm4017, %vm4018
    %v4020 = vsel %vm4019, %v4012, %v4016
    %v4021 = vand.u32 2147483647, %v4011
    %vm4022 = vcmp.eq.f32.partialorder %v4021, 8.507059e+37
    %v4023 = vand.u32 %v4011, 2147483648
    %v4024 = vor.u32 1.1754944e-38, %v4023
    %v4025 = vsel %vm4022, %v4024, %v4020
    %v4026 = vmul.f32 %v4001, %v4025
    %v4027 = vmin.f32 %v4026, 1.0
    %v4028 = vmax.f32 %v4027, -1.0
    %v4029 = vmul.f32 %v731, %v731
    %v4030 = vmin.f32 16.0, %v4029
    %v4031 = vmul.f32 %v4030, 2.1237322e-06
    %v4032 = vadd.f32 %v4031, 0.00028619796
    %v4033 = vmul.f32 %v4030, %v4032
    %v4034 = vadd.f32 %v4033, 0.0036580483
    %v4035 = vmul.f32 %v4030, %v4034
    %v4036 = vadd.f32 %v4035, 0.05243302
    %v4037 = vmul.f32 %v4030, %v4036
    %v4038 = vadd.f32 %v4037, 0.18741608
    %v4039 = vmul.f32 %v4030, %v4038
    %v4040 = vadd.f32 %v4039, 1.1283791
    %v4041 = vmul.f32 %v731, %v4040
    %v4042 = vmul.f32 %v4030, 3.8918573e-05
    %v4043 = vadd.f32 %v4042, 0.001143296
    %v4044 = vmul.f32 %v4030, %v4043
    %v4045 = vadd.f32 %v4044, 0.014752088
    %v4046 = vmul.f32 %v4030, %v4045
    %v4047 = vadd.f32 %v4046, 0.112945676
    %v4048 = vmul.f32 %v4030, %v4047
    %v4049 = vadd.f32 %v4048, 0.4994258
    %v4050 = vmul.f32 %v4030, %v4049
    %v4051 = vadd.f32 %v4050, 1.0
    %v4052 = vrcp.pop %v4051
    %v4053 = vmul.f32 %v4051, %v4052
    %v4054 = vsub.f32 1.0, %v4053
    %v4055 = vmul.f32 %v4052, %v4054
    %v4056 = vadd.f32 %v4052, %v4055
    %vm4057 = vweird.f32 %v4051
    %vm4058 = vweird.f32 %v4052
    %vm4059 = vmor %vm4057, %vm4058
    %v4060 = vsel %vm4059, %v4052, %v4056
    %v4061 = vand.u32 2147483647, %v4051
    %vm4062 = vcmp.eq.f32.partialorder %v4061, 8.507059e+37
    %v4063 = vand.u32 %v4051, 2147483648
    %v4064 = vor.u32 1.1754944e-38, %v4063
    %v4065 = vsel %vm4062, %v4064, %v4060
    %v4066 = vmul.f32 %v4041, %v4065
    %v4067 = vmin.f32 %v4066, 1.0
    %v4068 = vmax.f32 %v4067, -1.0
    %v4069 = vmul.f32 %v732, %v732
    %v4070 = vmin.f32 16.0, %v4069
    %v4071 = vmul.f32 %v4070, 2.1237322e-06
    %v4072 = vadd.f32 %v4071, 0.00028619796
    %v4073 = vmul.f32 %v4070, %v4072
    %v4074 = vadd.f32 %v4073, 0.0036580483
    %v4075 = vmul.f32 %v4070, %v4074
    %v4076 = vadd.f32 %v4075, 0.05243302
    %v4077 = vmul.f32 %v4070, %v4076
    %v4078 = vadd.f32 %v4077, 0.18741608
    %v4079 = vmul.f32 %v4070, %v4078
    %v4080 = vadd.f32 %v4079, 1.1283791
    %v4081 = vmul.f32 %v732, %v4080
    %v4082 = vmul.f32 %v4070, 3.8918573e-05
    %v4083 = vadd.f32 %v4082, 0.001143296
    %v4084 = vmul.f32 %v4070, %v4083
    %v4085 = vadd.f32 %v4084, 0.014752088
    %v4086 = vmul.f32 %v4070, %v4085
    %v4087 = vadd.f32 %v4086, 0.112945676
    %v4088 = vmul.f32 %v4070, %v4087
    %v4089 = vadd.f32 %v4088, 0.4994258
    %v4090 = vmul.f32 %v4070, %v4089
    %v4091 = vadd.f32 %v4090, 1.0
    %v4092 = vrcp.pop %v4091
    %v4093 = vmul.f32 %v4091, %v4092
    %v4094 = vsub.f32 1.0, %v4093
    %v4095 = vmul.f32 %v4092, %v4094
    %v4096 = vadd.f32 %v4092, %v4095
    %vm4097 = vweird.f32 %v4091
    %vm4098 = vweird.f32 %v4092
    %vm4099 = vmor %vm4097, %vm4098
    %v4100 = vsel %vm4099, %v4092, %v4096
    %v4101 = vand.u32 2147483647, %v4091
    %vm4102 = vcmp.eq.f32.partialorder %v4101, 8.507059e+37
    %v4103 = vand.u32 %v4091, 2147483648
    %v4104 = vor.u32 1.1754944e-38, %v4103
    %v4105 = vsel %vm4102, %v4104, %v4100
    %v4106 = vmul.f32 %v4081, %v4105
    %v4107 = vmin.f32 %v4106, 1.0
    %v4108 = vmax.f32 %v4107, -1.0
    %v4109 = vmul.f32 %v733, %v733
    %v4110 = vmin.f32 16.0, %v4109
    %v4111 = vmul.f32 %v4110, 2.1237322e-06
    %v4112 = vadd.f32 %v4111, 0.00028619796
    %v4113 = vmul.f32 %v4110, %v4112
    %v4114 = vadd.f32 %v4113, 0.0036580483
    %v4115 = vmul.f32 %v4110, %v4114
    %v4116 = vadd.f32 %v4115, 0.05243302
    %v4117 = vmul.f32 %v4110, %v4116
    %v4118 = vadd.f32 %v4117, 0.18741608
    %v4119 = vmul.f32 %v4110, %v4118
    %v4120 = vadd.f32 %v4119, 1.1283791
    %v4121 = vmul.f32 %v733, %v4120
    %v4122 = vmul.f32 %v4110, 3.8918573e-05
    %v4123 = vadd.f32 %v4122, 0.001143296
    %v4124 = vmul.f32 %v4110, %v4123
    %v4125 = vadd.f32 %v4124, 0.014752088
    %v4126 = vmul.f32 %v4110, %v4125
    %v4127 = vadd.f32 %v4126, 0.112945676
    %v4128 = vmul.f32 %v4110, %v4127
    %v4129 = vadd.f32 %v4128, 0.4994258
    %v4130 = vmul.f32 %v4110, %v4129
    %v4131 = vadd.f32 %v4130, 1.0
    %v4132 = vrcp.pop %v4131
    %v4133 = vmul.f32 %v4131, %v4132
    %v4134 = vsub.f32 1.0, %v4133
    %v4135 = vmul.f32 %v4132, %v4134
    %v4136 = vadd.f32 %v4132, %v4135
    %vm4137 = vweird.f32 %v4131
    %vm4138 = vweird.f32 %v4132
    %vm4139 = vmor %vm4137, %vm4138
    %v4140 = vsel %vm4139, %v4132, %v4136
    %v4141 = vand.u32 2147483647, %v4131
    %vm4142 = vcmp.eq.f32.partialorder %v4141, 8.507059e+37
    %v4143 = vand.u32 %v4131, 2147483648
    %v4144 = vor.u32 1.1754944e-38, %v4143
    %v4145 = vsel %vm4142, %v4144, %v4140
    %v4146 = vmul.f32 %v4121, %v4145
    %v4147 = vmin.f32 %v4146, 1.0
    %v4148 = vmax.f32 %v4147, -1.0
    %v4149 = vmul.f32 %v734, %v734
    %v4150 = vmin.f32 16.0, %v4149
    %v4151 = vmul.f32 %v4150, 2.1237322e-06
    %v4152 = vadd.f32 %v4151, 0.00028619796
    %v4153 = vmul.f32 %v4150, %v4152
    %v4154 = vadd.f32 %v4153, 0.0036580483
    %v4155 = vmul.f32 %v4150, %v4154
    %v4156 = vadd.f32 %v4155, 0.05243302
    %v4157 = vmul.f32 %v4150, %v4156
    %v4158 = vadd.f32 %v4157, 0.18741608
    %v4159 = vmul.f32 %v4150, %v4158
    %v4160 = vadd.f32 %v4159, 1.1283791
    %v4161 = vmul.f32 %v734, %v4160
    %v4162 = vmul.f32 %v4150, 3.8918573e-05
    %v4163 = vadd.f32 %v4162, 0.001143296
    %v4164 = vmul.f32 %v4150, %v4163
    %v4165 = vadd.f32 %v4164, 0.014752088
    %v4166 = vmul.f32 %v4150, %v4165
    %v4167 = vadd.f32 %v4166, 0.112945676
    %v4168 = vmul.f32 %v4150, %v4167
    %v4169 = vadd.f32 %v4168, 0.4994258
    %v4170 = vmul.f32 %v4150, %v4169
    %v4171 = vadd.f32 %v4170, 1.0
    %v4172 = vrcp.pop %v4171
    %v4173 = vmul.f32 %v4171, %v4172
    %v4174 = vsub.f32 1.0, %v4173
    %v4175 = vmul.f32 %v4172, %v4174
    %v4176 = vadd.f32 %v4172, %v4175
    %vm4177 = vweird.f32 %v4171
    %vm4178 = vweird.f32 %v4172
    %vm4179 = vmor %vm4177, %vm4178
    %v4180 = vsel %vm4179, %v4172, %v4176
    %v4181 = vand.u32 2147483647, %v4171
    %vm4182 = vcmp.eq.f32.partialorder %v4181, 8.507059e+37
    %v4183 = vand.u32 %v4171, 2147483648
    %v4184 = vor.u32 1.1754944e-38, %v4183
    %v4185 = vsel %vm4182, %v4184, %v4180
    %v4186 = vmul.f32 %v4161, %v4185
    %v4187 = vmin.f32 %v4186, 1.0
    %v4188 = vmax.f32 %v4187, -1.0
    %v4189 = vmul.f32 %v735, %v735
    %v4190 = vmin.f32 16.0, %v4189
    %v4191 = vmul.f32 %v4190, 2.1237322e-06
    %v4192 = vadd.f32 %v4191, 0.00028619796
    %v4193 = vmul.f32 %v4190, %v4192
    %v4194 = vadd.f32 %v4193, 0.0036580483
    %v4195 = vmul.f32 %v4190, %v4194
    %v4196 = vadd.f32 %v4195, 0.05243302
    %v4197 = vmul.f32 %v4190, %v4196
    %v4198 = vadd.f32 %v4197, 0.18741608
    %v4199 = vmul.f32 %v4190, %v4198
    %v4200 = vadd.f32 %v4199, 1.1283791
    %v4201 = vmul.f32 %v735, %v4200
    %v4202 = vmul.f32 %v4190, 3.8918573e-05
    %v4203 = vadd.f32 %v4202, 0.001143296
    %v4204 = vmul.f32 %v4190, %v4203
    %v4205 = vadd.f32 %v4204, 0.014752088
    %v4206 = vmul.f32 %v4190, %v4205
    %v4207 = vadd.f32 %v4206, 0.112945676
    %v4208 = vmul.f32 %v4190, %v4207
    %v4209 = vadd.f32 %v4208, 0.4994258
    %v4210 = vmul.f32 %v4190, %v4209
    %v4211 = vadd.f32 %v4210, 1.0
    %v4212 = vrcp.pop %v4211
    %v4213 = vmul.f32 %v4211, %v4212
    %v4214 = vsub.f32 1.0, %v4213
    %v4215 = vmul.f32 %v4212, %v4214
    %v4216 = vadd.f32 %v4212, %v4215
    %vm4217 = vweird.f32 %v4211
    %vm4218 = vweird.f32 %v4212
    %vm4219 = vmor %vm4217, %vm4218
    %v4220 = vsel %vm4219, %v4212, %v4216
    %v4221 = vand.u32 2147483647, %v4211
    %vm4222 = vcmp.eq.f32.partialorder %v4221, 8.507059e+37
    %v4223 = vand.u32 %v4211, 2147483648
    %v4224 = vor.u32 1.1754944e-38, %v4223
    %v4225 = vsel %vm4222, %v4224, %v4220
    %v4226 = vmul.f32 %v4201, %v4225
    %v4227 = vmin.f32 %v4226, 1.0
    %v4228 = vmax.f32 %v4227, -1.0
    %v4229 = vmul.f32 %v736, %v736
    %v4230 = vmin.f32 16.0, %v4229
    %v4231 = vmul.f32 %v4230, 2.1237322e-06
    %v4232 = vadd.f32 %v4231, 0.00028619796
    %v4233 = vmul.f32 %v4230, %v4232
    %v4234 = vadd.f32 %v4233, 0.0036580483
    %v4235 = vmul.f32 %v4230, %v4234
    %v4236 = vadd.f32 %v4235, 0.05243302
    %v4237 = vmul.f32 %v4230, %v4236
    %v4238 = vadd.f32 %v4237, 0.18741608
    %v4239 = vmul.f32 %v4230, %v4238
    %v4240 = vadd.f32 %v4239, 1.1283791
    %v4241 = vmul.f32 %v736, %v4240
    %v4242 = vmul.f32 %v4230, 3.8918573e-05
    %v4243 = vadd.f32 %v4242, 0.001143296
    %v4244 = vmul.f32 %v4230, %v4243
    %v4245 = vadd.f32 %v4244, 0.014752088
    %v4246 = vmul.f32 %v4230, %v4245
    %v4247 = vadd.f32 %v4246, 0.112945676
    %v4248 = vmul.f32 %v4230, %v4247
    %v4249 = vadd.f32 %v4248, 0.4994258
    %v4250 = vmul.f32 %v4230, %v4249
    %v4251 = vadd.f32 %v4250, 1.0
    %v4252 = vrcp.pop %v4251
    %v4253 = vmul.f32 %v4251, %v4252
    %v4254 = vsub.f32 1.0, %v4253
    %v4255 = vmul.f32 %v4252, %v4254
    %v4256 = vadd.f32 %v4252, %v4255
    %vm4257 = vweird.f32 %v4251
    %vm4258 = vweird.f32 %v4252
    %vm4259 = vmor %vm4257, %vm4258
    %v4260 = vsel %vm4259, %v4252, %v4256
    %v4261 = vand.u32 2147483647, %v4251
    %vm4262 = vcmp.eq.f32.partialorder %v4261, 8.507059e+37
    %v4263 = vand.u32 %v4251, 2147483648
    %v4264 = vor.u32 1.1754944e-38, %v4263
    %v4265 = vsel %vm4262, %v4264, %v4260
    %v4266 = vmul.f32 %v4241, %v4265
    %v4267 = vmin.f32 %v4266, 1.0
    %v4268 = vmax.f32 %v4267, -1.0
    %v4269 = vmul.f32 %v737, %v737
    %v4270 = vmin.f32 16.0, %v4269
    %v4271 = vmul.f32 %v4270, 2.1237322e-06
    %v4272 = vadd.f32 %v4271, 0.00028619796
    %v4273 = vmul.f32 %v4270, %v4272
    %v4274 = vadd.f32 %v4273, 0.0036580483
    %v4275 = vmul.f32 %v4270, %v4274
    %v4276 = vadd.f32 %v4275, 0.05243302
    %v4277 = vmul.f32 %v4270, %v4276
    %v4278 = vadd.f32 %v4277, 0.18741608
    %v4279 = vmul.f32 %v4270, %v4278
    %v4280 = vadd.f32 %v4279, 1.1283791
    %v4281 = vmul.f32 %v737, %v4280
    %v4282 = vmul.f32 %v4270, 3.8918573e-05
    %v4283 = vadd.f32 %v4282, 0.001143296
    %v4284 = vmul.f32 %v4270, %v4283
    %v4285 = vadd.f32 %v4284, 0.014752088
    %v4286 = vmul.f32 %v4270, %v4285
    %v4287 = vadd.f32 %v4286, 0.112945676
    %v4288 = vmul.f32 %v4270, %v4287
    %v4289 = vadd.f32 %v4288, 0.4994258
    %v4290 = vmul.f32 %v4270, %v4289
    %v4291 = vadd.f32 %v4290, 1.0
    %v4292 = vrcp.pop %v4291
    %v4293 = vmul.f32 %v4291, %v4292
    %v4294 = vsub.f32 1.0, %v4293
    %v4295 = vmul.f32 %v4292, %v4294
    %v4296 = vadd.f32 %v4292, %v4295
    %vm4297 = vweird.f32 %v4291
    %vm4298 = vweird.f32 %v4292
    %vm4299 = vmor %vm4297, %vm4298
    %v4300 = vsel %vm4299, %v4292, %v4296
    %v4301 = vand.u32 2147483647, %v4291
    %vm4302 = vcmp.eq.f32.partialorder %v4301, 8.507059e+37
    %v4303 = vand.u32 %v4291, 2147483648
    %v4304 = vor.u32 1.1754944e-38, %v4303
    %v4305 = vsel %vm4302, %v4304, %v4300
    %v4306 = vmul.f32 %v4281, %v4305
    %v4307 = vmin.f32 %v4306, 1.0
    %v4308 = vmax.f32 %v4307, -1.0
    %v4309 = vmul.f32 %v738, %v738
    %v4310 = vmin.f32 16.0, %v4309
    %v4311 = vmul.f32 %v4310, 2.1237322e-06
    %v4312 = vadd.f32 %v4311, 0.00028619796
    %v4313 = vmul.f32 %v4310, %v4312
    %v4314 = vadd.f32 %v4313, 0.0036580483
    %v4315 = vmul.f32 %v4310, %v4314
    %v4316 = vadd.f32 %v4315, 0.05243302
    %v4317 = vmul.f32 %v4310, %v4316
    %v4318 = vadd.f32 %v4317, 0.18741608
    %v4319 = vmul.f32 %v4310, %v4318
    %v4320 = vadd.f32 %v4319, 1.1283791
    %v4321 = vmul.f32 %v738, %v4320
    %v4322 = vmul.f32 %v4310, 3.8918573e-05
    %v4323 = vadd.f32 %v4322, 0.001143296
    %v4324 = vmul.f32 %v4310, %v4323
    %v4325 = vadd.f32 %v4324, 0.014752088
    %v4326 = vmul.f32 %v4310, %v4325
    %v4327 = vadd.f32 %v4326, 0.112945676
    %v4328 = vmul.f32 %v4310, %v4327
    %v4329 = vadd.f32 %v4328, 0.4994258
    %v4330 = vmul.f32 %v4310, %v4329
    %v4331 = vadd.f32 %v4330, 1.0
    %v4332 = vrcp.pop %v4331
    %v4333 = vmul.f32 %v4331, %v4332
    %v4334 = vsub.f32 1.0, %v4333
    %v4335 = vmul.f32 %v4332, %v4334
    %v4336 = vadd.f32 %v4332, %v4335
    %vm4337 = vweird.f32 %v4331
    %vm4338 = vweird.f32 %v4332
    %vm4339 = vmor %vm4337, %vm4338
    %v4340 = vsel %vm4339, %v4332, %v4336
    %v4341 = vand.u32 2147483647, %v4331
    %vm4342 = vcmp.eq.f32.partialorder %v4341, 8.507059e+37
    %v4343 = vand.u32 %v4331, 2147483648
    %v4344 = vor.u32 1.1754944e-38, %v4343
    %v4345 = vsel %vm4342, %v4344, %v4340
    %v4346 = vmul.f32 %v4321, %v4345
    %v4347 = vmin.f32 %v4346, 1.0
    %v4348 = vmax.f32 %v4347, -1.0
    %v4349 = vmul.f32 %v739, %v739
    %v4350 = vmin.f32 16.0, %v4349
    %v4351 = vmul.f32 %v4350, 2.1237322e-06
    %v4352 = vadd.f32 %v4351, 0.00028619796
    %v4353 = vmul.f32 %v4350, %v4352
    %v4354 = vadd.f32 %v4353, 0.0036580483
    %v4355 = vmul.f32 %v4350, %v4354
    %v4356 = vadd.f32 %v4355, 0.05243302
    %v4357 = vmul.f32 %v4350, %v4356
    %v4358 = vadd.f32 %v4357, 0.18741608
    %v4359 = vmul.f32 %v4350, %v4358
    %v4360 = vadd.f32 %v4359, 1.1283791
    %v4361 = vmul.f32 %v739, %v4360
    %v4362 = vmul.f32 %v4350, 3.8918573e-05
    %v4363 = vadd.f32 %v4362, 0.001143296
    %v4364 = vmul.f32 %v4350, %v4363
    %v4365 = vadd.f32 %v4364, 0.014752088
    %v4366 = vmul.f32 %v4350, %v4365
    %v4367 = vadd.f32 %v4366, 0.112945676
    %v4368 = vmul.f32 %v4350, %v4367
    %v4369 = vadd.f32 %v4368, 0.4994258
    %v4370 = vmul.f32 %v4350, %v4369
    %v4371 = vadd.f32 %v4370, 1.0
    %v4372 = vrcp.pop %v4371
    %v4373 = vmul.f32 %v4371, %v4372
    %v4374 = vsub.f32 1.0, %v4373
    %v4375 = vmul.f32 %v4372, %v4374
    %v4376 = vadd.f32 %v4372, %v4375
    %vm4377 = vweird.f32 %v4371
    %vm4378 = vweird.f32 %v4372
    %vm4379 = vmor %vm4377, %vm4378
    %v4380 = vsel %vm4379, %v4372, %v4376
    %v4381 = vand.u32 2147483647, %v4371
    %vm4382 = vcmp.eq.f32.partialorder %v4381, 8.507059e+37
    %v4383 = vand.u32 %v4371, 2147483648
    %v4384 = vor.u32 1.1754944e-38, %v4383
    %v4385 = vsel %vm4382, %v4384, %v4380
    %v4386 = vmul.f32 %v4361, %v4385
    %v4387 = vmin.f32 %v4386, 1.0
    %v4388 = vmax.f32 %v4387, -1.0
    %v4389 = vmul.f32 %v740, %v740
    %v4390 = vmin.f32 16.0, %v4389
    %v4391 = vmul.f32 %v4390, 2.1237322e-06
    %v4392 = vadd.f32 %v4391, 0.00028619796
    %v4393 = vmul.f32 %v4390, %v4392
    %v4394 = vadd.f32 %v4393, 0.0036580483
    %v4395 = vmul.f32 %v4390, %v4394
    %v4396 = vadd.f32 %v4395, 0.05243302
    %v4397 = vmul.f32 %v4390, %v4396
    %v4398 = vadd.f32 %v4397, 0.18741608
    %v4399 = vmul.f32 %v4390, %v4398
    %v4400 = vadd.f32 %v4399, 1.1283791
    %v4401 = vmul.f32 %v740, %v4400
    %v4402 = vmul.f32 %v4390, 3.8918573e-05
    %v4403 = vadd.f32 %v4402, 0.001143296
    %v4404 = vmul.f32 %v4390, %v4403
    %v4405 = vadd.f32 %v4404, 0.014752088
    %v4406 = vmul.f32 %v4390, %v4405
    %v4407 = vadd.f32 %v4406, 0.112945676
    %v4408 = vmul.f32 %v4390, %v4407
    %v4409 = vadd.f32 %v4408, 0.4994258
    %v4410 = vmul.f32 %v4390, %v4409
    %v4411 = vadd.f32 %v4410, 1.0
    %v4412 = vrcp.pop %v4411
    %v4413 = vmul.f32 %v4411, %v4412
    %v4414 = vsub.f32 1.0, %v4413
    %v4415 = vmul.f32 %v4412, %v4414
    %v4416 = vadd.f32 %v4412, %v4415
    %vm4417 = vweird.f32 %v4411
    %vm4418 = vweird.f32 %v4412
    %vm4419 = vmor %vm4417, %vm4418
    %v4420 = vsel %vm4419, %v4412, %v4416
    %v4421 = vand.u32 2147483647, %v4411
    %vm4422 = vcmp.eq.f32.partialorder %v4421, 8.507059e+37
    %v4423 = vand.u32 %v4411, 2147483648
    %v4424 = vor.u32 1.1754944e-38, %v4423
    %v4425 = vsel %vm4422, %v4424, %v4420
    %v4426 = vmul.f32 %v4401, %v4425
    %v4427 = vmin.f32 %v4426, 1.0
    %v4428 = vmax.f32 %v4427, -1.0
    %v4429 = vmul.f32 %v741, %v741
    %v4430 = vmin.f32 16.0, %v4429
    %v4431 = vmul.f32 %v4430, 2.1237322e-06
    %v4432 = vadd.f32 %v4431, 0.00028619796
    %v4433 = vmul.f32 %v4430, %v4432
    %v4434 = vadd.f32 %v4433, 0.0036580483
    %v4435 = vmul.f32 %v4430, %v4434
    %v4436 = vadd.f32 %v4435, 0.05243302
    %v4437 = vmul.f32 %v4430, %v4436
    %v4438 = vadd.f32 %v4437, 0.18741608
    %v4439 = vmul.f32 %v4430, %v4438
    %v4440 = vadd.f32 %v4439, 1.1283791
    %v4441 = vmul.f32 %v741, %v4440
    %v4442 = vmul.f32 %v4430, 3.8918573e-05
    %v4443 = vadd.f32 %v4442, 0.001143296
    %v4444 = vmul.f32 %v4430, %v4443
    %v4445 = vadd.f32 %v4444, 0.014752088
    %v4446 = vmul.f32 %v4430, %v4445
    %v4447 = vadd.f32 %v4446, 0.112945676
    %v4448 = vmul.f32 %v4430, %v4447
    %v4449 = vadd.f32 %v4448, 0.4994258
    %v4450 = vmul.f32 %v4430, %v4449
    %v4451 = vadd.f32 %v4450, 1.0
    %v4452 = vrcp.pop %v4451
    %v4453 = vmul.f32 %v4451, %v4452
    %v4454 = vsub.f32 1.0, %v4453
    %v4455 = vmul.f32 %v4452, %v4454
    %v4456 = vadd.f32 %v4452, %v4455
    %vm4457 = vweird.f32 %v4451
    %vm4458 = vweird.f32 %v4452
    %vm4459 = vmor %vm4457, %vm4458
    %v4460 = vsel %vm4459, %v4452, %v4456
    %v4461 = vand.u32 2147483647, %v4451
    %vm4462 = vcmp.eq.f32.partialorder %v4461, 8.507059e+37
    %v4463 = vand.u32 %v4451, 2147483648
    %v4464 = vor.u32 1.1754944e-38, %v4463
    %v4465 = vsel %vm4462, %v4464, %v4460
    %v4466 = vmul.f32 %v4441, %v4465
    %v4467 = vmin.f32 %v4466, 1.0
    %v4468 = vmax.f32 %v4467, -1.0
    %v4469 = vmul.f32 %v742, %v742
    %v4470 = vmin.f32 16.0, %v4469
    %v4471 = vmul.f32 %v4470, 2.1237322e-06
    %v4472 = vadd.f32 %v4471, 0.00028619796
    %v4473 = vmul.f32 %v4470, %v4472
    %v4474 = vadd.f32 %v4473, 0.0036580483
    %v4475 = vmul.f32 %v4470, %v4474
    %v4476 = vadd.f32 %v4475, 0.05243302
    %v4477 = vmul.f32 %v4470, %v4476
    %v4478 = vadd.f32 %v4477, 0.18741608
    %v4479 = vmul.f32 %v4470, %v4478
    %v4480 = vadd.f32 %v4479, 1.1283791
    %v4481 = vmul.f32 %v742, %v4480
    %v4482 = vmul.f32 %v4470, 3.8918573e-05
    %v4483 = vadd.f32 %v4482, 0.001143296
    %v4484 = vmul.f32 %v4470, %v4483
    %v4485 = vadd.f32 %v4484, 0.014752088
    %v4486 = vmul.f32 %v4470, %v4485
    %v4487 = vadd.f32 %v4486, 0.112945676
    %v4488 = vmul.f32 %v4470, %v4487
    %v4489 = vadd.f32 %v4488, 0.4994258
    %v4490 = vmul.f32 %v4470, %v4489
    %v4491 = vadd.f32 %v4490, 1.0
    %v4492 = vrcp.pop %v4491
    %v4493 = vmul.f32 %v4491, %v4492
    %v4494 = vsub.f32 1.0, %v4493
    %v4495 = vmul.f32 %v4492, %v4494
    %v4496 = vadd.f32 %v4492, %v4495
    %vm4497 = vweird.f32 %v4491
    %vm4498 = vweird.f32 %v4492
    %vm4499 = vmor %vm4497, %vm4498
    %v4500 = vsel %vm4499, %v4492, %v4496
    %v4501 = vand.u32 2147483647, %v4491
    %vm4502 = vcmp.eq.f32.partialorder %v4501, 8.507059e+37
    %v4503 = vand.u32 %v4491, 2147483648
    %v4504 = vor.u32 1.1754944e-38, %v4503
    %v4505 = vsel %vm4502, %v4504, %v4500
    %v4506 = vmul.f32 %v4481, %v4505
    %v4507 = vmin.f32 %v4506, 1.0
    %v4508 = vmax.f32 %v4507, -1.0
    %v4509 = vmul.f32 %v743, %v743
    %v4510 = vmin.f32 16.0, %v4509
    %v4511 = vmul.f32 %v4510, 2.1237322e-06
    %v4512 = vadd.f32 %v4511, 0.00028619796
    %v4513 = vmul.f32 %v4510, %v4512
    %v4514 = vadd.f32 %v4513, 0.0036580483
    %v4515 = vmul.f32 %v4510, %v4514
    %v4516 = vadd.f32 %v4515, 0.05243302
    %v4517 = vmul.f32 %v4510, %v4516
    %v4518 = vadd.f32 %v4517, 0.18741608
    %v4519 = vmul.f32 %v4510, %v4518
    %v4520 = vadd.f32 %v4519, 1.1283791
    %v4521 = vmul.f32 %v743, %v4520
    %v4522 = vmul.f32 %v4510, 3.8918573e-05
    %v4523 = vadd.f32 %v4522, 0.001143296
    %v4524 = vmul.f32 %v4510, %v4523
    %v4525 = vadd.f32 %v4524, 0.014752088
    %v4526 = vmul.f32 %v4510, %v4525
    %v4527 = vadd.f32 %v4526, 0.112945676
    %v4528 = vmul.f32 %v4510, %v4527
    %v4529 = vadd.f32 %v4528, 0.4994258
    %v4530 = vmul.f32 %v4510, %v4529
    %v4531 = vadd.f32 %v4530, 1.0
    %v4532 = vrcp.pop %v4531
    %v4533 = vmul.f32 %v4531, %v4532
    %v4534 = vsub.f32 1.0, %v4533
    %v4535 = vmul.f32 %v4532, %v4534
    %v4536 = vadd.f32 %v4532, %v4535
    %vm4537 = vweird.f32 %v4531
    %vm4538 = vweird.f32 %v4532
    %vm4539 = vmor %vm4537, %vm4538
    %v4540 = vsel %vm4539, %v4532, %v4536
    %v4541 = vand.u32 2147483647, %v4531
    %vm4542 = vcmp.eq.f32.partialorder %v4541, 8.507059e+37
    %v4543 = vand.u32 %v4531, 2147483648
    %v4544 = vor.u32 1.1754944e-38, %v4543
    %v4545 = vsel %vm4542, %v4544, %v4540
    %v4546 = vmul.f32 %v4521, %v4545
    %v4547 = vmin.f32 %v4546, 1.0
    %v4548 = vmax.f32 %v4547, -1.0
    %v4549 = vmul.f32 %v744, %v744
    %v4550 = vmin.f32 16.0, %v4549
    %v4551 = vmul.f32 %v4550, 2.1237322e-06
    %v4552 = vadd.f32 %v4551, 0.00028619796
    %v4553 = vmul.f32 %v4550, %v4552
    %v4554 = vadd.f32 %v4553, 0.0036580483
    %v4555 = vmul.f32 %v4550, %v4554
    %v4556 = vadd.f32 %v4555, 0.05243302
    %v4557 = vmul.f32 %v4550, %v4556
    %v4558 = vadd.f32 %v4557, 0.18741608
    %v4559 = vmul.f32 %v4550, %v4558
    %v4560 = vadd.f32 %v4559, 1.1283791
    %v4561 = vmul.f32 %v744, %v4560
    %v4562 = vmul.f32 %v4550, 3.8918573e-05
    %v4563 = vadd.f32 %v4562, 0.001143296
    %v4564 = vmul.f32 %v4550, %v4563
    %v4565 = vadd.f32 %v4564, 0.014752088
    %v4566 = vmul.f32 %v4550, %v4565
    %v4567 = vadd.f32 %v4566, 0.112945676
    %v4568 = vmul.f32 %v4550, %v4567
    %v4569 = vadd.f32 %v4568, 0.4994258
    %v4570 = vmul.f32 %v4550, %v4569
    %v4571 = vadd.f32 %v4570, 1.0
    %v4572 = vrcp.pop %v4571
    %v4573 = vmul.f32 %v4571, %v4572
    %v4574 = vsub.f32 1.0, %v4573
    %v4575 = vmul.f32 %v4572, %v4574
    %v4576 = vadd.f32 %v4572, %v4575
    %vm4577 = vweird.f32 %v4571
    %vm4578 = vweird.f32 %v4572
    %vm4579 = vmor %vm4577, %vm4578
    %v4580 = vsel %vm4579, %v4572, %v4576
    %v4581 = vand.u32 2147483647, %v4571
    %vm4582 = vcmp.eq.f32.partialorder %v4581, 8.507059e+37
    %v4583 = vand.u32 %v4571, 2147483648
    %v4584 = vor.u32 1.1754944e-38, %v4583
    %v4585 = vsel %vm4582, %v4584, %v4580
    %v4586 = vmul.f32 %v4561, %v4585
    %v4587 = vmin.f32 %v4586, 1.0
    %v4588 = vmax.f32 %v4587, -1.0
    %v4589 = vmul.f32 %v745, %v745
    %v4590 = vmin.f32 16.0, %v4589
    %v4591 = vmul.f32 %v4590, 2.1237322e-06
    %v4592 = vadd.f32 %v4591, 0.00028619796
    %v4593 = vmul.f32 %v4590, %v4592
    %v4594 = vadd.f32 %v4593, 0.0036580483
    %v4595 = vmul.f32 %v4590, %v4594
    %v4596 = vadd.f32 %v4595, 0.05243302
    %v4597 = vmul.f32 %v4590, %v4596
    %v4598 = vadd.f32 %v4597, 0.18741608
    %v4599 = vmul.f32 %v4590, %v4598
    %v4600 = vadd.f32 %v4599, 1.1283791
    %v4601 = vmul.f32 %v745, %v4600
    %v4602 = vmul.f32 %v4590, 3.8918573e-05
    %v4603 = vadd.f32 %v4602, 0.001143296
    %v4604 = vmul.f32 %v4590, %v4603
    %v4605 = vadd.f32 %v4604, 0.014752088
    %v4606 = vmul.f32 %v4590, %v4605
    %v4607 = vadd.f32 %v4606, 0.112945676
    %v4608 = vmul.f32 %v4590, %v4607
    %v4609 = vadd.f32 %v4608, 0.4994258
    %v4610 = vmul.f32 %v4590, %v4609
    %v4611 = vadd.f32 %v4610, 1.0
    %v4612 = vrcp.pop %v4611
    %v4613 = vmul.f32 %v4611, %v4612
    %v4614 = vsub.f32 1.0, %v4613
    %v4615 = vmul.f32 %v4612, %v4614
    %v4616 = vadd.f32 %v4612, %v4615
    %vm4617 = vweird.f32 %v4611
    %vm4618 = vweird.f32 %v4612
    %vm4619 = vmor %vm4617, %vm4618
    %v4620 = vsel %vm4619, %v4612, %v4616
    %v4621 = vand.u32 2147483647, %v4611
    %vm4622 = vcmp.eq.f32.partialorder %v4621, 8.507059e+37
    %v4623 = vand.u32 %v4611, 2147483648
    %v4624 = vor.u32 1.1754944e-38, %v4623
    %v4625 = vsel %vm4622, %v4624, %v4620
    %v4626 = vmul.f32 %v4601, %v4625
    %v4627 = vmin.f32 %v4626, 1.0
    %v4628 = vmax.f32 %v4627, -1.0
    %v4629 = vmul.f32 %v746, %v746
    %v4630 = vmin.f32 16.0, %v4629
    %v4631 = vmul.f32 %v4630, 2.1237322e-06
    %v4632 = vadd.f32 %v4631, 0.00028619796
    %v4633 = vmul.f32 %v4630, %v4632
    %v4634 = vadd.f32 %v4633, 0.0036580483
    %v4635 = vmul.f32 %v4630, %v4634
    %v4636 = vadd.f32 %v4635, 0.05243302
    %v4637 = vmul.f32 %v4630, %v4636
    %v4638 = vadd.f32 %v4637, 0.18741608
    %v4639 = vmul.f32 %v4630, %v4638
    %v4640 = vadd.f32 %v4639, 1.1283791
    %v4641 = vmul.f32 %v746, %v4640
    %v4642 = vmul.f32 %v4630, 3.8918573e-05
    %v4643 = vadd.f32 %v4642, 0.001143296
    %v4644 = vmul.f32 %v4630, %v4643
    %v4645 = vadd.f32 %v4644, 0.014752088
    %v4646 = vmul.f32 %v4630, %v4645
    %v4647 = vadd.f32 %v4646, 0.112945676
    %v4648 = vmul.f32 %v4630, %v4647
    %v4649 = vadd.f32 %v4648, 0.4994258
    %v4650 = vmul.f32 %v4630, %v4649
    %v4651 = vadd.f32 %v4650, 1.0
    %v4652 = vrcp.pop %v4651
    %v4653 = vmul.f32 %v4651, %v4652
    %v4654 = vsub.f32 1.0, %v4653
    %v4655 = vmul.f32 %v4652, %v4654
    %v4656 = vadd.f32 %v4652, %v4655
    %vm4657 = vweird.f32 %v4651
    %vm4658 = vweird.f32 %v4652
    %vm4659 = vmor %vm4657, %vm4658
    %v4660 = vsel %vm4659, %v4652, %v4656
    %v4661 = vand.u32 2147483647, %v4651
    %vm4662 = vcmp.eq.f32.partialorder %v4661, 8.507059e+37
    %v4663 = vand.u32 %v4651, 2147483648
    %v4664 = vor.u32 1.1754944e-38, %v4663
    %v4665 = vsel %vm4662, %v4664, %v4660
    %v4666 = vmul.f32 %v4641, %v4665
    %v4667 = vmin.f32 %v4666, 1.0
    %v4668 = vmax.f32 %v4667, -1.0
    %v4669 = vmul.f32 %v747, %v747
    %v4670 = vmin.f32 16.0, %v4669
    %v4671 = vmul.f32 %v4670, 2.1237322e-06
    %v4672 = vadd.f32 %v4671, 0.00028619796
    %v4673 = vmul.f32 %v4670, %v4672
    %v4674 = vadd.f32 %v4673, 0.0036580483
    %v4675 = vmul.f32 %v4670, %v4674
    %v4676 = vadd.f32 %v4675, 0.05243302
    %v4677 = vmul.f32 %v4670, %v4676
    %v4678 = vadd.f32 %v4677, 0.18741608
    %v4679 = vmul.f32 %v4670, %v4678
    %v4680 = vadd.f32 %v4679, 1.1283791
    %v4681 = vmul.f32 %v747, %v4680
    %v4682 = vmul.f32 %v4670, 3.8918573e-05
    %v4683 = vadd.f32 %v4682, 0.001143296
    %v4684 = vmul.f32 %v4670, %v4683
    %v4685 = vadd.f32 %v4684, 0.014752088
    %v4686 = vmul.f32 %v4670, %v4685
    %v4687 = vadd.f32 %v4686, 0.112945676
    %v4688 = vmul.f32 %v4670, %v4687
    %v4689 = vadd.f32 %v4688, 0.4994258
    %v4690 = vmul.f32 %v4670, %v4689
    %v4691 = vadd.f32 %v4690, 1.0
    %v4692 = vrcp.pop %v4691
    %v4693 = vmul.f32 %v4691, %v4692
    %v4694 = vsub.f32 1.0, %v4693
    %v4695 = vmul.f32 %v4692, %v4694
    %v4696 = vadd.f32 %v4692, %v4695
    %vm4697 = vweird.f32 %v4691
    %vm4698 = vweird.f32 %v4692
    %vm4699 = vmor %vm4697, %vm4698
    %v4700 = vsel %vm4699, %v4692, %v4696
    %v4701 = vand.u32 2147483647, %v4691
    %vm4702 = vcmp.eq.f32.partialorder %v4701, 8.507059e+37
    %v4703 = vand.u32 %v4691, 2147483648
    %v4704 = vor.u32 1.1754944e-38, %v4703
    %v4705 = vsel %vm4702, %v4704, %v4700
    %v4706 = vmul.f32 %v4681, %v4705
    %v4707 = vmin.f32 %v4706, 1.0
    %v4708 = vmax.f32 %v4707, -1.0
    %v4709 = vmul.f32 %v748, %v748
    %v4710 = vmin.f32 16.0, %v4709
    %v4711 = vmul.f32 %v4710, 2.1237322e-06
    %v4712 = vadd.f32 %v4711, 0.00028619796
    %v4713 = vmul.f32 %v4710, %v4712
    %v4714 = vadd.f32 %v4713, 0.0036580483
    %v4715 = vmul.f32 %v4710, %v4714
    %v4716 = vadd.f32 %v4715, 0.05243302
    %v4717 = vmul.f32 %v4710, %v4716
    %v4718 = vadd.f32 %v4717, 0.18741608
    %v4719 = vmul.f32 %v4710, %v4718
    %v4720 = vadd.f32 %v4719, 1.1283791
    %v4721 = vmul.f32 %v748, %v4720
    %v4722 = vmul.f32 %v4710, 3.8918573e-05
    %v4723 = vadd.f32 %v4722, 0.001143296
    %v4724 = vmul.f32 %v4710, %v4723
    %v4725 = vadd.f32 %v4724, 0.014752088
    %v4726 = vmul.f32 %v4710, %v4725
    %v4727 = vadd.f32 %v4726, 0.112945676
    %v4728 = vmul.f32 %v4710, %v4727
    %v4729 = vadd.f32 %v4728, 0.4994258
    %v4730 = vmul.f32 %v4710, %v4729
    %v4731 = vadd.f32 %v4730, 1.0
    %v4732 = vrcp.pop %v4731
    %v4733 = vmul.f32 %v4731, %v4732
    %v4734 = vsub.f32 1.0, %v4733
    %v4735 = vmul.f32 %v4732, %v4734
    %v4736 = vadd.f32 %v4732, %v4735
    %vm4737 = vweird.f32 %v4731
    %vm4738 = vweird.f32 %v4732
    %vm4739 = vmor %vm4737, %vm4738
    %v4740 = vsel %vm4739, %v4732, %v4736
    %v4741 = vand.u32 2147483647, %v4731
    %vm4742 = vcmp.eq.f32.partialorder %v4741, 8.507059e+37
    %v4743 = vand.u32 %v4731, 2147483648
    %v4744 = vor.u32 1.1754944e-38, %v4743
    %v4745 = vsel %vm4742, %v4744, %v4740
    %v4746 = vmul.f32 %v4721, %v4745
    %v4747 = vmin.f32 %v4746, 1.0
    %v4748 = vmax.f32 %v4747, -1.0
    %v4749 = vadd.f32 %v788, 1.0
    %v4750 = vadd.f32 %v828, 1.0
    %v4751 = vadd.f32 %v868, 1.0
    %v4752 = vadd.f32 %v908, 1.0
    %v4753 = vadd.f32 %v948, 1.0
    %v4754 = vadd.f32 %v988, 1.0
    %v4755 = vadd.f32 %v1028, 1.0
    %v4756 = vadd.f32 %v1068, 1.0
    %v4757 = vadd.f32 %v1108, 1.0
    %v4758 = vadd.f32 %v1148, 1.0
    %v4759 = vadd.f32 %v1188, 1.0
    %v4760 = vadd.f32 %v1228, 1.0
    %v4761 = vadd.f32 %v1268, 1.0
    %v4762 = vadd.f32 %v1308, 1.0
    %v4763 = vadd.f32 %v1348, 1.0
    %v4764 = vadd.f32 %v1388, 1.0
    %v4765 = vadd.f32 %v1428, 1.0
    %v4766 = vadd.f32 %v1468, 1.0
    %v4767 = vadd.f32 %v1508, 1.0
    %v4768 = vadd.f32 %v1548, 1.0
    %v4769 = vadd.f32 %v1588, 1.0
    %v4770 = vadd.f32 %v1628, 1.0
    %v4771 = vadd.f32 %v1668, 1.0
    %v4772 = vadd.f32 %v1708, 1.0
    %v4773 = vadd.f32 %v1748, 1.0
    %v4774 = vadd.f32 %v1788, 1.0
    %v4775 = vadd.f32 %v1828, 1.0
    %v4776 = vadd.f32 %v1868, 1.0
    %v4777 = vadd.f32 %v1908, 1.0
    %v4778 = vadd.f32 %v1948, 1.0
    %v4779 = vadd.f32 %v1988, 1.0
    %v4780 = vadd.f32 %v2028, 1.0
    %v4781 = vadd.f32 %v2068, 1.0
    %v4782 = vadd.f32 %v2108, 1.0
    %v4783 = vadd.f32 %v2148, 1.0
    %v4784 = vadd.f32 %v2188, 1.0
    %v4785 = vadd.f32 %v2228, 1.0
    %v4786 = vadd.f32 %v2268, 1.0
    %v4787 = vadd.f32 %v2308, 1.0
    %v4788 = vadd.f32 %v2348, 1.0
    %v4789 = vadd.f32 %v2388, 1.0
    %v4790 = vadd.f32 %v2428, 1.0
    %v4791 = vadd.f32 %v2468, 1.0
    %v4792 = vadd.f32 %v2508, 1.0
    %v4793 = vadd.f32 %v2548, 1.0
    %v4794 = vadd.f32 %v2588, 1.0
    %v4795 = vadd.f32 %v2628, 1.0
    %v4796 = vadd.f32 %v2668, 1.0
    %v4797 = vadd.f32 %v2708, 1.0
    %v4798 = vadd.f32 %v2748, 1.0
    %v4799 = vadd.f32 %v2788, 1.0
    %v4800 = vadd.f32 %v2828, 1.0
    %v4801 = vadd.f32 %v2868, 1.0
    %v4802 = vadd.f32 %v2908, 1.0
    %v4803 = vadd.f32 %v2948, 1.0
    %v4804 = vadd.f32 %v2988, 1.0
    %v4805 = vadd.f32 %v3028, 1.0
    %v4806 = vadd.f32 %v3068, 1.0
    %v4807 = vadd.f32 %v3108, 1.0
    %v4808 = vadd.f32 %v3148, 1.0
    %v4809 = vadd.f32 %v3188, 1.0
    %v4810 = vadd.f32 %v3228, 1.0
    %v4811 = vadd.f32 %v3268, 1.0
    %v4812 = vadd.f32 %v3308, 1.0
    %v4813 = vadd.f32 %v3348, 1.0
    %v4814 = vadd.f32 %v3388, 1.0
    %v4815 = vadd.f32 %v3428, 1.0
    %v4816 = vadd.f32 %v3468, 1.0
    %v4817 = vadd.f32 %v3508, 1.0
    %v4818 = vadd.f32 %v3548, 1.0
    %v4819 = vadd.f32 %v3588, 1.0
    %v4820 = vadd.f32 %v3628, 1.0
    %v4821 = vadd.f32 %v3668, 1.0
    %v4822 = vadd.f32 %v3708, 1.0
    %v4823 = vadd.f32 %v3748, 1.0
    %v4824 = vadd.f32 %v3788, 1.0
    %v4825 = vadd.f32 %v3828, 1.0
    %v4826 = vadd.f32 %v3868, 1.0
    %v4827 = vadd.f32 %v3908, 1.0
    %v4828 = vadd.f32 %v3948, 1.0
    %v4829 = vadd.f32 %v3988, 1.0
    %v4830 = vadd.f32 %v4028, 1.0
    %v4831 = vadd.f32 %v4068, 1.0
    %v4832 = vadd.f32 %v4108, 1.0
    %v4833 = vadd.f32 %v4148, 1.0
    %v4834 = vadd.f32 %v4188, 1.0
    %v4835 = vadd.f32 %v4228, 1.0
    %v4836 = vadd.f32 %v4268, 1.0
    %v4837 = vadd.f32 %v4308, 1.0
    %v4838 = vadd.f32 %v4348, 1.0
    %v4839 = vadd.f32 %v4388, 1.0
    %v4840 = vadd.f32 %v4428, 1.0
    %v4841 = vadd.f32 %v4468, 1.0
    %v4842 = vadd.f32 %v4508, 1.0
    %v4843 = vadd.f32 %v4548, 1.0
    %v4844 = vadd.f32 %v4588, 1.0
    %v4845 = vadd.f32 %v4628, 1.0
    %v4846 = vadd.f32 %v4668, 1.0
    %v4847 = vadd.f32 %v4708, 1.0
    %v4848 = vadd.f32 %v4748, 1.0
    %v4849 = vmul.f32 %v549, %v4749
    %v4850 = vmul.f32 %v550, %v4750
    %v4851 = vmul.f32 %v551, %v4751
    %v4852 = vmul.f32 %v552, %v4752
    %v4853 = vmul.f32 %v553, %v4753
    %v4854 = vmul.f32 %v554, %v4754
    %v4855 = vmul.f32 %v555, %v4755
    %v4856 = vmul.f32 %v556, %v4756
    %v4857 = vmul.f32 %v557, %v4757
    %v4858 = vmul.f32 %v558, %v4758
    %v4859 = vmul.f32 %v559, %v4759
    %v4860 = vmul.f32 %v560, %v4760
    %v4861 = vmul.f32 %v561, %v4761
    %v4862 = vmul.f32 %v562, %v4762
    %v4863 = vmul.f32 %v563, %v4763
    %v4864 = vmul.f32 %v564, %v4764
    %v4865 = vmul.f32 %v565, %v4765
    %v4866 = vmul.f32 %v566, %v4766
    %v4867 = vmul.f32 %v567, %v4767
    %v4868 = vmul.f32 %v568, %v4768
    %v4869 = vmul.f32 %v569, %v4769
    %v4870 = vmul.f32 %v570, %v4770
    %v4871 = vmul.f32 %v571, %v4771
    %v4872 = vmul.f32 %v572, %v4772
    %v4873 = vmul.f32 %v573, %v4773
    %v4874 = vmul.f32 %v574, %v4774
    %v4875 = vmul.f32 %v575, %v4775
    %v4876 = vmul.f32 %v576, %v4776
    %v4877 = vmul.f32 %v577, %v4777
    %v4878 = vmul.f32 %v578, %v4778
    %v4879 = vmul.f32 %v579, %v4779
    %v4880 = vmul.f32 %v580, %v4780
    %v4881 = vmul.f32 %v581, %v4781
    %v4882 = vmul.f32 %v582, %v4782
    %v4883 = vmul.f32 %v583, %v4783
    %v4884 = vmul.f32 %v584, %v4784
    %v4885 = vmul.f32 %v585, %v4785
    %v4886 = vmul.f32 %v586, %v4786
    %v4887 = vmul.f32 %v587, %v4787
    %v4888 = vmul.f32 %v588, %v4788
    %v4889 = vmul.f32 %v589, %v4789
    %v4890 = vmul.f32 %v590, %v4790
    %v4891 = vmul.f32 %v591, %v4791
    %v4892 = vmul.f32 %v592, %v4792
    %v4893 = vmul.f32 %v593, %v4793
    %v4894 = vmul.f32 %v594, %v4794
    %v4895 = vmul.f32 %v595, %v4795
    %v4896 = vmul.f32 %v596, %v4796
    %v4897 = vmul.f32 %v597, %v4797
    %v4898 = vmul.f32 %v598, %v4798
    %v4899 = vmul.f32 %v599, %v4799
    %v4900 = vmul.f32 %v600, %v4800
    %v4901 = vmul.f32 %v601, %v4801
    %v4902 = vmul.f32 %v602, %v4802
    %v4903 = vmul.f32 %v603, %v4803
    %v4904 = vmul.f32 %v604, %v4804
    %v4905 = vmul.f32 %v605, %v4805
    %v4906 = vmul.f32 %v606, %v4806
    %v4907 = vmul.f32 %v607, %v4807
    %v4908 = vmul.f32 %v608, %v4808
    %v4909 = vmul.f32 %v609, %v4809
    %v4910 = vmul.f32 %v610, %v4810
    %v4911 = vmul.f32 %v611, %v4811
    %v4912 = vmul.f32 %v612, %v4812
    %v4913 = vmul.f32 %v613, %v4813
    %v4914 = vmul.f32 %v614, %v4814
    %v4915 = vmul.f32 %v615, %v4815
    %v4916 = vmul.f32 %v616, %v4816
    %v4917 = vmul.f32 %v617, %v4817
    %v4918 = vmul.f32 %v618, %v4818
    %v4919 = vmul.f32 %v619, %v4819
    %v4920 = vmul.f32 %v620, %v4820
    %v4921 = vmul.f32 %v621, %v4821
    %v4922 = vmul.f32 %v622, %v4822
    %v4923 = vmul.f32 %v623, %v4823
    %v4924 = vmul.f32 %v624, %v4824
    %v4925 = vmul.f32 %v625, %v4825
    %v4926 = vmul.f32 %v626, %v4826
    %v4927 = vmul.f32 %v627, %v4827
    %v4928 = vmul.f32 %v628, %v4828
    %v4929 = vmul.f32 %v629, %v4829
    %v4930 = vmul.f32 %v630, %v4830
    %v4931 = vmul.f32 %v631, %v4831
    %v4932 = vmul.f32 %v632, %v4832
    %v4933 = vmul.f32 %v633, %v4833
    %v4934 = vmul.f32 %v634, %v4834
    %v4935 = vmul.f32 %v635, %v4835
    %v4936 = vmul.f32 %v636, %v4836
    %v4937 = vmul.f32 %v637, %v4837
    %v4938 = vmul.f32 %v638, %v4838
    %v4939 = vmul.f32 %v639, %v4839
    %v4940 = vmul.f32 %v640, %v4840
    %v4941 = vmul.f32 %v641, %v4841
    %v4942 = vmul.f32 %v642, %v4842
    %v4943 = vmul.f32 %v643, %v4843
    %v4944 = vmul.f32 %v644, %v4844
    %v4945 = vmul.f32 %v645, %v4845
    %v4946 = vmul.f32 %v646, %v4846
    %v4947 = vmul.f32 %v647, %v4847
    %v4948 = vmul.f32 %v648, %v4848
    %v4949 = vld [vmem:[#allocation8] sm:$0xff]
    %v4950 = vld [vmem:[#allocation8 + $0x8] sm:$0xff]
    %v4951 = vld [vmem:[#allocation8 + $0x10] sm:$0xff]
    %v4952 = vld [vmem:[#allocation8 + $0x18] sm:$0xff]
    %v4953 = vld [vmem:[#allocation8 + $0x20] sm:$0xff]
    %v4954 = vld [vmem:[#allocation8 + $0x28] sm:$0xff]
    %v4955 = vld [vmem:[#allocation8 + $0x30] sm:$0xff]
    %v4956 = vld [vmem:[#allocation8 + $0x38] sm:$0xff]
    %v4957 = vld [vmem:[#allocation8 + $0x40] sm:$0xff]
    %v4958 = vld [vmem:[#allocation8 + $0x48] sm:$0xff]
    %v4959 = vld [vmem:[#allocation8 + $0x50] sm:$0xff]
    %v4960 = vld [vmem:[#allocation8 + $0x58] sm:$0xff]
    %v4961 = vld [vmem:[#allocation8 + $0x60] sm:$0xff]
    %v4962 = vld [vmem:[#allocation8 + $0x68] sm:$0xff]
    %v4963 = vld [vmem:[#allocation8 + $0x70] sm:$0xff]
    %v4964 = vld [vmem:[#allocation8 + $0x78] sm:$0xff]
    %v4965 = vld [vmem:[#allocation8 + $0x80] sm:$0xff]
    %v4966 = vld [vmem:[#allocation8 + $0x88] sm:$0xff]
    %v4967 = vld [vmem:[#allocation8 + $0x90] sm:$0xff]
    %v4968 = vld [vmem:[#allocation8 + $0x98] sm:$0xff]
    %v4969 = vld [vmem:[#allocation8 + $0xa0] sm:$0xff]
    %v4970 = vld [vmem:[#allocation8 + $0xa8] sm:$0xff]
    %v4971 = vld [vmem:[#allocation8 + $0xb0] sm:$0xff]
    %v4972 = vld [vmem:[#allocation8 + $0xb8] sm:$0xff]
    %v4973 = vld [vmem:[#allocation8 + $0xc0] sm:$0xff]
    %v4974 = vld [vmem:[#allocation8 + $0xc8] sm:$0xff]
    %v4975 = vld [vmem:[#allocation8 + $0xd0] sm:$0xff]
    %v4976 = vld [vmem:[#allocation8 + $0xd8] sm:$0xff]
    %v4977 = vld [vmem:[#allocation8 + $0xe0] sm:$0xff]
    %v4978 = vld [vmem:[#allocation8 + $0xe8] sm:$0xff]
    %v4979 = vld [vmem:[#allocation8 + $0xf0] sm:$0xff]
    %v4980 = vld [vmem:[#allocation8 + $0xf8] sm:$0xff]
    %v4981 = vld [vmem:[#allocation8 + $0x100] sm:$0xff]
    %v4982 = vld [vmem:[#allocation8 + $0x108] sm:$0xff]
    %v4983 = vld [vmem:[#allocation8 + $0x110] sm:$0xff]
    %v4984 = vld [vmem:[#allocation8 + $0x118] sm:$0xff]
    %v4985 = vld [vmem:[#allocation8 + $0x120] sm:$0xff]
    %v4986 = vld [vmem:[#allocation8 + $0x128] sm:$0xff]
    %v4987 = vld [vmem:[#allocation8 + $0x130] sm:$0xff]
    %v4988 = vld [vmem:[#allocation8 + $0x138] sm:$0xff]
    %v4989 = vld [vmem:[#allocation8 + $0x140] sm:$0xff]
    %v4990 = vld [vmem:[#allocation8 + $0x148] sm:$0xff]
    %v4991 = vld [vmem:[#allocation8 + $0x150] sm:$0xff]
    %v4992 = vld [vmem:[#allocation8 + $0x158] sm:$0xff]
    %v4993 = vld [vmem:[#allocation8 + $0x160] sm:$0xff]
    %v4994 = vld [vmem:[#allocation8 + $0x168] sm:$0xff]
    %v4995 = vld [vmem:[#allocation8 + $0x170] sm:$0xff]
    %v4996 = vld [vmem:[#allocation8 + $0x178] sm:$0xff]
    %v4997 = vld [vmem:[#allocation8 + $0x180] sm:$0xff]
    %v4998 = vld [vmem:[#allocation8 + $0x188] sm:$0xff]
    %v4999 = vld [vmem:[#allocation8 + $0x190] sm:$0xff]
    %v5000 = vld [vmem:[#allocation8 + $0x198] sm:$0xff]
    %v5001 = vld [vmem:[#allocation8 + $0x1a0] sm:$0xff]
    %v5002 = vld [vmem:[#allocation8 + $0x1a8] sm:$0xff]
    %v5003 = vld [vmem:[#allocation8 + $0x1b0] sm:$0xff]
    %v5004 = vld [vmem:[#allocation8 + $0x1b8] sm:$0xff]
    %v5005 = vld [vmem:[#allocation8 + $0x1c0] sm:$0xff]
    %v5006 = vld [vmem:[#allocation8 + $0x1c8] sm:$0xff]
    %v5007 = vld [vmem:[#allocation8 + $0x1d0] sm:$0xff]
    %v5008 = vld [vmem:[#allocation8 + $0x1d8] sm:$0xff]
    %v5009 = vld [vmem:[#allocation8 + $0x1e0] sm:$0xff]
    %v5010 = vld [vmem:[#allocation8 + $0x1e8] sm:$0xff]
    %v5011 = vld [vmem:[#allocation8 + $0x1f0] sm:$0xff]
    %v5012 = vld [vmem:[#allocation8 + $0x1f8] sm:$0xff]
    %v5013 = vld [vmem:[%s4] sm:$0x1]
    %v5015 = vperm.slane %v5013, 0
    %5017 = vmatpush.msra.mxu0 %v4964
    %5018 = vmatpush.msra.mxu0 %v4963
    %5019 = vmatpush.msra.mxu0 %v4962
    %5020 = vmatpush.msra.mxu0 %v4961
    %5021 = vmatpush.msra.mxu0 %v4960
    %5022 = vmatpush.msra.mxu0 %v4959
    %5023 = vmatpush.msra.mxu0 %v4958
    %5024 = vmatpush.msra.mxu0 %v4957
    %5025 = vmatpush.msra.mxu0 %v4956
    %5026 = vmatpush.msra.mxu0 %v4955
    %5027 = vmatpush.msra.mxu0 %v4954
    %5028 = vmatpush.msra.mxu0 %v4953
    %5029 = vmatpush.msra.mxu0 %v4952
    %5030 = vmatpush.msra.mxu0 %v4951
    %5031 = vmatpush.msra.mxu0 %v4950
    %5032 = vmatpush.msra.mxu0 %v4949
    %5033 = vmatmul.f32.gmra.mxu0 %v4849
    %v5034 = vpop.f32.mrf.mxu0
    %v5035 = vadd.f32 %v5015, %v5034
    %5036 = vmatmul.f32.gmra.mxu0 %v4853
    %v5037 = vpop.f32.mrf.mxu0
    %v5038 = vadd.f32 %v5015, %v5037
    %5039 = vmatmul.f32.gmra.mxu0 %v4857
    %v5040 = vpop.f32.mrf.mxu0
    %v5041 = vadd.f32 %v5015, %v5040
    %5042 = vmatmul.f32.gmra.mxu0 %v4861
    %v5043 = vpop.f32.mrf.mxu0
    %v5044 = vadd.f32 %v5015, %v5043
    %5045 = vmatmul.f32.gmra.mxu0 %v4865
    %v5046 = vpop.f32.mrf.mxu0
    %v5047 = vadd.f32 %v5015, %v5046
    %5048 = vmatmul.f32.gmra.mxu0 %v4869
    %v5049 = vpop.f32.mrf.mxu0
    %v5050 = vadd.f32 %v5015, %v5049
    %5051 = vmatmul.f32.gmra.mxu0 %v4873
    %v5052 = vpop.f32.mrf.mxu0
    %v5053 = vadd.f32 %v5015, %v5052
    %5054 = vmatmul.f32.gmra.mxu0 %v4877
    %v5055 = vpop.f32.mrf.mxu0
    %v5056 = vadd.f32 %v5015, %v5055
    %5057 = vmatmul.f32.gmra.mxu0 %v4881
    %v5058 = vpop.f32.mrf.mxu0
    %v5059 = vadd.f32 %v5015, %v5058
    %5060 = vmatmul.f32.gmra.mxu0 %v4885
    %v5061 = vpop.f32.mrf.mxu0
    %v5062 = vadd.f32 %v5015, %v5061
    %5063 = vmatmul.f32.gmra.mxu0 %v4889
    %v5064 = vpop.f32.mrf.mxu0
    %v5065 = vadd.f32 %v5015, %v5064
    %5066 = vmatmul.f32.gmra.mxu0 %v4893
    %v5067 = vpop.f32.mrf.mxu0
    %v5068 = vadd.f32 %v5015, %v5067
    %5069 = vmatmul.f32.gmra.mxu0 %v4897
    %v5070 = vpop.f32.mrf.mxu0
    %v5071 = vadd.f32 %v5015, %v5070
    %5072 = vmatmul.f32.gmra.mxu0 %v4901
    %v5073 = vpop.f32.mrf.mxu0
    %v5074 = vadd.f32 %v5015, %v5073
    %5075 = vmatmul.f32.gmra.mxu0 %v4905
    %v5076 = vpop.f32.mrf.mxu0
    %v5077 = vadd.f32 %v5015, %v5076
    %5078 = vmatmul.f32.gmra.mxu0 %v4909
    %v5079 = vpop.f32.mrf.mxu0
    %v5080 = vadd.f32 %v5015, %v5079
    %5081 = vmatmul.f32.gmra.mxu0 %v4913
    %v5082 = vpop.f32.mrf.mxu0
    %v5083 = vadd.f32 %v5015, %v5082
    %5084 = vmatmul.f32.gmra.mxu0 %v4917
    %v5085 = vpop.f32.mrf.mxu0
    %v5086 = vadd.f32 %v5015, %v5085
    %5087 = vmatmul.f32.gmra.mxu0 %v4921
    %v5088 = vpop.f32.mrf.mxu0
    %v5089 = vadd.f32 %v5015, %v5088
    %5090 = vmatmul.f32.gmra.mxu0 %v4925
    %v5091 = vpop.f32.mrf.mxu0
    %v5092 = vadd.f32 %v5015, %v5091
    %5093 = vmatmul.f32.gmra.mxu0 %v4929
    %v5094 = vpop.f32.mrf.mxu0
    %v5095 = vadd.f32 %v5015, %v5094
    %5096 = vmatmul.f32.gmra.mxu0 %v4933
    %v5097 = vpop.f32.mrf.mxu0
    %v5098 = vadd.f32 %v5015, %v5097
    %5099 = vmatmul.f32.gmra.mxu0 %v4937
    %v5100 = vpop.f32.mrf.mxu0
    %v5101 = vadd.f32 %v5015, %v5100
    %5102 = vmatmul.f32.gmra.mxu0 %v4941
    %v5103 = vpop.f32.mrf.mxu0
    %v5104 = vadd.f32 %v5015, %v5103
    %5105 = vmatmul.f32.gmra.mxu0 %v4945
    %v5106 = vpop.f32.mrf.mxu0
    %v5107 = vadd.f32 %v5015, %v5106
    %5108 = vdwg.mxu0
    %5109 = vmatpush.msra.mxu0 %v4980
    %5110 = vmatpush.msra.mxu0 %v4979
    %5111 = vmatpush.msra.mxu0 %v4978
    %5112 = vmatpush.msra.mxu0 %v4977
    %5113 = vmatpush.msra.mxu0 %v4976
    %5114 = vmatpush.msra.mxu0 %v4975
    %5115 = vmatpush.msra.mxu0 %v4974
    %5116 = vmatpush.msra.mxu0 %v4973
    %5117 = vmatpush.msra.mxu0 %v4972
    %5118 = vmatpush.msra.mxu0 %v4971
    %5119 = vmatpush.msra.mxu0 %v4970
    %5120 = vmatpush.msra.mxu0 %v4969
    %5121 = vmatpush.msra.mxu0 %v4968
    %5122 = vmatpush.msra.mxu0 %v4967
    %5123 = vmatpush.msra.mxu0 %v4966
    %5124 = vmatpush.msra.mxu0 %v4965
    %5125 = vmatmul.f32.gmra.mxu0 %v4850
    %v5126 = vpop.f32.mrf.mxu0
    %v5127 = vadd.f32 %v5035, %v5126
    %5128 = vmatmul.f32.gmra.mxu0 %v4854
    %v5129 = vpop.f32.mrf.mxu0
    %v5130 = vadd.f32 %v5038, %v5129
    %5131 = vmatmul.f32.gmra.mxu0 %v4858
    %v5132 = vpop.f32.mrf.mxu0
    %v5133 = vadd.f32 %v5041, %v5132
    %5134 = vmatmul.f32.gmra.mxu0 %v4862
    %v5135 = vpop.f32.mrf.mxu0
    %v5136 = vadd.f32 %v5044, %v5135
    %5137 = vmatmul.f32.gmra.mxu0 %v4866
    %v5138 = vpop.f32.mrf.mxu0
    %v5139 = vadd.f32 %v5047, %v5138
    %5140 = vmatmul.f32.gmra.mxu0 %v4870
    %v5141 = vpop.f32.mrf.mxu0
    %v5142 = vadd.f32 %v5050, %v5141
    %5143 = vmatmul.f32.gmra.mxu0 %v4874
    %v5144 = vpop.f32.mrf.mxu0
    %v5145 = vadd.f32 %v5053, %v5144
    %5146 = vmatmul.f32.gmra.mxu0 %v4878
    %v5147 = vpop.f32.mrf.mxu0
    %v5148 = vadd.f32 %v5056, %v5147
    %5149 = vmatmul.f32.gmra.mxu0 %v4882
    %v5150 = vpop.f32.mrf.mxu0
    %v5151 = vadd.f32 %v5059, %v5150
    %5152 = vmatmul.f32.gmra.mxu0 %v4886
    %v5153 = vpop.f32.mrf.mxu0
    %v5154 = vadd.f32 %v5062, %v5153
    %5155 = vmatmul.f32.gmra.mxu0 %v4890
    %v5156 = vpop.f32.mrf.mxu0
    %v5157 = vadd.f32 %v5065, %v5156
    %5158 = vmatmul.f32.gmra.mxu0 %v4894
    %v5159 = vpop.f32.mrf.mxu0
    %v5160 = vadd.f32 %v5068, %v5159
    %5161 = vmatmul.f32.gmra.mxu0 %v4898
    %v5162 = vpop.f32.mrf.mxu0
    %v5163 = vadd.f32 %v5071, %v5162
    %5164 = vmatmul.f32.gmra.mxu0 %v4902
    %v5165 = vpop.f32.mrf.mxu0
    %v5166 = vadd.f32 %v5074, %v5165
    %5167 = vmatmul.f32.gmra.mxu0 %v4906
    %v5168 = vpop.f32.mrf.mxu0
    %v5169 = vadd.f32 %v5077, %v5168
    %5170 = vmatmul.f32.gmra.mxu0 %v4910
    %v5171 = vpop.f32.mrf.mxu0
    %v5172 = vadd.f32 %v5080, %v5171
    %5173 = vmatmul.f32.gmra.mxu0 %v4914
    %v5174 = vpop.f32.mrf.mxu0
    %v5175 = vadd.f32 %v5083, %v5174
    %5176 = vmatmul.f32.gmra.mxu0 %v4918
    %v5177 = vpop.f32.mrf.mxu0
    %v5178 = vadd.f32 %v5086, %v5177
    %5179 = vmatmul.f32.gmra.mxu0 %v4922
    %v5180 = vpop.f32.mrf.mxu0
    %v5181 = vadd.f32 %v5089, %v5180
    %5182 = vmatmul.f32.gmra.mxu0 %v4926
    %v5183 = vpop.f32.mrf.mxu0
    %v5184 = vadd.f32 %v5092, %v5183
    %5185 = vmatmul.f32.gmra.mxu0 %v4930
    %v5186 = vpop.f32.mrf.mxu0
    %v5187 = vadd.f32 %v5095, %v5186
    %5188 = vmatmul.f32.gmra.mxu0 %v4934
    %v5189 = vpop.f32.mrf.mxu0
    %v5190 = vadd.f32 %v5098, %v5189
    %5191 = vmatmul.f32.gmra.mxu0 %v4938
    %v5192 = vpop.f32.mrf.mxu0
    %v5193 = vadd.f32 %v5101, %v5192
    %5194 = vmatmul.f32.gmra.mxu0 %v4942
    %v5195 = vpop.f32.mrf.mxu0
    %v5196 = vadd.f32 %v5104, %v5195
    %5197 = vmatmul.f32.gmra.mxu0 %v4946
    %v5198 = vpop.f32.mrf.mxu0
    %v5199 = vadd.f32 %v5107, %v5198
    %5200 = vdwg.mxu0
    %5201 = vmatpush.msra.mxu0 %v4996
    %5202 = vmatpush.msra.mxu0 %v4995
    %5203 = vmatpush.msra.mxu0 %v4994
    %5204 = vmatpush.msra.mxu0 %v4993
    %5205 = vmatpush.msra.mxu0 %v4992
    %5206 = vmatpush.msra.mxu0 %v4991
    %5207 = vmatpush.msra.mxu0 %v4990
    %5208 = vmatpush.msra.mxu0 %v4989
    %5209 = vmatpush.msra.mxu0 %v4988
    %5210 = vmatpush.msra.mxu0 %v4987
    %5211 = vmatpush.msra.mxu0 %v4986
    %5212 = vmatpush.msra.mxu0 %v4985
    %5213 = vmatpush.msra.mxu0 %v4984
    %5214 = vmatpush.msra.mxu0 %v4983
    %5215 = vmatpush.msra.mxu0 %v4982
    %5216 = vmatpush.msra.mxu0 %v4981
    %5217 = vmatmul.f32.gmra.mxu0 %v4851
    %v5218 = vpop.f32.mrf.mxu0
    %v5219 = vadd.f32 %v5127, %v5218
    %5220 = vmatmul.f32.gmra.mxu0 %v4855
    %v5221 = vpop.f32.mrf.mxu0
    %v5222 = vadd.f32 %v5130, %v5221
    %5223 = vmatmul.f32.gmra.mxu0 %v4859
    %v5224 = vpop.f32.mrf.mxu0
    %v5225 = vadd.f32 %v5133, %v5224
    %5226 = vmatmul.f32.gmra.mxu0 %v4863
    %v5227 = vpop.f32.mrf.mxu0
    %v5228 = vadd.f32 %v5136, %v5227
    %5229 = vmatmul.f32.gmra.mxu0 %v4867
    %v5230 = vpop.f32.mrf.mxu0
    %v5231 = vadd.f32 %v5139, %v5230
    %5232 = vmatmul.f32.gmra.mxu0 %v4871
    %v5233 = vpop.f32.mrf.mxu0
    %v5234 = vadd.f32 %v5142, %v5233
    %5235 = vmatmul.f32.gmra.mxu0 %v4875
    %v5236 = vpop.f32.mrf.mxu0
    %v5237 = vadd.f32 %v5145, %v5236
    %5238 = vmatmul.f32.gmra.mxu0 %v4879
    %v5239 = vpop.f32.mrf.mxu0
    %v5240 = vadd.f32 %v5148, %v5239
    %5241 = vmatmul.f32.gmra.mxu0 %v4883
    %v5242 = vpop.f32.mrf.mxu0
    %v5243 = vadd.f32 %v5151, %v5242
    %5244 = vmatmul.f32.gmra.mxu0 %v4887
    %v5245 = vpop.f32.mrf.mxu0
    %v5246 = vadd.f32 %v5154, %v5245
    %5247 = vmatmul.f32.gmra.mxu0 %v4891
    %v5248 = vpop.f32.mrf.mxu0
    %v5249 = vadd.f32 %v5157, %v5248
    %5250 = vmatmul.f32.gmra.mxu0 %v4895
    %v5251 = vpop.f32.mrf.mxu0
    %v5252 = vadd.f32 %v5160, %v5251
    %5253 = vmatmul.f32.gmra.mxu0 %v4899
    %v5254 = vpop.f32.mrf.mxu0
    %v5255 = vadd.f32 %v5163, %v5254
    %5256 = vmatmul.f32.gmra.mxu0 %v4903
    %v5257 = vpop.f32.mrf.mxu0
    %v5258 = vadd.f32 %v5166, %v5257
    %5259 = vmatmul.f32.gmra.mxu0 %v4907
    %v5260 = vpop.f32.mrf.mxu0
    %v5261 = vadd.f32 %v5169, %v5260
    %5262 = vmatmul.f32.gmra.mxu0 %v4911
    %v5263 = vpop.f32.mrf.mxu0
    %v5264 = vadd.f32 %v5172, %v5263
    %5265 = vmatmul.f32.gmra.mxu0 %v4915
    %v5266 = vpop.f32.mrf.mxu0
    %v5267 = vadd.f32 %v5175, %v5266
    %5268 = vmatmul.f32.gmra.mxu0 %v4919
    %v5269 = vpop.f32.mrf.mxu0
    %v5270 = vadd.f32 %v5178, %v5269
    %5271 = vmatmul.f32.gmra.mxu0 %v4923
    %v5272 = vpop.f32.mrf.mxu0
    %v5273 = vadd.f32 %v5181, %v5272
    %5274 = vmatmul.f32.gmra.mxu0 %v4927
    %v5275 = vpop.f32.mrf.mxu0
    %v5276 = vadd.f32 %v5184, %v5275
    %5277 = vmatmul.f32.gmra.mxu0 %v4931
    %v5278 = vpop.f32.mrf.mxu0
    %v5279 = vadd.f32 %v5187, %v5278
    %5280 = vmatmul.f32.gmra.mxu0 %v4935
    %v5281 = vpop.f32.mrf.mxu0
    %v5282 = vadd.f32 %v5190, %v5281
    %5283 = vmatmul.f32.gmra.mxu0 %v4939
    %v5284 = vpop.f32.mrf.mxu0
    %v5285 = vadd.f32 %v5193, %v5284
    %5286 = vmatmul.f32.gmra.mxu0 %v4943
    %v5287 = vpop.f32.mrf.mxu0
    %v5288 = vadd.f32 %v5196, %v5287
    %5289 = vmatmul.f32.gmra.mxu0 %v4947
    %v5290 = vpop.f32.mrf.mxu0
    %v5291 = vadd.f32 %v5199, %v5290
    %5292 = vdwg.mxu0
    %5293 = vmatpush.msra.mxu0 %v5012
    %5294 = vmatpush.msra.mxu0 %v5011
    %5295 = vmatpush.msra.mxu0 %v5010
    %5296 = vmatpush.msra.mxu0 %v5009
    %5297 = vmatpush.msra.mxu0 %v5008
    %5298 = vmatpush.msra.mxu0 %v5007
    %5299 = vmatpush.msra.mxu0 %v5006
    %5300 = vmatpush.msra.mxu0 %v5005
    %5301 = vmatpush.msra.mxu0 %v5004
    %5302 = vmatpush.msra.mxu0 %v5003
    %5303 = vmatpush.msra.mxu0 %v5002
    %5304 = vmatpush.msra.mxu0 %v5001
    %5305 = vmatpush.msra.mxu0 %v5000
    %5306 = vmatpush.msra.mxu0 %v4999
    %5307 = vmatpush.msra.mxu0 %v4998
    %5308 = vmatpush.msra.mxu0 %v4997
    %5309 = vmatmul.f32.gmra.mxu0 %v4852
    %v5310 = vpop.f32.mrf.mxu0
    %v5311 = vadd.f32 %v5219, %v5310
    %5312 = vmatmul.f32.gmra.mxu0 %v4856
    %v5313 = vpop.f32.mrf.mxu0
    %v5314 = vadd.f32 %v5222, %v5313
    %5315 = vmatmul.f32.gmra.mxu0 %v4860
    %v5316 = vpop.f32.mrf.mxu0
    %v5317 = vadd.f32 %v5225, %v5316
    %5318 = vmatmul.f32.gmra.mxu0 %v4864
    %v5319 = vpop.f32.mrf.mxu0
    %v5320 = vadd.f32 %v5228, %v5319
    %5321 = vmatmul.f32.gmra.mxu0 %v4868
    %v5322 = vpop.f32.mrf.mxu0
    %v5323 = vadd.f32 %v5231, %v5322
    %5324 = vmatmul.f32.gmra.mxu0 %v4872
    %v5325 = vpop.f32.mrf.mxu0
    %v5326 = vadd.f32 %v5234, %v5325
    %5327 = vmatmul.f32.gmra.mxu0 %v4876
    %v5328 = vpop.f32.mrf.mxu0
    %v5329 = vadd.f32 %v5237, %v5328
    %5330 = vmatmul.f32.gmra.mxu0 %v4880
    %v5331 = vpop.f32.mrf.mxu0
    %v5332 = vadd.f32 %v5240, %v5331
    %5333 = vmatmul.f32.gmra.mxu0 %v4884
    %v5334 = vpop.f32.mrf.mxu0
    %v5335 = vadd.f32 %v5243, %v5334
    %5336 = vmatmul.f32.gmra.mxu0 %v4888
    %v5337 = vpop.f32.mrf.mxu0
    %v5338 = vadd.f32 %v5246, %v5337
    %5339 = vmatmul.f32.gmra.mxu0 %v4892
    %v5340 = vpop.f32.mrf.mxu0
    %v5341 = vadd.f32 %v5249, %v5340
    %5342 = vmatmul.f32.gmra.mxu0 %v4896
    %v5343 = vpop.f32.mrf.mxu0
    %v5344 = vadd.f32 %v5252, %v5343
    %5345 = vmatmul.f32.gmra.mxu0 %v4900
    %v5346 = vpop.f32.mrf.mxu0
    %v5347 = vadd.f32 %v5255, %v5346
    %5348 = vmatmul.f32.gmra.mxu0 %v4904
    %v5349 = vpop.f32.mrf.mxu0
    %v5350 = vadd.f32 %v5258, %v5349
    %5351 = vmatmul.f32.gmra.mxu0 %v4908
    %v5352 = vpop.f32.mrf.mxu0
    %v5353 = vadd.f32 %v5261, %v5352
    %5354 = vmatmul.f32.gmra.mxu0 %v4912
    %v5355 = vpop.f32.mrf.mxu0
    %v5356 = vadd.f32 %v5264, %v5355
    %5357 = vmatmul.f32.gmra.mxu0 %v4916
    %v5358 = vpop.f32.mrf.mxu0
    %v5359 = vadd.f32 %v5267, %v5358
    %5360 = vmatmul.f32.gmra.mxu0 %v4920
    %v5361 = vpop.f32.mrf.mxu0
    %v5362 = vadd.f32 %v5270, %v5361
    %5363 = vmatmul.f32.gmra.mxu0 %v4924
    %v5364 = vpop.f32.mrf.mxu0
    %v5365 = vadd.f32 %v5273, %v5364
    %5366 = vmatmul.f32.gmra.mxu0 %v4928
    %v5367 = vpop.f32.mrf.mxu0
    %v5368 = vadd.f32 %v5276, %v5367
    %5369 = vmatmul.f32.gmra.mxu0 %v4932
    %v5370 = vpop.f32.mrf.mxu0
    %v5371 = vadd.f32 %v5279, %v5370
    %5372 = vmatmul.f32.gmra.mxu0 %v4936
    %v5373 = vpop.f32.mrf.mxu0
    %v5374 = vadd.f32 %v5282, %v5373
    %5375 = vmatmul.f32.gmra.mxu0 %v4940
    %v5376 = vpop.f32.mrf.mxu0
    %v5377 = vadd.f32 %v5285, %v5376
    %5378 = vmatmul.f32.gmra.mxu0 %v4944
    %v5379 = vpop.f32.mrf.mxu0
    %v5380 = vadd.f32 %v5288, %v5379
    %5381 = vmatmul.f32.gmra.mxu0 %v4948
    %v5382 = vpop.f32.mrf.mxu0
    %v5383 = vadd.f32 %v5291, %v5382
    %5384 = vdwg.mxu0
    %5385 = vst [vmem:[#allocation10] sm:$0xff] %v5311
    %5386 = vst [vmem:[#allocation10 + $0x8] sm:$0xff] %v5314
    %5387 = vst [vmem:[#allocation10 + $0x10] sm:$0xff] %v5317
    %5388 = vst [vmem:[#allocation10 + $0x18] sm:$0xff] %v5320
    %5389 = vst [vmem:[#allocation10 + $0x20] sm:$0xff] %v5323
    %5390 = vst [vmem:[#allocation10 + $0x28] sm:$0xff] %v5326
    %5391 = vst [vmem:[#allocation10 + $0x30] sm:$0xff] %v5329
    %5392 = vst [vmem:[#allocation10 + $0x38] sm:$0xff] %v5332
    %5393 = vst [vmem:[#allocation10 + $0x40] sm:$0xff] %v5335
    %5394 = vst [vmem:[#allocation10 + $0x48] sm:$0xff] %v5338
    %5395 = vst [vmem:[#allocation10 + $0x50] sm:$0xff] %v5341
    %5396 = vst [vmem:[#allocation10 + $0x58] sm:$0xff] %v5344
    %5397 = vst [vmem:[#allocation10 + $0x60] sm:$0xff] %v5347
    %5398 = vst [vmem:[#allocation10 + $0x68] sm:$0xff] %v5350
    %5399 = vst [vmem:[#allocation10 + $0x70] sm:$0xff] %v5353
    %5400 = vst [vmem:[#allocation10 + $0x78] sm:$0xff] %v5356
    %5401 = vst [vmem:[#allocation10 + $0x80] sm:$0xff] %v5359
    %5402 = vst [vmem:[#allocation10 + $0x88] sm:$0xff] %v5362
    %5403 = vst [vmem:[#allocation10 + $0x90] sm:$0xff] %v5365
    %5404 = vst [vmem:[#allocation10 + $0x98] sm:$0xff] %v5368
    %5405 = vst [vmem:[#allocation10 + $0xa0] sm:$0xff] %v5371
    %5406 = vst [vmem:[#allocation10 + $0xa8] sm:$0xff] %v5374
    %5407 = vst [vmem:[#allocation10 + $0xb0] sm:$0xff] %v5377
    %5408 = vst [vmem:[#allocation10 + $0xb8] sm:$0xff] %v5380
    %5409 = vst [vmem:[#allocation10 + $0xc0] sm:$0xff] %v5383
    // Predicated region
    $region38: #{tpu_custom_call.1} parent=1 // pred_check
      _
    $region39: #{tpu_custom_call.1} parent=1 // pred_check_branch
      %5411 = sbr.rel (0) target = $region41
    $region40: #{tpu_custom_call.1} parent=1 // pred_region
      %5413 = vsyncadd [#allocation4], 0
      %s5414 = sshll.u32 [#allocation10], 4
      %s5415 = int_to_ptr.vmem [resolvable:$true] %s5414
      %s5416 = sshll.u32 %s5, 4
      %s5417 = int_to_ptr.hbm [resolvable:$true] %s5416
      %5422 = dma.vmem_to_hbm [thread:$0]  %s5415, 3200, %s5417, [#allocation4], 128, 128, 8
    $region41: #{tpu_custom_call.1} parent=1 // pred_fallthru
      _
    // Predicated region
    $region42: #{tpu_custom_call.1} parent=1 // pred_check
      _
    $region43: #{tpu_custom_call.1} parent=1 // pred_check_branch
      %5424 = sbr.rel (0) target = $region45
    $region44: #{tpu_custom_call.1} parent=1 // pred_region
      %5426 = dma.done [#allocation4], 3200
    $region45: #{tpu_custom_call.1} parent=1 // pred_fallthru
      _
    %5427 = vsyncpa [#allocation3], 1
    %5428 = vsyncpa [#allocation6], 1
    %5429 = vsyncpa [#allocation9], 1
    %5430 = vsyncpa [#allocation4], 1

</llo_original>
